<compile_context>
chip_gen: v6e
topology: v6e:2x2x1
jax: 0.10.0
libtpu: 0.0.40
codegen_flags: <defaults>
</compile_context>

<pallas_src>
import math
from functools import partial

import numpy as np
import jax
import jax.numpy as jnp
from jax import lax
from jax.experimental import pallas as pl
from jax.experimental.pallas import tpu as pltpu


# ----------------------------- in-kernel math -------------------------------

def _softplus(x):
    # matches torch.nn.functional.softplus (beta=1, threshold=20)
    return jnp.where(x > 20.0, x, jnp.log1p(jnp.exp(jnp.minimum(x, 20.0))))


def _mish(x):
    return x * jnp.tanh(_softplus(x))


def _mm(a, b):
    # MXU matmul: bf16 operands, f32 accumulation.
    return jnp.dot(a.astype(jnp.bfloat16), b.astype(jnp.bfloat16),
                   preferred_element_type=jnp.float32)


def _mm_f32(a, b):
    # exact f32 matmul (used for 0/1 broadcast / trim matrices).
    return jnp.dot(a, b, preferred_element_type=jnp.float32)


def _conv(xs_and_w, sel_ref, b_ref, act):
    """y = sum_k sum_parts (sel[k] @ x_part) @ W_part[k] + bias, then activation.

    xs_and_w : list of (activation value (Mi, Cin_part) f32,
                        weight ref (ks, Cin_part, Cout) bf16)
    sel_ref  : (ks, Mo, Mi) bf16 0/1 shift/stride/pad selection matrices
    b_ref    : (1, Cout) f32 bias
    """
    ks = sel_ref.shape[0]
    y = None
    for k in range(ks):
        s_k = sel_ref[k]                       # (Mo, Mi)
        for x, w_ref in xs_and_w:
            picked = _mm(s_k, x)               # exact row pick of bf16(x): (Mo, Cin)
            t = _mm(picked, w_ref[k])          # (Mo, Cout), f32 accumulate
            y = t if y is None else y + t
    y = y + b_ref[...]
    if act == "mish":
        y = _mish(y)
    return y


def _bn(x, g_ref, b_ref, eps=1e-5):
    # training-mode BatchNorm1d over the B*L rows (biased variance), f32.
    n = float(x.shape[0])
    mean = jnp.sum(x, axis=0, keepdims=True) / n
    xc = x - mean
    var = jnp.sum(xc * xc, axis=0, keepdims=True) / n
    inv = lax.rsqrt(var + eps)
    return xc * inv * g_ref[...] + b_ref[...]


def _block(h, r, bp, t, up):
    # per-block time embedding: Linear + Mish, then broadcast over frames.
    temb = _mish(_mm(t, bp["time_w"][...]) + bp["time_b"][...])     # (B, Cout) f32
    tfull = _mm_f32(bp["E"][...], temb)                             # (B*L1, Cout)

    pairs = [(h, bp["w1"])]
    if up:
        pairs.append((r, bp["w1r"]))       # channel-concat folded into weight split
    h = _conv(pairs, bp["sel1"], bp["b1"], act="mish")
    h = _bn(h, bp["bn1_g"], bp["bn1_b"])
    h = h + tfull
    h = _conv([(h, bp["w2"])], bp["sel2"], bp["b2"], act="mish")
    h = _bn(h, bp["bn2_g"], bp["bn2_b"])                            # no time-add
    if up:
        h = _conv([(h, bp["wT"])], bp["selT"], bp["bT"], act="none")
    return h


def _fused_unet_kernel(*refs, treedef):
    o_ref = refs[-1]
    ins = jax.tree_util.tree_unflatten(treedef, list(refs[:-1]))

    # time MLP: Linear + ReLU on the (precomputed) sinusoidal embedding.
    t = jnp.maximum(_mm(ins["emb"][...], ins["time_mlp_w"][...])
                    + ins["time_mlp_b"][...], 0.0)                  # (B, dim)

    # conv0
    h = _conv([(ins["x"][...], ins["conv0"]["w"])],
              ins["conv0"]["sel"], ins["conv0"]["b"], act="none")

    # down path
    residuals = []
    for bp in ins["downs"]:
        h = _block(h, None, bp, t, up=False)
        residuals.append(h)

    # up path
    for bp in ins["ups"]:
        r = residuals.pop()
        if "trim_h" in bp:
            h = _mm_f32(bp["trim_h"][...], h)
        if "trim_r" in bp:
            r = _mm_f32(bp["trim_r"][...], r)
        h = _block(h, r, bp, t, up=True)

    # folded (1x1 out_conv  o  out_linear) affine head
    out = _mm(h, ins["out_w"][...]) + ins["out_b"][...]
    o_ref[...] = out.astype(o_ref.dtype)


# ----------------------- trace-time operand construction --------------------

def _conv_sel(B, L_in, L_out, ks, stride, padding):
    """S[k] maps row b*L_in + i -> row b*L_out + o with i = o*stride + k - padding."""
    S = np.zeros((ks, B * L_out, B * L_in), np.float32)
    for b in range(B):
        for o in range(L_out):
            for k in range(ks):
                i = o * stride + k - padding
                if 0 <= i < L_in:
                    S[k, b * L_out + o, b * L_in + i] = 1.0
    return jnp.asarray(S, dtype=jnp.bfloat16)


def _convT_sel(B, L_in, L_out, ks, stride, padding):
    """T[k] scatters row b*L_in + i -> row b*L_out + o with o = i*stride - padding + k."""
    S = np.zeros((ks, B * L_out, B * L_in), np.float32)
    for b in range(B):
        for i in range(L_in):
            for k in range(ks):
                o = i * stride - padding + k
                if 0 <= o < L_out:
                    S[k, b * L_out + o, b * L_in + i] = 1.0
    return jnp.asarray(S, dtype=jnp.bfloat16)


def _bcast_rows(B, L):
    E = np.zeros((B * L, B), np.float32)
    for b in range(B):
        E[b * L:(b + 1) * L, b] = 1.0
    return jnp.asarray(E)


def _row_trim(B, L_in, L_keep):
    R = np.zeros((B * L_keep, B * L_in), np.float32)
    for b in range(B):
        for l in range(L_keep):
            R[b * L_keep + l, b * L_in + l] = 1.0
    return jnp.asarray(R)


def _block_operands(p, B, L_in, up):
    ks = p["ks"]
    pad = ks // 2
    bf16 = jnp.bfloat16
    stride1 = 1 if up else 2
    L1 = (L_in + 2 * pad - ks) // stride1 + 1
    L2 = (L1 + 2 * pad - ks) + 1

    ops = {
        "sel1": _conv_sel(B, L_in, L1, ks, stride1, pad),
        "b1": p["conv1_b"].reshape(1, -1).astype(jnp.float32),
        "bn1_g": p["bn1_g"].reshape(1, -1).astype(jnp.float32),
        "bn1_b": p["bn1_b"].reshape(1, -1).astype(jnp.float32),
        "sel2": _conv_sel(B, L1, L2, ks, 1, pad),
        "w2": jnp.transpose(p["conv2_w"], (2, 1, 0)).astype(bf16),
        "b2": p["conv2_b"].reshape(1, -1).astype(jnp.float32),
        "bn2_g": p["bn2_g"].reshape(1, -1).astype(jnp.float32),
        "bn2_b": p["bn2_b"].reshape(1, -1).astype(jnp.float32),
        "time_w": p["time_w"].T.astype(bf16),
        "time_b": p["time_b"].reshape(1, -1).astype(jnp.float32),
        "E": _bcast_rows(B, L1),
    }
    w1 = p["conv1_w"]                      # (Cout, Cin_total, ks)
    if up:
        cin_h = w1.shape[1] // 2           # current-path channels == residual channels
        ops["w1"] = jnp.transpose(w1[:, :cin_h, :], (2, 1, 0)).astype(bf16)
        ops["w1r"] = jnp.transpose(w1[:, cin_h:, :], (2, 1, 0)).astype(bf16)
        ksT = p["tr_w"].shape[2]
        L3 = (L2 - 1) * 2 - 2 * 1 + ksT    # ConvTranspose1d(stride=2, padding=1)
        ops["selT"] = _convT_sel(B, L2, L3, ksT, 2, 1)
        ops["wT"] = jnp.transpose(p["tr_w"], (2, 0, 1)).astype(bf16)
        ops["bT"] = p["tr_b"].reshape(1, -1).astype(jnp.float32)
        L_out = L3
    else:
        ops["w1"] = jnp.transpose(w1, (2, 1, 0)).astype(bf16)
        L_out = L2
    return ops, L_out


def simple_unet_forward(params, X, Q, timestep):
    bf16 = jnp.bfloat16
    B, F_, J, pd = X.shape
    _, _, _, ad = Q.shape
    L0 = F_

    # boundary glue (matches the torch view/cat/permute + .float())
    x = jnp.concatenate([X.reshape(B, F_, J * pd), Q.reshape(B, F_, J * ad)],
                        axis=2).astype(jnp.float32).reshape(B * F_, J * (pd + ad))

    # sinusoidal position embedding (parameter-free glue)
    dim = params["time_emb_dim"]
    half = dim // 2
    freqs = jnp.exp(jnp.arange(half, dtype=jnp.float32) * -(math.log(10000.0) / (half - 1)))
    emb = timestep.astype(jnp.float32)[:, None] * freqs[None, :]
    emb = jnp.concatenate([jnp.sin(emb), jnp.cos(emb)], axis=-1)     # (B, dim)

    ks = params["kernel_size"]
    pad = ks // 2
    assert params["conv0_w"].shape[0] == params["down_channels"][0], "Mismatch in channel size!"

    L = (L0 + 2 * pad - ks) + 1
    ops = {
        "x": x,
        "emb": emb,
        "time_mlp_w": params["time_mlp_w"].T.astype(bf16),
        "time_mlp_b": params["time_mlp_b"].reshape(1, -1).astype(jnp.float32),
        "conv0": {
            "sel": _conv_sel(B, L0, L, ks, 1, pad),
            "w": jnp.transpose(params["conv0_w"], (2, 1, 0)).astype(bf16),
            "b": params["conv0_b"].reshape(1, -1).astype(jnp.float32),
        },
        "downs": [],
        "ups": [],
    }

    res_lens = []
    for p in params["downs"]:
        bops, L = _block_operands(p, B, L, up=False)
        ops["downs"].append(bops)
        res_lens.append(L)
    for p in params["ups"]:
        L_res = res_lens.pop()
        min_len = min(L, L_res)
        bops, L_new = _block_operands(p, B, min_len, up=True)
        if min_len != L:
            bops["trim_h"] = _row_trim(B, L, min_len)
        if min_len != L_res:
            bops["trim_r"] = _row_trim(B, L_res, min_len)
        ops["ups"].append(bops)
        L = L_new

    # fold 1x1 out_conv and out_linear (both affine, act-free) into one matmul
    wc = params["out_conv_w"][:, :, 0].T                      # (C, 24)
    wl = params["out_lin_w"]                                  # (24, 24)
    ops["out_w"] = (wc @ wl.T).astype(bf16)
    ops["out_b"] = (params["out_conv_b"] @ wl.T + params["out_lin_b"]).reshape(1, -1)

    leaves, treedef = jax.tree_util.tree_flatten(ops)
    c_out = params["out_conv_w"].shape[0]
    vmem_spec = pl.BlockSpec(memory_space=pltpu.MemorySpace.VMEM)
    out2d = pl.pallas_call(
        partial(_fused_unet_kernel, treedef=treedef),
        out_shape=jax.ShapeDtypeStruct((B * L, c_out), jnp.float32),
        in_specs=[vmem_spec] * len(leaves),
        out_specs=vmem_spec,
    )(*leaves)

    out = out2d.reshape(B, L, c_out)
    return jnp.transpose(out, (0, 2, 1))                      # PyTorch (B, C_out, L)


# ----------------------------- parameter init -------------------------------

def init_params(key, *, time_emb_dim, n_joints, down_channels, kernel_size):
    keys = iter(jax.random.split(key, 256))

    def w(shape, fan_in):
        bound = 1.0 / math.sqrt(fan_in)
        return jax.random.uniform(next(keys), shape, jnp.float32, -bound, bound)

    params = {
        "time_emb_dim": time_emb_dim,
        "kernel_size": kernel_size,
        "down_channels": tuple(down_channels),
    }
    in_dims, out_dims = 9, 6
    params["time_mlp_w"] = w((time_emb_dim, time_emb_dim), time_emb_dim)
    params["time_mlp_b"] = w((time_emb_dim,), time_emb_dim)

    c_in0 = n_joints * in_dims
    params["conv0_w"] = w((down_channels[0], c_in0, kernel_size), c_in0 * kernel_size)
    params["conv0_b"] = w((down_channels[0],), c_in0 * kernel_size)

    def block_params(in_ch, out_ch, up):
        cin = 2 * in_ch if up else in_ch
        p = {"ks": kernel_size}
        p["conv1_w"] = w((out_ch, cin, kernel_size), cin * kernel_size)
        p["conv1_b"] = w((out_ch,), cin * kernel_size)
        p["conv2_w"] = w((out_ch, out_ch, kernel_size), out_ch * kernel_size)
        p["conv2_b"] = w((out_ch,), out_ch * kernel_size)
        p["time_w"] = w((out_ch, time_emb_dim), time_emb_dim)
        p["time_b"] = w((out_ch,), time_emb_dim)
        p["bn1_g"] = jnp.ones((out_ch,), jnp.float32)
        p["bn1_b"] = jnp.zeros((out_ch,), jnp.float32)
        p["bn2_g"] = jnp.ones((out_ch,), jnp.float32)
        p["bn2_b"] = jnp.zeros((out_ch,), jnp.float32)
        if up:
            # ConvTranspose1d weight layout: (in_channels, out_channels, ks)
            p["tr_w"] = w((out_ch, out_ch, 4), out_ch * 4)
            p["tr_b"] = w((out_ch,), out_ch * 4)
        return p

    params["downs"] = [block_params(down_channels[i], down_channels[i + 1], False)
                       for i in range(len(down_channels) - 1)]
    up_ch = tuple(down_channels[::-1])
    params["ups"] = [block_params(up_ch[i], up_ch[i + 1], True)
                     for i in range(len(up_ch) - 1)]

    co = n_joints * out_dims
    params["out_conv_w"] = w((co, up_ch[-1], 1), up_ch[-1])
    params["out_conv_b"] = w((co,), up_ch[-1])
    params["out_lin_w"] = w((co, co), co)
    params["out_lin_b"] = w((co,), co)
    return params


# --------------------------------- main --------------------------------------

if __name__ == "__main__":
    key = jax.random.PRNGKey(0)
    time_emb_dim = 32
    window = 16          # frames
    n_joints = 4
    down_channels = (32, 64, 128)
    kernel_size = 3
    B = 2

    k1, k2, k3, kp = jax.random.split(key, 4)
    X = jax.random.normal(k1, (B, window, n_joints, 3), jnp.float32)
    Q = jax.random.normal(k2, (B, window, n_joints, 6), jnp.float32)
    timestep = jax.random.randint(k3, (B,), 0, 1000).astype(jnp.float32)

    params = init_params(kp, time_emb_dim=time_emb_dim, n_joints=n_joints,
                         down_channels=down_channels, kernel_size=kernel_size)

    fwd = jax.jit(lambda X, Q, ts: simple_unet_forward(params, X, Q, ts))
    out = fwd(X, Q, timestep)
    jax.block_until_ready(out)
    assert out.shape == (B, n_joints * 6, window), out.shape
    assert jnp.all(jnp.isfinite(out))
    print("KERNEL_OK")
</pallas_src>

<mosaic_0001>
module attributes {stable_mosaic.version = 11 : i64} {
  func.func @_fused_unet_kernel(%arg0: memref<1x32xf32, #tpu.memory_space<vmem>>, %arg1: memref<3x32x32xbf16, #tpu.memory_space<vmem>>, %arg2: memref<3x36x32xbf16, #tpu.memory_space<vmem>>, %arg3: memref<16x2xf32, #tpu.memory_space<vmem>>, %arg4: memref<1x64xf32, #tpu.memory_space<vmem>>, %arg5: memref<1x64xf32, #tpu.memory_space<vmem>>, %arg6: memref<1x64xf32, #tpu.memory_space<vmem>>, %arg7: memref<1x64xf32, #tpu.memory_space<vmem>>, %arg8: memref<1x64xf32, #tpu.memory_space<vmem>>, %arg9: memref<1x64xf32, #tpu.memory_space<vmem>>, %arg10: memref<3x16x32xbf16, #tpu.memory_space<vmem>>, %arg11: memref<3x16x16xbf16, #tpu.memory_space<vmem>>, %arg12: memref<1x64xf32, #tpu.memory_space<vmem>>, %arg13: memref<32x64xbf16, #tpu.memory_space<vmem>>, %arg14: memref<3x32x64xbf16, #tpu.memory_space<vmem>>, %arg15: memref<3x64x64xbf16, #tpu.memory_space<vmem>>, %arg16: memref<8x2xf32, #tpu.memory_space<vmem>>, %arg17: memref<1x128xf32, #tpu.memory_space<vmem>>, %arg18: memref<1x128xf32, #tpu.memory_space<vmem>>, %arg19: memref<1x128xf32, #tpu.memory_space<vmem>>, %arg20: memref<1x128xf32, #tpu.memory_space<vmem>>, %arg21: memref<1x128xf32, #tpu.memory_space<vmem>>, %arg22: memref<1x128xf32, #tpu.memory_space<vmem>>, %arg23: memref<3x8x16xbf16, #tpu.memory_space<vmem>>, %arg24: memref<3x8x8xbf16, #tpu.memory_space<vmem>>, %arg25: memref<1x128xf32, #tpu.memory_space<vmem>>, %arg26: memref<32x128xbf16, #tpu.memory_space<vmem>>, %arg27: memref<3x64x128xbf16, #tpu.memory_space<vmem>>, %arg28: memref<3x128x128xbf16, #tpu.memory_space<vmem>>, %arg29: memref<2x32xf32, #tpu.memory_space<vmem>>, %arg30: memref<1x24xf32, #tpu.memory_space<vmem>>, %arg31: memref<32x24xbf16, #tpu.memory_space<vmem>>, %arg32: memref<1x32xf32, #tpu.memory_space<vmem>>, %arg33: memref<32x32xbf16, #tpu.memory_space<vmem>>, %arg34: memref<8x2xf32, #tpu.memory_space<vmem>>, %arg35: memref<1x64xf32, #tpu.memory_space<vmem>>, %arg36: memref<1x64xf32, #tpu.memory_space<vmem>>, %arg37: memref<1x64xf32, #tpu.memory_space<vmem>>, %arg38: memref<1x64xf32, #tpu.memory_space<vmem>>, %arg39: memref<1x64xf32, #tpu.memory_space<vmem>>, %arg40: memref<1x64xf32, #tpu.memory_space<vmem>>, %arg41: memref<1x64xf32, #tpu.memory_space<vmem>>, %arg42: memref<3x8x8xbf16, #tpu.memory_space<vmem>>, %arg43: memref<3x8x8xbf16, #tpu.memory_space<vmem>>, %arg44: memref<4x16x8xbf16, #tpu.memory_space<vmem>>, %arg45: memref<1x64xf32, #tpu.memory_space<vmem>>, %arg46: memref<32x64xbf16, #tpu.memory_space<vmem>>, %arg47: memref<3x128x64xbf16, #tpu.memory_space<vmem>>, %arg48: memref<3x128x64xbf16, #tpu.memory_space<vmem>>, %arg49: memref<3x64x64xbf16, #tpu.memory_space<vmem>>, %arg50: memref<4x64x64xbf16, #tpu.memory_space<vmem>>, %arg51: memref<16x2xf32, #tpu.memory_space<vmem>>, %arg52: memref<1x32xf32, #tpu.memory_space<vmem>>, %arg53: memref<1x32xf32, #tpu.memory_space<vmem>>, %arg54: memref<1x32xf32, #tpu.memory_space<vmem>>, %arg55: memref<1x32xf32, #tpu.memory_space<vmem>>, %arg56: memref<1x32xf32, #tpu.memory_space<vmem>>, %arg57: memref<1x32xf32, #tpu.memory_space<vmem>>, %arg58: memref<1x32xf32, #tpu.memory_space<vmem>>, %arg59: memref<3x16x16xbf16, #tpu.memory_space<vmem>>, %arg60: memref<3x16x16xbf16, #tpu.memory_space<vmem>>, %arg61: memref<4x32x16xbf16, #tpu.memory_space<vmem>>, %arg62: memref<1x32xf32, #tpu.memory_space<vmem>>, %arg63: memref<32x32xbf16, #tpu.memory_space<vmem>>, %arg64: memref<3x64x32xbf16, #tpu.memory_space<vmem>>, %arg65: memref<3x64x32xbf16, #tpu.memory_space<vmem>>, %arg66: memref<3x32x32xbf16, #tpu.memory_space<vmem>>, %arg67: memref<4x32x32xbf16, #tpu.memory_space<vmem>>, %arg68: memref<32x36xf32, #tpu.memory_space<vmem>>, %arg69: memref<32x24xf32, #tpu.memory_space<vmem>>) attributes {dimension_semantics = [], scalar_prefetch = 0 : i64, scratch_operands = 0 : i64, tpu.core_type = #tpu.core_type<tc>} {
    %c0 = arith.constant 0 : index
    %c0_0 = arith.constant 0 : index
    %0 = vector.load %arg29[%c0, %c0_0] : memref<2x32xf32, #tpu.memory_space<vmem>>, vector<2x32xf32>
    %c0_1 = arith.constant 0 : index
    %c0_2 = arith.constant 0 : index
    %1 = vector.load %arg33[%c0_1, %c0_2] : memref<32x32xbf16, #tpu.memory_space<vmem>>, vector<32x32xbf16>
    %2 = arith.truncf %0 : vector<2x32xf32> to vector<2x32xbf16>
    %cst = arith.constant dense<0.000000e+00> : vector<2x32xf32>
    %3 = tpu.matmul %2, %1, %cst {dimension_numbers = #tpu.dot_dimension_numbers<[1], [0], [0], [1], [0, 0, 1, 1], [], []>} : vector<2x32xbf16>, vector<32x32xbf16>, vector<2x32xf32> -> vector<2x32xf32>
    %c0_3 = arith.constant 0 : index
    %c0_4 = arith.constant 0 : index
    %4 = vector.load %arg32[%c0_3, %c0_4] : memref<1x32xf32, #tpu.memory_space<vmem>>, vector<1x32xf32>
    %5 = vector.broadcast %4 : vector<1x32xf32> to vector<2x32xf32>
    %6 = arith.addf %3, %5 : vector<2x32xf32>
    %cst_5 = arith.constant 0.000000e+00 : f32
    %7 = vector.broadcast %cst_5 : f32 to vector<2x32xf32>
    %8 = arith.maximumf %6, %7 : vector<2x32xf32>
    %c0_6 = arith.constant 0 : index
    %c0_7 = arith.constant 0 : index
    %9 = vector.load %arg68[%c0_6, %c0_7] : memref<32x36xf32, #tpu.memory_space<vmem>>, vector<32x36xf32>
    %c0_8 = arith.constant 0 : index
    %c0_9 = arith.constant 0 : index
    %c0_10 = arith.constant 0 : index
    %10 = vector.load %arg1[%c0_8, %c0_9, %c0_10] : memref<3x32x32xbf16, #tpu.memory_space<vmem>>, vector<1x32x32xbf16>
    %11 = vector.shape_cast %10 : vector<1x32x32xbf16> to vector<32x32xbf16>
    %12 = arith.truncf %9 : vector<32x36xf32> to vector<32x36xbf16>
    %cst_11 = arith.constant dense<0.000000e+00> : vector<32x36xf32>
    %13 = tpu.matmul %11, %12, %cst_11 {dimension_numbers = #tpu.dot_dimension_numbers<[1], [0], [0], [1], [0, 0, 1, 1], [], []>} : vector<32x32xbf16>, vector<32x36xbf16>, vector<32x36xf32> -> vector<32x36xf32>
    %c0_12 = arith.constant 0 : index
    %c0_13 = arith.constant 0 : index
    %c0_14 = arith.constant 0 : index
    %14 = vector.load %arg2[%c0_12, %c0_13, %c0_14] : memref<3x36x32xbf16, #tpu.memory_space<vmem>>, vector<1x36x32xbf16>
    %15 = vector.shape_cast %14 : vector<1x36x32xbf16> to vector<36x32xbf16>
    %16 = arith.truncf %13 : vector<32x36xf32> to vector<32x36xbf16>
    %cst_15 = arith.constant dense<0.000000e+00> : vector<32x32xf32>
    %17 = tpu.matmul %16, %15, %cst_15 {dimension_numbers = #tpu.dot_dimension_numbers<[1], [0], [0], [1], [0, 0, 1, 1], [], []>} : vector<32x36xbf16>, vector<36x32xbf16>, vector<32x32xf32> -> vector<32x32xf32>
    %c1 = arith.constant 1 : index
    %c0_16 = arith.constant 0 : index
    %c0_17 = arith.constant 0 : index
    %18 = vector.load %arg1[%c1, %c0_16, %c0_17] : memref<3x32x32xbf16, #tpu.memory_space<vmem>>, vector<1x32x32xbf16>
    %19 = vector.shape_cast %18 : vector<1x32x32xbf16> to vector<32x32xbf16>
    %20 = arith.truncf %9 : vector<32x36xf32> to vector<32x36xbf16>
    %cst_18 = arith.constant dense<0.000000e+00> : vector<32x36xf32>
    %21 = tpu.matmul %19, %20, %cst_18 {dimension_numbers = #tpu.dot_dimension_numbers<[1], [0], [0], [1], [0, 0, 1, 1], [], []>} : vector<32x32xbf16>, vector<32x36xbf16>, vector<32x36xf32> -> vector<32x36xf32>
    %c1_19 = arith.constant 1 : index
    %c0_20 = arith.constant 0 : index
    %c0_21 = arith.constant 0 : index
    %22 = vector.load %arg2[%c1_19, %c0_20, %c0_21] : memref<3x36x32xbf16, #tpu.memory_space<vmem>>, vector<1x36x32xbf16>
    %23 = vector.shape_cast %22 : vector<1x36x32xbf16> to vector<36x32xbf16>
    %24 = arith.truncf %21 : vector<32x36xf32> to vector<32x36xbf16>
    %cst_22 = arith.constant dense<0.000000e+00> : vector<32x32xf32>
    %25 = tpu.matmul %24, %23, %cst_22 {dimension_numbers = #tpu.dot_dimension_numbers<[1], [0], [0], [1], [0, 0, 1, 1], [], []>} : vector<32x36xbf16>, vector<36x32xbf16>, vector<32x32xf32> -> vector<32x32xf32>
    %26 = arith.addf %17, %25 : vector<32x32xf32>
    %c2 = arith.constant 2 : index
    %c0_23 = arith.constant 0 : index
    %c0_24 = arith.constant 0 : index
    %27 = vector.load %arg1[%c2, %c0_23, %c0_24] : memref<3x32x32xbf16, #tpu.memory_space<vmem>>, vector<1x32x32xbf16>
    %28 = vector.shape_cast %27 : vector<1x32x32xbf16> to vector<32x32xbf16>
    %29 = arith.truncf %9 : vector<32x36xf32> to vector<32x36xbf16>
    %cst_25 = arith.constant dense<0.000000e+00> : vector<32x36xf32>
    %30 = tpu.matmul %28, %29, %cst_25 {dimension_numbers = #tpu.dot_dimension_numbers<[1], [0], [0], [1], [0, 0, 1, 1], [], []>} : vector<32x32xbf16>, vector<32x36xbf16>, vector<32x36xf32> -> vector<32x36xf32>
    %c2_26 = arith.constant 2 : index
    %c0_27 = arith.constant 0 : index
    %c0_28 = arith.constant 0 : index
    %31 = vector.load %arg2[%c2_26, %c0_27, %c0_28] : memref<3x36x32xbf16, #tpu.memory_space<vmem>>, vector<1x36x32xbf16>
    %32 = vector.shape_cast %31 : vector<1x36x32xbf16> to vector<36x32xbf16>
    %33 = arith.truncf %30 : vector<32x36xf32> to vector<32x36xbf16>
    %cst_29 = arith.constant dense<0.000000e+00> : vector<32x32xf32>
    %34 = tpu.matmul %33, %32, %cst_29 {dimension_numbers = #tpu.dot_dimension_numbers<[1], [0], [0], [1], [0, 0, 1, 1], [], []>} : vector<32x36xbf16>, vector<36x32xbf16>, vector<32x32xf32> -> vector<32x32xf32>
    %35 = arith.addf %26, %34 : vector<32x32xf32>
    %c0_30 = arith.constant 0 : index
    %c0_31 = arith.constant 0 : index
    %36 = vector.load %arg0[%c0_30, %c0_31] : memref<1x32xf32, #tpu.memory_space<vmem>>, vector<1x32xf32>
    %37 = vector.broadcast %36 : vector<1x32xf32> to vector<32x32xf32>
    %38 = arith.addf %35, %37 : vector<32x32xf32>
    %c0_32 = arith.constant 0 : index
    %c0_33 = arith.constant 0 : index
    %39 = vector.load %arg13[%c0_32, %c0_33] : memref<32x64xbf16, #tpu.memory_space<vmem>>, vector<32x64xbf16>
    %40 = arith.truncf %8 : vector<2x32xf32> to vector<2x32xbf16>
    %cst_34 = arith.constant dense<0.000000e+00> : vector<2x64xf32>
    %41 = tpu.matmul %40, %39, %cst_34 {dimension_numbers = #tpu.dot_dimension_numbers<[1], [0], [0], [1], [0, 0, 1, 1], [], []>} : vector<2x32xbf16>, vector<32x64xbf16>, vector<2x64xf32> -> vector<2x64xf32>
    %c0_35 = arith.constant 0 : index
    %c0_36 = arith.constant 0 : index
    %42 = vector.load %arg12[%c0_35, %c0_36] : memref<1x64xf32, #tpu.memory_space<vmem>>, vector<1x64xf32>
    %43 = vector.broadcast %42 : vector<1x64xf32> to vector<2x64xf32>
    %44 = arith.addf %41, %43 : vector<2x64xf32>
    %cst_37 = arith.constant 2.000000e+01 : f32
    %45 = vector.broadcast %cst_37 : f32 to vector<2x64xf32>
    %46 = arith.cmpf ogt, %44, %45 : vector<2x64xf32>
    %cst_38 = arith.constant 2.000000e+01 : f32
    %47 = vector.broadcast %cst_38 : f32 to vector<2x64xf32>
    %48 = arith.minimumf %44, %47 : vector<2x64xf32>
    %49 = math.exp %48 : vector<2x64xf32>
    %50 = math.log1p %49 : vector<2x64xf32>
    %51 = arith.select %46, %44, %50 : vector<2x64xi1>, vector<2x64xf32>
    %52 = math.tanh %51 : vector<2x64xf32>
    %53 = arith.mulf %44, %52 : vector<2x64xf32>
    %c0_39 = arith.constant 0 : index
    %c0_40 = arith.constant 0 : index
    %54 = vector.load %arg3[%c0_39, %c0_40] : memref<16x2xf32, #tpu.memory_space<vmem>>, vector<16x2xf32>
    %cst_41 = arith.constant dense<0.000000e+00> : vector<16x64xf32>
    %55 = tpu.matmul %54, %53, %cst_41 {dimension_numbers = #tpu.dot_dimension_numbers<[1], [0], [0], [1], [0, 0, 1, 1], [], []>} : vector<16x2xf32>, vector<2x64xf32>, vector<16x64xf32> -> vector<16x64xf32>
    %c0_42 = arith.constant 0 : index
    %c0_43 = arith.constant 0 : index
    %c0_44 = arith.constant 0 : index
    %56 = vector.load %arg10[%c0_42, %c0_43, %c0_44] : memref<3x16x32xbf16, #tpu.memory_space<vmem>>, vector<1x16x32xbf16>
    %57 = vector.shape_cast %56 : vector<1x16x32xbf16> to vector<16x32xbf16>
    %58 = arith.truncf %38 : vector<32x32xf32> to vector<32x32xbf16>
    %cst_45 = arith.constant dense<0.000000e+00> : vector<16x32xf32>
    %59 = tpu.matmul %57, %58, %cst_45 {dimension_numbers = #tpu.dot_dimension_numbers<[1], [0], [0], [1], [0, 0, 1, 1], [], []>} : vector<16x32xbf16>, vector<32x32xbf16>, vector<16x32xf32> -> vector<16x32xf32>
    %c0_46 = arith.constant 0 : index
    %c0_47 = arith.constant 0 : index
    %c0_48 = arith.constant 0 : index
    %60 = vector.load %arg14[%c0_46, %c0_47, %c0_48] : memref<3x32x64xbf16, #tpu.memory_space<vmem>>, vector<1x32x64xbf16>
    %61 = vector.shape_cast %60 : vector<1x32x64xbf16> to vector<32x64xbf16>
    %62 = arith.truncf %59 : vector<16x32xf32> to vector<16x32xbf16>
    %cst_49 = arith.constant dense<0.000000e+00> : vector<16x64xf32>
    %63 = tpu.matmul %62, %61, %cst_49 {dimension_numbers = #tpu.dot_dimension_numbers<[1], [0], [0], [1], [0, 0, 1, 1], [], []>} : vector<16x32xbf16>, vector<32x64xbf16>, vector<16x64xf32> -> vector<16x64xf32>
    %c1_50 = arith.constant 1 : index
    %c0_51 = arith.constant 0 : index
    %c0_52 = arith.constant 0 : index
    %64 = vector.load %arg10[%c1_50, %c0_51, %c0_52] : memref<3x16x32xbf16, #tpu.memory_space<vmem>>, vector<1x16x32xbf16>
    %65 = vector.shape_cast %64 : vector<1x16x32xbf16> to vector<16x32xbf16>
    %66 = arith.truncf %38 : vector<32x32xf32> to vector<32x32xbf16>
    %cst_53 = arith.constant dense<0.000000e+00> : vector<16x32xf32>
    %67 = tpu.matmul %65, %66, %cst_53 {dimension_numbers = #tpu.dot_dimension_numbers<[1], [0], [0], [1], [0, 0, 1, 1], [], []>} : vector<16x32xbf16>, vector<32x32xbf16>, vector<16x32xf32> -> vector<16x32xf32>
    %c1_54 = arith.constant 1 : index
    %c0_55 = arith.constant 0 : index
    %c0_56 = arith.constant 0 : index
    %68 = vector.load %arg14[%c1_54, %c0_55, %c0_56] : memref<3x32x64xbf16, #tpu.memory_space<vmem>>, vector<1x32x64xbf16>
    %69 = vector.shape_cast %68 : vector<1x32x64xbf16> to vector<32x64xbf16>
    %70 = arith.truncf %67 : vector<16x32xf32> to vector<16x32xbf16>
    %cst_57 = arith.constant dense<0.000000e+00> : vector<16x64xf32>
    %71 = tpu.matmul %70, %69, %cst_57 {dimension_numbers = #tpu.dot_dimension_numbers<[1], [0], [0], [1], [0, 0, 1, 1], [], []>} : vector<16x32xbf16>, vector<32x64xbf16>, vector<16x64xf32> -> vector<16x64xf32>
    %72 = arith.addf %63, %71 : vector<16x64xf32>
    %c2_58 = arith.constant 2 : index
    %c0_59 = arith.constant 0 : index
    %c0_60 = arith.constant 0 : index
    %73 = vector.load %arg10[%c2_58, %c0_59, %c0_60] : memref<3x16x32xbf16, #tpu.memory_space<vmem>>, vector<1x16x32xbf16>
    %74 = vector.shape_cast %73 : vector<1x16x32xbf16> to vector<16x32xbf16>
    %75 = arith.truncf %38 : vector<32x32xf32> to vector<32x32xbf16>
    %cst_61 = arith.constant dense<0.000000e+00> : vector<16x32xf32>
    %76 = tpu.matmul %74, %75, %cst_61 {dimension_numbers = #tpu.dot_dimension_numbers<[1], [0], [0], [1], [0, 0, 1, 1], [], []>} : vector<16x32xbf16>, vector<32x32xbf16>, vector<16x32xf32> -> vector<16x32xf32>
    %c2_62 = arith.constant 2 : index
    %c0_63 = arith.constant 0 : index
    %c0_64 = arith.constant 0 : index
    %77 = vector.load %arg14[%c2_62, %c0_63, %c0_64] : memref<3x32x64xbf16, #tpu.memory_space<vmem>>, vector<1x32x64xbf16>
    %78 = vector.shape_cast %77 : vector<1x32x64xbf16> to vector<32x64xbf16>
    %79 = arith.truncf %76 : vector<16x32xf32> to vector<16x32xbf16>
    %cst_65 = arith.constant dense<0.000000e+00> : vector<16x64xf32>
    %80 = tpu.matmul %79, %78, %cst_65 {dimension_numbers = #tpu.dot_dimension_numbers<[1], [0], [0], [1], [0, 0, 1, 1], [], []>} : vector<16x32xbf16>, vector<32x64xbf16>, vector<16x64xf32> -> vector<16x64xf32>
    %81 = arith.addf %72, %80 : vector<16x64xf32>
    %c0_66 = arith.constant 0 : index
    %c0_67 = arith.constant 0 : index
    %82 = vector.load %arg4[%c0_66, %c0_67] : memref<1x64xf32, #tpu.memory_space<vmem>>, vector<1x64xf32>
    %83 = vector.broadcast %82 : vector<1x64xf32> to vector<16x64xf32>
    %84 = arith.addf %81, %83 : vector<16x64xf32>
    %cst_68 = arith.constant 2.000000e+01 : f32
    %85 = vector.broadcast %cst_68 : f32 to vector<16x64xf32>
    %86 = arith.cmpf ogt, %84, %85 : vector<16x64xf32>
    %cst_69 = arith.constant 2.000000e+01 : f32
    %87 = vector.broadcast %cst_69 : f32 to vector<16x64xf32>
    %88 = arith.minimumf %84, %87 : vector<16x64xf32>
    %89 = math.exp %88 : vector<16x64xf32>
    %90 = math.log1p %89 : vector<16x64xf32>
    %91 = arith.select %86, %84, %90 : vector<16x64xi1>, vector<16x64xf32>
    %92 = math.tanh %91 : vector<16x64xf32>
    %93 = arith.mulf %84, %92 : vector<16x64xf32>
    %cst_70 = arith.constant dense<0.000000e+00> : vector<64xf32>
    %94 = vector.multi_reduction <add>, %93, %cst_70 [0] : vector<16x64xf32> to vector<64xf32>
    %95 = vector.shape_cast %94 : vector<64xf32> to vector<1x64xf32>
    %cst_71 = arith.constant 1.600000e+01 : f32
    %96 = vector.broadcast %cst_71 : f32 to vector<1x64xf32>
    %97 = arith.divf %95, %96 : vector<1x64xf32>
    %98 = vector.broadcast %97 : vector<1x64xf32> to vector<16x64xf32>
    %99 = arith.subf %93, %98 : vector<16x64xf32>
    %100 = arith.mulf %99, %99 : vector<16x64xf32>
    %cst_72 = arith.constant dense<0.000000e+00> : vector<64xf32>
    %101 = vector.multi_reduction <add>, %100, %cst_72 [0] : vector<16x64xf32> to vector<64xf32>
    %102 = vector.shape_cast %101 : vector<64xf32> to vector<1x64xf32>
    %cst_73 = arith.constant 1.600000e+01 : f32
    %103 = vector.broadcast %cst_73 : f32 to vector<1x64xf32>
    %104 = arith.divf %102, %103 : vector<1x64xf32>
    %cst_74 = arith.constant 9.99999974E-6 : f32
    %105 = vector.broadcast %cst_74 : f32 to vector<1x64xf32>
    %106 = arith.addf %104, %105 : vector<1x64xf32>
    %107 = math.rsqrt %106 : vector<1x64xf32>
    %108 = vector.broadcast %107 : vector<1x64xf32> to vector<16x64xf32>
    %109 = arith.mulf %99, %108 : vector<16x64xf32>
    %c0_75 = arith.constant 0 : index
    %c0_76 = arith.constant 0 : index
    %110 = vector.load %arg7[%c0_75, %c0_76] : memref<1x64xf32, #tpu.memory_space<vmem>>, vector<1x64xf32>
    %111 = vector.broadcast %110 : vector<1x64xf32> to vector<16x64xf32>
    %112 = arith.mulf %109, %111 : vector<16x64xf32>
    %c0_77 = arith.constant 0 : index
    %c0_78 = arith.constant 0 : index
    %113 = vector.load %arg6[%c0_77, %c0_78] : memref<1x64xf32, #tpu.memory_space<vmem>>, vector<1x64xf32>
    %114 = vector.broadcast %113 : vector<1x64xf32> to vector<16x64xf32>
    %115 = arith.addf %112, %114 : vector<16x64xf32>
    %116 = arith.addf %115, %55 : vector<16x64xf32>
    %c0_79 = arith.constant 0 : index
    %c0_80 = arith.constant 0 : index
    %c0_81 = arith.constant 0 : index
    %117 = vector.load %arg11[%c0_79, %c0_80, %c0_81] : memref<3x16x16xbf16, #tpu.memory_space<vmem>>, vector<1x16x16xbf16>
    %118 = vector.shape_cast %117 : vector<1x16x16xbf16> to vector<16x16xbf16>
    %119 = arith.truncf %116 : vector<16x64xf32> to vector<16x64xbf16>
    %cst_82 = arith.constant dense<0.000000e+00> : vector<16x64xf32>
    %120 = tpu.matmul %118, %119, %cst_82 {dimension_numbers = #tpu.dot_dimension_numbers<[1], [0], [0], [1], [0, 0, 1, 1], [], []>} : vector<16x16xbf16>, vector<16x64xbf16>, vector<16x64xf32> -> vector<16x64xf32>
    %c0_83 = arith.constant 0 : index
    %c0_84 = arith.constant 0 : index
    %c0_85 = arith.constant 0 : index
    %121 = vector.load %arg15[%c0_83, %c0_84, %c0_85] : memref<3x64x64xbf16, #tpu.memory_space<vmem>>, vector<1x64x64xbf16>
    %122 = vector.shape_cast %121 : vector<1x64x64xbf16> to vector<64x64xbf16>
    %123 = arith.truncf %120 : vector<16x64xf32> to vector<16x64xbf16>
    %cst_86 = arith.constant dense<0.000000e+00> : vector<16x64xf32>
    %124 = tpu.matmul %123, %122, %cst_86 {dimension_numbers = #tpu.dot_dimension_numbers<[1], [0], [0], [1], [0, 0, 1, 1], [], []>} : vector<16x64xbf16>, vector<64x64xbf16>, vector<16x64xf32> -> vector<16x64xf32>
    %c1_87 = arith.constant 1 : index
    %c0_88 = arith.constant 0 : index
    %c0_89 = arith.constant 0 : index
    %125 = vector.load %arg11[%c1_87, %c0_88, %c0_89] : memref<3x16x16xbf16, #tpu.memory_space<vmem>>, vector<1x16x16xbf16>
    %126 = vector.shape_cast %125 : vector<1x16x16xbf16> to vector<16x16xbf16>
    %127 = arith.truncf %116 : vector<16x64xf32> to vector<16x64xbf16>
    %cst_90 = arith.constant dense<0.000000e+00> : vector<16x64xf32>
    %128 = tpu.matmul %126, %127, %cst_90 {dimension_numbers = #tpu.dot_dimension_numbers<[1], [0], [0], [1], [0, 0, 1, 1], [], []>} : vector<16x16xbf16>, vector<16x64xbf16>, vector<16x64xf32> -> vector<16x64xf32>
    %c1_91 = arith.constant 1 : index
    %c0_92 = arith.constant 0 : index
    %c0_93 = arith.constant 0 : index
    %129 = vector.load %arg15[%c1_91, %c0_92, %c0_93] : memref<3x64x64xbf16, #tpu.memory_space<vmem>>, vector<1x64x64xbf16>
    %130 = vector.shape_cast %129 : vector<1x64x64xbf16> to vector<64x64xbf16>
    %131 = arith.truncf %128 : vector<16x64xf32> to vector<16x64xbf16>
    %cst_94 = arith.constant dense<0.000000e+00> : vector<16x64xf32>
    %132 = tpu.matmul %131, %130, %cst_94 {dimension_numbers = #tpu.dot_dimension_numbers<[1], [0], [0], [1], [0, 0, 1, 1], [], []>} : vector<16x64xbf16>, vector<64x64xbf16>, vector<16x64xf32> -> vector<16x64xf32>
    %133 = arith.addf %124, %132 : vector<16x64xf32>
    %c2_95 = arith.constant 2 : index
    %c0_96 = arith.constant 0 : index
    %c0_97 = arith.constant 0 : index
    %134 = vector.load %arg11[%c2_95, %c0_96, %c0_97] : memref<3x16x16xbf16, #tpu.memory_space<vmem>>, vector<1x16x16xbf16>
    %135 = vector.shape_cast %134 : vector<1x16x16xbf16> to vector<16x16xbf16>
    %136 = arith.truncf %116 : vector<16x64xf32> to vector<16x64xbf16>
    %cst_98 = arith.constant dense<0.000000e+00> : vector<16x64xf32>
    %137 = tpu.matmul %135, %136, %cst_98 {dimension_numbers = #tpu.dot_dimension_numbers<[1], [0], [0], [1], [0, 0, 1, 1], [], []>} : vector<16x16xbf16>, vector<16x64xbf16>, vector<16x64xf32> -> vector<16x64xf32>
    %c2_99 = arith.constant 2 : index
    %c0_100 = arith.constant 0 : index
    %c0_101 = arith.constant 0 : index
    %138 = vector.load %arg15[%c2_99, %c0_100, %c0_101] : memref<3x64x64xbf16, #tpu.memory_space<vmem>>, vector<1x64x64xbf16>
    %139 = vector.shape_cast %138 : vector<1x64x64xbf16> to vector<64x64xbf16>
    %140 = arith.truncf %137 : vector<16x64xf32> to vector<16x64xbf16>
    %cst_102 = arith.constant dense<0.000000e+00> : vector<16x64xf32>
    %141 = tpu.matmul %140, %139, %cst_102 {dimension_numbers = #tpu.dot_dimension_numbers<[1], [0], [0], [1], [0, 0, 1, 1], [], []>} : vector<16x64xbf16>, vector<64x64xbf16>, vector<16x64xf32> -> vector<16x64xf32>
    %142 = arith.addf %133, %141 : vector<16x64xf32>
    %c0_103 = arith.constant 0 : index
    %c0_104 = arith.constant 0 : index
    %143 = vector.load %arg5[%c0_103, %c0_104] : memref<1x64xf32, #tpu.memory_space<vmem>>, vector<1x64xf32>
    %144 = vector.broadcast %143 : vector<1x64xf32> to vector<16x64xf32>
    %145 = arith.addf %142, %144 : vector<16x64xf32>
    %cst_105 = arith.constant 2.000000e+01 : f32
    %146 = vector.broadcast %cst_105 : f32 to vector<16x64xf32>
    %147 = arith.cmpf ogt, %145, %146 : vector<16x64xf32>
    %cst_106 = arith.constant 2.000000e+01 : f32
    %148 = vector.broadcast %cst_106 : f32 to vector<16x64xf32>
    %149 = arith.minimumf %145, %148 : vector<16x64xf32>
    %150 = math.exp %149 : vector<16x64xf32>
    %151 = math.log1p %150 : vector<16x64xf32>
    %152 = arith.select %147, %145, %151 : vector<16x64xi1>, vector<16x64xf32>
    %153 = math.tanh %152 : vector<16x64xf32>
    %154 = arith.mulf %145, %153 : vector<16x64xf32>
    %cst_107 = arith.constant dense<0.000000e+00> : vector<64xf32>
    %155 = vector.multi_reduction <add>, %154, %cst_107 [0] : vector<16x64xf32> to vector<64xf32>
    %156 = vector.shape_cast %155 : vector<64xf32> to vector<1x64xf32>
    %cst_108 = arith.constant 1.600000e+01 : f32
    %157 = vector.broadcast %cst_108 : f32 to vector<1x64xf32>
    %158 = arith.divf %156, %157 : vector<1x64xf32>
    %159 = vector.broadcast %158 : vector<1x64xf32> to vector<16x64xf32>
    %160 = arith.subf %154, %159 : vector<16x64xf32>
    %161 = arith.mulf %160, %160 : vector<16x64xf32>
    %cst_109 = arith.constant dense<0.000000e+00> : vector<64xf32>
    %162 = vector.multi_reduction <add>, %161, %cst_109 [0] : vector<16x64xf32> to vector<64xf32>
    %163 = vector.shape_cast %162 : vector<64xf32> to vector<1x64xf32>
    %cst_110 = arith.constant 1.600000e+01 : f32
    %164 = vector.broadcast %cst_110 : f32 to vector<1x64xf32>
    %165 = arith.divf %163, %164 : vector<1x64xf32>
    %cst_111 = arith.constant 9.99999974E-6 : f32
    %166 = vector.broadcast %cst_111 : f32 to vector<1x64xf32>
    %167 = arith.addf %165, %166 : vector<1x64xf32>
    %168 = math.rsqrt %167 : vector<1x64xf32>
    %169 = vector.broadcast %168 : vector<1x64xf32> to vector<16x64xf32>
    %170 = arith.mulf %160, %169 : vector<16x64xf32>
    %c0_112 = arith.constant 0 : index
    %c0_113 = arith.constant 0 : index
    %171 = vector.load %arg9[%c0_112, %c0_113] : memref<1x64xf32, #tpu.memory_space<vmem>>, vector<1x64xf32>
    %172 = vector.broadcast %171 : vector<1x64xf32> to vector<16x64xf32>
    %173 = arith.mulf %170, %172 : vector<16x64xf32>
    %c0_114 = arith.constant 0 : index
    %c0_115 = arith.constant 0 : index
    %174 = vector.load %arg8[%c0_114, %c0_115] : memref<1x64xf32, #tpu.memory_space<vmem>>, vector<1x64xf32>
    %175 = vector.broadcast %174 : vector<1x64xf32> to vector<16x64xf32>
    %176 = arith.addf %173, %175 : vector<16x64xf32>
    %c0_116 = arith.constant 0 : index
    %c0_117 = arith.constant 0 : index
    %177 = vector.load %arg26[%c0_116, %c0_117] : memref<32x128xbf16, #tpu.memory_space<vmem>>, vector<32x128xbf16>
    %178 = arith.truncf %8 : vector<2x32xf32> to vector<2x32xbf16>
    %cst_118 = arith.constant dense<0.000000e+00> : vector<2x128xf32>
    %179 = tpu.matmul %178, %177, %cst_118 {dimension_numbers = #tpu.dot_dimension_numbers<[1], [0], [0], [1], [0, 0, 1, 1], [], []>} : vector<2x32xbf16>, vector<32x128xbf16>, vector<2x128xf32> -> vector<2x128xf32>
    %c0_119 = arith.constant 0 : index
    %c0_120 = arith.constant 0 : index
    %180 = vector.load %arg25[%c0_119, %c0_120] : memref<1x128xf32, #tpu.memory_space<vmem>>, vector<1x128xf32>
    %181 = vector.broadcast %180 : vector<1x128xf32> to vector<2x128xf32>
    %182 = arith.addf %179, %181 : vector<2x128xf32>
    %cst_121 = arith.constant 2.000000e+01 : f32
    %183 = vector.broadcast %cst_121 : f32 to vector<2x128xf32>
    %184 = arith.cmpf ogt, %182, %183 : vector<2x128xf32>
    %cst_122 = arith.constant 2.000000e+01 : f32
    %185 = vector.broadcast %cst_122 : f32 to vector<2x128xf32>
    %186 = arith.minimumf %182, %185 : vector<2x128xf32>
    %187 = math.exp %186 : vector<2x128xf32>
    %188 = math.log1p %187 : vector<2x128xf32>
    %189 = arith.select %184, %182, %188 : vector<2x128xi1>, vector<2x128xf32>
    %190 = math.tanh %189 : vector<2x128xf32>
    %191 = arith.mulf %182, %190 : vector<2x128xf32>
    %c0_123 = arith.constant 0 : index
    %c0_124 = arith.constant 0 : index
    %192 = vector.load %arg16[%c0_123, %c0_124] : memref<8x2xf32, #tpu.memory_space<vmem>>, vector<8x2xf32>
    %cst_125 = arith.constant dense<0.000000e+00> : vector<8x128xf32>
    %193 = tpu.matmul %192, %191, %cst_125 {dimension_numbers = #tpu.dot_dimension_numbers<[1], [0], [0], [1], [0, 0, 1, 1], [], []>} : vector<8x2xf32>, vector<2x128xf32>, vector<8x128xf32> -> vector<8x128xf32>
    %c0_126 = arith.constant 0 : index
    %c0_127 = arith.constant 0 : index
    %c0_128 = arith.constant 0 : index
    %194 = vector.load %arg23[%c0_126, %c0_127, %c0_128] : memref<3x8x16xbf16, #tpu.memory_space<vmem>>, vector<1x8x16xbf16>
    %195 = vector.shape_cast %194 : vector<1x8x16xbf16> to vector<8x16xbf16>
    %196 = arith.truncf %176 : vector<16x64xf32> to vector<16x64xbf16>
    %cst_129 = arith.constant dense<0.000000e+00> : vector<8x64xf32>
    %197 = tpu.matmul %195, %196, %cst_129 {dimension_numbers = #tpu.dot_dimension_numbers<[1], [0], [0], [1], [0, 0, 1, 1], [], []>} : vector<8x16xbf16>, vector<16x64xbf16>, vector<8x64xf32> -> vector<8x64xf32>
    %c0_130 = arith.constant 0 : index
    %c0_131 = arith.constant 0 : index
    %c0_132 = arith.constant 0 : index
    %198 = vector.load %arg27[%c0_130, %c0_131, %c0_132] : memref<3x64x128xbf16, #tpu.memory_space<vmem>>, vector<1x64x128xbf16>
    %199 = vector.shape_cast %198 : vector<1x64x128xbf16> to vector<64x128xbf16>
    %200 = arith.truncf %197 : vector<8x64xf32> to vector<8x64xbf16>
    %cst_133 = arith.constant dense<0.000000e+00> : vector<8x128xf32>
    %201 = tpu.matmul %200, %199, %cst_133 {dimension_numbers = #tpu.dot_dimension_numbers<[1], [0], [0], [1], [0, 0, 1, 1], [], []>} : vector<8x64xbf16>, vector<64x128xbf16>, vector<8x128xf32> -> vector<8x128xf32>
    %c1_134 = arith.constant 1 : index
    %c0_135 = arith.constant 0 : index
    %c0_136 = arith.constant 0 : index
    %202 = vector.load %arg23[%c1_134, %c0_135, %c0_136] : memref<3x8x16xbf16, #tpu.memory_space<vmem>>, vector<1x8x16xbf16>
    %203 = vector.shape_cast %202 : vector<1x8x16xbf16> to vector<8x16xbf16>
    %204 = arith.truncf %176 : vector<16x64xf32> to vector<16x64xbf16>
    %cst_137 = arith.constant dense<0.000000e+00> : vector<8x64xf32>
    %205 = tpu.matmul %203, %204, %cst_137 {dimension_numbers = #tpu.dot_dimension_numbers<[1], [0], [0], [1], [0, 0, 1, 1], [], []>} : vector<8x16xbf16>, vector<16x64xbf16>, vector<8x64xf32> -> vector<8x64xf32>
    %c1_138 = arith.constant 1 : index
    %c0_139 = arith.constant 0 : index
    %c0_140 = arith.constant 0 : index
    %206 = vector.load %arg27[%c1_138, %c0_139, %c0_140] : memref<3x64x128xbf16, #tpu.memory_space<vmem>>, vector<1x64x128xbf16>
    %207 = vector.shape_cast %206 : vector<1x64x128xbf16> to vector<64x128xbf16>
    %208 = arith.truncf %205 : vector<8x64xf32> to vector<8x64xbf16>
    %cst_141 = arith.constant dense<0.000000e+00> : vector<8x128xf32>
    %209 = tpu.matmul %208, %207, %cst_141 {dimension_numbers = #tpu.dot_dimension_numbers<[1], [0], [0], [1], [0, 0, 1, 1], [], []>} : vector<8x64xbf16>, vector<64x128xbf16>, vector<8x128xf32> -> vector<8x128xf32>
    %210 = arith.addf %201, %209 : vector<8x128xf32>
    %c2_142 = arith.constant 2 : index
    %c0_143 = arith.constant 0 : index
    %c0_144 = arith.constant 0 : index
    %211 = vector.load %arg23[%c2_142, %c0_143, %c0_144] : memref<3x8x16xbf16, #tpu.memory_space<vmem>>, vector<1x8x16xbf16>
    %212 = vector.shape_cast %211 : vector<1x8x16xbf16> to vector<8x16xbf16>
    %213 = arith.truncf %176 : vector<16x64xf32> to vector<16x64xbf16>
    %cst_145 = arith.constant dense<0.000000e+00> : vector<8x64xf32>
    %214 = tpu.matmul %212, %213, %cst_145 {dimension_numbers = #tpu.dot_dimension_numbers<[1], [0], [0], [1], [0, 0, 1, 1], [], []>} : vector<8x16xbf16>, vector<16x64xbf16>, vector<8x64xf32> -> vector<8x64xf32>
    %c2_146 = arith.constant 2 : index
    %c0_147 = arith.constant 0 : index
    %c0_148 = arith.constant 0 : index
    %215 = vector.load %arg27[%c2_146, %c0_147, %c0_148] : memref<3x64x128xbf16, #tpu.memory_space<vmem>>, vector<1x64x128xbf16>
    %216 = vector.shape_cast %215 : vector<1x64x128xbf16> to vector<64x128xbf16>
    %217 = arith.truncf %214 : vector<8x64xf32> to vector<8x64xbf16>
    %cst_149 = arith.constant dense<0.000000e+00> : vector<8x128xf32>
    %218 = tpu.matmul %217, %216, %cst_149 {dimension_numbers = #tpu.dot_dimension_numbers<[1], [0], [0], [1], [0, 0, 1, 1], [], []>} : vector<8x64xbf16>, vector<64x128xbf16>, vector<8x128xf32> -> vector<8x128xf32>
    %219 = arith.addf %210, %218 : vector<8x128xf32>
    %c0_150 = arith.constant 0 : index
    %c0_151 = arith.constant 0 : index
    %220 = vector.load %arg17[%c0_150, %c0_151] : memref<1x128xf32, #tpu.memory_space<vmem>>, vector<1x128xf32>
    %221 = vector.broadcast %220 : vector<1x128xf32> to vector<8x128xf32>
    %222 = arith.addf %219, %221 : vector<8x128xf32>
    %cst_152 = arith.constant 2.000000e+01 : f32
    %223 = vector.broadcast %cst_152 : f32 to vector<8x128xf32>
    %224 = arith.cmpf ogt, %222, %223 : vector<8x128xf32>
    %cst_153 = arith.constant 2.000000e+01 : f32
    %225 = vector.broadcast %cst_153 : f32 to vector<8x128xf32>
    %226 = arith.minimumf %222, %225 : vector<8x128xf32>
    %227 = math.exp %226 : vector<8x128xf32>
    %228 = math.log1p %227 : vector<8x128xf32>
    %229 = arith.select %224, %222, %228 : vector<8x128xi1>, vector<8x128xf32>
    %230 = math.tanh %229 : vector<8x128xf32>
    %231 = arith.mulf %222, %230 : vector<8x128xf32>
    %cst_154 = arith.constant dense<0.000000e+00> : vector<128xf32>
    %232 = vector.multi_reduction <add>, %231, %cst_154 [0] : vector<8x128xf32> to vector<128xf32>
    %233 = vector.shape_cast %232 : vector<128xf32> to vector<1x128xf32>
    %cst_155 = arith.constant 8.000000e+00 : f32
    %234 = vector.broadcast %cst_155 : f32 to vector<1x128xf32>
    %235 = arith.divf %233, %234 : vector<1x128xf32>
    %236 = vector.broadcast %235 : vector<1x128xf32> to vector<8x128xf32>
    %237 = arith.subf %231, %236 : vector<8x128xf32>
    %238 = arith.mulf %237, %237 : vector<8x128xf32>
    %cst_156 = arith.constant dense<0.000000e+00> : vector<128xf32>
    %239 = vector.multi_reduction <add>, %238, %cst_156 [0] : vector<8x128xf32> to vector<128xf32>
    %240 = vector.shape_cast %239 : vector<128xf32> to vector<1x128xf32>
    %cst_157 = arith.constant 8.000000e+00 : f32
    %241 = vector.broadcast %cst_157 : f32 to vector<1x128xf32>
    %242 = arith.divf %240, %241 : vector<1x128xf32>
    %cst_158 = arith.constant 9.99999974E-6 : f32
    %243 = vector.broadcast %cst_158 : f32 to vector<1x128xf32>
    %244 = arith.addf %242, %243 : vector<1x128xf32>
    %245 = math.rsqrt %244 : vector<1x128xf32>
    %246 = vector.broadcast %245 : vector<1x128xf32> to vector<8x128xf32>
    %247 = arith.mulf %237, %246 : vector<8x128xf32>
    %c0_159 = arith.constant 0 : index
    %c0_160 = arith.constant 0 : index
    %248 = vector.load %arg20[%c0_159, %c0_160] : memref<1x128xf32, #tpu.memory_space<vmem>>, vector<1x128xf32>
    %249 = vector.broadcast %248 : vector<1x128xf32> to vector<8x128xf32>
    %250 = arith.mulf %247, %249 : vector<8x128xf32>
    %c0_161 = arith.constant 0 : index
    %c0_162 = arith.constant 0 : index
    %251 = vector.load %arg19[%c0_161, %c0_162] : memref<1x128xf32, #tpu.memory_space<vmem>>, vector<1x128xf32>
    %252 = vector.broadcast %251 : vector<1x128xf32> to vector<8x128xf32>
    %253 = arith.addf %250, %252 : vector<8x128xf32>
    %254 = arith.addf %253, %193 : vector<8x128xf32>
    %c0_163 = arith.constant 0 : index
    %c0_164 = arith.constant 0 : index
    %c0_165 = arith.constant 0 : index
    %255 = vector.load %arg24[%c0_163, %c0_164, %c0_165] : memref<3x8x8xbf16, #tpu.memory_space<vmem>>, vector<1x8x8xbf16>
    %256 = vector.shape_cast %255 : vector<1x8x8xbf16> to vector<8x8xbf16>
    %257 = arith.truncf %254 : vector<8x128xf32> to vector<8x128xbf16>
    %cst_166 = arith.constant dense<0.000000e+00> : vector<8x128xf32>
    %258 = tpu.matmul %256, %257, %cst_166 {dimension_numbers = #tpu.dot_dimension_numbers<[1], [0], [0], [1], [0, 0, 1, 1], [], []>} : vector<8x8xbf16>, vector<8x128xbf16>, vector<8x128xf32> -> vector<8x128xf32>
    %c0_167 = arith.constant 0 : index
    %c0_168 = arith.constant 0 : index
    %c0_169 = arith.constant 0 : index
    %259 = vector.load %arg28[%c0_167, %c0_168, %c0_169] : memref<3x128x128xbf16, #tpu.memory_space<vmem>>, vector<1x128x128xbf16>
    %260 = vector.shape_cast %259 : vector<1x128x128xbf16> to vector<128x128xbf16>
    %261 = arith.truncf %258 : vector<8x128xf32> to vector<8x128xbf16>
    %cst_170 = arith.constant dense<0.000000e+00> : vector<8x128xf32>
    %262 = tpu.matmul %261, %260, %cst_170 {dimension_numbers = #tpu.dot_dimension_numbers<[1], [0], [0], [1], [0, 0, 1, 1], [], []>} : vector<8x128xbf16>, vector<128x128xbf16>, vector<8x128xf32> -> vector<8x128xf32>
    %c1_171 = arith.constant 1 : index
    %c0_172 = arith.constant 0 : index
    %c0_173 = arith.constant 0 : index
    %263 = vector.load %arg24[%c1_171, %c0_172, %c0_173] : memref<3x8x8xbf16, #tpu.memory_space<vmem>>, vector<1x8x8xbf16>
    %264 = vector.shape_cast %263 : vector<1x8x8xbf16> to vector<8x8xbf16>
    %265 = arith.truncf %254 : vector<8x128xf32> to vector<8x128xbf16>
    %cst_174 = arith.constant dense<0.000000e+00> : vector<8x128xf32>
    %266 = tpu.matmul %264, %265, %cst_174 {dimension_numbers = #tpu.dot_dimension_numbers<[1], [0], [0], [1], [0, 0, 1, 1], [], []>} : vector<8x8xbf16>, vector<8x128xbf16>, vector<8x128xf32> -> vector<8x128xf32>
    %c1_175 = arith.constant 1 : index
    %c0_176 = arith.constant 0 : index
    %c0_177 = arith.constant 0 : index
    %267 = vector.load %arg28[%c1_175, %c0_176, %c0_177] : memref<3x128x128xbf16, #tpu.memory_space<vmem>>, vector<1x128x128xbf16>
    %268 = vector.shape_cast %267 : vector<1x128x128xbf16> to vector<128x128xbf16>
    %269 = arith.truncf %266 : vector<8x128xf32> to vector<8x128xbf16>
    %cst_178 = arith.constant dense<0.000000e+00> : vector<8x128xf32>
    %270 = tpu.matmul %269, %268, %cst_178 {dimension_numbers = #tpu.dot_dimension_numbers<[1], [0], [0], [1], [0, 0, 1, 1], [], []>} : vector<8x128xbf16>, vector<128x128xbf16>, vector<8x128xf32> -> vector<8x128xf32>
    %271 = arith.addf %262, %270 : vector<8x128xf32>
    %c2_179 = arith.constant 2 : index
    %c0_180 = arith.constant 0 : index
    %c0_181 = arith.constant 0 : index
    %272 = vector.load %arg24[%c2_179, %c0_180, %c0_181] : memref<3x8x8xbf16, #tpu.memory_space<vmem>>, vector<1x8x8xbf16>
    %273 = vector.shape_cast %272 : vector<1x8x8xbf16> to vector<8x8xbf16>
    %274 = arith.truncf %254 : vector<8x128xf32> to vector<8x128xbf16>
    %cst_182 = arith.constant dense<0.000000e+00> : vector<8x128xf32>
    %275 = tpu.matmul %273, %274, %cst_182 {dimension_numbers = #tpu.dot_dimension_numbers<[1], [0], [0], [1], [0, 0, 1, 1], [], []>} : vector<8x8xbf16>, vector<8x128xbf16>, vector<8x128xf32> -> vector<8x128xf32>
    %c2_183 = arith.constant 2 : index
    %c0_184 = arith.constant 0 : index
    %c0_185 = arith.constant 0 : index
    %276 = vector.load %arg28[%c2_183, %c0_184, %c0_185] : memref<3x128x128xbf16, #tpu.memory_space<vmem>>, vector<1x128x128xbf16>
    %277 = vector.shape_cast %276 : vector<1x128x128xbf16> to vector<128x128xbf16>
    %278 = arith.truncf %275 : vector<8x128xf32> to vector<8x128xbf16>
    %cst_186 = arith.constant dense<0.000000e+00> : vector<8x128xf32>
    %279 = tpu.matmul %278, %277, %cst_186 {dimension_numbers = #tpu.dot_dimension_numbers<[1], [0], [0], [1], [0, 0, 1, 1], [], []>} : vector<8x128xbf16>, vector<128x128xbf16>, vector<8x128xf32> -> vector<8x128xf32>
    %280 = arith.addf %271, %279 : vector<8x128xf32>
    %c0_187 = arith.constant 0 : index
    %c0_188 = arith.constant 0 : index
    %281 = vector.load %arg18[%c0_187, %c0_188] : memref<1x128xf32, #tpu.memory_space<vmem>>, vector<1x128xf32>
    %282 = vector.broadcast %281 : vector<1x128xf32> to vector<8x128xf32>
    %283 = arith.addf %280, %282 : vector<8x128xf32>
    %cst_189 = arith.constant 2.000000e+01 : f32
    %284 = vector.broadcast %cst_189 : f32 to vector<8x128xf32>
    %285 = arith.cmpf ogt, %283, %284 : vector<8x128xf32>
    %cst_190 = arith.constant 2.000000e+01 : f32
    %286 = vector.broadcast %cst_190 : f32 to vector<8x128xf32>
    %287 = arith.minimumf %283, %286 : vector<8x128xf32>
    %288 = math.exp %287 : vector<8x128xf32>
    %289 = math.log1p %288 : vector<8x128xf32>
    %290 = arith.select %285, %283, %289 : vector<8x128xi1>, vector<8x128xf32>
    %291 = math.tanh %290 : vector<8x128xf32>
    %292 = arith.mulf %283, %291 : vector<8x128xf32>
    %cst_191 = arith.constant dense<0.000000e+00> : vector<128xf32>
    %293 = vector.multi_reduction <add>, %292, %cst_191 [0] : vector<8x128xf32> to vector<128xf32>
    %294 = vector.shape_cast %293 : vector<128xf32> to vector<1x128xf32>
    %cst_192 = arith.constant 8.000000e+00 : f32
    %295 = vector.broadcast %cst_192 : f32 to vector<1x128xf32>
    %296 = arith.divf %294, %295 : vector<1x128xf32>
    %297 = vector.broadcast %296 : vector<1x128xf32> to vector<8x128xf32>
    %298 = arith.subf %292, %297 : vector<8x128xf32>
    %299 = arith.mulf %298, %298 : vector<8x128xf32>
    %cst_193 = arith.constant dense<0.000000e+00> : vector<128xf32>
    %300 = vector.multi_reduction <add>, %299, %cst_193 [0] : vector<8x128xf32> to vector<128xf32>
    %301 = vector.shape_cast %300 : vector<128xf32> to vector<1x128xf32>
    %cst_194 = arith.constant 8.000000e+00 : f32
    %302 = vector.broadcast %cst_194 : f32 to vector<1x128xf32>
    %303 = arith.divf %301, %302 : vector<1x128xf32>
    %cst_195 = arith.constant 9.99999974E-6 : f32
    %304 = vector.broadcast %cst_195 : f32 to vector<1x128xf32>
    %305 = arith.addf %303, %304 : vector<1x128xf32>
    %306 = math.rsqrt %305 : vector<1x128xf32>
    %307 = vector.broadcast %306 : vector<1x128xf32> to vector<8x128xf32>
    %308 = arith.mulf %298, %307 : vector<8x128xf32>
    %c0_196 = arith.constant 0 : index
    %c0_197 = arith.constant 0 : index
    %309 = vector.load %arg22[%c0_196, %c0_197] : memref<1x128xf32, #tpu.memory_space<vmem>>, vector<1x128xf32>
    %310 = vector.broadcast %309 : vector<1x128xf32> to vector<8x128xf32>
    %311 = arith.mulf %308, %310 : vector<8x128xf32>
    %c0_198 = arith.constant 0 : index
    %c0_199 = arith.constant 0 : index
    %312 = vector.load %arg21[%c0_198, %c0_199] : memref<1x128xf32, #tpu.memory_space<vmem>>, vector<1x128xf32>
    %313 = vector.broadcast %312 : vector<1x128xf32> to vector<8x128xf32>
    %314 = arith.addf %311, %313 : vector<8x128xf32>
    %c0_200 = arith.constant 0 : index
    %c0_201 = arith.constant 0 : index
    %315 = vector.load %arg46[%c0_200, %c0_201] : memref<32x64xbf16, #tpu.memory_space<vmem>>, vector<32x64xbf16>
    %316 = arith.truncf %8 : vector<2x32xf32> to vector<2x32xbf16>
    %cst_202 = arith.constant dense<0.000000e+00> : vector<2x64xf32>
    %317 = tpu.matmul %316, %315, %cst_202 {dimension_numbers = #tpu.dot_dimension_numbers<[1], [0], [0], [1], [0, 0, 1, 1], [], []>} : vector<2x32xbf16>, vector<32x64xbf16>, vector<2x64xf32> -> vector<2x64xf32>
    %c0_203 = arith.constant 0 : index
    %c0_204 = arith.constant 0 : index
    %318 = vector.load %arg45[%c0_203, %c0_204] : memref<1x64xf32, #tpu.memory_space<vmem>>, vector<1x64xf32>
    %319 = vector.broadcast %318 : vector<1x64xf32> to vector<2x64xf32>
    %320 = arith.addf %317, %319 : vector<2x64xf32>
    %cst_205 = arith.constant 2.000000e+01 : f32
    %321 = vector.broadcast %cst_205 : f32 to vector<2x64xf32>
    %322 = arith.cmpf ogt, %320, %321 : vector<2x64xf32>
    %cst_206 = arith.constant 2.000000e+01 : f32
    %323 = vector.broadcast %cst_206 : f32 to vector<2x64xf32>
    %324 = arith.minimumf %320, %323 : vector<2x64xf32>
    %325 = math.exp %324 : vector<2x64xf32>
    %326 = math.log1p %325 : vector<2x64xf32>
    %327 = arith.select %322, %320, %326 : vector<2x64xi1>, vector<2x64xf32>
    %328 = math.tanh %327 : vector<2x64xf32>
    %329 = arith.mulf %320, %328 : vector<2x64xf32>
    %c0_207 = arith.constant 0 : index
    %c0_208 = arith.constant 0 : index
    %330 = vector.load %arg34[%c0_207, %c0_208] : memref<8x2xf32, #tpu.memory_space<vmem>>, vector<8x2xf32>
    %cst_209 = arith.constant dense<0.000000e+00> : vector<8x64xf32>
    %331 = tpu.matmul %330, %329, %cst_209 {dimension_numbers = #tpu.dot_dimension_numbers<[1], [0], [0], [1], [0, 0, 1, 1], [], []>} : vector<8x2xf32>, vector<2x64xf32>, vector<8x64xf32> -> vector<8x64xf32>
    %c0_210 = arith.constant 0 : index
    %c0_211 = arith.constant 0 : index
    %c0_212 = arith.constant 0 : index
    %332 = vector.load %arg42[%c0_210, %c0_211, %c0_212] : memref<3x8x8xbf16, #tpu.memory_space<vmem>>, vector<1x8x8xbf16>
    %333 = vector.shape_cast %332 : vector<1x8x8xbf16> to vector<8x8xbf16>
    %334 = arith.truncf %314 : vector<8x128xf32> to vector<8x128xbf16>
    %cst_213 = arith.constant dense<0.000000e+00> : vector<8x128xf32>
    %335 = tpu.matmul %333, %334, %cst_213 {dimension_numbers = #tpu.dot_dimension_numbers<[1], [0], [0], [1], [0, 0, 1, 1], [], []>} : vector<8x8xbf16>, vector<8x128xbf16>, vector<8x128xf32> -> vector<8x128xf32>
    %c0_214 = arith.constant 0 : index
    %c0_215 = arith.constant 0 : index
    %c0_216 = arith.constant 0 : index
    %336 = vector.load %arg47[%c0_214, %c0_215, %c0_216] : memref<3x128x64xbf16, #tpu.memory_space<vmem>>, vector<1x128x64xbf16>
    %337 = vector.shape_cast %336 : vector<1x128x64xbf16> to vector<128x64xbf16>
    %338 = arith.truncf %335 : vector<8x128xf32> to vector<8x128xbf16>
    %cst_217 = arith.constant dense<0.000000e+00> : vector<8x64xf32>
    %339 = tpu.matmul %338, %337, %cst_217 {dimension_numbers = #tpu.dot_dimension_numbers<[1], [0], [0], [1], [0, 0, 1, 1], [], []>} : vector<8x128xbf16>, vector<128x64xbf16>, vector<8x64xf32> -> vector<8x64xf32>
    %340 = arith.truncf %314 : vector<8x128xf32> to vector<8x128xbf16>
    %cst_218 = arith.constant dense<0.000000e+00> : vector<8x128xf32>
    %341 = tpu.matmul %333, %340, %cst_218 {dimension_numbers = #tpu.dot_dimension_numbers<[1], [0], [0], [1], [0, 0, 1, 1], [], []>} : vector<8x8xbf16>, vector<8x128xbf16>, vector<8x128xf32> -> vector<8x128xf32>
    %c0_219 = arith.constant 0 : index
    %c0_220 = arith.constant 0 : index
    %c0_221 = arith.constant 0 : index
    %342 = vector.load %arg48[%c0_219, %c0_220, %c0_221] : memref<3x128x64xbf16, #tpu.memory_space<vmem>>, vector<1x128x64xbf16>
    %343 = vector.shape_cast %342 : vector<1x128x64xbf16> to vector<128x64xbf16>
    %344 = arith.truncf %341 : vector<8x128xf32> to vector<8x128xbf16>
    %cst_222 = arith.constant dense<0.000000e+00> : vector<8x64xf32>
    %345 = tpu.matmul %344, %343, %cst_222 {dimension_numbers = #tpu.dot_dimension_numbers<[1], [0], [0], [1], [0, 0, 1, 1], [], []>} : vector<8x128xbf16>, vector<128x64xbf16>, vector<8x64xf32> -> vector<8x64xf32>
    %346 = arith.addf %339, %345 : vector<8x64xf32>
    %c1_223 = arith.constant 1 : index
    %c0_224 = arith.constant 0 : index
    %c0_225 = arith.constant 0 : index
    %347 = vector.load %arg42[%c1_223, %c0_224, %c0_225] : memref<3x8x8xbf16, #tpu.memory_space<vmem>>, vector<1x8x8xbf16>
    %348 = vector.shape_cast %347 : vector<1x8x8xbf16> to vector<8x8xbf16>
    %349 = arith.truncf %314 : vector<8x128xf32> to vector<8x128xbf16>
    %cst_226 = arith.constant dense<0.000000e+00> : vector<8x128xf32>
    %350 = tpu.matmul %348, %349, %cst_226 {dimension_numbers = #tpu.dot_dimension_numbers<[1], [0], [0], [1], [0, 0, 1, 1], [], []>} : vector<8x8xbf16>, vector<8x128xbf16>, vector<8x128xf32> -> vector<8x128xf32>
    %c1_227 = arith.constant 1 : index
    %c0_228 = arith.constant 0 : index
    %c0_229 = arith.constant 0 : index
    %351 = vector.load %arg47[%c1_227, %c0_228, %c0_229] : memref<3x128x64xbf16, #tpu.memory_space<vmem>>, vector<1x128x64xbf16>
    %352 = vector.shape_cast %351 : vector<1x128x64xbf16> to vector<128x64xbf16>
    %353 = arith.truncf %350 : vector<8x128xf32> to vector<8x128xbf16>
    %cst_230 = arith.constant dense<0.000000e+00> : vector<8x64xf32>
    %354 = tpu.matmul %353, %352, %cst_230 {dimension_numbers = #tpu.dot_dimension_numbers<[1], [0], [0], [1], [0, 0, 1, 1], [], []>} : vector<8x128xbf16>, vector<128x64xbf16>, vector<8x64xf32> -> vector<8x64xf32>
    %355 = arith.addf %346, %354 : vector<8x64xf32>
    %356 = arith.truncf %314 : vector<8x128xf32> to vector<8x128xbf16>
    %cst_231 = arith.constant dense<0.000000e+00> : vector<8x128xf32>
    %357 = tpu.matmul %348, %356, %cst_231 {dimension_numbers = #tpu.dot_dimension_numbers<[1], [0], [0], [1], [0, 0, 1, 1], [], []>} : vector<8x8xbf16>, vector<8x128xbf16>, vector<8x128xf32> -> vector<8x128xf32>
    %c1_232 = arith.constant 1 : index
    %c0_233 = arith.constant 0 : index
    %c0_234 = arith.constant 0 : index
    %358 = vector.load %arg48[%c1_232, %c0_233, %c0_234] : memref<3x128x64xbf16, #tpu.memory_space<vmem>>, vector<1x128x64xbf16>
    %359 = vector.shape_cast %358 : vector<1x128x64xbf16> to vector<128x64xbf16>
    %360 = arith.truncf %357 : vector<8x128xf32> to vector<8x128xbf16>
    %cst_235 = arith.constant dense<0.000000e+00> : vector<8x64xf32>
    %361 = tpu.matmul %360, %359, %cst_235 {dimension_numbers = #tpu.dot_dimension_numbers<[1], [0], [0], [1], [0, 0, 1, 1], [], []>} : vector<8x128xbf16>, vector<128x64xbf16>, vector<8x64xf32> -> vector<8x64xf32>
    %362 = arith.addf %355, %361 : vector<8x64xf32>
    %c2_236 = arith.constant 2 : index
    %c0_237 = arith.constant 0 : index
    %c0_238 = arith.constant 0 : index
    %363 = vector.load %arg42[%c2_236, %c0_237, %c0_238] : memref<3x8x8xbf16, #tpu.memory_space<vmem>>, vector<1x8x8xbf16>
    %364 = vector.shape_cast %363 : vector<1x8x8xbf16> to vector<8x8xbf16>
    %365 = arith.truncf %314 : vector<8x128xf32> to vector<8x128xbf16>
    %cst_239 = arith.constant dense<0.000000e+00> : vector<8x128xf32>
    %366 = tpu.matmul %364, %365, %cst_239 {dimension_numbers = #tpu.dot_dimension_numbers<[1], [0], [0], [1], [0, 0, 1, 1], [], []>} : vector<8x8xbf16>, vector<8x128xbf16>, vector<8x128xf32> -> vector<8x128xf32>
    %c2_240 = arith.constant 2 : index
    %c0_241 = arith.constant 0 : index
    %c0_242 = arith.constant 0 : index
    %367 = vector.load %arg47[%c2_240, %c0_241, %c0_242] : memref<3x128x64xbf16, #tpu.memory_space<vmem>>, vector<1x128x64xbf16>
    %368 = vector.shape_cast %367 : vector<1x128x64xbf16> to vector<128x64xbf16>
    %369 = arith.truncf %366 : vector<8x128xf32> to vector<8x128xbf16>
    %cst_243 = arith.constant dense<0.000000e+00> : vector<8x64xf32>
    %370 = tpu.matmul %369, %368, %cst_243 {dimension_numbers = #tpu.dot_dimension_numbers<[1], [0], [0], [1], [0, 0, 1, 1], [], []>} : vector<8x128xbf16>, vector<128x64xbf16>, vector<8x64xf32> -> vector<8x64xf32>
    %371 = arith.addf %362, %370 : vector<8x64xf32>
    %372 = arith.truncf %314 : vector<8x128xf32> to vector<8x128xbf16>
    %cst_244 = arith.constant dense<0.000000e+00> : vector<8x128xf32>
    %373 = tpu.matmul %364, %372, %cst_244 {dimension_numbers = #tpu.dot_dimension_numbers<[1], [0], [0], [1], [0, 0, 1, 1], [], []>} : vector<8x8xbf16>, vector<8x128xbf16>, vector<8x128xf32> -> vector<8x128xf32>
    %c2_245 = arith.constant 2 : index
    %c0_246 = arith.constant 0 : index
    %c0_247 = arith.constant 0 : index
    %374 = vector.load %arg48[%c2_245, %c0_246, %c0_247] : memref<3x128x64xbf16, #tpu.memory_space<vmem>>, vector<1x128x64xbf16>
    %375 = vector.shape_cast %374 : vector<1x128x64xbf16> to vector<128x64xbf16>
    %376 = arith.truncf %373 : vector<8x128xf32> to vector<8x128xbf16>
    %cst_248 = arith.constant dense<0.000000e+00> : vector<8x64xf32>
    %377 = tpu.matmul %376, %375, %cst_248 {dimension_numbers = #tpu.dot_dimension_numbers<[1], [0], [0], [1], [0, 0, 1, 1], [], []>} : vector<8x128xbf16>, vector<128x64xbf16>, vector<8x64xf32> -> vector<8x64xf32>
    %378 = arith.addf %371, %377 : vector<8x64xf32>
    %c0_249 = arith.constant 0 : index
    %c0_250 = arith.constant 0 : index
    %379 = vector.load %arg35[%c0_249, %c0_250] : memref<1x64xf32, #tpu.memory_space<vmem>>, vector<1x64xf32>
    %380 = vector.broadcast %379 : vector<1x64xf32> to vector<8x64xf32>
    %381 = arith.addf %378, %380 : vector<8x64xf32>
    %cst_251 = arith.constant 2.000000e+01 : f32
    %382 = vector.broadcast %cst_251 : f32 to vector<8x64xf32>
    %383 = arith.cmpf ogt, %381, %382 : vector<8x64xf32>
    %cst_252 = arith.constant 2.000000e+01 : f32
    %384 = vector.broadcast %cst_252 : f32 to vector<8x64xf32>
    %385 = arith.minimumf %381, %384 : vector<8x64xf32>
    %386 = math.exp %385 : vector<8x64xf32>
    %387 = math.log1p %386 : vector<8x64xf32>
    %388 = arith.select %383, %381, %387 : vector<8x64xi1>, vector<8x64xf32>
    %389 = math.tanh %388 : vector<8x64xf32>
    %390 = arith.mulf %381, %389 : vector<8x64xf32>
    %cst_253 = arith.constant dense<0.000000e+00> : vector<64xf32>
    %391 = vector.multi_reduction <add>, %390, %cst_253 [0] : vector<8x64xf32> to vector<64xf32>
    %392 = vector.shape_cast %391 : vector<64xf32> to vector<1x64xf32>
    %cst_254 = arith.constant 8.000000e+00 : f32
    %393 = vector.broadcast %cst_254 : f32 to vector<1x64xf32>
    %394 = arith.divf %392, %393 : vector<1x64xf32>
    %395 = vector.broadcast %394 : vector<1x64xf32> to vector<8x64xf32>
    %396 = arith.subf %390, %395 : vector<8x64xf32>
    %397 = arith.mulf %396, %396 : vector<8x64xf32>
    %cst_255 = arith.constant dense<0.000000e+00> : vector<64xf32>
    %398 = vector.multi_reduction <add>, %397, %cst_255 [0] : vector<8x64xf32> to vector<64xf32>
    %399 = vector.shape_cast %398 : vector<64xf32> to vector<1x64xf32>
    %cst_256 = arith.constant 8.000000e+00 : f32
    %400 = vector.broadcast %cst_256 : f32 to vector<1x64xf32>
    %401 = arith.divf %399, %400 : vector<1x64xf32>
    %cst_257 = arith.constant 9.99999974E-6 : f32
    %402 = vector.broadcast %cst_257 : f32 to vector<1x64xf32>
    %403 = arith.addf %401, %402 : vector<1x64xf32>
    %404 = math.rsqrt %403 : vector<1x64xf32>
    %405 = vector.broadcast %404 : vector<1x64xf32> to vector<8x64xf32>
    %406 = arith.mulf %396, %405 : vector<8x64xf32>
    %c0_258 = arith.constant 0 : index
    %c0_259 = arith.constant 0 : index
    %407 = vector.load %arg39[%c0_258, %c0_259] : memref<1x64xf32, #tpu.memory_space<vmem>>, vector<1x64xf32>
    %408 = vector.broadcast %407 : vector<1x64xf32> to vector<8x64xf32>
    %409 = arith.mulf %406, %408 : vector<8x64xf32>
    %c0_260 = arith.constant 0 : index
    %c0_261 = arith.constant 0 : index
    %410 = vector.load %arg38[%c0_260, %c0_261] : memref<1x64xf32, #tpu.memory_space<vmem>>, vector<1x64xf32>
    %411 = vector.broadcast %410 : vector<1x64xf32> to vector<8x64xf32>
    %412 = arith.addf %409, %411 : vector<8x64xf32>
    %413 = arith.addf %412, %331 : vector<8x64xf32>
    %c0_262 = arith.constant 0 : index
    %c0_263 = arith.constant 0 : index
    %c0_264 = arith.constant 0 : index
    %414 = vector.load %arg43[%c0_262, %c0_263, %c0_264] : memref<3x8x8xbf16, #tpu.memory_space<vmem>>, vector<1x8x8xbf16>
    %415 = vector.shape_cast %414 : vector<1x8x8xbf16> to vector<8x8xbf16>
    %416 = arith.truncf %413 : vector<8x64xf32> to vector<8x64xbf16>
    %cst_265 = arith.constant dense<0.000000e+00> : vector<8x64xf32>
    %417 = tpu.matmul %415, %416, %cst_265 {dimension_numbers = #tpu.dot_dimension_numbers<[1], [0], [0], [1], [0, 0, 1, 1], [], []>} : vector<8x8xbf16>, vector<8x64xbf16>, vector<8x64xf32> -> vector<8x64xf32>
    %c0_266 = arith.constant 0 : index
    %c0_267 = arith.constant 0 : index
    %c0_268 = arith.constant 0 : index
    %418 = vector.load %arg49[%c0_266, %c0_267, %c0_268] : memref<3x64x64xbf16, #tpu.memory_space<vmem>>, vector<1x64x64xbf16>
    %419 = vector.shape_cast %418 : vector<1x64x64xbf16> to vector<64x64xbf16>
    %420 = arith.truncf %417 : vector<8x64xf32> to vector<8x64xbf16>
    %cst_269 = arith.constant dense<0.000000e+00> : vector<8x64xf32>
    %421 = tpu.matmul %420, %419, %cst_269 {dimension_numbers = #tpu.dot_dimension_numbers<[1], [0], [0], [1], [0, 0, 1, 1], [], []>} : vector<8x64xbf16>, vector<64x64xbf16>, vector<8x64xf32> -> vector<8x64xf32>
    %c1_270 = arith.constant 1 : index
    %c0_271 = arith.constant 0 : index
    %c0_272 = arith.constant 0 : index
    %422 = vector.load %arg43[%c1_270, %c0_271, %c0_272] : memref<3x8x8xbf16, #tpu.memory_space<vmem>>, vector<1x8x8xbf16>
    %423 = vector.shape_cast %422 : vector<1x8x8xbf16> to vector<8x8xbf16>
    %424 = arith.truncf %413 : vector<8x64xf32> to vector<8x64xbf16>
    %cst_273 = arith.constant dense<0.000000e+00> : vector<8x64xf32>
    %425 = tpu.matmul %423, %424, %cst_273 {dimension_numbers = #tpu.dot_dimension_numbers<[1], [0], [0], [1], [0, 0, 1, 1], [], []>} : vector<8x8xbf16>, vector<8x64xbf16>, vector<8x64xf32> -> vector<8x64xf32>
    %c1_274 = arith.constant 1 : index
    %c0_275 = arith.constant 0 : index
    %c0_276 = arith.constant 0 : index
    %426 = vector.load %arg49[%c1_274, %c0_275, %c0_276] : memref<3x64x64xbf16, #tpu.memory_space<vmem>>, vector<1x64x64xbf16>
    %427 = vector.shape_cast %426 : vector<1x64x64xbf16> to vector<64x64xbf16>
    %428 = arith.truncf %425 : vector<8x64xf32> to vector<8x64xbf16>
    %cst_277 = arith.constant dense<0.000000e+00> : vector<8x64xf32>
    %429 = tpu.matmul %428, %427, %cst_277 {dimension_numbers = #tpu.dot_dimension_numbers<[1], [0], [0], [1], [0, 0, 1, 1], [], []>} : vector<8x64xbf16>, vector<64x64xbf16>, vector<8x64xf32> -> vector<8x64xf32>
    %430 = arith.addf %421, %429 : vector<8x64xf32>
    %c2_278 = arith.constant 2 : index
    %c0_279 = arith.constant 0 : index
    %c0_280 = arith.constant 0 : index
    %431 = vector.load %arg43[%c2_278, %c0_279, %c0_280] : memref<3x8x8xbf16, #tpu.memory_space<vmem>>, vector<1x8x8xbf16>
    %432 = vector.shape_cast %431 : vector<1x8x8xbf16> to vector<8x8xbf16>
    %433 = arith.truncf %413 : vector<8x64xf32> to vector<8x64xbf16>
    %cst_281 = arith.constant dense<0.000000e+00> : vector<8x64xf32>
    %434 = tpu.matmul %432, %433, %cst_281 {dimension_numbers = #tpu.dot_dimension_numbers<[1], [0], [0], [1], [0, 0, 1, 1], [], []>} : vector<8x8xbf16>, vector<8x64xbf16>, vector<8x64xf32> -> vector<8x64xf32>
    %c2_282 = arith.constant 2 : index
    %c0_283 = arith.constant 0 : index
    %c0_284 = arith.constant 0 : index
    %435 = vector.load %arg49[%c2_282, %c0_283, %c0_284] : memref<3x64x64xbf16, #tpu.memory_space<vmem>>, vector<1x64x64xbf16>
    %436 = vector.shape_cast %435 : vector<1x64x64xbf16> to vector<64x64xbf16>
    %437 = arith.truncf %434 : vector<8x64xf32> to vector<8x64xbf16>
    %cst_285 = arith.constant dense<0.000000e+00> : vector<8x64xf32>
    %438 = tpu.matmul %437, %436, %cst_285 {dimension_numbers = #tpu.dot_dimension_numbers<[1], [0], [0], [1], [0, 0, 1, 1], [], []>} : vector<8x64xbf16>, vector<64x64xbf16>, vector<8x64xf32> -> vector<8x64xf32>
    %439 = arith.addf %430, %438 : vector<8x64xf32>
    %c0_286 = arith.constant 0 : index
    %c0_287 = arith.constant 0 : index
    %440 = vector.load %arg36[%c0_286, %c0_287] : memref<1x64xf32, #tpu.memory_space<vmem>>, vector<1x64xf32>
    %441 = vector.broadcast %440 : vector<1x64xf32> to vector<8x64xf32>
    %442 = arith.addf %439, %441 : vector<8x64xf32>
    %cst_288 = arith.constant 2.000000e+01 : f32
    %443 = vector.broadcast %cst_288 : f32 to vector<8x64xf32>
    %444 = arith.cmpf ogt, %442, %443 : vector<8x64xf32>
    %cst_289 = arith.constant 2.000000e+01 : f32
    %445 = vector.broadcast %cst_289 : f32 to vector<8x64xf32>
    %446 = arith.minimumf %442, %445 : vector<8x64xf32>
    %447 = math.exp %446 : vector<8x64xf32>
    %448 = math.log1p %447 : vector<8x64xf32>
    %449 = arith.select %444, %442, %448 : vector<8x64xi1>, vector<8x64xf32>
    %450 = math.tanh %449 : vector<8x64xf32>
    %451 = arith.mulf %442, %450 : vector<8x64xf32>
    %cst_290 = arith.constant dense<0.000000e+00> : vector<64xf32>
    %452 = vector.multi_reduction <add>, %451, %cst_290 [0] : vector<8x64xf32> to vector<64xf32>
    %453 = vector.shape_cast %452 : vector<64xf32> to vector<1x64xf32>
    %cst_291 = arith.constant 8.000000e+00 : f32
    %454 = vector.broadcast %cst_291 : f32 to vector<1x64xf32>
    %455 = arith.divf %453, %454 : vector<1x64xf32>
    %456 = vector.broadcast %455 : vector<1x64xf32> to vector<8x64xf32>
    %457 = arith.subf %451, %456 : vector<8x64xf32>
    %458 = arith.mulf %457, %457 : vector<8x64xf32>
    %cst_292 = arith.constant dense<0.000000e+00> : vector<64xf32>
    %459 = vector.multi_reduction <add>, %458, %cst_292 [0] : vector<8x64xf32> to vector<64xf32>
    %460 = vector.shape_cast %459 : vector<64xf32> to vector<1x64xf32>
    %cst_293 = arith.constant 8.000000e+00 : f32
    %461 = vector.broadcast %cst_293 : f32 to vector<1x64xf32>
    %462 = arith.divf %460, %461 : vector<1x64xf32>
    %cst_294 = arith.constant 9.99999974E-6 : f32
    %463 = vector.broadcast %cst_294 : f32 to vector<1x64xf32>
    %464 = arith.addf %462, %463 : vector<1x64xf32>
    %465 = math.rsqrt %464 : vector<1x64xf32>
    %466 = vector.broadcast %465 : vector<1x64xf32> to vector<8x64xf32>
    %467 = arith.mulf %457, %466 : vector<8x64xf32>
    %c0_295 = arith.constant 0 : index
    %c0_296 = arith.constant 0 : index
    %468 = vector.load %arg41[%c0_295, %c0_296] : memref<1x64xf32, #tpu.memory_space<vmem>>, vector<1x64xf32>
    %469 = vector.broadcast %468 : vector<1x64xf32> to vector<8x64xf32>
    %470 = arith.mulf %467, %469 : vector<8x64xf32>
    %c0_297 = arith.constant 0 : index
    %c0_298 = arith.constant 0 : index
    %471 = vector.load %arg40[%c0_297, %c0_298] : memref<1x64xf32, #tpu.memory_space<vmem>>, vector<1x64xf32>
    %472 = vector.broadcast %471 : vector<1x64xf32> to vector<8x64xf32>
    %473 = arith.addf %470, %472 : vector<8x64xf32>
    %c0_299 = arith.constant 0 : index
    %c0_300 = arith.constant 0 : index
    %c0_301 = arith.constant 0 : index
    %474 = vector.load %arg44[%c0_299, %c0_300, %c0_301] : memref<4x16x8xbf16, #tpu.memory_space<vmem>>, vector<1x16x8xbf16>
    %475 = vector.shape_cast %474 : vector<1x16x8xbf16> to vector<16x8xbf16>
    %476 = arith.truncf %473 : vector<8x64xf32> to vector<8x64xbf16>
    %cst_302 = arith.constant dense<0.000000e+00> : vector<16x64xf32>
    %477 = tpu.matmul %475, %476, %cst_302 {dimension_numbers = #tpu.dot_dimension_numbers<[1], [0], [0], [1], [0, 0, 1, 1], [], []>} : vector<16x8xbf16>, vector<8x64xbf16>, vector<16x64xf32> -> vector<16x64xf32>
    %c0_303 = arith.constant 0 : index
    %c0_304 = arith.constant 0 : index
    %c0_305 = arith.constant 0 : index
    %478 = vector.load %arg50[%c0_303, %c0_304, %c0_305] : memref<4x64x64xbf16, #tpu.memory_space<vmem>>, vector<1x64x64xbf16>
    %479 = vector.shape_cast %478 : vector<1x64x64xbf16> to vector<64x64xbf16>
    %480 = arith.truncf %477 : vector<16x64xf32> to vector<16x64xbf16>
    %cst_306 = arith.constant dense<0.000000e+00> : vector<16x64xf32>
    %481 = tpu.matmul %480, %479, %cst_306 {dimension_numbers = #tpu.dot_dimension_numbers<[1], [0], [0], [1], [0, 0, 1, 1], [], []>} : vector<16x64xbf16>, vector<64x64xbf16>, vector<16x64xf32> -> vector<16x64xf32>
    %c1_307 = arith.constant 1 : index
    %c0_308 = arith.constant 0 : index
    %c0_309 = arith.constant 0 : index
    %482 = vector.load %arg44[%c1_307, %c0_308, %c0_309] : memref<4x16x8xbf16, #tpu.memory_space<vmem>>, vector<1x16x8xbf16>
    %483 = vector.shape_cast %482 : vector<1x16x8xbf16> to vector<16x8xbf16>
    %484 = arith.truncf %473 : vector<8x64xf32> to vector<8x64xbf16>
    %cst_310 = arith.constant dense<0.000000e+00> : vector<16x64xf32>
    %485 = tpu.matmul %483, %484, %cst_310 {dimension_numbers = #tpu.dot_dimension_numbers<[1], [0], [0], [1], [0, 0, 1, 1], [], []>} : vector<16x8xbf16>, vector<8x64xbf16>, vector<16x64xf32> -> vector<16x64xf32>
    %c1_311 = arith.constant 1 : index
    %c0_312 = arith.constant 0 : index
    %c0_313 = arith.constant 0 : index
    %486 = vector.load %arg50[%c1_311, %c0_312, %c0_313] : memref<4x64x64xbf16, #tpu.memory_space<vmem>>, vector<1x64x64xbf16>
    %487 = vector.shape_cast %486 : vector<1x64x64xbf16> to vector<64x64xbf16>
    %488 = arith.truncf %485 : vector<16x64xf32> to vector<16x64xbf16>
    %cst_314 = arith.constant dense<0.000000e+00> : vector<16x64xf32>
    %489 = tpu.matmul %488, %487, %cst_314 {dimension_numbers = #tpu.dot_dimension_numbers<[1], [0], [0], [1], [0, 0, 1, 1], [], []>} : vector<16x64xbf16>, vector<64x64xbf16>, vector<16x64xf32> -> vector<16x64xf32>
    %490 = arith.addf %481, %489 : vector<16x64xf32>
    %c2_315 = arith.constant 2 : index
    %c0_316 = arith.constant 0 : index
    %c0_317 = arith.constant 0 : index
    %491 = vector.load %arg44[%c2_315, %c0_316, %c0_317] : memref<4x16x8xbf16, #tpu.memory_space<vmem>>, vector<1x16x8xbf16>
    %492 = vector.shape_cast %491 : vector<1x16x8xbf16> to vector<16x8xbf16>
    %493 = arith.truncf %473 : vector<8x64xf32> to vector<8x64xbf16>
    %cst_318 = arith.constant dense<0.000000e+00> : vector<16x64xf32>
    %494 = tpu.matmul %492, %493, %cst_318 {dimension_numbers = #tpu.dot_dimension_numbers<[1], [0], [0], [1], [0, 0, 1, 1], [], []>} : vector<16x8xbf16>, vector<8x64xbf16>, vector<16x64xf32> -> vector<16x64xf32>
    %c2_319 = arith.constant 2 : index
    %c0_320 = arith.constant 0 : index
    %c0_321 = arith.constant 0 : index
    %495 = vector.load %arg50[%c2_319, %c0_320, %c0_321] : memref<4x64x64xbf16, #tpu.memory_space<vmem>>, vector<1x64x64xbf16>
    %496 = vector.shape_cast %495 : vector<1x64x64xbf16> to vector<64x64xbf16>
    %497 = arith.truncf %494 : vector<16x64xf32> to vector<16x64xbf16>
    %cst_322 = arith.constant dense<0.000000e+00> : vector<16x64xf32>
    %498 = tpu.matmul %497, %496, %cst_322 {dimension_numbers = #tpu.dot_dimension_numbers<[1], [0], [0], [1], [0, 0, 1, 1], [], []>} : vector<16x64xbf16>, vector<64x64xbf16>, vector<16x64xf32> -> vector<16x64xf32>
    %499 = arith.addf %490, %498 : vector<16x64xf32>
    %c3 = arith.constant 3 : index
    %c0_323 = arith.constant 0 : index
    %c0_324 = arith.constant 0 : index
    %500 = vector.load %arg44[%c3, %c0_323, %c0_324] : memref<4x16x8xbf16, #tpu.memory_space<vmem>>, vector<1x16x8xbf16>
    %501 = vector.shape_cast %500 : vector<1x16x8xbf16> to vector<16x8xbf16>
    %502 = arith.truncf %473 : vector<8x64xf32> to vector<8x64xbf16>
    %cst_325 = arith.constant dense<0.000000e+00> : vector<16x64xf32>
    %503 = tpu.matmul %501, %502, %cst_325 {dimension_numbers = #tpu.dot_dimension_numbers<[1], [0], [0], [1], [0, 0, 1, 1], [], []>} : vector<16x8xbf16>, vector<8x64xbf16>, vector<16x64xf32> -> vector<16x64xf32>
    %c3_326 = arith.constant 3 : index
    %c0_327 = arith.constant 0 : index
    %c0_328 = arith.constant 0 : index
    %504 = vector.load %arg50[%c3_326, %c0_327, %c0_328] : memref<4x64x64xbf16, #tpu.memory_space<vmem>>, vector<1x64x64xbf16>
    %505 = vector.shape_cast %504 : vector<1x64x64xbf16> to vector<64x64xbf16>
    %506 = arith.truncf %503 : vector<16x64xf32> to vector<16x64xbf16>
    %cst_329 = arith.constant dense<0.000000e+00> : vector<16x64xf32>
    %507 = tpu.matmul %506, %505, %cst_329 {dimension_numbers = #tpu.dot_dimension_numbers<[1], [0], [0], [1], [0, 0, 1, 1], [], []>} : vector<16x64xbf16>, vector<64x64xbf16>, vector<16x64xf32> -> vector<16x64xf32>
    %508 = arith.addf %499, %507 : vector<16x64xf32>
    %c0_330 = arith.constant 0 : index
    %c0_331 = arith.constant 0 : index
    %509 = vector.load %arg37[%c0_330, %c0_331] : memref<1x64xf32, #tpu.memory_space<vmem>>, vector<1x64xf32>
    %510 = vector.broadcast %509 : vector<1x64xf32> to vector<16x64xf32>
    %511 = arith.addf %508, %510 : vector<16x64xf32>
    %c0_332 = arith.constant 0 : index
    %c0_333 = arith.constant 0 : index
    %512 = vector.load %arg63[%c0_332, %c0_333] : memref<32x32xbf16, #tpu.memory_space<vmem>>, vector<32x32xbf16>
    %513 = arith.truncf %8 : vector<2x32xf32> to vector<2x32xbf16>
    %cst_334 = arith.constant dense<0.000000e+00> : vector<2x32xf32>
    %514 = tpu.matmul %513, %512, %cst_334 {dimension_numbers = #tpu.dot_dimension_numbers<[1], [0], [0], [1], [0, 0, 1, 1], [], []>} : vector<2x32xbf16>, vector<32x32xbf16>, vector<2x32xf32> -> vector<2x32xf32>
    %c0_335 = arith.constant 0 : index
    %c0_336 = arith.constant 0 : index
    %515 = vector.load %arg62[%c0_335, %c0_336] : memref<1x32xf32, #tpu.memory_space<vmem>>, vector<1x32xf32>
    %516 = vector.broadcast %515 : vector<1x32xf32> to vector<2x32xf32>
    %517 = arith.addf %514, %516 : vector<2x32xf32>
    %cst_337 = arith.constant 2.000000e+01 : f32
    %518 = vector.broadcast %cst_337 : f32 to vector<2x32xf32>
    %519 = arith.cmpf ogt, %517, %518 : vector<2x32xf32>
    %cst_338 = arith.constant 2.000000e+01 : f32
    %520 = vector.broadcast %cst_338 : f32 to vector<2x32xf32>
    %521 = arith.minimumf %517, %520 : vector<2x32xf32>
    %522 = math.exp %521 : vector<2x32xf32>
    %523 = math.log1p %522 : vector<2x32xf32>
    %524 = arith.select %519, %517, %523 : vector<2x32xi1>, vector<2x32xf32>
    %525 = math.tanh %524 : vector<2x32xf32>
    %526 = arith.mulf %517, %525 : vector<2x32xf32>
    %c0_339 = arith.constant 0 : index
    %c0_340 = arith.constant 0 : index
    %527 = vector.load %arg51[%c0_339, %c0_340] : memref<16x2xf32, #tpu.memory_space<vmem>>, vector<16x2xf32>
    %cst_341 = arith.constant dense<0.000000e+00> : vector<16x32xf32>
    %528 = tpu.matmul %527, %526, %cst_341 {dimension_numbers = #tpu.dot_dimension_numbers<[1], [0], [0], [1], [0, 0, 1, 1], [], []>} : vector<16x2xf32>, vector<2x32xf32>, vector<16x32xf32> -> vector<16x32xf32>
    %c0_342 = arith.constant 0 : index
    %c0_343 = arith.constant 0 : index
    %c0_344 = arith.constant 0 : index
    %529 = vector.load %arg59[%c0_342, %c0_343, %c0_344] : memref<3x16x16xbf16, #tpu.memory_space<vmem>>, vector<1x16x16xbf16>
    %530 = vector.shape_cast %529 : vector<1x16x16xbf16> to vector<16x16xbf16>
    %531 = arith.truncf %511 : vector<16x64xf32> to vector<16x64xbf16>
    %cst_345 = arith.constant dense<0.000000e+00> : vector<16x64xf32>
    %532 = tpu.matmul %530, %531, %cst_345 {dimension_numbers = #tpu.dot_dimension_numbers<[1], [0], [0], [1], [0, 0, 1, 1], [], []>} : vector<16x16xbf16>, vector<16x64xbf16>, vector<16x64xf32> -> vector<16x64xf32>
    %c0_346 = arith.constant 0 : index
    %c0_347 = arith.constant 0 : index
    %c0_348 = arith.constant 0 : index
    %533 = vector.load %arg64[%c0_346, %c0_347, %c0_348] : memref<3x64x32xbf16, #tpu.memory_space<vmem>>, vector<1x64x32xbf16>
    %534 = vector.shape_cast %533 : vector<1x64x32xbf16> to vector<64x32xbf16>
    %535 = arith.truncf %532 : vector<16x64xf32> to vector<16x64xbf16>
    %cst_349 = arith.constant dense<0.000000e+00> : vector<16x32xf32>
    %536 = tpu.matmul %535, %534, %cst_349 {dimension_numbers = #tpu.dot_dimension_numbers<[1], [0], [0], [1], [0, 0, 1, 1], [], []>} : vector<16x64xbf16>, vector<64x32xbf16>, vector<16x32xf32> -> vector<16x32xf32>
    %537 = arith.truncf %176 : vector<16x64xf32> to vector<16x64xbf16>
    %cst_350 = arith.constant dense<0.000000e+00> : vector<16x64xf32>
    %538 = tpu.matmul %530, %537, %cst_350 {dimension_numbers = #tpu.dot_dimension_numbers<[1], [0], [0], [1], [0, 0, 1, 1], [], []>} : vector<16x16xbf16>, vector<16x64xbf16>, vector<16x64xf32> -> vector<16x64xf32>
    %c0_351 = arith.constant 0 : index
    %c0_352 = arith.constant 0 : index
    %c0_353 = arith.constant 0 : index
    %539 = vector.load %arg65[%c0_351, %c0_352, %c0_353] : memref<3x64x32xbf16, #tpu.memory_space<vmem>>, vector<1x64x32xbf16>
    %540 = vector.shape_cast %539 : vector<1x64x32xbf16> to vector<64x32xbf16>
    %541 = arith.truncf %538 : vector<16x64xf32> to vector<16x64xbf16>
    %cst_354 = arith.constant dense<0.000000e+00> : vector<16x32xf32>
    %542 = tpu.matmul %541, %540, %cst_354 {dimension_numbers = #tpu.dot_dimension_numbers<[1], [0], [0], [1], [0, 0, 1, 1], [], []>} : vector<16x64xbf16>, vector<64x32xbf16>, vector<16x32xf32> -> vector<16x32xf32>
    %543 = arith.addf %536, %542 : vector<16x32xf32>
    %c1_355 = arith.constant 1 : index
    %c0_356 = arith.constant 0 : index
    %c0_357 = arith.constant 0 : index
    %544 = vector.load %arg59[%c1_355, %c0_356, %c0_357] : memref<3x16x16xbf16, #tpu.memory_space<vmem>>, vector<1x16x16xbf16>
    %545 = vector.shape_cast %544 : vector<1x16x16xbf16> to vector<16x16xbf16>
    %546 = arith.truncf %511 : vector<16x64xf32> to vector<16x64xbf16>
    %cst_358 = arith.constant dense<0.000000e+00> : vector<16x64xf32>
    %547 = tpu.matmul %545, %546, %cst_358 {dimension_numbers = #tpu.dot_dimension_numbers<[1], [0], [0], [1], [0, 0, 1, 1], [], []>} : vector<16x16xbf16>, vector<16x64xbf16>, vector<16x64xf32> -> vector<16x64xf32>
    %c1_359 = arith.constant 1 : index
    %c0_360 = arith.constant 0 : index
    %c0_361 = arith.constant 0 : index
    %548 = vector.load %arg64[%c1_359, %c0_360, %c0_361] : memref<3x64x32xbf16, #tpu.memory_space<vmem>>, vector<1x64x32xbf16>
    %549 = vector.shape_cast %548 : vector<1x64x32xbf16> to vector<64x32xbf16>
    %550 = arith.truncf %547 : vector<16x64xf32> to vector<16x64xbf16>
    %cst_362 = arith.constant dense<0.000000e+00> : vector<16x32xf32>
    %551 = tpu.matmul %550, %549, %cst_362 {dimension_numbers = #tpu.dot_dimension_numbers<[1], [0], [0], [1], [0, 0, 1, 1], [], []>} : vector<16x64xbf16>, vector<64x32xbf16>, vector<16x32xf32> -> vector<16x32xf32>
    %552 = arith.addf %543, %551 : vector<16x32xf32>
    %553 = arith.truncf %176 : vector<16x64xf32> to vector<16x64xbf16>
    %cst_363 = arith.constant dense<0.000000e+00> : vector<16x64xf32>
    %554 = tpu.matmul %545, %553, %cst_363 {dimension_numbers = #tpu.dot_dimension_numbers<[1], [0], [0], [1], [0, 0, 1, 1], [], []>} : vector<16x16xbf16>, vector<16x64xbf16>, vector<16x64xf32> -> vector<16x64xf32>
    %c1_364 = arith.constant 1 : index
    %c0_365 = arith.constant 0 : index
    %c0_366 = arith.constant 0 : index
    %555 = vector.load %arg65[%c1_364, %c0_365, %c0_366] : memref<3x64x32xbf16, #tpu.memory_space<vmem>>, vector<1x64x32xbf16>
    %556 = vector.shape_cast %555 : vector<1x64x32xbf16> to vector<64x32xbf16>
    %557 = arith.truncf %554 : vector<16x64xf32> to vector<16x64xbf16>
    %cst_367 = arith.constant dense<0.000000e+00> : vector<16x32xf32>
    %558 = tpu.matmul %557, %556, %cst_367 {dimension_numbers = #tpu.dot_dimension_numbers<[1], [0], [0], [1], [0, 0, 1, 1], [], []>} : vector<16x64xbf16>, vector<64x32xbf16>, vector<16x32xf32> -> vector<16x32xf32>
    %559 = arith.addf %552, %558 : vector<16x32xf32>
    %c2_368 = arith.constant 2 : index
    %c0_369 = arith.constant 0 : index
    %c0_370 = arith.constant 0 : index
    %560 = vector.load %arg59[%c2_368, %c0_369, %c0_370] : memref<3x16x16xbf16, #tpu.memory_space<vmem>>, vector<1x16x16xbf16>
    %561 = vector.shape_cast %560 : vector<1x16x16xbf16> to vector<16x16xbf16>
    %562 = arith.truncf %511 : vector<16x64xf32> to vector<16x64xbf16>
    %cst_371 = arith.constant dense<0.000000e+00> : vector<16x64xf32>
    %563 = tpu.matmul %561, %562, %cst_371 {dimension_numbers = #tpu.dot_dimension_numbers<[1], [0], [0], [1], [0, 0, 1, 1], [], []>} : vector<16x16xbf16>, vector<16x64xbf16>, vector<16x64xf32> -> vector<16x64xf32>
    %c2_372 = arith.constant 2 : index
    %c0_373 = arith.constant 0 : index
    %c0_374 = arith.constant 0 : index
    %564 = vector.load %arg64[%c2_372, %c0_373, %c0_374] : memref<3x64x32xbf16, #tpu.memory_space<vmem>>, vector<1x64x32xbf16>
    %565 = vector.shape_cast %564 : vector<1x64x32xbf16> to vector<64x32xbf16>
    %566 = arith.truncf %563 : vector<16x64xf32> to vector<16x64xbf16>
    %cst_375 = arith.constant dense<0.000000e+00> : vector<16x32xf32>
    %567 = tpu.matmul %566, %565, %cst_375 {dimension_numbers = #tpu.dot_dimension_numbers<[1], [0], [0], [1], [0, 0, 1, 1], [], []>} : vector<16x64xbf16>, vector<64x32xbf16>, vector<16x32xf32> -> vector<16x32xf32>
    %568 = arith.addf %559, %567 : vector<16x32xf32>
    %569 = arith.truncf %176 : vector<16x64xf32> to vector<16x64xbf16>
    %cst_376 = arith.constant dense<0.000000e+00> : vector<16x64xf32>
    %570 = tpu.matmul %561, %569, %cst_376 {dimension_numbers = #tpu.dot_dimension_numbers<[1], [0], [0], [1], [0, 0, 1, 1], [], []>} : vector<16x16xbf16>, vector<16x64xbf16>, vector<16x64xf32> -> vector<16x64xf32>
    %c2_377 = arith.constant 2 : index
    %c0_378 = arith.constant 0 : index
    %c0_379 = arith.constant 0 : index
    %571 = vector.load %arg65[%c2_377, %c0_378, %c0_379] : memref<3x64x32xbf16, #tpu.memory_space<vmem>>, vector<1x64x32xbf16>
    %572 = vector.shape_cast %571 : vector<1x64x32xbf16> to vector<64x32xbf16>
    %573 = arith.truncf %570 : vector<16x64xf32> to vector<16x64xbf16>
    %cst_380 = arith.constant dense<0.000000e+00> : vector<16x32xf32>
    %574 = tpu.matmul %573, %572, %cst_380 {dimension_numbers = #tpu.dot_dimension_numbers<[1], [0], [0], [1], [0, 0, 1, 1], [], []>} : vector<16x64xbf16>, vector<64x32xbf16>, vector<16x32xf32> -> vector<16x32xf32>
    %575 = arith.addf %568, %574 : vector<16x32xf32>
    %c0_381 = arith.constant 0 : index
    %c0_382 = arith.constant 0 : index
    %576 = vector.load %arg52[%c0_381, %c0_382] : memref<1x32xf32, #tpu.memory_space<vmem>>, vector<1x32xf32>
    %577 = vector.broadcast %576 : vector<1x32xf32> to vector<16x32xf32>
    %578 = arith.addf %575, %577 : vector<16x32xf32>
    %cst_383 = arith.constant 2.000000e+01 : f32
    %579 = vector.broadcast %cst_383 : f32 to vector<16x32xf32>
    %580 = arith.cmpf ogt, %578, %579 : vector<16x32xf32>
    %cst_384 = arith.constant 2.000000e+01 : f32
    %581 = vector.broadcast %cst_384 : f32 to vector<16x32xf32>
    %582 = arith.minimumf %578, %581 : vector<16x32xf32>
    %583 = math.exp %582 : vector<16x32xf32>
    %584 = math.log1p %583 : vector<16x32xf32>
    %585 = arith.select %580, %578, %584 : vector<16x32xi1>, vector<16x32xf32>
    %586 = math.tanh %585 : vector<16x32xf32>
    %587 = arith.mulf %578, %586 : vector<16x32xf32>
    %cst_385 = arith.constant dense<0.000000e+00> : vector<32xf32>
    %588 = vector.multi_reduction <add>, %587, %cst_385 [0] : vector<16x32xf32> to vector<32xf32>
    %589 = vector.shape_cast %588 : vector<32xf32> to vector<1x32xf32>
    %cst_386 = arith.constant 1.600000e+01 : f32
    %590 = vector.broadcast %cst_386 : f32 to vector<1x32xf32>
    %591 = arith.divf %589, %590 : vector<1x32xf32>
    %592 = vector.broadcast %591 : vector<1x32xf32> to vector<16x32xf32>
    %593 = arith.subf %587, %592 : vector<16x32xf32>
    %594 = arith.mulf %593, %593 : vector<16x32xf32>
    %cst_387 = arith.constant dense<0.000000e+00> : vector<32xf32>
    %595 = vector.multi_reduction <add>, %594, %cst_387 [0] : vector<16x32xf32> to vector<32xf32>
    %596 = vector.shape_cast %595 : vector<32xf32> to vector<1x32xf32>
    %cst_388 = arith.constant 1.600000e+01 : f32
    %597 = vector.broadcast %cst_388 : f32 to vector<1x32xf32>
    %598 = arith.divf %596, %597 : vector<1x32xf32>
    %cst_389 = arith.constant 9.99999974E-6 : f32
    %599 = vector.broadcast %cst_389 : f32 to vector<1x32xf32>
    %600 = arith.addf %598, %599 : vector<1x32xf32>
    %601 = math.rsqrt %600 : vector<1x32xf32>
    %602 = vector.broadcast %601 : vector<1x32xf32> to vector<16x32xf32>
    %603 = arith.mulf %593, %602 : vector<16x32xf32>
    %c0_390 = arith.constant 0 : index
    %c0_391 = arith.constant 0 : index
    %604 = vector.load %arg56[%c0_390, %c0_391] : memref<1x32xf32, #tpu.memory_space<vmem>>, vector<1x32xf32>
    %605 = vector.broadcast %604 : vector<1x32xf32> to vector<16x32xf32>
    %606 = arith.mulf %603, %605 : vector<16x32xf32>
    %c0_392 = arith.constant 0 : index
    %c0_393 = arith.constant 0 : index
    %607 = vector.load %arg55[%c0_392, %c0_393] : memref<1x32xf32, #tpu.memory_space<vmem>>, vector<1x32xf32>
    %608 = vector.broadcast %607 : vector<1x32xf32> to vector<16x32xf32>
    %609 = arith.addf %606, %608 : vector<16x32xf32>
    %610 = arith.addf %609, %528 : vector<16x32xf32>
    %c0_394 = arith.constant 0 : index
    %c0_395 = arith.constant 0 : index
    %c0_396 = arith.constant 0 : index
    %611 = vector.load %arg60[%c0_394, %c0_395, %c0_396] : memref<3x16x16xbf16, #tpu.memory_space<vmem>>, vector<1x16x16xbf16>
    %612 = vector.shape_cast %611 : vector<1x16x16xbf16> to vector<16x16xbf16>
    %613 = arith.truncf %610 : vector<16x32xf32> to vector<16x32xbf16>
    %cst_397 = arith.constant dense<0.000000e+00> : vector<16x32xf32>
    %614 = tpu.matmul %612, %613, %cst_397 {dimension_numbers = #tpu.dot_dimension_numbers<[1], [0], [0], [1], [0, 0, 1, 1], [], []>} : vector<16x16xbf16>, vector<16x32xbf16>, vector<16x32xf32> -> vector<16x32xf32>
    %c0_398 = arith.constant 0 : index
    %c0_399 = arith.constant 0 : index
    %c0_400 = arith.constant 0 : index
    %615 = vector.load %arg66[%c0_398, %c0_399, %c0_400] : memref<3x32x32xbf16, #tpu.memory_space<vmem>>, vector<1x32x32xbf16>
    %616 = vector.shape_cast %615 : vector<1x32x32xbf16> to vector<32x32xbf16>
    %617 = arith.truncf %614 : vector<16x32xf32> to vector<16x32xbf16>
    %cst_401 = arith.constant dense<0.000000e+00> : vector<16x32xf32>
    %618 = tpu.matmul %617, %616, %cst_401 {dimension_numbers = #tpu.dot_dimension_numbers<[1], [0], [0], [1], [0, 0, 1, 1], [], []>} : vector<16x32xbf16>, vector<32x32xbf16>, vector<16x32xf32> -> vector<16x32xf32>
    %c1_402 = arith.constant 1 : index
    %c0_403 = arith.constant 0 : index
    %c0_404 = arith.constant 0 : index
    %619 = vector.load %arg60[%c1_402, %c0_403, %c0_404] : memref<3x16x16xbf16, #tpu.memory_space<vmem>>, vector<1x16x16xbf16>
    %620 = vector.shape_cast %619 : vector<1x16x16xbf16> to vector<16x16xbf16>
    %621 = arith.truncf %610 : vector<16x32xf32> to vector<16x32xbf16>
    %cst_405 = arith.constant dense<0.000000e+00> : vector<16x32xf32>
    %622 = tpu.matmul %620, %621, %cst_405 {dimension_numbers = #tpu.dot_dimension_numbers<[1], [0], [0], [1], [0, 0, 1, 1], [], []>} : vector<16x16xbf16>, vector<16x32xbf16>, vector<16x32xf32> -> vector<16x32xf32>
    %c1_406 = arith.constant 1 : index
    %c0_407 = arith.constant 0 : index
    %c0_408 = arith.constant 0 : index
    %623 = vector.load %arg66[%c1_406, %c0_407, %c0_408] : memref<3x32x32xbf16, #tpu.memory_space<vmem>>, vector<1x32x32xbf16>
    %624 = vector.shape_cast %623 : vector<1x32x32xbf16> to vector<32x32xbf16>
    %625 = arith.truncf %622 : vector<16x32xf32> to vector<16x32xbf16>
    %cst_409 = arith.constant dense<0.000000e+00> : vector<16x32xf32>
    %626 = tpu.matmul %625, %624, %cst_409 {dimension_numbers = #tpu.dot_dimension_numbers<[1], [0], [0], [1], [0, 0, 1, 1], [], []>} : vector<16x32xbf16>, vector<32x32xbf16>, vector<16x32xf32> -> vector<16x32xf32>
    %627 = arith.addf %618, %626 : vector<16x32xf32>
    %c2_410 = arith.constant 2 : index
    %c0_411 = arith.constant 0 : index
    %c0_412 = arith.constant 0 : index
    %628 = vector.load %arg60[%c2_410, %c0_411, %c0_412] : memref<3x16x16xbf16, #tpu.memory_space<vmem>>, vector<1x16x16xbf16>
    %629 = vector.shape_cast %628 : vector<1x16x16xbf16> to vector<16x16xbf16>
    %630 = arith.truncf %610 : vector<16x32xf32> to vector<16x32xbf16>
    %cst_413 = arith.constant dense<0.000000e+00> : vector<16x32xf32>
    %631 = tpu.matmul %629, %630, %cst_413 {dimension_numbers = #tpu.dot_dimension_numbers<[1], [0], [0], [1], [0, 0, 1, 1], [], []>} : vector<16x16xbf16>, vector<16x32xbf16>, vector<16x32xf32> -> vector<16x32xf32>
    %c2_414 = arith.constant 2 : index
    %c0_415 = arith.constant 0 : index
    %c0_416 = arith.constant 0 : index
    %632 = vector.load %arg66[%c2_414, %c0_415, %c0_416] : memref<3x32x32xbf16, #tpu.memory_space<vmem>>, vector<1x32x32xbf16>
    %633 = vector.shape_cast %632 : vector<1x32x32xbf16> to vector<32x32xbf16>
    %634 = arith.truncf %631 : vector<16x32xf32> to vector<16x32xbf16>
    %cst_417 = arith.constant dense<0.000000e+00> : vector<16x32xf32>
    %635 = tpu.matmul %634, %633, %cst_417 {dimension_numbers = #tpu.dot_dimension_numbers<[1], [0], [0], [1], [0, 0, 1, 1], [], []>} : vector<16x32xbf16>, vector<32x32xbf16>, vector<16x32xf32> -> vector<16x32xf32>
    %636 = arith.addf %627, %635 : vector<16x32xf32>
    %c0_418 = arith.constant 0 : index
    %c0_419 = arith.constant 0 : index
    %637 = vector.load %arg53[%c0_418, %c0_419] : memref<1x32xf32, #tpu.memory_space<vmem>>, vector<1x32xf32>
    %638 = vector.broadcast %637 : vector<1x32xf32> to vector<16x32xf32>
    %639 = arith.addf %636, %638 : vector<16x32xf32>
    %cst_420 = arith.constant 2.000000e+01 : f32
    %640 = vector.broadcast %cst_420 : f32 to vector<16x32xf32>
    %641 = arith.cmpf ogt, %639, %640 : vector<16x32xf32>
    %cst_421 = arith.constant 2.000000e+01 : f32
    %642 = vector.broadcast %cst_421 : f32 to vector<16x32xf32>
    %643 = arith.minimumf %639, %642 : vector<16x32xf32>
    %644 = math.exp %643 : vector<16x32xf32>
    %645 = math.log1p %644 : vector<16x32xf32>
    %646 = arith.select %641, %639, %645 : vector<16x32xi1>, vector<16x32xf32>
    %647 = math.tanh %646 : vector<16x32xf32>
    %648 = arith.mulf %639, %647 : vector<16x32xf32>
    %cst_422 = arith.constant dense<0.000000e+00> : vector<32xf32>
    %649 = vector.multi_reduction <add>, %648, %cst_422 [0] : vector<16x32xf32> to vector<32xf32>
    %650 = vector.shape_cast %649 : vector<32xf32> to vector<1x32xf32>
    %cst_423 = arith.constant 1.600000e+01 : f32
    %651 = vector.broadcast %cst_423 : f32 to vector<1x32xf32>
    %652 = arith.divf %650, %651 : vector<1x32xf32>
    %653 = vector.broadcast %652 : vector<1x32xf32> to vector<16x32xf32>
    %654 = arith.subf %648, %653 : vector<16x32xf32>
    %655 = arith.mulf %654, %654 : vector<16x32xf32>
    %cst_424 = arith.constant dense<0.000000e+00> : vector<32xf32>
    %656 = vector.multi_reduction <add>, %655, %cst_424 [0] : vector<16x32xf32> to vector<32xf32>
    %657 = vector.shape_cast %656 : vector<32xf32> to vector<1x32xf32>
    %cst_425 = arith.constant 1.600000e+01 : f32
    %658 = vector.broadcast %cst_425 : f32 to vector<1x32xf32>
    %659 = arith.divf %657, %658 : vector<1x32xf32>
    %cst_426 = arith.constant 9.99999974E-6 : f32
    %660 = vector.broadcast %cst_426 : f32 to vector<1x32xf32>
    %661 = arith.addf %659, %660 : vector<1x32xf32>
    %662 = math.rsqrt %661 : vector<1x32xf32>
    %663 = vector.broadcast %662 : vector<1x32xf32> to vector<16x32xf32>
    %664 = arith.mulf %654, %663 : vector<16x32xf32>
    %c0_427 = arith.constant 0 : index
    %c0_428 = arith.constant 0 : index
    %665 = vector.load %arg58[%c0_427, %c0_428] : memref<1x32xf32, #tpu.memory_space<vmem>>, vector<1x32xf32>
    %666 = vector.broadcast %665 : vector<1x32xf32> to vector<16x32xf32>
    %667 = arith.mulf %664, %666 : vector<16x32xf32>
    %c0_429 = arith.constant 0 : index
    %c0_430 = arith.constant 0 : index
    %668 = vector.load %arg57[%c0_429, %c0_430] : memref<1x32xf32, #tpu.memory_space<vmem>>, vector<1x32xf32>
    %669 = vector.broadcast %668 : vector<1x32xf32> to vector<16x32xf32>
    %670 = arith.addf %667, %669 : vector<16x32xf32>
    %c0_431 = arith.constant 0 : index
    %c0_432 = arith.constant 0 : index
    %c0_433 = arith.constant 0 : index
    %671 = vector.load %arg61[%c0_431, %c0_432, %c0_433] : memref<4x32x16xbf16, #tpu.memory_space<vmem>>, vector<1x32x16xbf16>
    %672 = vector.shape_cast %671 : vector<1x32x16xbf16> to vector<32x16xbf16>
    %673 = arith.truncf %670 : vector<16x32xf32> to vector<16x32xbf16>
    %cst_434 = arith.constant dense<0.000000e+00> : vector<32x32xf32>
    %674 = tpu.matmul %672, %673, %cst_434 {dimension_numbers = #tpu.dot_dimension_numbers<[1], [0], [0], [1], [0, 0, 1, 1], [], []>} : vector<32x16xbf16>, vector<16x32xbf16>, vector<32x32xf32> -> vector<32x32xf32>
    %c0_435 = arith.constant 0 : index
    %c0_436 = arith.constant 0 : index
    %c0_437 = arith.constant 0 : index
    %675 = vector.load %arg67[%c0_435, %c0_436, %c0_437] : memref<4x32x32xbf16, #tpu.memory_space<vmem>>, vector<1x32x32xbf16>
    %676 = vector.shape_cast %675 : vector<1x32x32xbf16> to vector<32x32xbf16>
    %677 = arith.truncf %674 : vector<32x32xf32> to vector<32x32xbf16>
    %cst_438 = arith.constant dense<0.000000e+00> : vector<32x32xf32>
    %678 = tpu.matmul %677, %676, %cst_438 {dimension_numbers = #tpu.dot_dimension_numbers<[1], [0], [0], [1], [0, 0, 1, 1], [], []>} : vector<32x32xbf16>, vector<32x32xbf16>, vector<32x32xf32> -> vector<32x32xf32>
    %c1_439 = arith.constant 1 : index
    %c0_440 = arith.constant 0 : index
    %c0_441 = arith.constant 0 : index
    %679 = vector.load %arg61[%c1_439, %c0_440, %c0_441] : memref<4x32x16xbf16, #tpu.memory_space<vmem>>, vector<1x32x16xbf16>
    %680 = vector.shape_cast %679 : vector<1x32x16xbf16> to vector<32x16xbf16>
    %681 = arith.truncf %670 : vector<16x32xf32> to vector<16x32xbf16>
    %cst_442 = arith.constant dense<0.000000e+00> : vector<32x32xf32>
    %682 = tpu.matmul %680, %681, %cst_442 {dimension_numbers = #tpu.dot_dimension_numbers<[1], [0], [0], [1], [0, 0, 1, 1], [], []>} : vector<32x16xbf16>, vector<16x32xbf16>, vector<32x32xf32> -> vector<32x32xf32>
    %c1_443 = arith.constant 1 : index
    %c0_444 = arith.constant 0 : index
    %c0_445 = arith.constant 0 : index
    %683 = vector.load %arg67[%c1_443, %c0_444, %c0_445] : memref<4x32x32xbf16, #tpu.memory_space<vmem>>, vector<1x32x32xbf16>
    %684 = vector.shape_cast %683 : vector<1x32x32xbf16> to vector<32x32xbf16>
    %685 = arith.truncf %682 : vector<32x32xf32> to vector<32x32xbf16>
    %cst_446 = arith.constant dense<0.000000e+00> : vector<32x32xf32>
    %686 = tpu.matmul %685, %684, %cst_446 {dimension_numbers = #tpu.dot_dimension_numbers<[1], [0], [0], [1], [0, 0, 1, 1], [], []>} : vector<32x32xbf16>, vector<32x32xbf16>, vector<32x32xf32> -> vector<32x32xf32>
    %687 = arith.addf %678, %686 : vector<32x32xf32>
    %c2_447 = arith.constant 2 : index
    %c0_448 = arith.constant 0 : index
    %c0_449 = arith.constant 0 : index
    %688 = vector.load %arg61[%c2_447, %c0_448, %c0_449] : memref<4x32x16xbf16, #tpu.memory_space<vmem>>, vector<1x32x16xbf16>
    %689 = vector.shape_cast %688 : vector<1x32x16xbf16> to vector<32x16xbf16>
    %690 = arith.truncf %670 : vector<16x32xf32> to vector<16x32xbf16>
    %cst_450 = arith.constant dense<0.000000e+00> : vector<32x32xf32>
    %691 = tpu.matmul %689, %690, %cst_450 {dimension_numbers = #tpu.dot_dimension_numbers<[1], [0], [0], [1], [0, 0, 1, 1], [], []>} : vector<32x16xbf16>, vector<16x32xbf16>, vector<32x32xf32> -> vector<32x32xf32>
    %c2_451 = arith.constant 2 : index
    %c0_452 = arith.constant 0 : index
    %c0_453 = arith.constant 0 : index
    %692 = vector.load %arg67[%c2_451, %c0_452, %c0_453] : memref<4x32x32xbf16, #tpu.memory_space<vmem>>, vector<1x32x32xbf16>
    %693 = vector.shape_cast %692 : vector<1x32x32xbf16> to vector<32x32xbf16>
    %694 = arith.truncf %691 : vector<32x32xf32> to vector<32x32xbf16>
    %cst_454 = arith.constant dense<0.000000e+00> : vector<32x32xf32>
    %695 = tpu.matmul %694, %693, %cst_454 {dimension_numbers = #tpu.dot_dimension_numbers<[1], [0], [0], [1], [0, 0, 1, 1], [], []>} : vector<32x32xbf16>, vector<32x32xbf16>, vector<32x32xf32> -> vector<32x32xf32>
    %696 = arith.addf %687, %695 : vector<32x32xf32>
    %c3_455 = arith.constant 3 : index
    %c0_456 = arith.constant 0 : index
    %c0_457 = arith.constant 0 : index
    %697 = vector.load %arg61[%c3_455, %c0_456, %c0_457] : memref<4x32x16xbf16, #tpu.memory_space<vmem>>, vector<1x32x16xbf16>
    %698 = vector.shape_cast %697 : vector<1x32x16xbf16> to vector<32x16xbf16>
    %699 = arith.truncf %670 : vector<16x32xf32> to vector<16x32xbf16>
    %cst_458 = arith.constant dense<0.000000e+00> : vector<32x32xf32>
    %700 = tpu.matmul %698, %699, %cst_458 {dimension_numbers = #tpu.dot_dimension_numbers<[1], [0], [0], [1], [0, 0, 1, 1], [], []>} : vector<32x16xbf16>, vector<16x32xbf16>, vector<32x32xf32> -> vector<32x32xf32>
    %c3_459 = arith.constant 3 : index
    %c0_460 = arith.constant 0 : index
    %c0_461 = arith.constant 0 : index
    %701 = vector.load %arg67[%c3_459, %c0_460, %c0_461] : memref<4x32x32xbf16, #tpu.memory_space<vmem>>, vector<1x32x32xbf16>
    %702 = vector.shape_cast %701 : vector<1x32x32xbf16> to vector<32x32xbf16>
    %703 = arith.truncf %700 : vector<32x32xf32> to vector<32x32xbf16>
    %cst_462 = arith.constant dense<0.000000e+00> : vector<32x32xf32>
    %704 = tpu.matmul %703, %702, %cst_462 {dimension_numbers = #tpu.dot_dimension_numbers<[1], [0], [0], [1], [0, 0, 1, 1], [], []>} : vector<32x32xbf16>, vector<32x32xbf16>, vector<32x32xf32> -> vector<32x32xf32>
    %705 = arith.addf %696, %704 : vector<32x32xf32>
    %c0_463 = arith.constant 0 : index
    %c0_464 = arith.constant 0 : index
    %706 = vector.load %arg54[%c0_463, %c0_464] : memref<1x32xf32, #tpu.memory_space<vmem>>, vector<1x32xf32>
    %707 = vector.broadcast %706 : vector<1x32xf32> to vector<32x32xf32>
    %708 = arith.addf %705, %707 : vector<32x32xf32>
    %c0_465 = arith.constant 0 : index
    %c0_466 = arith.constant 0 : index
    %709 = vector.load %arg31[%c0_465, %c0_466] : memref<32x24xbf16, #tpu.memory_space<vmem>>, vector<32x24xbf16>
    %710 = arith.truncf %708 : vector<32x32xf32> to vector<32x32xbf16>
    %cst_467 = arith.constant dense<0.000000e+00> : vector<32x24xf32>
    %711 = tpu.matmul %710, %709, %cst_467 {dimension_numbers = #tpu.dot_dimension_numbers<[1], [0], [0], [1], [0, 0, 1, 1], [], []>} : vector<32x32xbf16>, vector<32x24xbf16>, vector<32x24xf32> -> vector<32x24xf32>
    %c0_468 = arith.constant 0 : index
    %c0_469 = arith.constant 0 : index
    %712 = vector.load %arg30[%c0_468, %c0_469] : memref<1x24xf32, #tpu.memory_space<vmem>>, vector<1x24xf32>
    %713 = vector.broadcast %712 : vector<1x24xf32> to vector<32x24xf32>
    %714 = arith.addf %711, %713 : vector<32x24xf32>
    %c0_470 = arith.constant 0 : index
    %c0_471 = arith.constant 0 : index
    %715 = vector.load %arg69[%c0_470, %c0_471] : memref<32x24xf32, #tpu.memory_space<vmem>>, vector<32x24xf32>
    tpu.vector_store %arg69[%c0_470, %c0_471], %714 {strides = array<i32>} : memref<32x24xf32, #tpu.memory_space<vmem>>, vector<32x24xf32>,
    return
  }
}

</mosaic_0001>

<llo_original>
// kernel: _lambda_.1
$region0: #{_lambda_.1}
  #allocation0 [shape = 'u32[]', space=smem, size = 0x4, offset = 0x4, fixed_abs, tag = 'smem constant byte address 0x4 - core index']
  #allocation1 [shape = 'u32[144,128]{1,0:T(1,128)}', space=vmem, size = 0x12000, scoped, tag = 'internal scratch']
  %s0 = inlined_call_operand.smem [shape: u32[70], index: -1, kind: input, shape index: {}]
  %s1 = sld [smem:[%s0]]
  %s2 = scalar_lea.smem %s0, 1
  %s3 = sld [smem:[%s2]]
  %s4 = scalar_lea.smem %s0, 2
  %s5 = sld [smem:[%s4]]
  %s6 = scalar_lea.smem %s0, 3
  %s7 = sld [smem:[%s6]]
  %s8 = scalar_lea.smem %s0, 4
  %s9 = sld [smem:[%s8]]
  %s10 = scalar_lea.smem %s0, 5
  %s11 = sld [smem:[%s10]]
  %s12 = scalar_lea.smem %s0, 6
  %s13 = sld [smem:[%s12]]
  %s14 = scalar_lea.smem %s0, 7
  %s15 = sld [smem:[%s14]]
  %s16 = scalar_lea.smem %s0, 8
  %s17 = sld [smem:[%s16]]
  %s18 = scalar_lea.smem %s0, 9
  %s19 = sld [smem:[%s18]]
  %s20 = scalar_lea.smem %s0, 10
  %s21 = sld [smem:[%s20]]
  %s22 = scalar_lea.smem %s0, 11
  %s23 = sld [smem:[%s22]]
  %s24 = scalar_lea.smem %s0, 12
  %s25 = sld [smem:[%s24]]
  %s26 = scalar_lea.smem %s0, 13
  %s27 = sld [smem:[%s26]]
  %s28 = scalar_lea.smem %s0, 14
  %s29 = sld [smem:[%s28]]
  %s30 = scalar_lea.smem %s0, 15
  %s31 = sld [smem:[%s30]]
  %s32 = scalar_lea.smem %s0, 16
  %s33 = sld [smem:[%s32]]
  %s34 = scalar_lea.smem %s0, 17
  %s35 = sld [smem:[%s34]]
  %s36 = scalar_lea.smem %s0, 18
  %s37 = sld [smem:[%s36]]
  %s38 = scalar_lea.smem %s0, 19
  %s39 = sld [smem:[%s38]]
  %s40 = scalar_lea.smem %s0, 20
  %s41 = sld [smem:[%s40]]
  %s42 = scalar_lea.smem %s0, 21
  %s43 = sld [smem:[%s42]]
  %s44 = scalar_lea.smem %s0, 22
  %s45 = sld [smem:[%s44]]
  %s46 = scalar_lea.smem %s0, 23
  %s47 = sld [smem:[%s46]]
  %s48 = scalar_lea.smem %s0, 24
  %s49 = sld [smem:[%s48]]
  %s50 = scalar_lea.smem %s0, 25
  %s51 = sld [smem:[%s50]]
  %s52 = scalar_lea.smem %s0, 26
  %s53 = sld [smem:[%s52]]
  %s54 = scalar_lea.smem %s0, 27
  %s55 = sld [smem:[%s54]]
  %s56 = scalar_lea.smem %s0, 28
  %s57 = sld [smem:[%s56]]
  %s58 = scalar_lea.smem %s0, 29
  %s59 = sld [smem:[%s58]]
  %s60 = scalar_lea.smem %s0, 30
  %s61 = sld [smem:[%s60]]
  %s62 = scalar_lea.smem %s0, 31
  %s63 = sld [smem:[%s62]]
  %s64 = scalar_lea.smem %s0, 32
  %s65 = sld [smem:[%s64]]
  %s66 = scalar_lea.smem %s0, 33
  %s67 = sld [smem:[%s66]]
  %s68 = scalar_lea.smem %s0, 34
  %s69 = sld [smem:[%s68]]
  %s70 = scalar_lea.smem %s0, 35
  %s71 = sld [smem:[%s70]]
  %s72 = scalar_lea.smem %s0, 36
  %s73 = sld [smem:[%s72]]
  %s74 = scalar_lea.smem %s0, 37
  %s75 = sld [smem:[%s74]]
  %s76 = scalar_lea.smem %s0, 38
  %s77 = sld [smem:[%s76]]
  %s78 = scalar_lea.smem %s0, 39
  %s79 = sld [smem:[%s78]]
  %s80 = scalar_lea.smem %s0, 40
  %s81 = sld [smem:[%s80]]
  %s82 = scalar_lea.smem %s0, 41
  %s83 = sld [smem:[%s82]]
  %s84 = scalar_lea.smem %s0, 42
  %s85 = sld [smem:[%s84]]
  %s86 = scalar_lea.smem %s0, 43
  %s87 = sld [smem:[%s86]]
  %s88 = scalar_lea.smem %s0, 44
  %s89 = sld [smem:[%s88]]
  %s90 = scalar_lea.smem %s0, 45
  %s91 = sld [smem:[%s90]]
  %s92 = scalar_lea.smem %s0, 46
  %s93 = sld [smem:[%s92]]
  %s94 = scalar_lea.smem %s0, 47
  %s95 = sld [smem:[%s94]]
  %s96 = scalar_lea.smem %s0, 48
  %s97 = sld [smem:[%s96]]
  %s98 = scalar_lea.smem %s0, 49
  %s99 = sld [smem:[%s98]]
  %s100 = scalar_lea.smem %s0, 50
  %s101 = sld [smem:[%s100]]
  %s102 = scalar_lea.smem %s0, 51
  %s103 = sld [smem:[%s102]]
  %s104 = scalar_lea.smem %s0, 52
  %s105 = sld [smem:[%s104]]
  %s106 = scalar_lea.smem %s0, 53
  %s107 = sld [smem:[%s106]]
  %s108 = scalar_lea.smem %s0, 54
  %s109 = sld [smem:[%s108]]
  %s110 = scalar_lea.smem %s0, 55
  %s111 = sld [smem:[%s110]]
  %s112 = scalar_lea.smem %s0, 56
  %s113 = sld [smem:[%s112]]
  %s114 = scalar_lea.smem %s0, 57
  %s115 = sld [smem:[%s114]]
  %s116 = scalar_lea.smem %s0, 58
  %s117 = sld [smem:[%s116]]
  %s118 = scalar_lea.smem %s0, 59
  %s119 = sld [smem:[%s118]]
  %s120 = scalar_lea.smem %s0, 60
  %s121 = sld [smem:[%s120]]
  %s122 = scalar_lea.smem %s0, 61
  %s123 = sld [smem:[%s122]]
  %s124 = scalar_lea.smem %s0, 62
  %s125 = sld [smem:[%s124]]
  %s126 = scalar_lea.smem %s0, 63
  %s127 = sld [smem:[%s126]]
  %s128 = scalar_lea.smem %s0, 64
  %s129 = sld [smem:[%s128]]
  %s130 = scalar_lea.smem %s0, 65
  %s131 = sld [smem:[%s130]]
  %s132 = scalar_lea.smem %s0, 66
  %s133 = sld [smem:[%s132]]
  %s134 = scalar_lea.smem %s0, 67
  %s135 = sld [smem:[%s134]]
  %s136 = scalar_lea.smem %s0, 68
  %s137 = sld [smem:[%s136]]
  %s138 = scalar_lea.smem %s0, 69
  %s139 = sld [smem:[%s138]]
  %s140 = sld [smem:[#allocation0]]
  $region446: #{_lambda_.1} parent=0
    _
  %s142 = ssub.s32 1, %s140
  %s143 = scalar_select 0, %s142, %s140
  $region1: #{_lambda_.1} parent=0
    #allocation2 [shape = 'u8[512]{0}', space=vmem, size = 0x400, scoped, tag = 'input window, operand 0, single buffered']
    #allocation3 [shape = 's32[1]{0}', space=sflag, size = 0x4, scoped, tag = 'scoped memory for _lambda_.1']
    #allocation4 [shape = 's32[1]{0}', space=sflag, size = 0x4, scoped, tag = 'scoped memory for _lambda_.1']
    #allocation5 [shape = 'u8[24576]{0}', space=vmem, size = 0x6000, scoped, tag = 'input window, operand 1, single buffered']
    #allocation6 [shape = 's32[1]{0}', space=sflag, size = 0x4, scoped, tag = 'scoped memory for _lambda_.1']
    #allocation7 [shape = 'u8[30720]{0}', space=vmem, size = 0x7800, scoped, tag = 'input window, operand 2, single buffered']
    #allocation8 [shape = 'u8[512]{0}', space=vmem, size = 0x400, scoped, tag = 'input window, operand 4, single buffered']
    #allocation9 [shape = 's32[1]{0}', space=sflag, size = 0x4, scoped, tag = 'scoped memory for _lambda_.1']
    #allocation10 [shape = 'u8[512]{0}', space=vmem, size = 0x400, scoped, tag = 'input window, operand 5, single buffered']
    #allocation11 [shape = 'u8[12288]{0}', space=vmem, size = 0x3000, scoped, tag = 'input window, operand 10, single buffered']
    #allocation12 [shape = 's32[1]{0}', space=sflag, size = 0x4, scoped, tag = 'scoped memory for _lambda_.1']
    #allocation13 [shape = 'u8[512]{0}', space=vmem, size = 0x400, scoped, tag = 'input window, operand 12, single buffered']
    #allocation14 [shape = 'u8[8192]{0}', space=vmem, size = 0x2000, scoped, tag = 'input window, operand 13, single buffered']
    #allocation15 [shape = 's32[1]{0}', space=sflag, size = 0x4, scoped, tag = 'scoped memory for _lambda_.1']
    #allocation16 [shape = 'u8[24576]{0}', space=vmem, size = 0x6000, scoped, tag = 'input window, operand 14, single buffered']
    #allocation17 [shape = 'u8[49152]{0}', space=vmem, size = 0xc000, scoped, tag = 'input window, operand 15, single buffered']
    #allocation18 [shape = 's32[1]{0}', space=sflag, size = 0x4, scoped, tag = 'scoped memory for _lambda_.1']
    #allocation19 [shape = 'u8[4096]{0}', space=vmem, size = 0x1000, scoped, tag = 'input window, operand 16, single buffered']
    #allocation20 [shape = 'u8[512]{0}', space=vmem, size = 0x400, scoped, tag = 'input window, operand 17, single buffered']
    #allocation21 [shape = 's32[1]{0}', space=sflag, size = 0x4, scoped, tag = 'scoped memory for _lambda_.1']
    #allocation22 [shape = 'u8[512]{0}', space=vmem, size = 0x400, scoped, tag = 'input window, operand 18, single buffered']
    #allocation23 [shape = 'u8[6144]{0}', space=vmem, size = 0x1800, scoped, tag = 'input window, operand 23, single buffered']
    #allocation24 [shape = 's32[1]{0}', space=sflag, size = 0x4, scoped, tag = 'scoped memory for _lambda_.1']
    #allocation25 [shape = 'u8[512]{0}', space=vmem, size = 0x400, scoped, tag = 'input window, operand 25, single buffered']
    #allocation26 [shape = 'u8[8192]{0}', space=vmem, size = 0x2000, scoped, tag = 'input window, operand 26, single buffered']
    #allocation27 [shape = 's32[1]{0}', space=sflag, size = 0x4, scoped, tag = 'scoped memory for _lambda_.1']
    #allocation28 [shape = 'u8[49152]{0}', space=vmem, size = 0xc000, scoped, tag = 'input window, operand 27, single buffered']
    #allocation29 [shape = 'u8[98304]{0}', space=vmem, size = 0x18000, scoped, tag = 'input window, operand 28, single buffered']
    #allocation30 [shape = 's32[1]{0}', space=sflag, size = 0x4, scoped, tag = 'scoped memory for _lambda_.1']
    #allocation31 [shape = 'u8[512]{0}', space=vmem, size = 0x400, scoped, tag = 'input window, operand 30, single buffered']
    #allocation32 [shape = 'u8[8192]{0}', space=vmem, size = 0x2000, scoped, tag = 'input window, operand 31, single buffered']
    #allocation33 [shape = 's32[1]{0}', space=sflag, size = 0x4, scoped, tag = 'scoped memory for _lambda_.1']
    #allocation34 [shape = 'u8[512]{0}', space=vmem, size = 0x400, scoped, tag = 'input window, operand 32, single buffered']
    #allocation35 [shape = 'u8[8192]{0}', space=vmem, size = 0x2000, scoped, tag = 'input window, operand 33, single buffered']
    #allocation36 [shape = 's32[1]{0}', space=sflag, size = 0x4, scoped, tag = 'scoped memory for _lambda_.1']
    #allocation37 [shape = 'u8[4096]{0}', space=vmem, size = 0x1000, scoped, tag = 'input window, operand 34, single buffered']
    #allocation38 [shape = 'u8[512]{0}', space=vmem, size = 0x400, scoped, tag = 'input window, operand 35, single buffered']
    #allocation39 [shape = 's32[1]{0}', space=sflag, size = 0x4, scoped, tag = 'scoped memory for _lambda_.1']
    #allocation40 [shape = 'u8[512]{0}', space=vmem, size = 0x400, scoped, tag = 'input window, operand 36, single buffered']
    #allocation41 [shape = 'u8[512]{0}', space=vmem, size = 0x400, scoped, tag = 'input window, operand 37, single buffered']
    #allocation42 [shape = 's32[1]{0}', space=sflag, size = 0x4, scoped, tag = 'scoped memory for _lambda_.1']
    #allocation43 [shape = 'u8[16384]{0}', space=vmem, size = 0x4000, scoped, tag = 'input window, operand 44, single buffered']
    #allocation44 [shape = 'u8[512]{0}', space=vmem, size = 0x400, scoped, tag = 'input window, operand 45, single buffered']
    #allocation45 [shape = 's32[1]{0}', space=sflag, size = 0x4, scoped, tag = 'scoped memory for _lambda_.1']
    #allocation46 [shape = 'u8[8192]{0}', space=vmem, size = 0x2000, scoped, tag = 'input window, operand 46, single buffered']
    #allocation47 [shape = 'u8[49152]{0}', space=vmem, size = 0xc000, scoped, tag = 'input window, operand 49, single buffered']
    #allocation48 [shape = 's32[1]{0}', space=sflag, size = 0x4, scoped, tag = 'scoped memory for _lambda_.1']
    #allocation49 [shape = 'u8[512]{0}', space=vmem, size = 0x400, scoped, tag = 'input window, operand 52, single buffered']
    #allocation50 [shape = 'u8[512]{0}', space=vmem, size = 0x400, scoped, tag = 'input window, operand 53, single buffered']
    #allocation51 [shape = 's32[1]{0}', space=sflag, size = 0x4, scoped, tag = 'scoped memory for _lambda_.1']
    #allocation52 [shape = 'u8[512]{0}', space=vmem, size = 0x400, scoped, tag = 'input window, operand 54, single buffered']
    #allocation53 [shape = 'u8[32768]{0}', space=vmem, size = 0x8000, scoped, tag = 'input window, operand 61, single buffered']
    #allocation54 [shape = 's32[1]{0}', space=sflag, size = 0x4, scoped, tag = 'scoped memory for _lambda_.1']
    #allocation55 [shape = 'u8[512]{0}', space=vmem, size = 0x400, scoped, tag = 'input window, operand 62, single buffered']
    #allocation56 [shape = 'u8[8192]{0}', space=vmem, size = 0x2000, scoped, tag = 'input window, operand 63, single buffered']
    #allocation57 [shape = 's32[1]{0}', space=sflag, size = 0x4, scoped, tag = 'scoped memory for _lambda_.1']
    #allocation58 [shape = 'u8[49152]{0}', space=vmem, size = 0xc000, scoped, tag = 'input window, operand 64, single buffered']
    #allocation59 [shape = 'u8[49152]{0}', space=vmem, size = 0xc000, scoped, tag = 'input window, operand 65, single buffered']
    #allocation60 [shape = 's32[1]{0}', space=sflag, size = 0x4, scoped, tag = 'scoped memory for _lambda_.1']
    #allocation61 [shape = 'u8[24576]{0}', space=vmem, size = 0x6000, scoped, tag = 'input window, operand 66, single buffered']
    #allocation62 [shape = 'u8[32768]{0}', space=vmem, size = 0x8000, scoped, tag = 'input window, operand 67, single buffered']
    #allocation63 [shape = 's32[1]{0}', space=sflag, size = 0x4, scoped, tag = 'scoped memory for _lambda_.1']
    #allocation64 [shape = 'u8[16384]{0}', space=vmem, size = 0x4000, scoped, tag = 'output window, operand 0, single buffered']
    %144 = vsyncpa [#allocation3], 0
    %145 = vsyncpa [#allocation6], 0
    %146 = vsyncpa [#allocation9], 0
    %147 = vsyncpa [#allocation12], 0
    %148 = vsyncpa [#allocation15], 0
    %149 = vsyncpa [#allocation18], 0
    %150 = vsyncpa [#allocation21], 0
    %151 = vsyncpa [#allocation24], 0
    %152 = vsyncpa [#allocation27], 0
    %153 = vsyncpa [#allocation30], 0
    %154 = vsyncpa [#allocation33], 0
    %155 = vsyncpa [#allocation36], 0
    %156 = vsyncpa [#allocation39], 0
    %157 = vsyncpa [#allocation42], 0
    %158 = vsyncpa [#allocation45], 0
    %159 = vsyncpa [#allocation48], 0
    %160 = vsyncpa [#allocation51], 0
    %161 = vsyncpa [#allocation54], 0
    %162 = vsyncpa [#allocation57], 0
    %163 = vsyncpa [#allocation60], 0
    %164 = vsyncpa [#allocation63], 0
    %165 = vsyncpa [#allocation4], 0
    // Predicated region
    $region2: #{_lambda_.1} parent=1 // pred_check
      _
    $region3: #{_lambda_.1} parent=1 // pred_check_branch
      %167 = sbr.rel (0) target = $region5
    $region4: #{_lambda_.1} parent=1 // pred_region
      %s169 = ssub.s32 16, 16
      %170 = vsyncadd [#allocation3], %s169
      %s172 = sshll.u32 [#allocation2], 4
      %s173 = int_to_ptr.vmem [resolvable:$true] %s172
      %175 = dma.hbm_to_vmem [thread:$0]  %s1, 16, %s173, [#allocation3]
    $region5: #{_lambda_.1} parent=1 // pred_fallthru
      _
    // Predicated region
    $region6: #{_lambda_.1} parent=1 // pred_check
      _
    $region7: #{_lambda_.1} parent=1 // pred_check_branch
      %177 = sbr.rel (0) target = $region9
    $region8: #{_lambda_.1} parent=1 // pred_region
      %s179 = ssub.s32 768, 768
      %180 = vsyncadd [#allocation6], %s179
      %s181 = sshll.u32 [#allocation5], 4
      %s182 = int_to_ptr.vmem [resolvable:$true] %s181
      %187 = dma.hbm_to_vmem [thread:$0]  %s3, 768, %s182, [#allocation6], 64, 64, 4
    $region9: #{_lambda_.1} parent=1 // pred_fallthru
      _
    // Predicated region
    $region10: #{_lambda_.1} parent=1 // pred_check
      _
    $region11: #{_lambda_.1} parent=1 // pred_check_branch
      %189 = sbr.rel (0) target = $region13
    $region12: #{_lambda_.1} parent=1 // pred_region
      %s191 = ssub.s32 960, 960
      %192 = vsyncadd [#allocation6], %s191
      %s193 = sshll.u32 [#allocation7], 4
      %s194 = int_to_ptr.vmem [resolvable:$true] %s193
      %199 = dma.hbm_to_vmem [thread:$0]  %s5, 960, %s194, [#allocation6], 64, 64, 4
    $region13: #{_lambda_.1} parent=1 // pred_fallthru
      _
    // Predicated region
    $region14: #{_lambda_.1} parent=1 // pred_check
      _
    $region15: #{_lambda_.1} parent=1 // pred_check_branch
      %201 = sbr.rel (0) target = $region17
    $region16: #{_lambda_.1} parent=1 // pred_region
      _
    $region17: #{_lambda_.1} parent=1 // pred_fallthru
      _
    // Predicated region
    $region18: #{_lambda_.1} parent=1 // pred_check
      _
    $region19: #{_lambda_.1} parent=1 // pred_check_branch
      %203 = sbr.rel (0) target = $region21
    $region20: #{_lambda_.1} parent=1 // pred_region
      %s205 = ssub.s32 16, 16
      %206 = vsyncadd [#allocation9], %s205
      %s208 = sshll.u32 [#allocation8], 4
      %s209 = int_to_ptr.vmem [resolvable:$true] %s208
      %211 = dma.hbm_to_vmem [thread:$0]  %s9, 16, %s209, [#allocation9]
    $region21: #{_lambda_.1} parent=1 // pred_fallthru
      _
    // Predicated region
    $region22: #{_lambda_.1} parent=1 // pred_check
      _
    $region23: #{_lambda_.1} parent=1 // pred_check_branch
      %213 = sbr.rel (0) target = $region25
    $region24: #{_lambda_.1} parent=1 // pred_region
      %s215 = ssub.s32 16, 16
      %216 = vsyncadd [#allocation9], %s215
      %s218 = sshll.u32 [#allocation10], 4
      %s219 = int_to_ptr.vmem [resolvable:$true] %s218
      %221 = dma.hbm_to_vmem [thread:$0]  %s11, 16, %s219, [#allocation9]
    $region25: #{_lambda_.1} parent=1 // pred_fallthru
      _
    // Predicated region
    $region26: #{_lambda_.1} parent=1 // pred_check
      _
    $region27: #{_lambda_.1} parent=1 // pred_check_branch
      %223 = sbr.rel (0) target = $region29
    $region28: #{_lambda_.1} parent=1 // pred_region
      _
    $region29: #{_lambda_.1} parent=1 // pred_fallthru
      _
    // Predicated region
    $region30: #{_lambda_.1} parent=1 // pred_check
      _
    $region31: #{_lambda_.1} parent=1 // pred_check_branch
      %225 = sbr.rel (0) target = $region33
    $region32: #{_lambda_.1} parent=1 // pred_region
      _
    $region33: #{_lambda_.1} parent=1 // pred_fallthru
      _
    // Predicated region
    $region34: #{_lambda_.1} parent=1 // pred_check
      _
    $region35: #{_lambda_.1} parent=1 // pred_check_branch
      %227 = sbr.rel (0) target = $region37
    $region36: #{_lambda_.1} parent=1 // pred_region
      _
    $region37: #{_lambda_.1} parent=1 // pred_fallthru
      _
    // Predicated region
    $region38: #{_lambda_.1} parent=1 // pred_check
      _
    $region39: #{_lambda_.1} parent=1 // pred_check_branch
      %229 = sbr.rel (0) target = $region41
    $region40: #{_lambda_.1} parent=1 // pred_region
      _
    $region41: #{_lambda_.1} parent=1 // pred_fallthru
      _
    // Predicated region
    $region42: #{_lambda_.1} parent=1 // pred_check
      _
    $region43: #{_lambda_.1} parent=1 // pred_check_branch
      %231 = sbr.rel (0) target = $region45
    $region44: #{_lambda_.1} parent=1 // pred_region
      %s233 = ssub.s32 384, 384
      %234 = vsyncadd [#allocation12], %s233
      %s235 = sshll.u32 [#allocation11], 4
      %s236 = int_to_ptr.vmem [resolvable:$true] %s235
      %241 = dma.hbm_to_vmem [thread:$0]  %s21, 384, %s236, [#allocation12], 64, 64, 4
    $region45: #{_lambda_.1} parent=1 // pred_fallthru
      _
    // Predicated region
    $region46: #{_lambda_.1} parent=1 // pred_check
      _
    $region47: #{_lambda_.1} parent=1 // pred_check_branch
      %243 = sbr.rel (0) target = $region49
    $region48: #{_lambda_.1} parent=1 // pred_region
      _
    $region49: #{_lambda_.1} parent=1 // pred_fallthru
      _
    // Predicated region
    $region50: #{_lambda_.1} parent=1 // pred_check
      _
    $region51: #{_lambda_.1} parent=1 // pred_check_branch
      %245 = sbr.rel (0) target = $region53
    $region52: #{_lambda_.1} parent=1 // pred_region
      %s247 = ssub.s32 16, 16
      %248 = vsyncadd [#allocation12], %s247
      %s250 = sshll.u32 [#allocation13], 4
      %s251 = int_to_ptr.vmem [resolvable:$true] %s250
      %253 = dma.hbm_to_vmem [thread:$0]  %s25, 16, %s251, [#allocation12]
    $region53: #{_lambda_.1} parent=1 // pred_fallthru
      _
    // Predicated region
    $region54: #{_lambda_.1} parent=1 // pred_check
      _
    $region55: #{_lambda_.1} parent=1 // pred_check_branch
      %255 = sbr.rel (0) target = $region57
    $region56: #{_lambda_.1} parent=1 // pred_region
      %s257 = ssub.s32 256, 256
      %258 = vsyncadd [#allocation15], %s257
      %s259 = sshll.u32 [#allocation14], 4
      %s260 = int_to_ptr.vmem [resolvable:$true] %s259
      %265 = dma.hbm_to_vmem [thread:$0]  %s27, 256, %s260, [#allocation15], 64, 64, 4
    $region57: #{_lambda_.1} parent=1 // pred_fallthru
      _
    // Predicated region
    $region58: #{_lambda_.1} parent=1 // pred_check
      _
    $region59: #{_lambda_.1} parent=1 // pred_check_branch
      %267 = sbr.rel (0) target = $region61
    $region60: #{_lambda_.1} parent=1 // pred_region
      %s269 = ssub.s32 768, 768
      %270 = vsyncadd [#allocation15], %s269
      %s271 = sshll.u32 [#allocation16], 4
      %s272 = int_to_ptr.vmem [resolvable:$true] %s271
      %277 = dma.hbm_to_vmem [thread:$0]  %s29, 768, %s272, [#allocation15], 64, 64, 4
    $region61: #{_lambda_.1} parent=1 // pred_fallthru
      _
    // Predicated region
    $region62: #{_lambda_.1} parent=1 // pred_check
      _
    $region63: #{_lambda_.1} parent=1 // pred_check_branch
      %279 = sbr.rel (0) target = $region65
    $region64: #{_lambda_.1} parent=1 // pred_region
      %s281 = ssub.s32 1536, 1536
      %282 = vsyncadd [#allocation18], %s281
      %s283 = sshll.u32 [#allocation17], 4
      %s284 = int_to_ptr.vmem [resolvable:$true] %s283
      %289 = dma.hbm_to_vmem [thread:$0]  %s31, 1536, %s284, [#allocation18], 64, 64, 4
    $region65: #{_lambda_.1} parent=1 // pred_fallthru
      _
    // Predicated region
    $region66: #{_lambda_.1} parent=1 // pred_check
      _
    $region67: #{_lambda_.1} parent=1 // pred_check_branch
      %291 = sbr.rel (0) target = $region69
    $region68: #{_lambda_.1} parent=1 // pred_region
      %s293 = ssub.s32 128, 128
      %294 = vsyncadd [#allocation18], %s293
      %s296 = sshll.u32 [#allocation19], 4
      %s297 = int_to_ptr.vmem [resolvable:$true] %s296
      %299 = dma.hbm_to_vmem [thread:$0]  %s33, 128, %s297, [#allocation18]
    $region69: #{_lambda_.1} parent=1 // pred_fallthru
      _
    // Predicated region
    $region70: #{_lambda_.1} parent=1 // pred_check
      _
    $region71: #{_lambda_.1} parent=1 // pred_check_branch
      %301 = sbr.rel (0) target = $region73
    $region72: #{_lambda_.1} parent=1 // pred_region
      %s303 = ssub.s32 16, 16
      %304 = vsyncadd [#allocation21], %s303
      %s306 = sshll.u32 [#allocation20], 4
      %s307 = int_to_ptr.vmem [resolvable:$true] %s306
      %309 = dma.hbm_to_vmem [thread:$0]  %s35, 16, %s307, [#allocation21]
    $region73: #{_lambda_.1} parent=1 // pred_fallthru
      _
    // Predicated region
    $region74: #{_lambda_.1} parent=1 // pred_check
      _
    $region75: #{_lambda_.1} parent=1 // pred_check_branch
      %311 = sbr.rel (0) target = $region77
    $region76: #{_lambda_.1} parent=1 // pred_region
      %s313 = ssub.s32 16, 16
      %314 = vsyncadd [#allocation21], %s313
      %s316 = sshll.u32 [#allocation22], 4
      %s317 = int_to_ptr.vmem [resolvable:$true] %s316
      %319 = dma.hbm_to_vmem [thread:$0]  %s37, 16, %s317, [#allocation21]
    $region77: #{_lambda_.1} parent=1 // pred_fallthru
      _
    // Predicated region
    $region78: #{_lambda_.1} parent=1 // pred_check
      _
    $region79: #{_lambda_.1} parent=1 // pred_check_branch
      %321 = sbr.rel (0) target = $region81
    $region80: #{_lambda_.1} parent=1 // pred_region
      _
    $region81: #{_lambda_.1} parent=1 // pred_fallthru
      _
    // Predicated region
    $region82: #{_lambda_.1} parent=1 // pred_check
      _
    $region83: #{_lambda_.1} parent=1 // pred_check_branch
      %323 = sbr.rel (0) target = $region85
    $region84: #{_lambda_.1} parent=1 // pred_region
      _
    $region85: #{_lambda_.1} parent=1 // pred_fallthru
      _
    // Predicated region
    $region86: #{_lambda_.1} parent=1 // pred_check
      _
    $region87: #{_lambda_.1} parent=1 // pred_check_branch
      %325 = sbr.rel (0) target = $region89
    $region88: #{_lambda_.1} parent=1 // pred_region
      _
    $region89: #{_lambda_.1} parent=1 // pred_fallthru
      _
    // Predicated region
    $region90: #{_lambda_.1} parent=1 // pred_check
      _
    $region91: #{_lambda_.1} parent=1 // pred_check_branch
      %327 = sbr.rel (0) target = $region93
    $region92: #{_lambda_.1} parent=1 // pred_region
      _
    $region93: #{_lambda_.1} parent=1 // pred_fallthru
      _
    // Predicated region
    $region94: #{_lambda_.1} parent=1 // pred_check
      _
    $region95: #{_lambda_.1} parent=1 // pred_check_branch
      %329 = sbr.rel (0) target = $region97
    $region96: #{_lambda_.1} parent=1 // pred_region
      %s331 = ssub.s32 192, 192
      %332 = vsyncadd [#allocation24], %s331
      %s333 = sshll.u32 [#allocation23], 4
      %s334 = int_to_ptr.vmem [resolvable:$true] %s333
      %339 = dma.hbm_to_vmem [thread:$0]  %s47, 192, %s334, [#allocation24], 64, 64, 4
    $region97: #{_lambda_.1} parent=1 // pred_fallthru
      _
    // Predicated region
    $region98: #{_lambda_.1} parent=1 // pred_check
      _
    $region99: #{_lambda_.1} parent=1 // pred_check_branch
      %341 = sbr.rel (0) target = $region101
    $region100: #{_lambda_.1} parent=1 // pred_region
      _
    $region101: #{_lambda_.1} parent=1 // pred_fallthru
      _
    // Predicated region
    $region102: #{_lambda_.1} parent=1 // pred_check
      _
    $region103: #{_lambda_.1} parent=1 // pred_check_branch
      %343 = sbr.rel (0) target = $region105
    $region104: #{_lambda_.1} parent=1 // pred_region
      %s345 = ssub.s32 16, 16
      %346 = vsyncadd [#allocation24], %s345
      %s348 = sshll.u32 [#allocation25], 4
      %s349 = int_to_ptr.vmem [resolvable:$true] %s348
      %351 = dma.hbm_to_vmem [thread:$0]  %s51, 16, %s349, [#allocation24]
    $region105: #{_lambda_.1} parent=1 // pred_fallthru
      _
    // Predicated region
    $region106: #{_lambda_.1} parent=1 // pred_check
      _
    $region107: #{_lambda_.1} parent=1 // pred_check_branch
      %353 = sbr.rel (0) target = $region109
    $region108: #{_lambda_.1} parent=1 // pred_region
      %s355 = ssub.s32 256, 256
      %356 = vsyncadd [#allocation27], %s355
      %s357 = sshll.u32 [#allocation26], 4
      %s358 = int_to_ptr.vmem [resolvable:$true] %s357
      %363 = dma.hbm_to_vmem [thread:$0]  %s53, 256, %s358, [#allocation27], 64, 64, 4
    $region109: #{_lambda_.1} parent=1 // pred_fallthru
      _
    // Predicated region
    $region110: #{_lambda_.1} parent=1 // pred_check
      _
    $region111: #{_lambda_.1} parent=1 // pred_check_branch
      %365 = sbr.rel (0) target = $region113
    $region112: #{_lambda_.1} parent=1 // pred_region
      %s367 = ssub.s32 1536, 1536
      %368 = vsyncadd [#allocation27], %s367
      %s369 = sshll.u32 [#allocation28], 4
      %s370 = int_to_ptr.vmem [resolvable:$true] %s369
      %375 = dma.hbm_to_vmem [thread:$0]  %s55, 1536, %s370, [#allocation27], 64, 64, 4
    $region113: #{_lambda_.1} parent=1 // pred_fallthru
      _
    // Predicated region
    $region114: #{_lambda_.1} parent=1 // pred_check
      _
    $region115: #{_lambda_.1} parent=1 // pred_check_branch
      %377 = sbr.rel (0) target = $region117
    $region116: #{_lambda_.1} parent=1 // pred_region
      %s379 = ssub.s32 3072, 3072
      %380 = vsyncadd [#allocation30], %s379
      %s381 = sshll.u32 [#allocation29], 4
      %s382 = int_to_ptr.vmem [resolvable:$true] %s381
      %387 = dma.hbm_to_vmem [thread:$0]  %s57, 3072, %s382, [#allocation30], 64, 64, 4
    $region117: #{_lambda_.1} parent=1 // pred_fallthru
      _
    // Predicated region
    $region118: #{_lambda_.1} parent=1 // pred_check
      _
    $region119: #{_lambda_.1} parent=1 // pred_check_branch
      %389 = sbr.rel (0) target = $region121
    $region120: #{_lambda_.1} parent=1 // pred_region
      _
    $region121: #{_lambda_.1} parent=1 // pred_fallthru
      _
    // Predicated region
    $region122: #{_lambda_.1} parent=1 // pred_check
      _
    $region123: #{_lambda_.1} parent=1 // pred_check_branch
      %391 = sbr.rel (0) target = $region125
    $region124: #{_lambda_.1} parent=1 // pred_region
      %s393 = ssub.s32 16, 16
      %394 = vsyncadd [#allocation30], %s393
      %s396 = sshll.u32 [#allocation31], 4
      %s397 = int_to_ptr.vmem [resolvable:$true] %s396
      %399 = dma.hbm_to_vmem [thread:$0]  %s61, 16, %s397, [#allocation30]
    $region125: #{_lambda_.1} parent=1 // pred_fallthru
      _
    // Predicated region
    $region126: #{_lambda_.1} parent=1 // pred_check
      _
    $region127: #{_lambda_.1} parent=1 // pred_check_branch
      %401 = sbr.rel (0) target = $region129
    $region128: #{_lambda_.1} parent=1 // pred_region
      %s403 = ssub.s32 256, 256
      %404 = vsyncadd [#allocation33], %s403
      %s405 = sshll.u32 [#allocation32], 4
      %s406 = int_to_ptr.vmem [resolvable:$true] %s405
      %411 = dma.hbm_to_vmem [thread:$0]  %s63, 256, %s406, [#allocation33], 64, 64, 4
    $region129: #{_lambda_.1} parent=1 // pred_fallthru
      _
    // Predicated region
    $region130: #{_lambda_.1} parent=1 // pred_check
      _
    $region131: #{_lambda_.1} parent=1 // pred_check_branch
      %413 = sbr.rel (0) target = $region133
    $region132: #{_lambda_.1} parent=1 // pred_region
      %s415 = ssub.s32 16, 16
      %416 = vsyncadd [#allocation33], %s415
      %s418 = sshll.u32 [#allocation34], 4
      %s419 = int_to_ptr.vmem [resolvable:$true] %s418
      %421 = dma.hbm_to_vmem [thread:$0]  %s65, 16, %s419, [#allocation33]
    $region133: #{_lambda_.1} parent=1 // pred_fallthru
      _
    // Predicated region
    $region134: #{_lambda_.1} parent=1 // pred_check
      _
    $region135: #{_lambda_.1} parent=1 // pred_check_branch
      %423 = sbr.rel (0) target = $region137
    $region136: #{_lambda_.1} parent=1 // pred_region
      %s425 = ssub.s32 256, 256
      %426 = vsyncadd [#allocation36], %s425
      %s427 = sshll.u32 [#allocation35], 4
      %s428 = int_to_ptr.vmem [resolvable:$true] %s427
      %433 = dma.hbm_to_vmem [thread:$0]  %s67, 256, %s428, [#allocation36], 64, 64, 4
    $region137: #{_lambda_.1} parent=1 // pred_fallthru
      _
    // Predicated region
    $region138: #{_lambda_.1} parent=1 // pred_check
      _
    $region139: #{_lambda_.1} parent=1 // pred_check_branch
      %435 = sbr.rel (0) target = $region141
    $region140: #{_lambda_.1} parent=1 // pred_region
      %s437 = ssub.s32 128, 128
      %438 = vsyncadd [#allocation36], %s437
      %s440 = sshll.u32 [#allocation37], 4
      %s441 = int_to_ptr.vmem [resolvable:$true] %s440
      %443 = dma.hbm_to_vmem [thread:$0]  %s69, 128, %s441, [#allocation36]
    $region141: #{_lambda_.1} parent=1 // pred_fallthru
      _
    // Predicated region
    $region142: #{_lambda_.1} parent=1 // pred_check
      _
    $region143: #{_lambda_.1} parent=1 // pred_check_branch
      %445 = sbr.rel (0) target = $region145
    $region144: #{_lambda_.1} parent=1 // pred_region
      %s447 = ssub.s32 16, 16
      %448 = vsyncadd [#allocation39], %s447
      %s450 = sshll.u32 [#allocation38], 4
      %s451 = int_to_ptr.vmem [resolvable:$true] %s450
      %453 = dma.hbm_to_vmem [thread:$0]  %s71, 16, %s451, [#allocation39]
    $region145: #{_lambda_.1} parent=1 // pred_fallthru
      _
    // Predicated region
    $region146: #{_lambda_.1} parent=1 // pred_check
      _
    $region147: #{_lambda_.1} parent=1 // pred_check_branch
      %455 = sbr.rel (0) target = $region149
    $region148: #{_lambda_.1} parent=1 // pred_region
      %s457 = ssub.s32 16, 16
      %458 = vsyncadd [#allocation39], %s457
      %s460 = sshll.u32 [#allocation40], 4
      %s461 = int_to_ptr.vmem [resolvable:$true] %s460
      %463 = dma.hbm_to_vmem [thread:$0]  %s73, 16, %s461, [#allocation39]
    $region149: #{_lambda_.1} parent=1 // pred_fallthru
      _
    // Predicated region
    $region150: #{_lambda_.1} parent=1 // pred_check
      _
    $region151: #{_lambda_.1} parent=1 // pred_check_branch
      %465 = sbr.rel (0) target = $region153
    $region152: #{_lambda_.1} parent=1 // pred_region
      %s467 = ssub.s32 16, 16
      %468 = vsyncadd [#allocation42], %s467
      %s470 = sshll.u32 [#allocation41], 4
      %s471 = int_to_ptr.vmem [resolvable:$true] %s470
      %473 = dma.hbm_to_vmem [thread:$0]  %s75, 16, %s471, [#allocation42]
    $region153: #{_lambda_.1} parent=1 // pred_fallthru
      _
    // Predicated region
    $region154: #{_lambda_.1} parent=1 // pred_check
      _
    $region155: #{_lambda_.1} parent=1 // pred_check_branch
      %475 = sbr.rel (0) target = $region157
    $region156: #{_lambda_.1} parent=1 // pred_region
      _
    $region157: #{_lambda_.1} parent=1 // pred_fallthru
      _
    // Predicated region
    $region158: #{_lambda_.1} parent=1 // pred_check
      _
    $region159: #{_lambda_.1} parent=1 // pred_check_branch
      %477 = sbr.rel (0) target = $region161
    $region160: #{_lambda_.1} parent=1 // pred_region
      _
    $region161: #{_lambda_.1} parent=1 // pred_fallthru
      _
    // Predicated region
    $region162: #{_lambda_.1} parent=1 // pred_check
      _
    $region163: #{_lambda_.1} parent=1 // pred_check_branch
      %479 = sbr.rel (0) target = $region165
    $region164: #{_lambda_.1} parent=1 // pred_region
      _
    $region165: #{_lambda_.1} parent=1 // pred_fallthru
      _
    // Predicated region
    $region166: #{_lambda_.1} parent=1 // pred_check
      _
    $region167: #{_lambda_.1} parent=1 // pred_check_branch
      %481 = sbr.rel (0) target = $region169
    $region168: #{_lambda_.1} parent=1 // pred_region
      _
    $region169: #{_lambda_.1} parent=1 // pred_fallthru
      _
    // Predicated region
    $region170: #{_lambda_.1} parent=1 // pred_check
      _
    $region171: #{_lambda_.1} parent=1 // pred_check_branch
      %483 = sbr.rel (0) target = $region173
    $region172: #{_lambda_.1} parent=1 // pred_region
      _
    $region173: #{_lambda_.1} parent=1 // pred_fallthru
      _
    // Predicated region
    $region174: #{_lambda_.1} parent=1 // pred_check
      _
    $region175: #{_lambda_.1} parent=1 // pred_check_branch
      %485 = sbr.rel (0) target = $region177
    $region176: #{_lambda_.1} parent=1 // pred_region
      _
    $region177: #{_lambda_.1} parent=1 // pred_fallthru
      _
    // Predicated region
    $region178: #{_lambda_.1} parent=1 // pred_check
      _
    $region179: #{_lambda_.1} parent=1 // pred_check_branch
      %487 = sbr.rel (0) target = $region181
    $region180: #{_lambda_.1} parent=1 // pred_region
      %s489 = ssub.s32 512, 512
      %490 = vsyncadd [#allocation42], %s489
      %s491 = sshll.u32 [#allocation43], 4
      %s492 = int_to_ptr.vmem [resolvable:$true] %s491
      %497 = dma.hbm_to_vmem [thread:$0]  %s89, 512, %s492, [#allocation42], 64, 64, 4
    $region181: #{_lambda_.1} parent=1 // pred_fallthru
      _
    // Predicated region
    $region182: #{_lambda_.1} parent=1 // pred_check
      _
    $region183: #{_lambda_.1} parent=1 // pred_check_branch
      %499 = sbr.rel (0) target = $region185
    $region184: #{_lambda_.1} parent=1 // pred_region
      %s501 = ssub.s32 16, 16
      %502 = vsyncadd [#allocation45], %s501
      %s504 = sshll.u32 [#allocation44], 4
      %s505 = int_to_ptr.vmem [resolvable:$true] %s504
      %507 = dma.hbm_to_vmem [thread:$0]  %s91, 16, %s505, [#allocation45]
    $region185: #{_lambda_.1} parent=1 // pred_fallthru
      _
    // Predicated region
    $region186: #{_lambda_.1} parent=1 // pred_check
      _
    $region187: #{_lambda_.1} parent=1 // pred_check_branch
      %509 = sbr.rel (0) target = $region189
    $region188: #{_lambda_.1} parent=1 // pred_region
      %s511 = ssub.s32 256, 256
      %512 = vsyncadd [#allocation45], %s511
      %s513 = sshll.u32 [#allocation46], 4
      %s514 = int_to_ptr.vmem [resolvable:$true] %s513
      %519 = dma.hbm_to_vmem [thread:$0]  %s93, 256, %s514, [#allocation45], 64, 64, 4
    $region189: #{_lambda_.1} parent=1 // pred_fallthru
      _
    // Predicated region
    $region190: #{_lambda_.1} parent=1 // pred_check
      _
    $region191: #{_lambda_.1} parent=1 // pred_check_branch
      %521 = sbr.rel (0) target = $region193
    $region192: #{_lambda_.1} parent=1 // pred_region
      _
    $region193: #{_lambda_.1} parent=1 // pred_fallthru
      _
    // Predicated region
    $region194: #{_lambda_.1} parent=1 // pred_check
      _
    $region195: #{_lambda_.1} parent=1 // pred_check_branch
      %523 = sbr.rel (0) target = $region197
    $region196: #{_lambda_.1} parent=1 // pred_region
      _
    $region197: #{_lambda_.1} parent=1 // pred_fallthru
      _
    // Predicated region
    $region198: #{_lambda_.1} parent=1 // pred_check
      _
    $region199: #{_lambda_.1} parent=1 // pred_check_branch
      %525 = sbr.rel (0) target = $region201
    $region200: #{_lambda_.1} parent=1 // pred_region
      %s527 = ssub.s32 1536, 1536
      %528 = vsyncadd [#allocation48], %s527
      %s529 = sshll.u32 [#allocation47], 4
      %s530 = int_to_ptr.vmem [resolvable:$true] %s529
      %535 = dma.hbm_to_vmem [thread:$0]  %s99, 1536, %s530, [#allocation48], 64, 64, 4
    $region201: #{_lambda_.1} parent=1 // pred_fallthru
      _
    // Predicated region
    $region202: #{_lambda_.1} parent=1 // pred_check
      _
    $region203: #{_lambda_.1} parent=1 // pred_check_branch
      %537 = sbr.rel (0) target = $region205
    $region204: #{_lambda_.1} parent=1 // pred_region
      _
    $region205: #{_lambda_.1} parent=1 // pred_fallthru
      _
    // Predicated region
    $region206: #{_lambda_.1} parent=1 // pred_check
      _
    $region207: #{_lambda_.1} parent=1 // pred_check_branch
      %539 = sbr.rel (0) target = $region209
    $region208: #{_lambda_.1} parent=1 // pred_region
      _
    $region209: #{_lambda_.1} parent=1 // pred_fallthru
      _
    // Predicated region
    $region210: #{_lambda_.1} parent=1 // pred_check
      _
    $region211: #{_lambda_.1} parent=1 // pred_check_branch
      %541 = sbr.rel (0) target = $region213
    $region212: #{_lambda_.1} parent=1 // pred_region
      %s543 = ssub.s32 16, 16
      %544 = vsyncadd [#allocation48], %s543
      %s546 = sshll.u32 [#allocation49], 4
      %s547 = int_to_ptr.vmem [resolvable:$true] %s546
      %549 = dma.hbm_to_vmem [thread:$0]  %s105, 16, %s547, [#allocation48]
    $region213: #{_lambda_.1} parent=1 // pred_fallthru
      _
    // Predicated region
    $region214: #{_lambda_.1} parent=1 // pred_check
      _
    $region215: #{_lambda_.1} parent=1 // pred_check_branch
      %551 = sbr.rel (0) target = $region217
    $region216: #{_lambda_.1} parent=1 // pred_region
      %s553 = ssub.s32 16, 16
      %554 = vsyncadd [#allocation51], %s553
      %s556 = sshll.u32 [#allocation50], 4
      %s557 = int_to_ptr.vmem [resolvable:$true] %s556
      %559 = dma.hbm_to_vmem [thread:$0]  %s107, 16, %s557, [#allocation51]
    $region217: #{_lambda_.1} parent=1 // pred_fallthru
      _
    // Predicated region
    $region218: #{_lambda_.1} parent=1 // pred_check
      _
    $region219: #{_lambda_.1} parent=1 // pred_check_branch
      %561 = sbr.rel (0) target = $region221
    $region220: #{_lambda_.1} parent=1 // pred_region
      %s563 = ssub.s32 16, 16
      %564 = vsyncadd [#allocation51], %s563
      %s566 = sshll.u32 [#allocation52], 4
      %s567 = int_to_ptr.vmem [resolvable:$true] %s566
      %569 = dma.hbm_to_vmem [thread:$0]  %s109, 16, %s567, [#allocation51]
    $region221: #{_lambda_.1} parent=1 // pred_fallthru
      _
    // Predicated region
    $region222: #{_lambda_.1} parent=1 // pred_check
      _
    $region223: #{_lambda_.1} parent=1 // pred_check_branch
      %571 = sbr.rel (0) target = $region225
    $region224: #{_lambda_.1} parent=1 // pred_region
      _
    $region225: #{_lambda_.1} parent=1 // pred_fallthru
      _
    // Predicated region
    $region226: #{_lambda_.1} parent=1 // pred_check
      _
    $region227: #{_lambda_.1} parent=1 // pred_check_branch
      %573 = sbr.rel (0) target = $region229
    $region228: #{_lambda_.1} parent=1 // pred_region
      _
    $region229: #{_lambda_.1} parent=1 // pred_fallthru
      _
    // Predicated region
    $region230: #{_lambda_.1} parent=1 // pred_check
      _
    $region231: #{_lambda_.1} parent=1 // pred_check_branch
      %575 = sbr.rel (0) target = $region233
    $region232: #{_lambda_.1} parent=1 // pred_region
      _
    $region233: #{_lambda_.1} parent=1 // pred_fallthru
      _
    // Predicated region
    $region234: #{_lambda_.1} parent=1 // pred_check
      _
    $region235: #{_lambda_.1} parent=1 // pred_check_branch
      %577 = sbr.rel (0) target = $region237
    $region236: #{_lambda_.1} parent=1 // pred_region
      _
    $region237: #{_lambda_.1} parent=1 // pred_fallthru
      _
    // Predicated region
    $region238: #{_lambda_.1} parent=1 // pred_check
      _
    $region239: #{_lambda_.1} parent=1 // pred_check_branch
      %579 = sbr.rel (0) target = $region241
    $region240: #{_lambda_.1} parent=1 // pred_region
      _
    $region241: #{_lambda_.1} parent=1 // pred_fallthru
      _
    // Predicated region
    $region242: #{_lambda_.1} parent=1 // pred_check
      _
    $region243: #{_lambda_.1} parent=1 // pred_check_branch
      %581 = sbr.rel (0) target = $region245
    $region244: #{_lambda_.1} parent=1 // pred_region
      _
    $region245: #{_lambda_.1} parent=1 // pred_fallthru
      _
    // Predicated region
    $region246: #{_lambda_.1} parent=1 // pred_check
      _
    $region247: #{_lambda_.1} parent=1 // pred_check_branch
      %583 = sbr.rel (0) target = $region249
    $region248: #{_lambda_.1} parent=1 // pred_region
      %s585 = ssub.s32 1024, 1024
      %586 = vsyncadd [#allocation54], %s585
      %s587 = sshll.u32 [#allocation53], 4
      %s588 = int_to_ptr.vmem [resolvable:$true] %s587
      %593 = dma.hbm_to_vmem [thread:$0]  %s123, 1024, %s588, [#allocation54], 64, 64, 4
    $region249: #{_lambda_.1} parent=1 // pred_fallthru
      _
    // Predicated region
    $region250: #{_lambda_.1} parent=1 // pred_check
      _
    $region251: #{_lambda_.1} parent=1 // pred_check_branch
      %595 = sbr.rel (0) target = $region253
    $region252: #{_lambda_.1} parent=1 // pred_region
      %s597 = ssub.s32 16, 16
      %598 = vsyncadd [#allocation54], %s597
      %s600 = sshll.u32 [#allocation55], 4
      %s601 = int_to_ptr.vmem [resolvable:$true] %s600
      %603 = dma.hbm_to_vmem [thread:$0]  %s125, 16, %s601, [#allocation54]
    $region253: #{_lambda_.1} parent=1 // pred_fallthru
      _
    // Predicated region
    $region254: #{_lambda_.1} parent=1 // pred_check
      _
    $region255: #{_lambda_.1} parent=1 // pred_check_branch
      %605 = sbr.rel (0) target = $region257
    $region256: #{_lambda_.1} parent=1 // pred_region
      %s607 = ssub.s32 256, 256
      %608 = vsyncadd [#allocation57], %s607
      %s609 = sshll.u32 [#allocation56], 4
      %s610 = int_to_ptr.vmem [resolvable:$true] %s609
      %615 = dma.hbm_to_vmem [thread:$0]  %s127, 256, %s610, [#allocation57], 64, 64, 4
    $region257: #{_lambda_.1} parent=1 // pred_fallthru
      _
    // Predicated region
    $region258: #{_lambda_.1} parent=1 // pred_check
      _
    $region259: #{_lambda_.1} parent=1 // pred_check_branch
      %617 = sbr.rel (0) target = $region261
    $region260: #{_lambda_.1} parent=1 // pred_region
      %s619 = ssub.s32 1536, 1536
      %620 = vsyncadd [#allocation57], %s619
      %s621 = sshll.u32 [#allocation58], 4
      %s622 = int_to_ptr.vmem [resolvable:$true] %s621
      %627 = dma.hbm_to_vmem [thread:$0]  %s129, 1536, %s622, [#allocation57], 64, 64, 4
    $region261: #{_lambda_.1} parent=1 // pred_fallthru
      _
    // Predicated region
    $region262: #{_lambda_.1} parent=1 // pred_check
      _
    $region263: #{_lambda_.1} parent=1 // pred_check_branch
      %629 = sbr.rel (0) target = $region265
    $region264: #{_lambda_.1} parent=1 // pred_region
      %s631 = ssub.s32 1536, 1536
      %632 = vsyncadd [#allocation60], %s631
      %s633 = sshll.u32 [#allocation59], 4
      %s634 = int_to_ptr.vmem [resolvable:$true] %s633
      %639 = dma.hbm_to_vmem [thread:$0]  %s131, 1536, %s634, [#allocation60], 64, 64, 4
    $region265: #{_lambda_.1} parent=1 // pred_fallthru
      _
    // Predicated region
    $region266: #{_lambda_.1} parent=1 // pred_check
      _
    $region267: #{_lambda_.1} parent=1 // pred_check_branch
      %641 = sbr.rel (0) target = $region269
    $region268: #{_lambda_.1} parent=1 // pred_region
      %s643 = ssub.s32 768, 768
      %644 = vsyncadd [#allocation60], %s643
      %s645 = sshll.u32 [#allocation61], 4
      %s646 = int_to_ptr.vmem [resolvable:$true] %s645
      %651 = dma.hbm_to_vmem [thread:$0]  %s133, 768, %s646, [#allocation60], 64, 64, 4
    $region269: #{_lambda_.1} parent=1 // pred_fallthru
      _
    // Predicated region
    $region270: #{_lambda_.1} parent=1 // pred_check
      _
    $region271: #{_lambda_.1} parent=1 // pred_check_branch
      %653 = sbr.rel (0) target = $region273
    $region272: #{_lambda_.1} parent=1 // pred_region
      %s655 = ssub.s32 1024, 1024
      %656 = vsyncadd [#allocation63], %s655
      %s657 = sshll.u32 [#allocation62], 4
      %s658 = int_to_ptr.vmem [resolvable:$true] %s657
      %663 = dma.hbm_to_vmem [thread:$0]  %s135, 1024, %s658, [#allocation63], 64, 64, 4
    $region273: #{_lambda_.1} parent=1 // pred_fallthru
      _
    // Predicated region
    $region274: #{_lambda_.1} parent=1 // pred_check
      _
    $region275: #{_lambda_.1} parent=1 // pred_check_branch
      %665 = sbr.rel (0) target = $region277
    $region276: #{_lambda_.1} parent=1 // pred_region
      _
    $region277: #{_lambda_.1} parent=1 // pred_fallthru
      _
    // Predicated region
    $region278: #{_lambda_.1} parent=1 // pred_check
      _
    $region279: #{_lambda_.1} parent=1 // pred_check_branch
      %667 = sbr.rel (0) target = $region281
    $region280: #{_lambda_.1} parent=1 // pred_region
      %668 = dma.done [#allocation3], 16
    $region281: #{_lambda_.1} parent=1 // pred_fallthru
      _
    // Predicated region
    $region282: #{_lambda_.1} parent=1 // pred_check
      _
    $region283: #{_lambda_.1} parent=1 // pred_check_branch
      %670 = sbr.rel (0) target = $region285
    $region284: #{_lambda_.1} parent=1 // pred_region
      %671 = dma.done [#allocation6], 768
    $region285: #{_lambda_.1} parent=1 // pred_fallthru
      _
    // Predicated region
    $region286: #{_lambda_.1} parent=1 // pred_check
      _
    $region287: #{_lambda_.1} parent=1 // pred_check_branch
      %673 = sbr.rel (0) target = $region289
    $region288: #{_lambda_.1} parent=1 // pred_region
      %674 = dma.done [#allocation6], 960
    $region289: #{_lambda_.1} parent=1 // pred_fallthru
      _
    // Predicated region
    $region290: #{_lambda_.1} parent=1 // pred_check
      _
    $region291: #{_lambda_.1} parent=1 // pred_check_branch
      %676 = sbr.rel (0) target = $region293
    $region292: #{_lambda_.1} parent=1 // pred_region
      %677 = dma.done [#allocation9], 16
    $region293: #{_lambda_.1} parent=1 // pred_fallthru
      _
    // Predicated region
    $region294: #{_lambda_.1} parent=1 // pred_check
      _
    $region295: #{_lambda_.1} parent=1 // pred_check_branch
      %679 = sbr.rel (0) target = $region297
    $region296: #{_lambda_.1} parent=1 // pred_region
      %680 = dma.done [#allocation9], 16
    $region297: #{_lambda_.1} parent=1 // pred_fallthru
      _
    // Predicated region
    $region298: #{_lambda_.1} parent=1 // pred_check
      _
    $region299: #{_lambda_.1} parent=1 // pred_check_branch
      %682 = sbr.rel (0) target = $region301
    $region300: #{_lambda_.1} parent=1 // pred_region
      %683 = dma.done [#allocation12], 384
    $region301: #{_lambda_.1} parent=1 // pred_fallthru
      _
    // Predicated region
    $region302: #{_lambda_.1} parent=1 // pred_check
      _
    $region303: #{_lambda_.1} parent=1 // pred_check_branch
      %685 = sbr.rel (0) target = $region305
    $region304: #{_lambda_.1} parent=1 // pred_region
      %686 = dma.done [#allocation12], 16
    $region305: #{_lambda_.1} parent=1 // pred_fallthru
      _
    // Predicated region
    $region306: #{_lambda_.1} parent=1 // pred_check
      _
    $region307: #{_lambda_.1} parent=1 // pred_check_branch
      %688 = sbr.rel (0) target = $region309
    $region308: #{_lambda_.1} parent=1 // pred_region
      %689 = dma.done [#allocation15], 256
    $region309: #{_lambda_.1} parent=1 // pred_fallthru
      _
    // Predicated region
    $region310: #{_lambda_.1} parent=1 // pred_check
      _
    $region311: #{_lambda_.1} parent=1 // pred_check_branch
      %691 = sbr.rel (0) target = $region313
    $region312: #{_lambda_.1} parent=1 // pred_region
      %692 = dma.done [#allocation15], 768
    $region313: #{_lambda_.1} parent=1 // pred_fallthru
      _
    // Predicated region
    $region314: #{_lambda_.1} parent=1 // pred_check
      _
    $region315: #{_lambda_.1} parent=1 // pred_check_branch
      %694 = sbr.rel (0) target = $region317
    $region316: #{_lambda_.1} parent=1 // pred_region
      %695 = dma.done [#allocation18], 1536
    $region317: #{_lambda_.1} parent=1 // pred_fallthru
      _
    // Predicated region
    $region318: #{_lambda_.1} parent=1 // pred_check
      _
    $region319: #{_lambda_.1} parent=1 // pred_check_branch
      %697 = sbr.rel (0) target = $region321
    $region320: #{_lambda_.1} parent=1 // pred_region
      %698 = dma.done [#allocation18], 128
    $region321: #{_lambda_.1} parent=1 // pred_fallthru
      _
    // Predicated region
    $region322: #{_lambda_.1} parent=1 // pred_check
      _
    $region323: #{_lambda_.1} parent=1 // pred_check_branch
      %700 = sbr.rel (0) target = $region325
    $region324: #{_lambda_.1} parent=1 // pred_region
      %701 = dma.done [#allocation21], 16
    $region325: #{_lambda_.1} parent=1 // pred_fallthru
      _
    // Predicated region
    $region326: #{_lambda_.1} parent=1 // pred_check
      _
    $region327: #{_lambda_.1} parent=1 // pred_check_branch
      %703 = sbr.rel (0) target = $region329
    $region328: #{_lambda_.1} parent=1 // pred_region
      %704 = dma.done [#allocation21], 16
    $region329: #{_lambda_.1} parent=1 // pred_fallthru
      _
    // Predicated region
    $region330: #{_lambda_.1} parent=1 // pred_check
      _
    $region331: #{_lambda_.1} parent=1 // pred_check_branch
      %706 = sbr.rel (0) target = $region333
    $region332: #{_lambda_.1} parent=1 // pred_region
      %707 = dma.done [#allocation24], 192
    $region333: #{_lambda_.1} parent=1 // pred_fallthru
      _
    // Predicated region
    $region334: #{_lambda_.1} parent=1 // pred_check
      _
    $region335: #{_lambda_.1} parent=1 // pred_check_branch
      %709 = sbr.rel (0) target = $region337
    $region336: #{_lambda_.1} parent=1 // pred_region
      %710 = dma.done [#allocation24], 16
    $region337: #{_lambda_.1} parent=1 // pred_fallthru
      _
    // Predicated region
    $region338: #{_lambda_.1} parent=1 // pred_check
      _
    $region339: #{_lambda_.1} parent=1 // pred_check_branch
      %712 = sbr.rel (0) target = $region341
    $region340: #{_lambda_.1} parent=1 // pred_region
      %713 = dma.done [#allocation27], 256
    $region341: #{_lambda_.1} parent=1 // pred_fallthru
      _
    // Predicated region
    $region342: #{_lambda_.1} parent=1 // pred_check
      _
    $region343: #{_lambda_.1} parent=1 // pred_check_branch
      %715 = sbr.rel (0) target = $region345
    $region344: #{_lambda_.1} parent=1 // pred_region
      %716 = dma.done [#allocation27], 1536
    $region345: #{_lambda_.1} parent=1 // pred_fallthru
      _
    // Predicated region
    $region346: #{_lambda_.1} parent=1 // pred_check
      _
    $region347: #{_lambda_.1} parent=1 // pred_check_branch
      %718 = sbr.rel (0) target = $region349
    $region348: #{_lambda_.1} parent=1 // pred_region
      %719 = dma.done [#allocation30], 3072
    $region349: #{_lambda_.1} parent=1 // pred_fallthru
      _
    // Predicated region
    $region350: #{_lambda_.1} parent=1 // pred_check
      _
    $region351: #{_lambda_.1} parent=1 // pred_check_branch
      %721 = sbr.rel (0) target = $region353
    $region352: #{_lambda_.1} parent=1 // pred_region
      %722 = dma.done [#allocation30], 16
    $region353: #{_lambda_.1} parent=1 // pred_fallthru
      _
    // Predicated region
    $region354: #{_lambda_.1} parent=1 // pred_check
      _
    $region355: #{_lambda_.1} parent=1 // pred_check_branch
      %724 = sbr.rel (0) target = $region357
    $region356: #{_lambda_.1} parent=1 // pred_region
      %725 = dma.done [#allocation33], 256
    $region357: #{_lambda_.1} parent=1 // pred_fallthru
      _
    // Predicated region
    $region358: #{_lambda_.1} parent=1 // pred_check
      _
    $region359: #{_lambda_.1} parent=1 // pred_check_branch
      %727 = sbr.rel (0) target = $region361
    $region360: #{_lambda_.1} parent=1 // pred_region
      %728 = dma.done [#allocation33], 16
    $region361: #{_lambda_.1} parent=1 // pred_fallthru
      _
    // Predicated region
    $region362: #{_lambda_.1} parent=1 // pred_check
      _
    $region363: #{_lambda_.1} parent=1 // pred_check_branch
      %730 = sbr.rel (0) target = $region365
    $region364: #{_lambda_.1} parent=1 // pred_region
      %731 = dma.done [#allocation36], 256
    $region365: #{_lambda_.1} parent=1 // pred_fallthru
      _
    // Predicated region
    $region366: #{_lambda_.1} parent=1 // pred_check
      _
    $region367: #{_lambda_.1} parent=1 // pred_check_branch
      %733 = sbr.rel (0) target = $region369
    $region368: #{_lambda_.1} parent=1 // pred_region
      %734 = dma.done [#allocation36], 128
    $region369: #{_lambda_.1} parent=1 // pred_fallthru
      _
    // Predicated region
    $region370: #{_lambda_.1} parent=1 // pred_check
      _
    $region371: #{_lambda_.1} parent=1 // pred_check_branch
      %736 = sbr.rel (0) target = $region373
    $region372: #{_lambda_.1} parent=1 // pred_region
      %737 = dma.done [#allocation39], 16
    $region373: #{_lambda_.1} parent=1 // pred_fallthru
      _
    // Predicated region
    $region374: #{_lambda_.1} parent=1 // pred_check
      _
    $region375: #{_lambda_.1} parent=1 // pred_check_branch
      %739 = sbr.rel (0) target = $region377
    $region376: #{_lambda_.1} parent=1 // pred_region
      %740 = dma.done [#allocation39], 16
    $region377: #{_lambda_.1} parent=1 // pred_fallthru
      _
    // Predicated region
    $region378: #{_lambda_.1} parent=1 // pred_check
      _
    $region379: #{_lambda_.1} parent=1 // pred_check_branch
      %742 = sbr.rel (0) target = $region381
    $region380: #{_lambda_.1} parent=1 // pred_region
      %743 = dma.done [#allocation42], 16
    $region381: #{_lambda_.1} parent=1 // pred_fallthru
      _
    // Predicated region
    $region382: #{_lambda_.1} parent=1 // pred_check
      _
    $region383: #{_lambda_.1} parent=1 // pred_check_branch
      %745 = sbr.rel (0) target = $region385
    $region384: #{_lambda_.1} parent=1 // pred_region
      %746 = dma.done [#allocation42], 512
    $region385: #{_lambda_.1} parent=1 // pred_fallthru
      _
    // Predicated region
    $region386: #{_lambda_.1} parent=1 // pred_check
      _
    $region387: #{_lambda_.1} parent=1 // pred_check_branch
      %748 = sbr.rel (0) target = $region389
    $region388: #{_lambda_.1} parent=1 // pred_region
      %749 = dma.done [#allocation45], 16
    $region389: #{_lambda_.1} parent=1 // pred_fallthru
      _
    // Predicated region
    $region390: #{_lambda_.1} parent=1 // pred_check
      _
    $region391: #{_lambda_.1} parent=1 // pred_check_branch
      %751 = sbr.rel (0) target = $region393
    $region392: #{_lambda_.1} parent=1 // pred_region
      %752 = dma.done [#allocation45], 256
    $region393: #{_lambda_.1} parent=1 // pred_fallthru
      _
    // Predicated region
    $region394: #{_lambda_.1} parent=1 // pred_check
      _
    $region395: #{_lambda_.1} parent=1 // pred_check_branch
      %754 = sbr.rel (0) target = $region397
    $region396: #{_lambda_.1} parent=1 // pred_region
      %755 = dma.done [#allocation48], 1536
    $region397: #{_lambda_.1} parent=1 // pred_fallthru
      _
    // Predicated region
    $region398: #{_lambda_.1} parent=1 // pred_check
      _
    $region399: #{_lambda_.1} parent=1 // pred_check_branch
      %757 = sbr.rel (0) target = $region401
    $region400: #{_lambda_.1} parent=1 // pred_region
      %758 = dma.done [#allocation48], 16
    $region401: #{_lambda_.1} parent=1 // pred_fallthru
      _
    // Predicated region
    $region402: #{_lambda_.1} parent=1 // pred_check
      _
    $region403: #{_lambda_.1} parent=1 // pred_check_branch
      %760 = sbr.rel (0) target = $region405
    $region404: #{_lambda_.1} parent=1 // pred_region
      %761 = dma.done [#allocation51], 16
    $region405: #{_lambda_.1} parent=1 // pred_fallthru
      _
    // Predicated region
    $region406: #{_lambda_.1} parent=1 // pred_check
      _
    $region407: #{_lambda_.1} parent=1 // pred_check_branch
      %763 = sbr.rel (0) target = $region409
    $region408: #{_lambda_.1} parent=1 // pred_region
      %764 = dma.done [#allocation51], 16
    $region409: #{_lambda_.1} parent=1 // pred_fallthru
      _
    // Predicated region
    $region410: #{_lambda_.1} parent=1 // pred_check
      _
    $region411: #{_lambda_.1} parent=1 // pred_check_branch
      %766 = sbr.rel (0) target = $region413
    $region412: #{_lambda_.1} parent=1 // pred_region
      %767 = dma.done [#allocation54], 1024
    $region413: #{_lambda_.1} parent=1 // pred_fallthru
      _
    // Predicated region
    $region414: #{_lambda_.1} parent=1 // pred_check
      _
    $region415: #{_lambda_.1} parent=1 // pred_check_branch
      %769 = sbr.rel (0) target = $region417
    $region416: #{_lambda_.1} parent=1 // pred_region
      %770 = dma.done [#allocation54], 16
    $region417: #{_lambda_.1} parent=1 // pred_fallthru
      _
    // Predicated region
    $region418: #{_lambda_.1} parent=1 // pred_check
      _
    $region419: #{_lambda_.1} parent=1 // pred_check_branch
      %772 = sbr.rel (0) target = $region421
    $region420: #{_lambda_.1} parent=1 // pred_region
      %773 = dma.done [#allocation57], 256
    $region421: #{_lambda_.1} parent=1 // pred_fallthru
      _
    // Predicated region
    $region422: #{_lambda_.1} parent=1 // pred_check
      _
    $region423: #{_lambda_.1} parent=1 // pred_check_branch
      %775 = sbr.rel (0) target = $region425
    $region424: #{_lambda_.1} parent=1 // pred_region
      %776 = dma.done [#allocation57], 1536
    $region425: #{_lambda_.1} parent=1 // pred_fallthru
      _
    // Predicated region
    $region426: #{_lambda_.1} parent=1 // pred_check
      _
    $region427: #{_lambda_.1} parent=1 // pred_check_branch
      %778 = sbr.rel (0) target = $region429
    $region428: #{_lambda_.1} parent=1 // pred_region
      %779 = dma.done [#allocation60], 1536
    $region429: #{_lambda_.1} parent=1 // pred_fallthru
      _
    // Predicated region
    $region430: #{_lambda_.1} parent=1 // pred_check
      _
    $region431: #{_lambda_.1} parent=1 // pred_check_branch
      %781 = sbr.rel (0) target = $region433
    $region432: #{_lambda_.1} parent=1 // pred_region
      %782 = dma.done [#allocation60], 768
    $region433: #{_lambda_.1} parent=1 // pred_fallthru
      _
    // Predicated region
    $region434: #{_lambda_.1} parent=1 // pred_check
      _
    $region435: #{_lambda_.1} parent=1 // pred_check_branch
      %784 = sbr.rel (0) target = $region437
    $region436: #{_lambda_.1} parent=1 // pred_region
      %785 = dma.done [#allocation63], 1024
    $region437: #{_lambda_.1} parent=1 // pred_fallthru
      _
    %v787 = vld [vmem:[%s59] sm:$0x3]
    %v788 = vld [vmem:[#allocation35] sm:$0xf]
    %v789 = vld [vmem:[#allocation35 + $0x4] sm:$0xf]
    %v790 = vld [vmem:[#allocation35 + $0x8] sm:$0xf]
    %v791 = vld [vmem:[#allocation35 + $0xc] sm:$0xf]
    %v792 = vpack.c.bf16 %v787, %v787
    %v793 = vld [vmem:[#allocation34] sm:$0x1]
    %v795 = vlaneseq
    %v796 = vshrl.u32 %v795, 7
    %v797 = vsub.s32 0, %v796
    %v798 = vrot.slane %v793, %v797
    %v804 = vunpack.c.l.b16 %v788
    %v805 = vunpack.c.l.b16 %v789
    %v806 = vunpack.c.l.b16 %v790
    %v807 = vunpack.c.l.b16 %v791
    %v808 = vpack.c.b16 %v805, %v804
    %v809 = vpack.c.b16 %v807, %v806
    %vm812 = vcmask 261120
    %v814 = vsel %vm812, %v792, 0
    %816 = vmatprep.subr.bf16.mxu0 0
    %817 = vmatpush1.bf16.msra.mxu0 0
    %818 = vmatprep.subr.bf16.mxu0 0
    %819 = vmatpush1.bf16.msra.mxu0 0
    %820 = vmatprep.subr.bf16.mxu0 0
    %821 = vmatpush1.bf16.msra.mxu0 0
    %822 = vmatprep.subr.bf16.mxu0 0
    %823 = vmatpush1.bf16.msra.mxu0 0
    %824 = vmatprep.subr.bf16.mxu0 0
    %825 = vmatpush1.bf16.msra.mxu0 0
    %826 = vmatprep.subr.bf16.mxu0 0
    %827 = vmatpush1.bf16.msra.mxu0 0
    %828 = vmatprep.subr.bf16.mxu0 0
    %829 = vmatpush1.bf16.msra.mxu0 %v809
    %830 = vmatprep.subr.bf16.mxu0 0
    %831 = vmatpush1.bf16.msra.mxu0 %v808
    %832 = vmatprep.subr.bf16.mxu0 0
    %833 = vmatpush2.bf16.msra.mxu0 0
    %834 = vmatprep.subr.bf16.mxu0 0
    %835 = vmatpush2.bf16.msra.mxu0 0
    %836 = vmatprep.subr.bf16.mxu0 0
    %837 = vmatpush2.bf16.msra.mxu0 0
    %838 = vmatprep.subr.bf16.mxu0 0
    %839 = vmatpush2.bf16.msra.mxu0 0
    %840 = vmatprep.subr.bf16.mxu0 0
    %841 = vmatpush2.bf16.msra.mxu0 0
    %842 = vmatprep.subr.bf16.mxu0 0
    %843 = vmatpush2.bf16.msra.mxu0 0
    %844 = vmatprep.subr.bf16.mxu0 0
    %845 = vmatpush2.bf16.msra.mxu0 0
    %846 = vmatprep.subr.bf16.mxu0 0
    %847 = vmatpush2.bf16.msra.mxu0 0
    %848 = vmatprep.mubr.bf16.mxu0 0
    %849 = vmatmul.mubr.bf16.gmra.mxu0 %v814
    %v850 = vpop.f32.mrf.mxu0
    %v851 = vadd.f32 %v798, %v850
    %v852 = vpop.f32.mrf.mxu0
    %v853 = vpop.f32.mrf.mxu0
    %v854 = vpop.f32.mrf.mxu0
    %855 = vdwg.mxu0
    %v856 = vmax.f32 %v851, 0.0
    %v857 = vld [vmem:[%s137] sm:$0xff]
    %v858 = vld [vmem:[%s137 + $0x8] sm:$0xff]
    %v859 = vld [vmem:[%s137 + $0x10] sm:$0xff]
    %v860 = vld [vmem:[%s137 + $0x18] sm:$0xff]
    %v861 = vld [vmem:[#allocation5] sm:$0xf]
    %v862 = vld [vmem:[#allocation5 + $0x4] sm:$0xf]
    %v863 = vld [vmem:[#allocation5 + $0x8] sm:$0xf]
    %v864 = vld [vmem:[#allocation5 + $0xc] sm:$0xf]
    %v865 = vpack.c.bf16 %v858, %v857
    %v866 = vpack.c.bf16 %v860, %v859
    %v871 = vunpack.c.l.b16 %v861
    %v872 = vunpack.c.l.b16 %v862
    %v873 = vunpack.c.l.b16 %v863
    %v874 = vunpack.c.l.b16 %v864
    %v875 = vpack.c.b16 %v872, %v871
    %v876 = vpack.c.b16 %v874, %v873
    %v878 = vsel %vm812, %v875, 0
    %v881 = vsel %vm812, %v876, 0
    %883 = vmatprep.subr.bf16.mxu0 0
    %884 = vmatpush1.bf16.msra.mxu0 0
    %885 = vmatprep.subr.bf16.mxu0 0
    %886 = vmatpush1.bf16.msra.mxu0 0
    %887 = vmatprep.subr.bf16.mxu0 0
    %888 = vmatpush1.bf16.msra.mxu0 0
    %889 = vmatprep.subr.bf16.mxu0 0
    %890 = vmatpush1.bf16.msra.mxu0 0
    %891 = vmatprep.subr.bf16.mxu0 0
    %892 = vmatpush1.bf16.msra.mxu0 0
    %893 = vmatprep.subr.bf16.mxu0 0
    %894 = vmatpush1.bf16.msra.mxu0 0
    %895 = vmatprep.subr.bf16.mxu0 0
    %896 = vmatpush1.bf16.msra.mxu0 %v866
    %897 = vmatprep.subr.bf16.mxu0 0
    %898 = vmatpush1.bf16.msra.mxu0 %v865
    %899 = vmatprep.subr.bf16.mxu0 0
    %900 = vmatpush2.bf16.msra.mxu0 0
    %901 = vmatprep.subr.bf16.mxu0 0
    %902 = vmatpush2.bf16.msra.mxu0 0
    %903 = vmatprep.subr.bf16.mxu0 0
    %904 = vmatpush2.bf16.msra.mxu0 0
    %905 = vmatprep.subr.bf16.mxu0 0
    %906 = vmatpush2.bf16.msra.mxu0 0
    %907 = vmatprep.subr.bf16.mxu0 0
    %908 = vmatpush2.bf16.msra.mxu0 0
    %909 = vmatprep.subr.bf16.mxu0 0
    %910 = vmatpush2.bf16.msra.mxu0 0
    %911 = vmatprep.subr.bf16.mxu0 0
    %912 = vmatpush2.bf16.msra.mxu0 0
    %913 = vmatprep.subr.bf16.mxu0 0
    %914 = vmatpush2.bf16.msra.mxu0 0
    %915 = vmatprep.mubr.bf16.mxu0 0
    %916 = vmatmul.mubr.bf16.gmra.mxu0 %v878
    %v917 = vpop.f32.mrf.mxu0
    %v918 = vadd.f32 0.0, %v917
    %v919 = vpop.f32.mrf.mxu0
    %v920 = vpop.f32.mrf.mxu0
    %v921 = vadd.f32 0.0, %v920
    %v922 = vpop.f32.mrf.mxu0
    %923 = vmatprep.mubr.bf16.mxu0 0
    %924 = vmatmul.mubr.bf16.gmra.mxu0 %v881
    %v925 = vpop.f32.mrf.mxu0
    %v926 = vadd.f32 0.0, %v925
    %v927 = vpop.f32.mrf.mxu0
    %v928 = vpop.f32.mrf.mxu0
    %v929 = vadd.f32 0.0, %v928
    %v930 = vpop.f32.mrf.mxu0
    %931 = vdwg.mxu0
    %v932 = vld [vmem:[#allocation7] sm:$0xf]
    %v933 = vld [vmem:[#allocation7 + $0x4] sm:$0xf]
    %v934 = vld [vmem:[#allocation7 + $0x8] sm:$0xf]
    %v935 = vld [vmem:[#allocation7 + $0xc] sm:$0xf]
    %v936 = vld [vmem:[#allocation7 + $0x10] sm:$0x3]
    %v937 = vpack.c.bf16 %v921, %v918
    %v938 = vpack.c.bf16 %v929, %v926
    %s939 = scalar_lea.vmem [#allocation5], 16
    %v940 = vld [vmem:[%s939] sm:$0xf]
    %v941 = vld [vmem:[%s939 + $0x4] sm:$0xf]
    %v942 = vld [vmem:[%s939 + $0x8] sm:$0xf]
    %v943 = vld [vmem:[%s939 + $0xc] sm:$0xf]
    %v948 = vunpack.c.l.b16 %v940
    %v949 = vunpack.c.l.b16 %v941
    %v950 = vunpack.c.l.b16 %v942
    %v951 = vunpack.c.l.b16 %v943
    %v952 = vpack.c.b16 %v949, %v948
    %v953 = vpack.c.b16 %v951, %v950
    %v955 = vsel %vm812, %v952, 0
    %v958 = vsel %vm812, %v953, 0
    %960 = vmatprep.subr.bf16.mxu0 0
    %961 = vmatpush1.bf16.msra.mxu0 0
    %962 = vmatprep.subr.bf16.mxu0 0
    %963 = vmatpush1.bf16.msra.mxu0 0
    %964 = vmatprep.subr.bf16.mxu0 0
    %965 = vmatpush1.bf16.msra.mxu0 0
    %966 = vmatprep.subr.bf16.mxu0 0
    %967 = vmatpush1.bf16.msra.mxu0 0
    %968 = vmatprep.subr.bf16.mxu0 0
    %969 = vmatpush1.bf16.msra.mxu0 0
    %970 = vmatprep.subr.bf16.mxu0 0
    %971 = vmatpush1.bf16.msra.mxu0 0
    %972 = vmatprep.subr.bf16.mxu0 0
    %973 = vmatpush1.bf16.msra.mxu0 %v866
    %974 = vmatprep.subr.bf16.mxu0 0
    %975 = vmatpush1.bf16.msra.mxu0 %v865
    %976 = vmatprep.subr.bf16.mxu0 0
    %977 = vmatpush2.bf16.msra.mxu0 0
    %978 = vmatprep.subr.bf16.mxu0 0
    %979 = vmatpush2.bf16.msra.mxu0 0
    %980 = vmatprep.subr.bf16.mxu0 0
    %981 = vmatpush2.bf16.msra.mxu0 0
    %982 = vmatprep.subr.bf16.mxu0 0
    %983 = vmatpush2.bf16.msra.mxu0 0
    %984 = vmatprep.subr.bf16.mxu0 0
    %985 = vmatpush2.bf16.msra.mxu0 0
    %986 = vmatprep.subr.bf16.mxu0 0
    %987 = vmatpush2.bf16.msra.mxu0 0
    %988 = vmatprep.subr.bf16.mxu0 0
    %989 = vmatpush2.bf16.msra.mxu0 0
    %990 = vmatprep.subr.bf16.mxu0 0
    %991 = vmatpush2.bf16.msra.mxu0 0
    %992 = vmatprep.mubr.bf16.mxu0 0
    %993 = vmatmul.mubr.bf16.gmra.mxu0 %v955
    %v994 = vpop.f32.mrf.mxu0
    %v995 = vadd.f32 0.0, %v994
    %v996 = vpop.f32.mrf.mxu0
    %v997 = vpop.f32.mrf.mxu0
    %v998 = vadd.f32 0.0, %v997
    %v999 = vpop.f32.mrf.mxu0
    %1000 = vmatprep.mubr.bf16.mxu0 0
    %1001 = vmatmul.mubr.bf16.gmra.mxu0 %v958
    %v1002 = vpop.f32.mrf.mxu0
    %v1003 = vadd.f32 0.0, %v1002
    %v1004 = vpop.f32.mrf.mxu0
    %v1005 = vpop.f32.mrf.mxu0
    %v1006 = vadd.f32 0.0, %v1005
    %v1007 = vpop.f32.mrf.mxu0
    %1008 = vdwg.mxu0
    %s1009 = scalar_lea.vmem [#allocation7], 20
    %v1010 = vld [vmem:[%s1009] sm:$0xf]
    %v1011 = vld [vmem:[%s1009 + $0x4] sm:$0xf]
    %v1012 = vld [vmem:[%s1009 + $0x8] sm:$0xf]
    %v1013 = vld [vmem:[%s1009 + $0xc] sm:$0xf]
    %v1014 = vld [vmem:[%s1009 + $0x10] sm:$0x3]
    %v1015 = vpack.c.bf16 %v998, %v995
    %v1016 = vpack.c.bf16 %v1006, %v1003
    %v1022 = vunpack.c.l.b16 %v1010
    %v1023 = vunpack.c.l.b16 %v1011
    %v1024 = vunpack.c.l.b16 %v1012
    %v1025 = vunpack.c.l.b16 %v1013
    %v1026 = vunpack.c.l.b16 %v1014
    %v1027 = vpack.c.b16 %v1023, %v1022
    %v1028 = vpack.c.b16 %v1025, %v1024
    %v1029 = vpack.c.b16 %v1026, %v1026
    %vm1032 = vcmask 293888
    %v1034 = vsel %vm1032, %v1015, 0
    %v1037 = vsel %vm1032, %v1016, 0
    %vm1039 = vcmask 1041408
    %v1041 = vsel %vm1039, %v1029, 0
    %1043 = vmatprep.subr.bf16.mxu0 0
    %1044 = vmatpush1.bf16.msra.mxu0 0
    %1045 = vmatprep.subr.bf16.mxu0 0
    %1046 = vmatpush1.bf16.msra.mxu0 0
    %1047 = vmatprep.subr.bf16.mxu0 0
    %1048 = vmatpush1.bf16.msra.mxu0 0
    %1049 = vmatprep.subr.bf16.mxu0 0
    %1050 = vmatpush1.bf16.msra.mxu0 0
    %1051 = vmatprep.subr.bf16.mxu0 0
    %1052 = vmatpush1.bf16.msra.mxu0 0
    %1053 = vmatprep.subr.bf16.mxu0 0
    %1054 = vmatpush1.bf16.msra.mxu0 %v1041
    %1055 = vmatprep.subr.bf16.mxu0 0
    %1056 = vmatpush1.bf16.msra.mxu0 %v1028
    %1057 = vmatprep.subr.bf16.mxu0 0
    %1058 = vmatpush1.bf16.msra.mxu0 %v1027
    %1059 = vmatprep.subr.bf16.mxu0 0
    %1060 = vmatpush2.bf16.msra.mxu0 0
    %1061 = vmatprep.subr.bf16.mxu0 0
    %1062 = vmatpush2.bf16.msra.mxu0 0
    %1063 = vmatprep.subr.bf16.mxu0 0
    %1064 = vmatpush2.bf16.msra.mxu0 0
    %1065 = vmatprep.subr.bf16.mxu0 0
    %1066 = vmatpush2.bf16.msra.mxu0 0
    %1067 = vmatprep.subr.bf16.mxu0 0
    %1068 = vmatpush2.bf16.msra.mxu0 0
    %1069 = vmatprep.subr.bf16.mxu0 0
    %1070 = vmatpush2.bf16.msra.mxu0 0
    %1071 = vmatprep.subr.bf16.mxu0 0
    %1072 = vmatpush2.bf16.msra.mxu0 0
    %1073 = vmatprep.subr.bf16.mxu0 0
    %1074 = vmatpush2.bf16.msra.mxu0 0
    %1075 = vmatprep.mubr.bf16.mxu0 0
    %1076 = vmatmul.mubr.bf16.gmra.mxu0 %v1034
    %v1077 = vpop.f32.mrf.mxu0
    %v1078 = vadd.f32 0.0, %v1077
    %v1079 = vpop.f32.mrf.mxu0
    %v1080 = vpop.f32.mrf.mxu0
    %v1081 = vadd.f32 0.0, %v1080
    %v1082 = vpop.f32.mrf.mxu0
    %1083 = vmatprep.mubr.bf16.mxu0 0
    %1084 = vmatmul.mubr.bf16.gmra.mxu0 %v1037
    %v1085 = vpop.f32.mrf.mxu0
    %v1086 = vadd.f32 0.0, %v1085
    %v1087 = vpop.f32.mrf.mxu0
    %v1088 = vpop.f32.mrf.mxu0
    %v1089 = vadd.f32 0.0, %v1088
    %v1090 = vpop.f32.mrf.mxu0
    %1091 = vdwg.mxu0
    %v1097 = vunpack.c.l.b16 %v932
    %v1098 = vunpack.c.l.b16 %v933
    %v1099 = vunpack.c.l.b16 %v934
    %v1100 = vunpack.c.l.b16 %v935
    %v1101 = vunpack.c.l.b16 %v936
    %v1102 = vpack.c.b16 %v1098, %v1097
    %v1103 = vpack.c.b16 %v1100, %v1099
    %v1104 = vpack.c.b16 %v1101, %v1101
    %v1108 = vsel %vm1032, %v937, 0
    %v1111 = vsel %vm1032, %v938, 0
    %v1114 = vsel %vm1039, %v1104, 0
    %1116 = vmatprep.subr.bf16.mxu0 0
    %1117 = vmatpush1.bf16.msra.mxu0 0
    %1118 = vmatprep.subr.bf16.mxu0 0
    %1119 = vmatpush1.bf16.msra.mxu0 0
    %1120 = vmatprep.subr.bf16.mxu0 0
    %1121 = vmatpush1.bf16.msra.mxu0 0
    %1122 = vmatprep.subr.bf16.mxu0 0
    %1123 = vmatpush1.bf16.msra.mxu0 0
    %1124 = vmatprep.subr.bf16.mxu0 0
    %1125 = vmatpush1.bf16.msra.mxu0 0
    %1126 = vmatprep.subr.bf16.mxu0 0
    %1127 = vmatpush1.bf16.msra.mxu0 %v1114
    %1128 = vmatprep.subr.bf16.mxu0 0
    %1129 = vmatpush1.bf16.msra.mxu0 %v1103
    %1130 = vmatprep.subr.bf16.mxu0 0
    %1131 = vmatpush1.bf16.msra.mxu0 %v1102
    %1132 = vmatprep.subr.bf16.mxu0 0
    %1133 = vmatpush2.bf16.msra.mxu0 0
    %1134 = vmatprep.subr.bf16.mxu0 0
    %1135 = vmatpush2.bf16.msra.mxu0 0
    %1136 = vmatprep.subr.bf16.mxu0 0
    %1137 = vmatpush2.bf16.msra.mxu0 0
    %1138 = vmatprep.subr.bf16.mxu0 0
    %1139 = vmatpush2.bf16.msra.mxu0 0
    %1140 = vmatprep.subr.bf16.mxu0 0
    %1141 = vmatpush2.bf16.msra.mxu0 0
    %1142 = vmatprep.subr.bf16.mxu0 0
    %1143 = vmatpush2.bf16.msra.mxu0 0
    %1144 = vmatprep.subr.bf16.mxu0 0
    %1145 = vmatpush2.bf16.msra.mxu0 0
    %1146 = vmatprep.subr.bf16.mxu0 0
    %1147 = vmatpush2.bf16.msra.mxu0 0
    %1148 = vmatprep.mubr.bf16.mxu0 0
    %1149 = vmatmul.mubr.bf16.gmra.mxu0 %v1108
    %v1150 = vpop.f32.mrf.mxu0
    %v1151 = vadd.f32 %v1078, %v1150
    %v1152 = vpop.f32.mrf.mxu0
    %v1153 = vpop.f32.mrf.mxu0
    %v1154 = vadd.f32 %v1081, %v1153
    %v1155 = vpop.f32.mrf.mxu0
    %1156 = vmatprep.mubr.bf16.mxu0 0
    %1157 = vmatmul.mubr.bf16.gmra.mxu0 %v1111
    %v1158 = vpop.f32.mrf.mxu0
    %v1159 = vadd.f32 %v1086, %v1158
    %v1160 = vpop.f32.mrf.mxu0
    %v1161 = vpop.f32.mrf.mxu0
    %v1162 = vadd.f32 %v1089, %v1161
    %v1163 = vpop.f32.mrf.mxu0
    %1164 = vdwg.mxu0
    %s1165 = scalar_lea.vmem [#allocation5], 32
    %v1166 = vld [vmem:[%s1165] sm:$0xf]
    %v1167 = vld [vmem:[%s1165 + $0x4] sm:$0xf]
    %v1168 = vld [vmem:[%s1165 + $0x8] sm:$0xf]
    %v1169 = vld [vmem:[%s1165 + $0xc] sm:$0xf]
    %v1174 = vunpack.c.l.b16 %v1166
    %v1175 = vunpack.c.l.b16 %v1167
    %v1176 = vunpack.c.l.b16 %v1168
    %v1177 = vunpack.c.l.b16 %v1169
    %v1178 = vpack.c.b16 %v1175, %v1174
    %v1179 = vpack.c.b16 %v1177, %v1176
    %v1181 = vsel %vm812, %v1178, 0
    %v1184 = vsel %vm812, %v1179, 0
    %1186 = vmatprep.subr.bf16.mxu0 0
    %1187 = vmatpush1.bf16.msra.mxu0 0
    %1188 = vmatprep.subr.bf16.mxu0 0
    %1189 = vmatpush1.bf16.msra.mxu0 0
    %1190 = vmatprep.subr.bf16.mxu0 0
    %1191 = vmatpush1.bf16.msra.mxu0 0
    %1192 = vmatprep.subr.bf16.mxu0 0
    %1193 = vmatpush1.bf16.msra.mxu0 0
    %1194 = vmatprep.subr.bf16.mxu0 0
    %1195 = vmatpush1.bf16.msra.mxu0 0
    %1196 = vmatprep.subr.bf16.mxu0 0
    %1197 = vmatpush1.bf16.msra.mxu0 0
    %1198 = vmatprep.subr.bf16.mxu0 0
    %1199 = vmatpush1.bf16.msra.mxu0 %v866
    %1200 = vmatprep.subr.bf16.mxu0 0
    %1201 = vmatpush1.bf16.msra.mxu0 %v865
    %1202 = vmatprep.subr.bf16.mxu0 0
    %1203 = vmatpush2.bf16.msra.mxu0 0
    %1204 = vmatprep.subr.bf16.mxu0 0
    %1205 = vmatpush2.bf16.msra.mxu0 0
    %1206 = vmatprep.subr.bf16.mxu0 0
    %1207 = vmatpush2.bf16.msra.mxu0 0
    %1208 = vmatprep.subr.bf16.mxu0 0
    %1209 = vmatpush2.bf16.msra.mxu0 0
    %1210 = vmatprep.subr.bf16.mxu0 0
    %1211 = vmatpush2.bf16.msra.mxu0 0
    %1212 = vmatprep.subr.bf16.mxu0 0
    %1213 = vmatpush2.bf16.msra.mxu0 0
    %1214 = vmatprep.subr.bf16.mxu0 0
    %1215 = vmatpush2.bf16.msra.mxu0 0
    %1216 = vmatprep.subr.bf16.mxu0 0
    %1217 = vmatpush2.bf16.msra.mxu0 0
    %1218 = vmatprep.mubr.bf16.mxu0 0
    %1219 = vmatmul.mubr.bf16.gmra.mxu0 %v1181
    %v1220 = vpop.f32.mrf.mxu0
    %v1221 = vadd.f32 0.0, %v1220
    %v1222 = vpop.f32.mrf.mxu0
    %v1223 = vpop.f32.mrf.mxu0
    %v1224 = vadd.f32 0.0, %v1223
    %v1225 = vpop.f32.mrf.mxu0
    %1226 = vmatprep.mubr.bf16.mxu0 0
    %1227 = vmatmul.mubr.bf16.gmra.mxu0 %v1184
    %v1228 = vpop.f32.mrf.mxu0
    %v1229 = vadd.f32 0.0, %v1228
    %v1230 = vpop.f32.mrf.mxu0
    %v1231 = vpop.f32.mrf.mxu0
    %v1232 = vadd.f32 0.0, %v1231
    %v1233 = vpop.f32.mrf.mxu0
    %1234 = vdwg.mxu0
    %s1235 = scalar_lea.vmem [#allocation7], 40
    %v1236 = vld [vmem:[%s1235] sm:$0xf]
    %v1237 = vld [vmem:[%s1235 + $0x4] sm:$0xf]
    %v1238 = vld [vmem:[%s1235 + $0x8] sm:$0xf]
    %v1239 = vld [vmem:[%s1235 + $0xc] sm:$0xf]
    %v1240 = vld [vmem:[%s1235 + $0x10] sm:$0x3]
    %v1241 = vpack.c.bf16 %v1224, %v1221
    %v1242 = vpack.c.bf16 %v1232, %v1229
    %v1248 = vunpack.c.l.b16 %v1236
    %v1249 = vunpack.c.l.b16 %v1237
    %v1250 = vunpack.c.l.b16 %v1238
    %v1251 = vunpack.c.l.b16 %v1239
    %v1252 = vunpack.c.l.b16 %v1240
    %v1253 = vpack.c.b16 %v1249, %v1248
    %v1254 = vpack.c.b16 %v1251, %v1250
    %v1255 = vpack.c.b16 %v1252, %v1252
    %v1259 = vsel %vm1032, %v1241, 0
    %v1262 = vsel %vm1032, %v1242, 0
    %v1265 = vsel %vm1039, %v1255, 0
    %1267 = vmatprep.subr.bf16.mxu0 0
    %1268 = vmatpush1.bf16.msra.mxu0 0
    %1269 = vmatprep.subr.bf16.mxu0 0
    %1270 = vmatpush1.bf16.msra.mxu0 0
    %1271 = vmatprep.subr.bf16.mxu0 0
    %1272 = vmatpush1.bf16.msra.mxu0 0
    %1273 = vmatprep.subr.bf16.mxu0 0
    %1274 = vmatpush1.bf16.msra.mxu0 0
    %1275 = vmatprep.subr.bf16.mxu0 0
    %1276 = vmatpush1.bf16.msra.mxu0 0
    %1277 = vmatprep.subr.bf16.mxu0 0
    %1278 = vmatpush1.bf16.msra.mxu0 %v1265
    %1279 = vmatprep.subr.bf16.mxu0 0
    %1280 = vmatpush1.bf16.msra.mxu0 %v1254
    %1281 = vmatprep.subr.bf16.mxu0 0
    %1282 = vmatpush1.bf16.msra.mxu0 %v1253
    %1283 = vmatprep.subr.bf16.mxu0 0
    %1284 = vmatpush2.bf16.msra.mxu0 0
    %1285 = vmatprep.subr.bf16.mxu0 0
    %1286 = vmatpush2.bf16.msra.mxu0 0
    %1287 = vmatprep.subr.bf16.mxu0 0
    %1288 = vmatpush2.bf16.msra.mxu0 0
    %1289 = vmatprep.subr.bf16.mxu0 0
    %1290 = vmatpush2.bf16.msra.mxu0 0
    %1291 = vmatprep.subr.bf16.mxu0 0
    %1292 = vmatpush2.bf16.msra.mxu0 0
    %1293 = vmatprep.subr.bf16.mxu0 0
    %1294 = vmatpush2.bf16.msra.mxu0 0
    %1295 = vmatprep.subr.bf16.mxu0 0
    %1296 = vmatpush2.bf16.msra.mxu0 0
    %1297 = vmatprep.subr.bf16.mxu0 0
    %1298 = vmatpush2.bf16.msra.mxu0 0
    %1299 = vmatprep.mubr.bf16.mxu0 0
    %1300 = vmatmul.mubr.bf16.gmra.mxu0 %v1259
    %v1301 = vpop.f32.mrf.mxu0
    %v1302 = vadd.f32 0.0, %v1301
    %v1303 = vpop.f32.mrf.mxu0
    %v1304 = vpop.f32.mrf.mxu0
    %v1305 = vadd.f32 0.0, %v1304
    %v1306 = vpop.f32.mrf.mxu0
    %1307 = vmatprep.mubr.bf16.mxu0 0
    %1308 = vmatmul.mubr.bf16.gmra.mxu0 %v1262
    %v1309 = vpop.f32.mrf.mxu0
    %v1310 = vadd.f32 0.0, %v1309
    %v1311 = vpop.f32.mrf.mxu0
    %v1312 = vpop.f32.mrf.mxu0
    %v1313 = vadd.f32 0.0, %v1312
    %v1314 = vpop.f32.mrf.mxu0
    %1315 = vdwg.mxu0
    %v1316 = vadd.f32 %v1151, %v1302
    %v1317 = vadd.f32 %v1154, %v1305
    %v1318 = vadd.f32 %v1159, %v1310
    %v1319 = vadd.f32 %v1162, %v1313
    %v1320 = vld [vmem:[#allocation2] sm:$0x1]
    %v1322 = vlaneseq
    %v1323 = vshrl.u32 %v1322, 7
    %v1324 = vsub.s32 0, %v1323
    %v1325 = vrot.slane %v1320, %v1324
    %v1327 = vadd.f32 %v1316, %v1325
    %v1328 = vadd.f32 %v1317, %v1325
    %v1329 = vadd.f32 %v1318, %v1325
    %v1330 = vadd.f32 %v1319, %v1325
    %v1331 = vld [vmem:[#allocation14] sm:$0xf]
    %v1332 = vld [vmem:[#allocation14 + $0x4] sm:$0xf]
    %v1333 = vld [vmem:[#allocation14 + $0x8] sm:$0xf]
    %v1334 = vld [vmem:[#allocation14 + $0xc] sm:$0xf]
    %v1335 = vpack.c.bf16 %v856, %v856
    %v1336 = vld [vmem:[#allocation13] sm:$0x1]
    %v1338 = vlaneseq
    %v1339 = vshrl.u32 %v1338, 7
    %v1340 = vsub.s32 0, %v1339
    %v1341 = vrot.slane %v1336, %v1340
    %v1347 = vunpack.c.l.b16 %v1331
    %v1348 = vunpack.c.l.b16 %v1332
    %v1349 = vunpack.c.l.b16 %v1333
    %v1350 = vunpack.c.l.b16 %v1334
    %v1351 = vpack.c.b16 %v1348, %v1347
    %v1352 = vpack.c.b16 %v1350, %v1349
    %v1356 = vsel %vm812, %v1335, 0
    %1358 = vmatprep.subr.bf16.mxu0 0
    %1359 = vmatpush1.bf16.msra.mxu0 0
    %1360 = vmatprep.subr.bf16.mxu0 0
    %1361 = vmatpush1.bf16.msra.mxu0 0
    %1362 = vmatprep.subr.bf16.mxu0 0
    %1363 = vmatpush1.bf16.msra.mxu0 0
    %1364 = vmatprep.subr.bf16.mxu0 0
    %1365 = vmatpush1.bf16.msra.mxu0 0
    %1366 = vmatprep.subr.bf16.mxu0 0
    %1367 = vmatpush1.bf16.msra.mxu0 0
    %1368 = vmatprep.subr.bf16.mxu0 0
    %1369 = vmatpush1.bf16.msra.mxu0 0
    %1370 = vmatprep.subr.bf16.mxu0 0
    %1371 = vmatpush1.bf16.msra.mxu0 %v1352
    %1372 = vmatprep.subr.bf16.mxu0 0
    %1373 = vmatpush1.bf16.msra.mxu0 %v1351
    %1374 = vmatprep.subr.bf16.mxu0 0
    %1375 = vmatpush2.bf16.msra.mxu0 0
    %1376 = vmatprep.subr.bf16.mxu0 0
    %1377 = vmatpush2.bf16.msra.mxu0 0
    %1378 = vmatprep.subr.bf16.mxu0 0
    %1379 = vmatpush2.bf16.msra.mxu0 0
    %1380 = vmatprep.subr.bf16.mxu0 0
    %1381 = vmatpush2.bf16.msra.mxu0 0
    %1382 = vmatprep.subr.bf16.mxu0 0
    %1383 = vmatpush2.bf16.msra.mxu0 0
    %1384 = vmatprep.subr.bf16.mxu0 0
    %1385 = vmatpush2.bf16.msra.mxu0 0
    %1386 = vmatprep.subr.bf16.mxu0 0
    %1387 = vmatpush2.bf16.msra.mxu0 0
    %1388 = vmatprep.subr.bf16.mxu0 0
    %1389 = vmatpush2.bf16.msra.mxu0 0
    %1390 = vmatprep.mubr.bf16.mxu0 0
    %1391 = vmatmul.mubr.bf16.gmra.mxu0 %v1356
    %v1392 = vpop.f32.mrf.mxu0
    %v1393 = vadd.f32 %v1341, %v1392
    %v1394 = vpop.f32.mrf.mxu0
    %v1395 = vpop.f32.mrf.mxu0
    %v1396 = vpop.f32.mrf.mxu0
    %1397 = vdwg.mxu0
    %vm1398 = vcmp.gt.f32.partialorder %v1393, 20.0
    %v1399 = vmin.f32 %v1393, 20.0
    %v1400 = vmul.f32 %v1399, 1.442695
    %v1401 = vpow.pop %v1400
    %v1402 = vadd.f32 %v1401, 1.0
    %v1403 = vlog2.pop %v1402
    %v1404 = vmul.f32 %v1403, 0.6931472
    %v1405 = vmul.f32 -0.5, %v1401
    %v1406 = vadd.f32 %v1405, 1.0
    %v1407 = vmul.f32 %v1406, %v1401
    %v1408 = vand.u32 2147483647, %v1401
    %vm1409 = vcmp.lt.f32.partialorder %v1408, 0.0004427343
    %v1410 = vsel %vm1409, %v1407, %v1404
    %v1411 = vsel %vm1398, %v1393, %v1410
    %v1412 = vtanh.pop %v1411
    %v1413 = vmul.f32 %v1393, %v1412
    %v1414 = vld [vmem:[%s7] sm:$0xff]
    %v1415 = vld [vmem:[%s7 + $0x8] sm:$0xff]
    %vm1416 = vcmask 15360
    %v1418 = vsel %vm1416, %v1414, 0
    %v1421 = vsel %vm1416, %v1415, 0
    %v1424 = vsel %vm1039, %v1413, 0
    %1426 = vmatprep.subr.mxu0 0.0
    %1427 = vmatpush1.msra.mxu0 0.0
    %1428 = vmatprep.subr.mxu0 0.0
    %1429 = vmatpush1.msra.mxu0 0.0
    %1430 = vmatprep.subr.mxu0 0.0
    %1431 = vmatpush1.msra.mxu0 0.0
    %1432 = vmatprep.subr.mxu0 0.0
    %1433 = vmatpush1.msra.mxu0 0.0
    %1434 = vmatprep.subr.mxu0 0.0
    %1435 = vmatpush1.msra.mxu0 0.0
    %1436 = vmatprep.subr.mxu0 0.0
    %1437 = vmatpush1.msra.mxu0 0.0
    %1438 = vmatprep.subr.mxu0 0.0
    %1439 = vmatpush1.msra.mxu0 0.0
    %1440 = vmatprep.subr.mxu0 0.0
    %1441 = vmatpush1.msra.mxu0 0.0
    %1442 = vmatprep.subr.mxu0 0.0
    %1443 = vmatpush1.msra.mxu0 0.0
    %1444 = vmatprep.subr.mxu0 0.0
    %1445 = vmatpush1.msra.mxu0 0.0
    %1446 = vmatprep.subr.mxu0 0.0
    %1447 = vmatpush1.msra.mxu0 0.0
    %1448 = vmatprep.subr.mxu0 0.0
    %1449 = vmatpush1.msra.mxu0 0.0
    %1450 = vmatprep.subr.mxu0 0.0
    %1451 = vmatpush1.msra.mxu0 0.0
    %1452 = vmatprep.subr.mxu0 0.0
    %1453 = vmatpush1.msra.mxu0 0.0
    %1454 = vmatprep.subr.mxu0 0.0
    %1455 = vmatpush1.msra.mxu0 0.0
    %1456 = vmatprep.subr.mxu0 0.0
    %1457 = vmatpush1.msra.mxu0 %v1424
    %1458 = vmatprep.subr.mxu0 0.0
    %1459 = vmatpush2.msra.mxu0 0.0
    %1460 = vmatprep.subr.mxu0 0.0
    %1461 = vmatpush2.msra.mxu0 0.0
    %1462 = vmatprep.subr.mxu0 0.0
    %1463 = vmatpush2.msra.mxu0 0.0
    %1464 = vmatprep.subr.mxu0 0.0
    %1465 = vmatpush2.msra.mxu0 0.0
    %1466 = vmatprep.subr.mxu0 0.0
    %1467 = vmatpush2.msra.mxu0 0.0
    %1468 = vmatprep.subr.mxu0 0.0
    %1469 = vmatpush2.msra.mxu0 0.0
    %1470 = vmatprep.subr.mxu0 0.0
    %1471 = vmatpush2.msra.mxu0 0.0
    %1472 = vmatprep.subr.mxu0 0.0
    %1473 = vmatpush2.msra.mxu0 0.0
    %1474 = vmatprep.subr.mxu0 0.0
    %1475 = vmatpush2.msra.mxu0 0.0
    %1476 = vmatprep.subr.mxu0 0.0
    %1477 = vmatpush2.msra.mxu0 0.0
    %1478 = vmatprep.subr.mxu0 0.0
    %1479 = vmatpush2.msra.mxu0 0.0
    %1480 = vmatprep.subr.mxu0 0.0
    %1481 = vmatpush2.msra.mxu0 0.0
    %1482 = vmatprep.subr.mxu0 0.0
    %1483 = vmatpush2.msra.mxu0 0.0
    %1484 = vmatprep.subr.mxu0 0.0
    %1485 = vmatpush2.msra.mxu0 0.0
    %1486 = vmatprep.subr.mxu0 0.0
    %1487 = vmatpush2.msra.mxu0 0.0
    %1488 = vmatprep.subr.mxu0 0.0
    %1489 = vmatpush2.msra.mxu0 0.0
    %1490 = vmatprep.mubr.f32.mxu0 0.0
    %1491 = vmatmul.mubr.f32.gmra.mxu0 %v1418
    %v1492 = vpop.f32.mrf.mxu0
    %v1493 = vadd.f32 0.0, %v1492
    %v1494 = vpop.f32.mrf.mxu0
    %1495 = vmatprep.mubr.f32.mxu0 0.0
    %1496 = vmatmul.mubr.f32.gmra.mxu0 %v1421
    %v1497 = vpop.f32.mrf.mxu0
    %v1498 = vadd.f32 0.0, %v1497
    %v1499 = vpop.f32.mrf.mxu0
    %1500 = vdwg.mxu0
    %v1501 = vld [vmem:[#allocation11] sm:$0xf]
    %v1502 = vld [vmem:[#allocation11 + $0x4] sm:$0xf]
    %v1503 = vpack.c.bf16 %v1328, %v1327
    %v1504 = vpack.c.bf16 %v1330, %v1329
    %v1507 = vunpack.c.l.b16 %v1501
    %v1508 = vunpack.c.l.b16 %v1502
    %v1509 = vpack.c.b16 %v1508, %v1507
    %v1511 = vsel %vm812, %v1509, 0
    %1513 = vmatprep.subr.bf16.mxu0 0
    %1514 = vmatpush1.bf16.msra.mxu0 0
    %1515 = vmatprep.subr.bf16.mxu0 0
    %1516 = vmatpush1.bf16.msra.mxu0 0
    %1517 = vmatprep.subr.bf16.mxu0 0
    %1518 = vmatpush1.bf16.msra.mxu0 0
    %1519 = vmatprep.subr.bf16.mxu0 0
    %1520 = vmatpush1.bf16.msra.mxu0 0
    %1521 = vmatprep.subr.bf16.mxu0 0
    %1522 = vmatpush1.bf16.msra.mxu0 0
    %1523 = vmatprep.subr.bf16.mxu0 0
    %1524 = vmatpush1.bf16.msra.mxu0 0
    %1525 = vmatprep.subr.bf16.mxu0 0
    %1526 = vmatpush1.bf16.msra.mxu0 %v1504
    %1527 = vmatprep.subr.bf16.mxu0 0
    %1528 = vmatpush1.bf16.msra.mxu0 %v1503
    %1529 = vmatprep.subr.bf16.mxu0 0
    %1530 = vmatpush2.bf16.msra.mxu0 0
    %1531 = vmatprep.subr.bf16.mxu0 0
    %1532 = vmatpush2.bf16.msra.mxu0 0
    %1533 = vmatprep.subr.bf16.mxu0 0
    %1534 = vmatpush2.bf16.msra.mxu0 0
    %1535 = vmatprep.subr.bf16.mxu0 0
    %1536 = vmatpush2.bf16.msra.mxu0 0
    %1537 = vmatprep.subr.bf16.mxu0 0
    %1538 = vmatpush2.bf16.msra.mxu0 0
    %1539 = vmatprep.subr.bf16.mxu0 0
    %1540 = vmatpush2.bf16.msra.mxu0 0
    %1541 = vmatprep.subr.bf16.mxu0 0
    %1542 = vmatpush2.bf16.msra.mxu0 0
    %1543 = vmatprep.subr.bf16.mxu0 0
    %1544 = vmatpush2.bf16.msra.mxu0 0
    %1545 = vmatprep.mubr.bf16.mxu0 0
    %1546 = vmatmul.mubr.bf16.gmra.mxu0 %v1511
    %v1547 = vpop.f32.mrf.mxu0
    %v1548 = vadd.f32 0.0, %v1547
    %v1549 = vpop.f32.mrf.mxu0
    %v1550 = vpop.f32.mrf.mxu0
    %v1551 = vadd.f32 0.0, %v1550
    %v1552 = vpop.f32.mrf.mxu0
    %1553 = vdwg.mxu0
    %v1554 = vld [vmem:[#allocation16] sm:$0xf]
    %v1555 = vld [vmem:[#allocation16 + $0x4] sm:$0xf]
    %v1556 = vld [vmem:[#allocation16 + $0x8] sm:$0xf]
    %v1557 = vld [vmem:[#allocation16 + $0xc] sm:$0xf]
    %v1558 = vpack.c.bf16 %v1551, %v1548
    %s1559 = scalar_lea.vmem [#allocation11], 8
    %v1560 = vld [vmem:[%s1559] sm:$0xf]
    %v1561 = vld [vmem:[%s1559 + $0x4] sm:$0xf]
    %v1564 = vunpack.c.l.b16 %v1560
    %v1565 = vunpack.c.l.b16 %v1561
    %v1566 = vpack.c.b16 %v1565, %v1564
    %v1568 = vsel %vm812, %v1566, 0
    %1570 = vmatprep.subr.bf16.mxu0 0
    %1571 = vmatpush1.bf16.msra.mxu0 0
    %1572 = vmatprep.subr.bf16.mxu0 0
    %1573 = vmatpush1.bf16.msra.mxu0 0
    %1574 = vmatprep.subr.bf16.mxu0 0
    %1575 = vmatpush1.bf16.msra.mxu0 0
    %1576 = vmatprep.subr.bf16.mxu0 0
    %1577 = vmatpush1.bf16.msra.mxu0 0
    %1578 = vmatprep.subr.bf16.mxu0 0
    %1579 = vmatpush1.bf16.msra.mxu0 0
    %1580 = vmatprep.subr.bf16.mxu0 0
    %1581 = vmatpush1.bf16.msra.mxu0 0
    %1582 = vmatprep.subr.bf16.mxu0 0
    %1583 = vmatpush1.bf16.msra.mxu0 %v1504
    %1584 = vmatprep.subr.bf16.mxu0 0
    %1585 = vmatpush1.bf16.msra.mxu0 %v1503
    %1586 = vmatprep.subr.bf16.mxu0 0
    %1587 = vmatpush2.bf16.msra.mxu0 0
    %1588 = vmatprep.subr.bf16.mxu0 0
    %1589 = vmatpush2.bf16.msra.mxu0 0
    %1590 = vmatprep.subr.bf16.mxu0 0
    %1591 = vmatpush2.bf16.msra.mxu0 0
    %1592 = vmatprep.subr.bf16.mxu0 0
    %1593 = vmatpush2.bf16.msra.mxu0 0
    %1594 = vmatprep.subr.bf16.mxu0 0
    %1595 = vmatpush2.bf16.msra.mxu0 0
    %1596 = vmatprep.subr.bf16.mxu0 0
    %1597 = vmatpush2.bf16.msra.mxu0 0
    %1598 = vmatprep.subr.bf16.mxu0 0
    %1599 = vmatpush2.bf16.msra.mxu0 0
    %1600 = vmatprep.subr.bf16.mxu0 0
    %1601 = vmatpush2.bf16.msra.mxu0 0
    %1602 = vmatprep.mubr.bf16.mxu0 0
    %1603 = vmatmul.mubr.bf16.gmra.mxu0 %v1568
    %v1604 = vpop.f32.mrf.mxu0
    %v1605 = vadd.f32 0.0, %v1604
    %v1606 = vpop.f32.mrf.mxu0
    %v1607 = vpop.f32.mrf.mxu0
    %v1608 = vadd.f32 0.0, %v1607
    %v1609 = vpop.f32.mrf.mxu0
    %1610 = vdwg.mxu0
    %s1611 = scalar_lea.vmem [#allocation16], 16
    %v1612 = vld [vmem:[%s1611] sm:$0xf]
    %v1613 = vld [vmem:[%s1611 + $0x4] sm:$0xf]
    %v1614 = vld [vmem:[%s1611 + $0x8] sm:$0xf]
    %v1615 = vld [vmem:[%s1611 + $0xc] sm:$0xf]
    %v1616 = vpack.c.bf16 %v1608, %v1605
    %v1621 = vunpack.c.l.b16 %v1612
    %v1622 = vunpack.c.l.b16 %v1613
    %v1623 = vunpack.c.l.b16 %v1614
    %v1624 = vunpack.c.l.b16 %v1615
    %v1625 = vpack.c.b16 %v1622, %v1621
    %v1626 = vpack.c.b16 %v1624, %v1623
    %v1630 = vsel %vm812, %v1616, 0
    %1632 = vmatprep.subr.bf16.mxu0 0
    %1633 = vmatpush1.bf16.msra.mxu0 0
    %1634 = vmatprep.subr.bf16.mxu0 0
    %1635 = vmatpush1.bf16.msra.mxu0 0
    %1636 = vmatprep.subr.bf16.mxu0 0
    %1637 = vmatpush1.bf16.msra.mxu0 0
    %1638 = vmatprep.subr.bf16.mxu0 0
    %1639 = vmatpush1.bf16.msra.mxu0 0
    %1640 = vmatprep.subr.bf16.mxu0 0
    %1641 = vmatpush1.bf16.msra.mxu0 0
    %1642 = vmatprep.subr.bf16.mxu0 0
    %1643 = vmatpush1.bf16.msra.mxu0 0
    %1644 = vmatprep.subr.bf16.mxu0 0
    %1645 = vmatpush1.bf16.msra.mxu0 %v1626
    %1646 = vmatprep.subr.bf16.mxu0 0
    %1647 = vmatpush1.bf16.msra.mxu0 %v1625
    %1648 = vmatprep.subr.bf16.mxu0 0
    %1649 = vmatpush2.bf16.msra.mxu0 0
    %1650 = vmatprep.subr.bf16.mxu0 0
    %1651 = vmatpush2.bf16.msra.mxu0 0
    %1652 = vmatprep.subr.bf16.mxu0 0
    %1653 = vmatpush2.bf16.msra.mxu0 0
    %1654 = vmatprep.subr.bf16.mxu0 0
    %1655 = vmatpush2.bf16.msra.mxu0 0
    %1656 = vmatprep.subr.bf16.mxu0 0
    %1657 = vmatpush2.bf16.msra.mxu0 0
    %1658 = vmatprep.subr.bf16.mxu0 0
    %1659 = vmatpush2.bf16.msra.mxu0 0
    %1660 = vmatprep.subr.bf16.mxu0 0
    %1661 = vmatpush2.bf16.msra.mxu0 0
    %1662 = vmatprep.subr.bf16.mxu0 0
    %1663 = vmatpush2.bf16.msra.mxu0 0
    %1664 = vmatprep.mubr.bf16.mxu0 0
    %1665 = vmatmul.mubr.bf16.gmra.mxu0 %v1630
    %v1666 = vpop.f32.mrf.mxu0
    %v1667 = vadd.f32 0.0, %v1666
    %v1668 = vpop.f32.mrf.mxu0
    %v1669 = vpop.f32.mrf.mxu0
    %v1670 = vadd.f32 0.0, %v1669
    %v1671 = vpop.f32.mrf.mxu0
    %1672 = vdwg.mxu0
    %v1677 = vunpack.c.l.b16 %v1554
    %v1678 = vunpack.c.l.b16 %v1555
    %v1679 = vunpack.c.l.b16 %v1556
    %v1680 = vunpack.c.l.b16 %v1557
    %v1681 = vpack.c.b16 %v1678, %v1677
    %v1682 = vpack.c.b16 %v1680, %v1679
    %v1686 = vsel %vm812, %v1558, 0
    %1688 = vmatprep.subr.bf16.mxu0 0
    %1689 = vmatpush1.bf16.msra.mxu0 0
    %1690 = vmatprep.subr.bf16.mxu0 0
    %1691 = vmatpush1.bf16.msra.mxu0 0
    %1692 = vmatprep.subr.bf16.mxu0 0
    %1693 = vmatpush1.bf16.msra.mxu0 0
    %1694 = vmatprep.subr.bf16.mxu0 0
    %1695 = vmatpush1.bf16.msra.mxu0 0
    %1696 = vmatprep.subr.bf16.mxu0 0
    %1697 = vmatpush1.bf16.msra.mxu0 0
    %1698 = vmatprep.subr.bf16.mxu0 0
    %1699 = vmatpush1.bf16.msra.mxu0 0
    %1700 = vmatprep.subr.bf16.mxu0 0
    %1701 = vmatpush1.bf16.msra.mxu0 %v1682
    %1702 = vmatprep.subr.bf16.mxu0 0
    %1703 = vmatpush1.bf16.msra.mxu0 %v1681
    %1704 = vmatprep.subr.bf16.mxu0 0
    %1705 = vmatpush2.bf16.msra.mxu0 0
    %1706 = vmatprep.subr.bf16.mxu0 0
    %1707 = vmatpush2.bf16.msra.mxu0 0
    %1708 = vmatprep.subr.bf16.mxu0 0
    %1709 = vmatpush2.bf16.msra.mxu0 0
    %1710 = vmatprep.subr.bf16.mxu0 0
    %1711 = vmatpush2.bf16.msra.mxu0 0
    %1712 = vmatprep.subr.bf16.mxu0 0
    %1713 = vmatpush2.bf16.msra.mxu0 0
    %1714 = vmatprep.subr.bf16.mxu0 0
    %1715 = vmatpush2.bf16.msra.mxu0 0
    %1716 = vmatprep.subr.bf16.mxu0 0
    %1717 = vmatpush2.bf16.msra.mxu0 0
    %1718 = vmatprep.subr.bf16.mxu0 0
    %1719 = vmatpush2.bf16.msra.mxu0 0
    %1720 = vmatprep.mubr.bf16.mxu0 0
    %1721 = vmatmul.mubr.bf16.gmra.mxu0 %v1686
    %v1722 = vpop.f32.mrf.mxu0
    %v1723 = vadd.f32 %v1667, %v1722
    %v1724 = vpop.f32.mrf.mxu0
    %v1725 = vpop.f32.mrf.mxu0
    %v1726 = vadd.f32 %v1670, %v1725
    %v1727 = vpop.f32.mrf.mxu0
    %1728 = vdwg.mxu0
    %s1729 = scalar_lea.vmem [#allocation11], 16
    %v1730 = vld [vmem:[%s1729] sm:$0xf]
    %v1731 = vld [vmem:[%s1729 + $0x4] sm:$0xf]
    %v1734 = vunpack.c.l.b16 %v1730
    %v1735 = vunpack.c.l.b16 %v1731
    %v1736 = vpack.c.b16 %v1735, %v1734
    %v1738 = vsel %vm812, %v1736, 0
    %1740 = vmatprep.subr.bf16.mxu0 0
    %1741 = vmatpush1.bf16.msra.mxu0 0
    %1742 = vmatprep.subr.bf16.mxu0 0
    %1743 = vmatpush1.bf16.msra.mxu0 0
    %1744 = vmatprep.subr.bf16.mxu0 0
    %1745 = vmatpush1.bf16.msra.mxu0 0
    %1746 = vmatprep.subr.bf16.mxu0 0
    %1747 = vmatpush1.bf16.msra.mxu0 0
    %1748 = vmatprep.subr.bf16.mxu0 0
    %1749 = vmatpush1.bf16.msra.mxu0 0
    %1750 = vmatprep.subr.bf16.mxu0 0
    %1751 = vmatpush1.bf16.msra.mxu0 0
    %1752 = vmatprep.subr.bf16.mxu0 0
    %1753 = vmatpush1.bf16.msra.mxu0 %v1504
    %1754 = vmatprep.subr.bf16.mxu0 0
    %1755 = vmatpush1.bf16.msra.mxu0 %v1503
    %1756 = vmatprep.subr.bf16.mxu0 0
    %1757 = vmatpush2.bf16.msra.mxu0 0
    %1758 = vmatprep.subr.bf16.mxu0 0
    %1759 = vmatpush2.bf16.msra.mxu0 0
    %1760 = vmatprep.subr.bf16.mxu0 0
    %1761 = vmatpush2.bf16.msra.mxu0 0
    %1762 = vmatprep.subr.bf16.mxu0 0
    %1763 = vmatpush2.bf16.msra.mxu0 0
    %1764 = vmatprep.subr.bf16.mxu0 0
    %1765 = vmatpush2.bf16.msra.mxu0 0
    %1766 = vmatprep.subr.bf16.mxu0 0
    %1767 = vmatpush2.bf16.msra.mxu0 0
    %1768 = vmatprep.subr.bf16.mxu0 0
    %1769 = vmatpush2.bf16.msra.mxu0 0
    %1770 = vmatprep.subr.bf16.mxu0 0
    %1771 = vmatpush2.bf16.msra.mxu0 0
    %1772 = vmatprep.mubr.bf16.mxu0 0
    %1773 = vmatmul.mubr.bf16.gmra.mxu0 %v1738
    %v1774 = vpop.f32.mrf.mxu0
    %v1775 = vadd.f32 0.0, %v1774
    %v1776 = vpop.f32.mrf.mxu0
    %v1777 = vpop.f32.mrf.mxu0
    %v1778 = vadd.f32 0.0, %v1777
    %v1779 = vpop.f32.mrf.mxu0
    %1780 = vdwg.mxu0
    %s1781 = scalar_lea.vmem [#allocation16], 32
    %v1782 = vld [vmem:[%s1781] sm:$0xf]
    %v1783 = vld [vmem:[%s1781 + $0x4] sm:$0xf]
    %v1784 = vld [vmem:[%s1781 + $0x8] sm:$0xf]
    %v1785 = vld [vmem:[%s1781 + $0xc] sm:$0xf]
    %v1786 = vpack.c.bf16 %v1778, %v1775
    %v1791 = vunpack.c.l.b16 %v1782
    %v1792 = vunpack.c.l.b16 %v1783
    %v1793 = vunpack.c.l.b16 %v1784
    %v1794 = vunpack.c.l.b16 %v1785
    %v1795 = vpack.c.b16 %v1792, %v1791
    %v1796 = vpack.c.b16 %v1794, %v1793
    %v1800 = vsel %vm812, %v1786, 0
    %1802 = vmatprep.subr.bf16.mxu0 0
    %1803 = vmatpush1.bf16.msra.mxu0 0
    %1804 = vmatprep.subr.bf16.mxu0 0
    %1805 = vmatpush1.bf16.msra.mxu0 0
    %1806 = vmatprep.subr.bf16.mxu0 0
    %1807 = vmatpush1.bf16.msra.mxu0 0
    %1808 = vmatprep.subr.bf16.mxu0 0
    %1809 = vmatpush1.bf16.msra.mxu0 0
    %1810 = vmatprep.subr.bf16.mxu0 0
    %1811 = vmatpush1.bf16.msra.mxu0 0
    %1812 = vmatprep.subr.bf16.mxu0 0
    %1813 = vmatpush1.bf16.msra.mxu0 0
    %1814 = vmatprep.subr.bf16.mxu0 0
    %1815 = vmatpush1.bf16.msra.mxu0 %v1796
    %1816 = vmatprep.subr.bf16.mxu0 0
    %1817 = vmatpush1.bf16.msra.mxu0 %v1795
    %1818 = vmatprep.subr.bf16.mxu0 0
    %1819 = vmatpush2.bf16.msra.mxu0 0
    %1820 = vmatprep.subr.bf16.mxu0 0
    %1821 = vmatpush2.bf16.msra.mxu0 0
    %1822 = vmatprep.subr.bf16.mxu0 0
    %1823 = vmatpush2.bf16.msra.mxu0 0
    %1824 = vmatprep.subr.bf16.mxu0 0
    %1825 = vmatpush2.bf16.msra.mxu0 0
    %1826 = vmatprep.subr.bf16.mxu0 0
    %1827 = vmatpush2.bf16.msra.mxu0 0
    %1828 = vmatprep.subr.bf16.mxu0 0
    %1829 = vmatpush2.bf16.msra.mxu0 0
    %1830 = vmatprep.subr.bf16.mxu0 0
    %1831 = vmatpush2.bf16.msra.mxu0 0
    %1832 = vmatprep.subr.bf16.mxu0 0
    %1833 = vmatpush2.bf16.msra.mxu0 0
    %1834 = vmatprep.mubr.bf16.mxu0 0
    %1835 = vmatmul.mubr.bf16.gmra.mxu0 %v1800
    %v1836 = vpop.f32.mrf.mxu0
    %v1837 = vadd.f32 0.0, %v1836
    %v1838 = vpop.f32.mrf.mxu0
    %v1839 = vpop.f32.mrf.mxu0
    %v1840 = vadd.f32 0.0, %v1839
    %v1841 = vpop.f32.mrf.mxu0
    %1842 = vdwg.mxu0
    %v1843 = vadd.f32 %v1723, %v1837
    %v1844 = vadd.f32 %v1726, %v1840
    %v1845 = vld [vmem:[#allocation8] sm:$0x1]
    %v1847 = vlaneseq
    %v1848 = vshrl.u32 %v1847, 7
    %v1849 = vsub.s32 0, %v1848
    %v1850 = vrot.slane %v1845, %v1849
    %v1852 = vadd.f32 %v1843, %v1850
    %v1853 = vadd.f32 %v1844, %v1850
    %vm1854 = vcmp.gt.f32.partialorder %v1852, 20.0
    %vm1855 = vcmp.gt.f32.partialorder %v1853, 20.0
    %v1856 = vmin.f32 %v1852, 20.0
    %v1857 = vmin.f32 %v1853, 20.0
    %v1858 = vmul.f32 %v1856, 1.442695
    %v1859 = vpow.pop %v1858
    %v1860 = vmul.f32 %v1857, 1.442695
    %v1861 = vpow.pop %v1860
    %v1862 = vadd.f32 %v1859, 1.0
    %v1863 = vlog2.pop %v1862
    %v1864 = vmul.f32 %v1863, 0.6931472
    %v1865 = vmul.f32 -0.5, %v1859
    %v1866 = vadd.f32 %v1865, 1.0
    %v1867 = vmul.f32 %v1866, %v1859
    %v1868 = vand.u32 2147483647, %v1859
    %vm1869 = vcmp.lt.f32.partialorder %v1868, 0.0004427343
    %v1870 = vsel %vm1869, %v1867, %v1864
    %v1871 = vadd.f32 %v1861, 1.0
    %v1872 = vlog2.pop %v1871
    %v1873 = vmul.f32 %v1872, 0.6931472
    %v1874 = vmul.f32 -0.5, %v1861
    %v1875 = vadd.f32 %v1874, 1.0
    %v1876 = vmul.f32 %v1875, %v1861
    %v1877 = vand.u32 2147483647, %v1861
    %vm1878 = vcmp.lt.f32.partialorder %v1877, 0.0004427343
    %v1879 = vsel %vm1878, %v1876, %v1873
    %v1880 = vsel %vm1854, %v1852, %v1870
    %v1881 = vsel %vm1855, %v1853, %v1879
    %v1882 = vtanh.pop %v1880
    %v1883 = vtanh.pop %v1881
    %v1884 = vmul.f32 %v1852, %v1882
    %v1885 = vmul.f32 %v1853, %v1883
    %vm1886 = vcmask 523264
    %v1887 = vsel %vm1886, %v1884, 0.0
    %v1888 = vsel %vm1886, %v1885, 0.0
    %v1889 = vadd.f32 %v1887, %v1888
    %v1890 = vrot.slane %v1889, 4
    %v1891 = vadd.f32 %v1889, %v1890
    %v1892 = vrot.slane %v1891, 2
    %v1893 = vadd.f32 %v1891, %v1892
    %v1894 = vrot.slane %v1893, 1
    %v1895 = vadd.f32 %v1893, %v1894
    %v1896 = vrcp.pop 16.0
    %v1897 = vmul.f32 %v1895, %v1896
    %v1898 = vsub.f32 %v1884, %v1897
    %v1899 = vsub.f32 %v1885, %v1897
    %v1900 = vmul.f32 %v1898, %v1898
    %v1901 = vmul.f32 %v1899, %v1899
    %v1902 = vsel %vm1886, %v1900, 0.0
    %v1903 = vsel %vm1886, %v1901, 0.0
    %v1904 = vadd.f32 %v1902, %v1903
    %v1905 = vrot.slane %v1904, 4
    %v1906 = vadd.f32 %v1904, %v1905
    %v1907 = vrot.slane %v1906, 2
    %v1908 = vadd.f32 %v1906, %v1907
    %v1909 = vrot.slane %v1908, 1
    %v1910 = vadd.f32 %v1908, %v1909
    %v1911 = vmul.f32 %v1910, %v1896
    %v1912 = vadd.f32 %v1911, 1e-05
    %v1913 = vrsqrt.pop %v1912
    %v1914 = vmul.f32 %v1898, %v1913
    %v1915 = vmul.f32 %v1899, %v1913
    %v1916 = vld [vmem:[%s15] sm:$0x1]
    %v1918 = vlaneseq
    %v1919 = vshrl.u32 %v1918, 7
    %v1920 = vsub.s32 0, %v1919
    %v1921 = vrot.slane %v1916, %v1920
    %v1923 = vmul.f32 %v1914, %v1921
    %v1924 = vmul.f32 %v1915, %v1921
    %v1925 = vld [vmem:[%s13] sm:$0x1]
    %v1927 = vlaneseq
    %v1928 = vshrl.u32 %v1927, 7
    %v1929 = vsub.s32 0, %v1928
    %v1930 = vrot.slane %v1925, %v1929
    %v1932 = vadd.f32 %v1923, %v1930
    %v1933 = vadd.f32 %v1924, %v1930
    %v1934 = vadd.f32 %v1932, %v1493
    %v1935 = vadd.f32 %v1933, %v1498
    %v1936 = vld [vmem:[%s23] sm:$0xf]
    %v1937 = vld [vmem:[%s23 + $0x4] sm:$0xf]
    %v1938 = vpack.c.bf16 %v1935, %v1934
    %v1941 = vunpack.c.l.b16 %v1936
    %v1942 = vunpack.c.l.b16 %v1937
    %v1943 = vpack.c.b16 %v1942, %v1941
    %vm1944 = vcmask 130048
    %v1946 = vsel %vm1944, %v1943, 0
    %1948 = vmatprep.subr.bf16.mxu0 0
    %1949 = vmatpush1.bf16.msra.mxu0 0
    %1950 = vmatprep.subr.bf16.mxu0 0
    %1951 = vmatpush1.bf16.msra.mxu0 0
    %1952 = vmatprep.subr.bf16.mxu0 0
    %1953 = vmatpush1.bf16.msra.mxu0 0
    %1954 = vmatprep.subr.bf16.mxu0 0
    %1955 = vmatpush1.bf16.msra.mxu0 0
    %1956 = vmatprep.subr.bf16.mxu0 0
    %1957 = vmatpush1.bf16.msra.mxu0 0
    %1958 = vmatprep.subr.bf16.mxu0 0
    %1959 = vmatpush1.bf16.msra.mxu0 0
    %1960 = vmatprep.subr.bf16.mxu0 0
    %1961 = vmatpush1.bf16.msra.mxu0 0
    %1962 = vmatprep.subr.bf16.mxu0 0
    %1963 = vmatpush1.bf16.msra.mxu0 %v1938
    %1964 = vmatprep.subr.bf16.mxu0 0
    %1965 = vmatpush2.bf16.msra.mxu0 0
    %1966 = vmatprep.subr.bf16.mxu0 0
    %1967 = vmatpush2.bf16.msra.mxu0 0
    %1968 = vmatprep.subr.bf16.mxu0 0
    %1969 = vmatpush2.bf16.msra.mxu0 0
    %1970 = vmatprep.subr.bf16.mxu0 0
    %1971 = vmatpush2.bf16.msra.mxu0 0
    %1972 = vmatprep.subr.bf16.mxu0 0
    %1973 = vmatpush2.bf16.msra.mxu0 0
    %1974 = vmatprep.subr.bf16.mxu0 0
    %1975 = vmatpush2.bf16.msra.mxu0 0
    %1976 = vmatprep.subr.bf16.mxu0 0
    %1977 = vmatpush2.bf16.msra.mxu0 0
    %1978 = vmatprep.subr.bf16.mxu0 0
    %1979 = vmatpush2.bf16.msra.mxu0 0
    %1980 = vmatprep.mubr.bf16.mxu0 0
    %1981 = vmatmul.mubr.bf16.gmra.mxu0 %v1946
    %v1982 = vpop.f32.mrf.mxu0
    %v1983 = vadd.f32 0.0, %v1982
    %v1984 = vpop.f32.mrf.mxu0
    %v1985 = vpop.f32.mrf.mxu0
    %v1986 = vadd.f32 0.0, %v1985
    %v1987 = vpop.f32.mrf.mxu0
    %1988 = vdwg.mxu0
    %v1989 = vld [vmem:[#allocation17] sm:$0xf]
    %v1990 = vld [vmem:[#allocation17 + $0x4] sm:$0xf]
    %v1991 = vld [vmem:[#allocation17 + $0x8] sm:$0xf]
    %v1992 = vld [vmem:[#allocation17 + $0xc] sm:$0xf]
    %v1993 = vld [vmem:[#allocation17 + $0x10] sm:$0xf]
    %v1994 = vld [vmem:[#allocation17 + $0x14] sm:$0xf]
    %v1995 = vld [vmem:[#allocation17 + $0x18] sm:$0xf]
    %v1996 = vld [vmem:[#allocation17 + $0x1c] sm:$0xf]
    %v1997 = vpack.c.bf16 %v1986, %v1983
    %s1998 = scalar_lea.vmem %s23, 8
    %v1999 = vld [vmem:[%s1998] sm:$0xf]
    %v2000 = vld [vmem:[%s1998 + $0x4] sm:$0xf]
    %v2003 = vunpack.c.l.b16 %v1999
    %v2004 = vunpack.c.l.b16 %v2000
    %v2005 = vpack.c.b16 %v2004, %v2003
    %v2007 = vsel %vm1944, %v2005, 0
    %2009 = vmatprep.subr.bf16.mxu0 0
    %2010 = vmatpush1.bf16.msra.mxu0 0
    %2011 = vmatprep.subr.bf16.mxu0 0
    %2012 = vmatpush1.bf16.msra.mxu0 0
    %2013 = vmatprep.subr.bf16.mxu0 0
    %2014 = vmatpush1.bf16.msra.mxu0 0
    %2015 = vmatprep.subr.bf16.mxu0 0
    %2016 = vmatpush1.bf16.msra.mxu0 0
    %2017 = vmatprep.subr.bf16.mxu0 0
    %2018 = vmatpush1.bf16.msra.mxu0 0
    %2019 = vmatprep.subr.bf16.mxu0 0
    %2020 = vmatpush1.bf16.msra.mxu0 0
    %2021 = vmatprep.subr.bf16.mxu0 0
    %2022 = vmatpush1.bf16.msra.mxu0 0
    %2023 = vmatprep.subr.bf16.mxu0 0
    %2024 = vmatpush1.bf16.msra.mxu0 %v1938
    %2025 = vmatprep.subr.bf16.mxu0 0
    %2026 = vmatpush2.bf16.msra.mxu0 0
    %2027 = vmatprep.subr.bf16.mxu0 0
    %2028 = vmatpush2.bf16.msra.mxu0 0
    %2029 = vmatprep.subr.bf16.mxu0 0
    %2030 = vmatpush2.bf16.msra.mxu0 0
    %2031 = vmatprep.subr.bf16.mxu0 0
    %2032 = vmatpush2.bf16.msra.mxu0 0
    %2033 = vmatprep.subr.bf16.mxu0 0
    %2034 = vmatpush2.bf16.msra.mxu0 0
    %2035 = vmatprep.subr.bf16.mxu0 0
    %2036 = vmatpush2.bf16.msra.mxu0 0
    %2037 = vmatprep.subr.bf16.mxu0 0
    %2038 = vmatpush2.bf16.msra.mxu0 0
    %2039 = vmatprep.subr.bf16.mxu0 0
    %2040 = vmatpush2.bf16.msra.mxu0 0
    %2041 = vmatprep.mubr.bf16.mxu0 0
    %2042 = vmatmul.mubr.bf16.gmra.mxu0 %v2007
    %v2043 = vpop.f32.mrf.mxu0
    %v2044 = vadd.f32 0.0, %v2043
    %v2045 = vpop.f32.mrf.mxu0
    %v2046 = vpop.f32.mrf.mxu0
    %v2047 = vadd.f32 0.0, %v2046
    %v2048 = vpop.f32.mrf.mxu0
    %2049 = vdwg.mxu0
    %s2050 = scalar_lea.vmem [#allocation17], 32
    %v2051 = vld [vmem:[%s2050] sm:$0xf]
    %v2052 = vld [vmem:[%s2050 + $0x4] sm:$0xf]
    %v2053 = vld [vmem:[%s2050 + $0x8] sm:$0xf]
    %v2054 = vld [vmem:[%s2050 + $0xc] sm:$0xf]
    %v2055 = vld [vmem:[%s2050 + $0x10] sm:$0xf]
    %v2056 = vld [vmem:[%s2050 + $0x14] sm:$0xf]
    %v2057 = vld [vmem:[%s2050 + $0x18] sm:$0xf]
    %v2058 = vld [vmem:[%s2050 + $0x1c] sm:$0xf]
    %v2059 = vpack.c.bf16 %v2047, %v2044
    %v2068 = vunpack.c.l.b16 %v2051
    %v2069 = vunpack.c.l.b16 %v2052
    %v2070 = vunpack.c.l.b16 %v2053
    %v2071 = vunpack.c.l.b16 %v2054
    %v2072 = vunpack.c.l.b16 %v2055
    %v2073 = vunpack.c.l.b16 %v2056
    %v2074 = vunpack.c.l.b16 %v2057
    %v2075 = vunpack.c.l.b16 %v2058
    %v2076 = vpack.c.b16 %v2069, %v2068
    %v2077 = vpack.c.b16 %v2071, %v2070
    %v2078 = vpack.c.b16 %v2073, %v2072
    %v2079 = vpack.c.b16 %v2075, %v2074
    %v2085 = vsel %vm1886, %v2059, 0
    %2087 = vmatprep.subr.bf16.mxu0 0
    %2088 = vmatpush1.bf16.msra.mxu0 0
    %2089 = vmatprep.subr.bf16.mxu0 0
    %2090 = vmatpush1.bf16.msra.mxu0 0
    %2091 = vmatprep.subr.bf16.mxu0 0
    %2092 = vmatpush1.bf16.msra.mxu0 0
    %2093 = vmatprep.subr.bf16.mxu0 0
    %2094 = vmatpush1.bf16.msra.mxu0 0
    %2095 = vmatprep.subr.bf16.mxu0 0
    %2096 = vmatpush1.bf16.msra.mxu0 %v2079
    %2097 = vmatprep.subr.bf16.mxu0 0
    %2098 = vmatpush1.bf16.msra.mxu0 %v2078
    %2099 = vmatprep.subr.bf16.mxu0 0
    %2100 = vmatpush1.bf16.msra.mxu0 %v2077
    %2101 = vmatprep.subr.bf16.mxu0 0
    %2102 = vmatpush1.bf16.msra.mxu0 %v2076
    %2103 = vmatprep.subr.bf16.mxu0 0
    %2104 = vmatpush2.bf16.msra.mxu0 0
    %2105 = vmatprep.subr.bf16.mxu0 0
    %2106 = vmatpush2.bf16.msra.mxu0 0
    %2107 = vmatprep.subr.bf16.mxu0 0
    %2108 = vmatpush2.bf16.msra.mxu0 0
    %2109 = vmatprep.subr.bf16.mxu0 0
    %2110 = vmatpush2.bf16.msra.mxu0 0
    %2111 = vmatprep.subr.bf16.mxu0 0
    %2112 = vmatpush2.bf16.msra.mxu0 0
    %2113 = vmatprep.subr.bf16.mxu0 0
    %2114 = vmatpush2.bf16.msra.mxu0 0
    %2115 = vmatprep.subr.bf16.mxu0 0
    %2116 = vmatpush2.bf16.msra.mxu0 0
    %2117 = vmatprep.subr.bf16.mxu0 0
    %2118 = vmatpush2.bf16.msra.mxu0 0
    %2119 = vmatprep.mubr.bf16.mxu0 0
    %2120 = vmatmul.mubr.bf16.gmra.mxu0 %v2085
    %v2121 = vpop.f32.mrf.mxu0
    %v2122 = vadd.f32 0.0, %v2121
    %v2123 = vpop.f32.mrf.mxu0
    %v2124 = vpop.f32.mrf.mxu0
    %v2125 = vadd.f32 0.0, %v2124
    %v2126 = vpop.f32.mrf.mxu0
    %2127 = vdwg.mxu0
    %v2136 = vunpack.c.l.b16 %v1989
    %v2137 = vunpack.c.l.b16 %v1990
    %v2138 = vunpack.c.l.b16 %v1991
    %v2139 = vunpack.c.l.b16 %v1992
    %v2140 = vunpack.c.l.b16 %v1993
    %v2141 = vunpack.c.l.b16 %v1994
    %v2142 = vunpack.c.l.b16 %v1995
    %v2143 = vunpack.c.l.b16 %v1996
    %v2144 = vpack.c.b16 %v2137, %v2136
    %v2145 = vpack.c.b16 %v2139, %v2138
    %v2146 = vpack.c.b16 %v2141, %v2140
    %v2147 = vpack.c.b16 %v2143, %v2142
    %v2153 = vsel %vm1886, %v1997, 0
    %2155 = vmatprep.subr.bf16.mxu0 0
    %2156 = vmatpush1.bf16.msra.mxu0 0
    %2157 = vmatprep.subr.bf16.mxu0 0
    %2158 = vmatpush1.bf16.msra.mxu0 0
    %2159 = vmatprep.subr.bf16.mxu0 0
    %2160 = vmatpush1.bf16.msra.mxu0 0
    %2161 = vmatprep.subr.bf16.mxu0 0
    %2162 = vmatpush1.bf16.msra.mxu0 0
    %2163 = vmatprep.subr.bf16.mxu0 0
    %2164 = vmatpush1.bf16.msra.mxu0 %v2147
    %2165 = vmatprep.subr.bf16.mxu0 0
    %2166 = vmatpush1.bf16.msra.mxu0 %v2146
    %2167 = vmatprep.subr.bf16.mxu0 0
    %2168 = vmatpush1.bf16.msra.mxu0 %v2145
    %2169 = vmatprep.subr.bf16.mxu0 0
    %2170 = vmatpush1.bf16.msra.mxu0 %v2144
    %2171 = vmatprep.subr.bf16.mxu0 0
    %2172 = vmatpush2.bf16.msra.mxu0 0
    %2173 = vmatprep.subr.bf16.mxu0 0
    %2174 = vmatpush2.bf16.msra.mxu0 0
    %2175 = vmatprep.subr.bf16.mxu0 0
    %2176 = vmatpush2.bf16.msra.mxu0 0
    %2177 = vmatprep.subr.bf16.mxu0 0
    %2178 = vmatpush2.bf16.msra.mxu0 0
    %2179 = vmatprep.subr.bf16.mxu0 0
    %2180 = vmatpush2.bf16.msra.mxu0 0
    %2181 = vmatprep.subr.bf16.mxu0 0
    %2182 = vmatpush2.bf16.msra.mxu0 0
    %2183 = vmatprep.subr.bf16.mxu0 0
    %2184 = vmatpush2.bf16.msra.mxu0 0
    %2185 = vmatprep.subr.bf16.mxu0 0
    %2186 = vmatpush2.bf16.msra.mxu0 0
    %2187 = vmatprep.mubr.bf16.mxu0 0
    %2188 = vmatmul.mubr.bf16.gmra.mxu0 %v2153
    %v2189 = vpop.f32.mrf.mxu0
    %v2190 = vadd.f32 %v2122, %v2189
    %v2191 = vpop.f32.mrf.mxu0
    %v2192 = vpop.f32.mrf.mxu0
    %v2193 = vadd.f32 %v2125, %v2192
    %v2194 = vpop.f32.mrf.mxu0
    %2195 = vdwg.mxu0
    %s2196 = scalar_lea.vmem %s23, 16
    %v2197 = vld [vmem:[%s2196] sm:$0xf]
    %v2198 = vld [vmem:[%s2196 + $0x4] sm:$0xf]
    %v2201 = vunpack.c.l.b16 %v2197
    %v2202 = vunpack.c.l.b16 %v2198
    %v2203 = vpack.c.b16 %v2202, %v2201
    %v2205 = vsel %vm1944, %v2203, 0
    %2207 = vmatprep.subr.bf16.mxu0 0
    %2208 = vmatpush1.bf16.msra.mxu0 0
    %2209 = vmatprep.subr.bf16.mxu0 0
    %2210 = vmatpush1.bf16.msra.mxu0 0
    %2211 = vmatprep.subr.bf16.mxu0 0
    %2212 = vmatpush1.bf16.msra.mxu0 0
    %2213 = vmatprep.subr.bf16.mxu0 0
    %2214 = vmatpush1.bf16.msra.mxu0 0
    %2215 = vmatprep.subr.bf16.mxu0 0
    %2216 = vmatpush1.bf16.msra.mxu0 0
    %2217 = vmatprep.subr.bf16.mxu0 0
    %2218 = vmatpush1.bf16.msra.mxu0 0
    %2219 = vmatprep.subr.bf16.mxu0 0
    %2220 = vmatpush1.bf16.msra.mxu0 0
    %2221 = vmatprep.subr.bf16.mxu0 0
    %2222 = vmatpush1.bf16.msra.mxu0 %v1938
    %2223 = vmatprep.subr.bf16.mxu0 0
    %2224 = vmatpush2.bf16.msra.mxu0 0
    %2225 = vmatprep.subr.bf16.mxu0 0
    %2226 = vmatpush2.bf16.msra.mxu0 0
    %2227 = vmatprep.subr.bf16.mxu0 0
    %2228 = vmatpush2.bf16.msra.mxu0 0
    %2229 = vmatprep.subr.bf16.mxu0 0
    %2230 = vmatpush2.bf16.msra.mxu0 0
    %2231 = vmatprep.subr.bf16.mxu0 0
    %2232 = vmatpush2.bf16.msra.mxu0 0
    %2233 = vmatprep.subr.bf16.mxu0 0
    %2234 = vmatpush2.bf16.msra.mxu0 0
    %2235 = vmatprep.subr.bf16.mxu0 0
    %2236 = vmatpush2.bf16.msra.mxu0 0
    %2237 = vmatprep.subr.bf16.mxu0 0
    %2238 = vmatpush2.bf16.msra.mxu0 0
    %2239 = vmatprep.mubr.bf16.mxu0 0
    %2240 = vmatmul.mubr.bf16.gmra.mxu0 %v2205
    %v2241 = vpop.f32.mrf.mxu0
    %v2242 = vadd.f32 0.0, %v2241
    %v2243 = vpop.f32.mrf.mxu0
    %v2244 = vpop.f32.mrf.mxu0
    %v2245 = vadd.f32 0.0, %v2244
    %v2246 = vpop.f32.mrf.mxu0
    %2247 = vdwg.mxu0
    %s2248 = scalar_lea.vmem [#allocation17], 64
    %v2249 = vld [vmem:[%s2248] sm:$0xf]
    %v2250 = vld [vmem:[%s2248 + $0x4] sm:$0xf]
    %v2251 = vld [vmem:[%s2248 + $0x8] sm:$0xf]
    %v2252 = vld [vmem:[%s2248 + $0xc] sm:$0xf]
    %v2253 = vld [vmem:[%s2248 + $0x10] sm:$0xf]
    %v2254 = vld [vmem:[%s2248 + $0x14] sm:$0xf]
    %v2255 = vld [vmem:[%s2248 + $0x18] sm:$0xf]
    %v2256 = vld [vmem:[%s2248 + $0x1c] sm:$0xf]
    %v2257 = vpack.c.bf16 %v2245, %v2242
    %v2266 = vunpack.c.l.b16 %v2249
    %v2267 = vunpack.c.l.b16 %v2250
    %v2268 = vunpack.c.l.b16 %v2251
    %v2269 = vunpack.c.l.b16 %v2252
    %v2270 = vunpack.c.l.b16 %v2253
    %v2271 = vunpack.c.l.b16 %v2254
    %v2272 = vunpack.c.l.b16 %v2255
    %v2273 = vunpack.c.l.b16 %v2256
    %v2274 = vpack.c.b16 %v2267, %v2266
    %v2275 = vpack.c.b16 %v2269, %v2268
    %v2276 = vpack.c.b16 %v2271, %v2270
    %v2277 = vpack.c.b16 %v2273, %v2272
    %v2283 = vsel %vm1886, %v2257, 0
    %2285 = vmatprep.subr.bf16.mxu0 0
    %2286 = vmatpush1.bf16.msra.mxu0 0
    %2287 = vmatprep.subr.bf16.mxu0 0
    %2288 = vmatpush1.bf16.msra.mxu0 0
    %2289 = vmatprep.subr.bf16.mxu0 0
    %2290 = vmatpush1.bf16.msra.mxu0 0
    %2291 = vmatprep.subr.bf16.mxu0 0
    %2292 = vmatpush1.bf16.msra.mxu0 0
    %2293 = vmatprep.subr.bf16.mxu0 0
    %2294 = vmatpush1.bf16.msra.mxu0 %v2277
    %2295 = vmatprep.subr.bf16.mxu0 0
    %2296 = vmatpush1.bf16.msra.mxu0 %v2276
    %2297 = vmatprep.subr.bf16.mxu0 0
    %2298 = vmatpush1.bf16.msra.mxu0 %v2275
    %2299 = vmatprep.subr.bf16.mxu0 0
    %2300 = vmatpush1.bf16.msra.mxu0 %v2274
    %2301 = vmatprep.subr.bf16.mxu0 0
    %2302 = vmatpush2.bf16.msra.mxu0 0
    %2303 = vmatprep.subr.bf16.mxu0 0
    %2304 = vmatpush2.bf16.msra.mxu0 0
    %2305 = vmatprep.subr.bf16.mxu0 0
    %2306 = vmatpush2.bf16.msra.mxu0 0
    %2307 = vmatprep.subr.bf16.mxu0 0
    %2308 = vmatpush2.bf16.msra.mxu0 0
    %2309 = vmatprep.subr.bf16.mxu0 0
    %2310 = vmatpush2.bf16.msra.mxu0 0
    %2311 = vmatprep.subr.bf16.mxu0 0
    %2312 = vmatpush2.bf16.msra.mxu0 0
    %2313 = vmatprep.subr.bf16.mxu0 0
    %2314 = vmatpush2.bf16.msra.mxu0 0
    %2315 = vmatprep.subr.bf16.mxu0 0
    %2316 = vmatpush2.bf16.msra.mxu0 0
    %2317 = vmatprep.mubr.bf16.mxu0 0
    %2318 = vmatmul.mubr.bf16.gmra.mxu0 %v2283
    %v2319 = vpop.f32.mrf.mxu0
    %v2320 = vadd.f32 0.0, %v2319
    %v2321 = vpop.f32.mrf.mxu0
    %v2322 = vpop.f32.mrf.mxu0
    %v2323 = vadd.f32 0.0, %v2322
    %v2324 = vpop.f32.mrf.mxu0
    %2325 = vdwg.mxu0
    %v2326 = vadd.f32 %v2190, %v2320
    %v2327 = vadd.f32 %v2193, %v2323
    %v2328 = vld [vmem:[#allocation10] sm:$0x1]
    %v2330 = vlaneseq
    %v2331 = vshrl.u32 %v2330, 7
    %v2332 = vsub.s32 0, %v2331
    %v2333 = vrot.slane %v2328, %v2332
    %v2335 = vadd.f32 %v2326, %v2333
    %v2336 = vadd.f32 %v2327, %v2333
    %vm2337 = vcmp.gt.f32.partialorder %v2335, 20.0
    %vm2338 = vcmp.gt.f32.partialorder %v2336, 20.0
    %v2339 = vmin.f32 %v2335, 20.0
    %v2340 = vmin.f32 %v2336, 20.0
    %v2341 = vmul.f32 %v2339, 1.442695
    %v2342 = vpow.pop %v2341
    %v2343 = vmul.f32 %v2340, 1.442695
    %v2344 = vpow.pop %v2343
    %v2345 = vadd.f32 %v2342, 1.0
    %v2346 = vlog2.pop %v2345
    %v2347 = vmul.f32 %v2346, 0.6931472
    %v2348 = vmul.f32 -0.5, %v2342
    %v2349 = vadd.f32 %v2348, 1.0
    %v2350 = vmul.f32 %v2349, %v2342
    %v2351 = vand.u32 2147483647, %v2342
    %vm2352 = vcmp.lt.f32.partialorder %v2351, 0.0004427343
    %v2353 = vsel %vm2352, %v2350, %v2347
    %v2354 = vadd.f32 %v2344, 1.0
    %v2355 = vlog2.pop %v2354
    %v2356 = vmul.f32 %v2355, 0.6931472
    %v2357 = vmul.f32 -0.5, %v2344
    %v2358 = vadd.f32 %v2357, 1.0
    %v2359 = vmul.f32 %v2358, %v2344
    %v2360 = vand.u32 2147483647, %v2344
    %vm2361 = vcmp.lt.f32.partialorder %v2360, 0.0004427343
    %v2362 = vsel %vm2361, %v2359, %v2356
    %v2363 = vsel %vm2337, %v2335, %v2353
    %v2364 = vsel %vm2338, %v2336, %v2362
    %v2365 = vtanh.pop %v2363
    %v2366 = vtanh.pop %v2364
    %v2367 = vmul.f32 %v2335, %v2365
    %v2368 = vmul.f32 %v2336, %v2366
    %v2369 = vsel %vm1886, %v2367, 0.0
    %v2370 = vsel %vm1886, %v2368, 0.0
    %v2371 = vadd.f32 %v2369, %v2370
    %v2372 = vrot.slane %v2371, 4
    %v2373 = vadd.f32 %v2371, %v2372
    %v2374 = vrot.slane %v2373, 2
    %v2375 = vadd.f32 %v2373, %v2374
    %v2376 = vrot.slane %v2375, 1
    %v2377 = vadd.f32 %v2375, %v2376
    %v2378 = vmul.f32 %v2377, %v1896
    %v2379 = vsub.f32 %v2367, %v2378
    %v2380 = vsub.f32 %v2368, %v2378
    %v2381 = vmul.f32 %v2379, %v2379
    %v2382 = vmul.f32 %v2380, %v2380
    %v2383 = vsel %vm1886, %v2381, 0.0
    %v2384 = vsel %vm1886, %v2382, 0.0
    %v2385 = vadd.f32 %v2383, %v2384
    %v2386 = vrot.slane %v2385, 4
    %v2387 = vadd.f32 %v2385, %v2386
    %v2388 = vrot.slane %v2387, 2
    %v2389 = vadd.f32 %v2387, %v2388
    %v2390 = vrot.slane %v2389, 1
    %v2391 = vadd.f32 %v2389, %v2390
    %v2392 = vmul.f32 %v2391, %v1896
    %v2393 = vadd.f32 %v2392, 1e-05
    %v2394 = vrsqrt.pop %v2393
    %v2395 = vmul.f32 %v2379, %v2394
    %v2396 = vmul.f32 %v2380, %v2394
    %v2397 = vld [vmem:[%s19] sm:$0x1]
    %v2399 = vlaneseq
    %v2400 = vshrl.u32 %v2399, 7
    %v2401 = vsub.s32 0, %v2400
    %v2402 = vrot.slane %v2397, %v2401
    %v2404 = vmul.f32 %v2395, %v2402
    %v2405 = vmul.f32 %v2396, %v2402
    %v2406 = vld [vmem:[%s17] sm:$0x1]
    %v2408 = vlaneseq
    %v2409 = vshrl.u32 %v2408, 7
    %v2410 = vsub.s32 0, %v2409
    %v2411 = vrot.slane %v2406, %v2410
    %v2413 = vadd.f32 %v2404, %v2411
    %v2414 = vadd.f32 %v2405, %v2411
    %v2415 = vld [vmem:[#allocation26] sm:$0xf]
    %v2416 = vld [vmem:[#allocation26 + $0x4] sm:$0xf]
    %v2417 = vld [vmem:[#allocation26 + $0x8] sm:$0xf]
    %v2418 = vld [vmem:[#allocation26 + $0xc] sm:$0xf]
    %v2419 = vld [vmem:[#allocation25] sm:$0x1]
    %v2421 = vlaneseq
    %v2422 = vshrl.u32 %v2421, 7
    %v2423 = vsub.s32 0, %v2422
    %v2424 = vrot.slane %v2419, %v2423
    %v2430 = vunpack.c.l.b16 %v2415
    %v2431 = vunpack.c.l.b16 %v2416
    %v2432 = vunpack.c.l.b16 %v2417
    %v2433 = vunpack.c.l.b16 %v2418
    %v2434 = vpack.c.b16 %v2431, %v2430
    %v2435 = vpack.c.b16 %v2433, %v2432
    %2438 = vmatprep.subr.bf16.mxu0 0
    %2439 = vmatpush1.bf16.msra.mxu0 0
    %2440 = vmatprep.subr.bf16.mxu0 0
    %2441 = vmatpush1.bf16.msra.mxu0 0
    %2442 = vmatprep.subr.bf16.mxu0 0
    %2443 = vmatpush1.bf16.msra.mxu0 0
    %2444 = vmatprep.subr.bf16.mxu0 0
    %2445 = vmatpush1.bf16.msra.mxu0 0
    %2446 = vmatprep.subr.bf16.mxu0 0
    %2447 = vmatpush1.bf16.msra.mxu0 0
    %2448 = vmatprep.subr.bf16.mxu0 0
    %2449 = vmatpush1.bf16.msra.mxu0 0
    %2450 = vmatprep.subr.bf16.mxu0 0
    %2451 = vmatpush1.bf16.msra.mxu0 %v2435
    %2452 = vmatprep.subr.bf16.mxu0 0
    %2453 = vmatpush1.bf16.msra.mxu0 %v2434
    %2454 = vmatprep.subr.bf16.mxu0 0
    %2455 = vmatpush2.bf16.msra.mxu0 0
    %2456 = vmatprep.subr.bf16.mxu0 0
    %2457 = vmatpush2.bf16.msra.mxu0 0
    %2458 = vmatprep.subr.bf16.mxu0 0
    %2459 = vmatpush2.bf16.msra.mxu0 0
    %2460 = vmatprep.subr.bf16.mxu0 0
    %2461 = vmatpush2.bf16.msra.mxu0 0
    %2462 = vmatprep.subr.bf16.mxu0 0
    %2463 = vmatpush2.bf16.msra.mxu0 0
    %2464 = vmatprep.subr.bf16.mxu0 0
    %2465 = vmatpush2.bf16.msra.mxu0 0
    %2466 = vmatprep.subr.bf16.mxu0 0
    %2467 = vmatpush2.bf16.msra.mxu0 0
    %2468 = vmatprep.subr.bf16.mxu0 0
    %2469 = vmatpush2.bf16.msra.mxu0 0
    %2470 = vmatprep.mubr.bf16.mxu0 0
    %2471 = vmatmul.mubr.bf16.gmra.mxu0 %v1356
    %v2472 = vpop.f32.mrf.mxu0
    %v2473 = vadd.f32 %v2424, %v2472
    %v2474 = vpop.f32.mrf.mxu0
    %v2475 = vpop.f32.mrf.mxu0
    %v2476 = vpop.f32.mrf.mxu0
    %2477 = vdwg.mxu0
    %vm2478 = vcmp.gt.f32.partialorder %v2473, 20.0
    %v2479 = vmin.f32 %v2473, 20.0
    %v2480 = vmul.f32 %v2479, 1.442695
    %v2481 = vpow.pop %v2480
    %v2482 = vadd.f32 %v2481, 1.0
    %v2483 = vlog2.pop %v2482
    %v2484 = vmul.f32 %v2483, 0.6931472
    %v2485 = vmul.f32 -0.5, %v2481
    %v2486 = vadd.f32 %v2485, 1.0
    %v2487 = vmul.f32 %v2486, %v2481
    %v2488 = vand.u32 2147483647, %v2481
    %vm2489 = vcmp.lt.f32.partialorder %v2488, 0.0004427343
    %v2490 = vsel %vm2489, %v2487, %v2484
    %v2491 = vsel %vm2478, %v2473, %v2490
    %v2492 = vtanh.pop %v2491
    %v2493 = vmul.f32 %v2473, %v2492
    %v2494 = vld [vmem:[#allocation19] sm:$0xff]
    %v2496 = vsel %vm1416, %v2494, 0
    %v2499 = vsel %vm1039, %v2493, 0
    %2501 = vmatprep.subr.mxu0 0.0
    %2502 = vmatpush1.msra.mxu0 0.0
    %2503 = vmatprep.subr.mxu0 0.0
    %2504 = vmatpush1.msra.mxu0 0.0
    %2505 = vmatprep.subr.mxu0 0.0
    %2506 = vmatpush1.msra.mxu0 0.0
    %2507 = vmatprep.subr.mxu0 0.0
    %2508 = vmatpush1.msra.mxu0 0.0
    %2509 = vmatprep.subr.mxu0 0.0
    %2510 = vmatpush1.msra.mxu0 0.0
    %2511 = vmatprep.subr.mxu0 0.0
    %2512 = vmatpush1.msra.mxu0 0.0
    %2513 = vmatprep.subr.mxu0 0.0
    %2514 = vmatpush1.msra.mxu0 0.0
    %2515 = vmatprep.subr.mxu0 0.0
    %2516 = vmatpush1.msra.mxu0 0.0
    %2517 = vmatprep.subr.mxu0 0.0
    %2518 = vmatpush1.msra.mxu0 0.0
    %2519 = vmatprep.subr.mxu0 0.0
    %2520 = vmatpush1.msra.mxu0 0.0
    %2521 = vmatprep.subr.mxu0 0.0
    %2522 = vmatpush1.msra.mxu0 0.0
    %2523 = vmatprep.subr.mxu0 0.0
    %2524 = vmatpush1.msra.mxu0 0.0
    %2525 = vmatprep.subr.mxu0 0.0
    %2526 = vmatpush1.msra.mxu0 0.0
    %2527 = vmatprep.subr.mxu0 0.0
    %2528 = vmatpush1.msra.mxu0 0.0
    %2529 = vmatprep.subr.mxu0 0.0
    %2530 = vmatpush1.msra.mxu0 0.0
    %2531 = vmatprep.subr.mxu0 0.0
    %2532 = vmatpush1.msra.mxu0 %v2499
    %2533 = vmatprep.subr.mxu0 0.0
    %2534 = vmatpush2.msra.mxu0 0.0
    %2535 = vmatprep.subr.mxu0 0.0
    %2536 = vmatpush2.msra.mxu0 0.0
    %2537 = vmatprep.subr.mxu0 0.0
    %2538 = vmatpush2.msra.mxu0 0.0
    %2539 = vmatprep.subr.mxu0 0.0
    %2540 = vmatpush2.msra.mxu0 0.0
    %2541 = vmatprep.subr.mxu0 0.0
    %2542 = vmatpush2.msra.mxu0 0.0
    %2543 = vmatprep.subr.mxu0 0.0
    %2544 = vmatpush2.msra.mxu0 0.0
    %2545 = vmatprep.subr.mxu0 0.0
    %2546 = vmatpush2.msra.mxu0 0.0
    %2547 = vmatprep.subr.mxu0 0.0
    %2548 = vmatpush2.msra.mxu0 0.0
    %2549 = vmatprep.subr.mxu0 0.0
    %2550 = vmatpush2.msra.mxu0 0.0
    %2551 = vmatprep.subr.mxu0 0.0
    %2552 = vmatpush2.msra.mxu0 0.0
    %2553 = vmatprep.subr.mxu0 0.0
    %2554 = vmatpush2.msra.mxu0 0.0
    %2555 = vmatprep.subr.mxu0 0.0
    %2556 = vmatpush2.msra.mxu0 0.0
    %2557 = vmatprep.subr.mxu0 0.0
    %2558 = vmatpush2.msra.mxu0 0.0
    %2559 = vmatprep.subr.mxu0 0.0
    %2560 = vmatpush2.msra.mxu0 0.0
    %2561 = vmatprep.subr.mxu0 0.0
    %2562 = vmatpush2.msra.mxu0 0.0
    %2563 = vmatprep.subr.mxu0 0.0
    %2564 = vmatpush2.msra.mxu0 0.0
    %2565 = vmatprep.mubr.f32.mxu0 0.0
    %2566 = vmatmul.mubr.f32.gmra.mxu0 %v2496
    %v2567 = vpop.f32.mrf.mxu0
    %v2568 = vadd.f32 0.0, %v2567
    %v2569 = vpop.f32.mrf.mxu0
    %2570 = vdwg.mxu0
    %v2571 = vld [vmem:[#allocation23] sm:$0xf]
    %v2572 = vpack.c.bf16 %v2414, %v2413
    %v2574 = vsel %vm1944, %v2571, 0
    %2576 = vmatprep.subr.bf16.mxu0 0
    %2577 = vmatpush1.bf16.msra.mxu0 0
    %2578 = vmatprep.subr.bf16.mxu0 0
    %2579 = vmatpush1.bf16.msra.mxu0 0
    %2580 = vmatprep.subr.bf16.mxu0 0
    %2581 = vmatpush1.bf16.msra.mxu0 0
    %2582 = vmatprep.subr.bf16.mxu0 0
    %2583 = vmatpush1.bf16.msra.mxu0 0
    %2584 = vmatprep.subr.bf16.mxu0 0
    %2585 = vmatpush1.bf16.msra.mxu0 0
    %2586 = vmatprep.subr.bf16.mxu0 0
    %2587 = vmatpush1.bf16.msra.mxu0 0
    %2588 = vmatprep.subr.bf16.mxu0 0
    %2589 = vmatpush1.bf16.msra.mxu0 0
    %2590 = vmatprep.subr.bf16.mxu0 0
    %2591 = vmatpush1.bf16.msra.mxu0 %v2572
    %2592 = vmatprep.subr.bf16.mxu0 0
    %2593 = vmatpush2.bf16.msra.mxu0 0
    %2594 = vmatprep.subr.bf16.mxu0 0
    %2595 = vmatpush2.bf16.msra.mxu0 0
    %2596 = vmatprep.subr.bf16.mxu0 0
    %2597 = vmatpush2.bf16.msra.mxu0 0
    %2598 = vmatprep.subr.bf16.mxu0 0
    %2599 = vmatpush2.bf16.msra.mxu0 0
    %2600 = vmatprep.subr.bf16.mxu0 0
    %2601 = vmatpush2.bf16.msra.mxu0 0
    %2602 = vmatprep.subr.bf16.mxu0 0
    %2603 = vmatpush2.bf16.msra.mxu0 0
    %2604 = vmatprep.subr.bf16.mxu0 0
    %2605 = vmatpush2.bf16.msra.mxu0 0
    %2606 = vmatprep.subr.bf16.mxu0 0
    %2607 = vmatpush2.bf16.msra.mxu0 0
    %2608 = vmatprep.mubr.bf16.mxu0 0
    %2609 = vmatmul.mubr.bf16.gmra.mxu0 %v2574
    %v2610 = vpop.f32.mrf.mxu0
    %v2611 = vadd.f32 0.0, %v2610
    %v2612 = vpop.f32.mrf.mxu0
    %v2613 = vpop.f32.mrf.mxu0
    %v2614 = vpop.f32.mrf.mxu0
    %2615 = vdwg.mxu0
    %v2616 = vld [vmem:[#allocation28] sm:$0xf]
    %v2617 = vld [vmem:[#allocation28 + $0x4] sm:$0xf]
    %v2618 = vld [vmem:[#allocation28 + $0x8] sm:$0xf]
    %v2619 = vld [vmem:[#allocation28 + $0xc] sm:$0xf]
    %v2620 = vld [vmem:[#allocation28 + $0x10] sm:$0xf]
    %v2621 = vld [vmem:[#allocation28 + $0x14] sm:$0xf]
    %v2622 = vld [vmem:[#allocation28 + $0x18] sm:$0xf]
    %v2623 = vld [vmem:[#allocation28 + $0x1c] sm:$0xf]
    %v2624 = vpack.c.bf16 %v2611, %v2611
    %s2625 = scalar_lea.vmem [#allocation23], 4
    %v2626 = vld [vmem:[%s2625] sm:$0xf]
    %v2628 = vsel %vm1944, %v2626, 0
    %2630 = vmatprep.subr.bf16.mxu0 0
    %2631 = vmatpush1.bf16.msra.mxu0 0
    %2632 = vmatprep.subr.bf16.mxu0 0
    %2633 = vmatpush1.bf16.msra.mxu0 0
    %2634 = vmatprep.subr.bf16.mxu0 0
    %2635 = vmatpush1.bf16.msra.mxu0 0
    %2636 = vmatprep.subr.bf16.mxu0 0
    %2637 = vmatpush1.bf16.msra.mxu0 0
    %2638 = vmatprep.subr.bf16.mxu0 0
    %2639 = vmatpush1.bf16.msra.mxu0 0
    %2640 = vmatprep.subr.bf16.mxu0 0
    %2641 = vmatpush1.bf16.msra.mxu0 0
    %2642 = vmatprep.subr.bf16.mxu0 0
    %2643 = vmatpush1.bf16.msra.mxu0 0
    %2644 = vmatprep.subr.bf16.mxu0 0
    %2645 = vmatpush1.bf16.msra.mxu0 %v2572
    %2646 = vmatprep.subr.bf16.mxu0 0
    %2647 = vmatpush2.bf16.msra.mxu0 0
    %2648 = vmatprep.subr.bf16.mxu0 0
    %2649 = vmatpush2.bf16.msra.mxu0 0
    %2650 = vmatprep.subr.bf16.mxu0 0
    %2651 = vmatpush2.bf16.msra.mxu0 0
    %2652 = vmatprep.subr.bf16.mxu0 0
    %2653 = vmatpush2.bf16.msra.mxu0 0
    %2654 = vmatprep.subr.bf16.mxu0 0
    %2655 = vmatpush2.bf16.msra.mxu0 0
    %2656 = vmatprep.subr.bf16.mxu0 0
    %2657 = vmatpush2.bf16.msra.mxu0 0
    %2658 = vmatprep.subr.bf16.mxu0 0
    %2659 = vmatpush2.bf16.msra.mxu0 0
    %2660 = vmatprep.subr.bf16.mxu0 0
    %2661 = vmatpush2.bf16.msra.mxu0 0
    %2662 = vmatprep.mubr.bf16.mxu0 0
    %2663 = vmatmul.mubr.bf16.gmra.mxu0 %v2628
    %v2664 = vpop.f32.mrf.mxu0
    %v2665 = vadd.f32 0.0, %v2664
    %v2666 = vpop.f32.mrf.mxu0
    %v2667 = vpop.f32.mrf.mxu0
    %v2668 = vpop.f32.mrf.mxu0
    %2669 = vdwg.mxu0
    %s2670 = scalar_lea.vmem [#allocation28], 32
    %v2671 = vld [vmem:[%s2670] sm:$0xf]
    %v2672 = vld [vmem:[%s2670 + $0x4] sm:$0xf]
    %v2673 = vld [vmem:[%s2670 + $0x8] sm:$0xf]
    %v2674 = vld [vmem:[%s2670 + $0xc] sm:$0xf]
    %v2675 = vld [vmem:[%s2670 + $0x10] sm:$0xf]
    %v2676 = vld [vmem:[%s2670 + $0x14] sm:$0xf]
    %v2677 = vld [vmem:[%s2670 + $0x18] sm:$0xf]
    %v2678 = vld [vmem:[%s2670 + $0x1c] sm:$0xf]
    %v2679 = vpack.c.bf16 %v2665, %v2665
    %v2688 = vunpack.c.l.b16 %v2671
    %v2689 = vunpack.c.l.b16 %v2672
    %v2690 = vunpack.c.l.b16 %v2673
    %v2691 = vunpack.c.l.b16 %v2674
    %v2692 = vunpack.c.l.b16 %v2675
    %v2693 = vunpack.c.l.b16 %v2676
    %v2694 = vunpack.c.l.b16 %v2677
    %v2695 = vunpack.c.l.b16 %v2678
    %v2696 = vpack.c.b16 %v2689, %v2688
    %v2697 = vpack.c.b16 %v2691, %v2690
    %v2698 = vpack.c.b16 %v2693, %v2692
    %v2699 = vpack.c.b16 %v2695, %v2694
    %v2705 = vsel %vm1886, %v2679, 0
    %2707 = vmatprep.subr.bf16.mxu0 0
    %2708 = vmatpush1.bf16.msra.mxu0 0
    %2709 = vmatprep.subr.bf16.mxu0 0
    %2710 = vmatpush1.bf16.msra.mxu0 0
    %2711 = vmatprep.subr.bf16.mxu0 0
    %2712 = vmatpush1.bf16.msra.mxu0 0
    %2713 = vmatprep.subr.bf16.mxu0 0
    %2714 = vmatpush1.bf16.msra.mxu0 0
    %2715 = vmatprep.subr.bf16.mxu0 0
    %2716 = vmatpush1.bf16.msra.mxu0 %v2699
    %2717 = vmatprep.subr.bf16.mxu0 0
    %2718 = vmatpush1.bf16.msra.mxu0 %v2698
    %2719 = vmatprep.subr.bf16.mxu0 0
    %2720 = vmatpush1.bf16.msra.mxu0 %v2697
    %2721 = vmatprep.subr.bf16.mxu0 0
    %2722 = vmatpush1.bf16.msra.mxu0 %v2696
    %2723 = vmatprep.subr.bf16.mxu0 0
    %2724 = vmatpush2.bf16.msra.mxu0 0
    %2725 = vmatprep.subr.bf16.mxu0 0
    %2726 = vmatpush2.bf16.msra.mxu0 0
    %2727 = vmatprep.subr.bf16.mxu0 0
    %2728 = vmatpush2.bf16.msra.mxu0 0
    %2729 = vmatprep.subr.bf16.mxu0 0
    %2730 = vmatpush2.bf16.msra.mxu0 0
    %2731 = vmatprep.subr.bf16.mxu0 0
    %2732 = vmatpush2.bf16.msra.mxu0 0
    %2733 = vmatprep.subr.bf16.mxu0 0
    %2734 = vmatpush2.bf16.msra.mxu0 0
    %2735 = vmatprep.subr.bf16.mxu0 0
    %2736 = vmatpush2.bf16.msra.mxu0 0
    %2737 = vmatprep.subr.bf16.mxu0 0
    %2738 = vmatpush2.bf16.msra.mxu0 0
    %2739 = vmatprep.mubr.bf16.mxu0 0
    %2740 = vmatmul.mubr.bf16.gmra.mxu0 %v2705
    %v2741 = vpop.f32.mrf.mxu0
    %v2742 = vadd.f32 0.0, %v2741
    %v2743 = vpop.f32.mrf.mxu0
    %v2744 = vpop.f32.mrf.mxu0
    %v2745 = vpop.f32.mrf.mxu0
    %2746 = vdwg.mxu0
    %v2755 = vunpack.c.l.b16 %v2616
    %v2756 = vunpack.c.l.b16 %v2617
    %v2757 = vunpack.c.l.b16 %v2618
    %v2758 = vunpack.c.l.b16 %v2619
    %v2759 = vunpack.c.l.b16 %v2620
    %v2760 = vunpack.c.l.b16 %v2621
    %v2761 = vunpack.c.l.b16 %v2622
    %v2762 = vunpack.c.l.b16 %v2623
    %v2763 = vpack.c.b16 %v2756, %v2755
    %v2764 = vpack.c.b16 %v2758, %v2757
    %v2765 = vpack.c.b16 %v2760, %v2759
    %v2766 = vpack.c.b16 %v2762, %v2761
    %v2772 = vsel %vm1886, %v2624, 0
    %2774 = vmatprep.subr.bf16.mxu0 0
    %2775 = vmatpush1.bf16.msra.mxu0 0
    %2776 = vmatprep.subr.bf16.mxu0 0
    %2777 = vmatpush1.bf16.msra.mxu0 0
    %2778 = vmatprep.subr.bf16.mxu0 0
    %2779 = vmatpush1.bf16.msra.mxu0 0
    %2780 = vmatprep.subr.bf16.mxu0 0
    %2781 = vmatpush1.bf16.msra.mxu0 0
    %2782 = vmatprep.subr.bf16.mxu0 0
    %2783 = vmatpush1.bf16.msra.mxu0 %v2766
    %2784 = vmatprep.subr.bf16.mxu0 0
    %2785 = vmatpush1.bf16.msra.mxu0 %v2765
    %2786 = vmatprep.subr.bf16.mxu0 0
    %2787 = vmatpush1.bf16.msra.mxu0 %v2764
    %2788 = vmatprep.subr.bf16.mxu0 0
    %2789 = vmatpush1.bf16.msra.mxu0 %v2763
    %2790 = vmatprep.subr.bf16.mxu0 0
    %2791 = vmatpush2.bf16.msra.mxu0 0
    %2792 = vmatprep.subr.bf16.mxu0 0
    %2793 = vmatpush2.bf16.msra.mxu0 0
    %2794 = vmatprep.subr.bf16.mxu0 0
    %2795 = vmatpush2.bf16.msra.mxu0 0
    %2796 = vmatprep.subr.bf16.mxu0 0
    %2797 = vmatpush2.bf16.msra.mxu0 0
    %2798 = vmatprep.subr.bf16.mxu0 0
    %2799 = vmatpush2.bf16.msra.mxu0 0
    %2800 = vmatprep.subr.bf16.mxu0 0
    %2801 = vmatpush2.bf16.msra.mxu0 0
    %2802 = vmatprep.subr.bf16.mxu0 0
    %2803 = vmatpush2.bf16.msra.mxu0 0
    %2804 = vmatprep.subr.bf16.mxu0 0
    %2805 = vmatpush2.bf16.msra.mxu0 0
    %2806 = vmatprep.mubr.bf16.mxu0 0
    %2807 = vmatmul.mubr.bf16.gmra.mxu0 %v2772
    %v2808 = vpop.f32.mrf.mxu0
    %v2809 = vadd.f32 %v2742, %v2808
    %v2810 = vpop.f32.mrf.mxu0
    %v2811 = vpop.f32.mrf.mxu0
    %v2812 = vpop.f32.mrf.mxu0
    %2813 = vdwg.mxu0
    %s2814 = scalar_lea.vmem [#allocation23], 8
    %v2815 = vld [vmem:[%s2814] sm:$0xf]
    %v2817 = vsel %vm1944, %v2815, 0
    %2819 = vmatprep.subr.bf16.mxu0 0
    %2820 = vmatpush1.bf16.msra.mxu0 0
    %2821 = vmatprep.subr.bf16.mxu0 0
    %2822 = vmatpush1.bf16.msra.mxu0 0
    %2823 = vmatprep.subr.bf16.mxu0 0
    %2824 = vmatpush1.bf16.msra.mxu0 0
    %2825 = vmatprep.subr.bf16.mxu0 0
    %2826 = vmatpush1.bf16.msra.mxu0 0
    %2827 = vmatprep.subr.bf16.mxu0 0
    %2828 = vmatpush1.bf16.msra.mxu0 0
    %2829 = vmatprep.subr.bf16.mxu0 0
    %2830 = vmatpush1.bf16.msra.mxu0 0
    %2831 = vmatprep.subr.bf16.mxu0 0
    %2832 = vmatpush1.bf16.msra.mxu0 0
    %2833 = vmatprep.subr.bf16.mxu0 0
    %2834 = vmatpush1.bf16.msra.mxu0 %v2572
    %2835 = vmatprep.subr.bf16.mxu0 0
    %2836 = vmatpush2.bf16.msra.mxu0 0
    %2837 = vmatprep.subr.bf16.mxu0 0
    %2838 = vmatpush2.bf16.msra.mxu0 0
    %2839 = vmatprep.subr.bf16.mxu0 0
    %2840 = vmatpush2.bf16.msra.mxu0 0
    %2841 = vmatprep.subr.bf16.mxu0 0
    %2842 = vmatpush2.bf16.msra.mxu0 0
    %2843 = vmatprep.subr.bf16.mxu0 0
    %2844 = vmatpush2.bf16.msra.mxu0 0
    %2845 = vmatprep.subr.bf16.mxu0 0
    %2846 = vmatpush2.bf16.msra.mxu0 0
    %2847 = vmatprep.subr.bf16.mxu0 0
    %2848 = vmatpush2.bf16.msra.mxu0 0
    %2849 = vmatprep.subr.bf16.mxu0 0
    %2850 = vmatpush2.bf16.msra.mxu0 0
    %2851 = vmatprep.mubr.bf16.mxu0 0
    %2852 = vmatmul.mubr.bf16.gmra.mxu0 %v2817
    %v2853 = vpop.f32.mrf.mxu0
    %v2854 = vadd.f32 0.0, %v2853
    %v2855 = vpop.f32.mrf.mxu0
    %v2856 = vpop.f32.mrf.mxu0
    %v2857 = vpop.f32.mrf.mxu0
    %2858 = vdwg.mxu0
    %s2859 = scalar_lea.vmem [#allocation28], 64
    %v2860 = vld [vmem:[%s2859] sm:$0xf]
    %v2861 = vld [vmem:[%s2859 + $0x4] sm:$0xf]
    %v2862 = vld [vmem:[%s2859 + $0x8] sm:$0xf]
    %v2863 = vld [vmem:[%s2859 + $0xc] sm:$0xf]
    %v2864 = vld [vmem:[%s2859 + $0x10] sm:$0xf]
    %v2865 = vld [vmem:[%s2859 + $0x14] sm:$0xf]
    %v2866 = vld [vmem:[%s2859 + $0x18] sm:$0xf]
    %v2867 = vld [vmem:[%s2859 + $0x1c] sm:$0xf]
    %v2868 = vpack.c.bf16 %v2854, %v2854
    %v2877 = vunpack.c.l.b16 %v2860
    %v2878 = vunpack.c.l.b16 %v2861
    %v2879 = vunpack.c.l.b16 %v2862
    %v2880 = vunpack.c.l.b16 %v2863
    %v2881 = vunpack.c.l.b16 %v2864
    %v2882 = vunpack.c.l.b16 %v2865
    %v2883 = vunpack.c.l.b16 %v2866
    %v2884 = vunpack.c.l.b16 %v2867
    %v2885 = vpack.c.b16 %v2878, %v2877
    %v2886 = vpack.c.b16 %v2880, %v2879
    %v2887 = vpack.c.b16 %v2882, %v2881
    %v2888 = vpack.c.b16 %v2884, %v2883
    %v2894 = vsel %vm1886, %v2868, 0
    %2896 = vmatprep.subr.bf16.mxu0 0
    %2897 = vmatpush1.bf16.msra.mxu0 0
    %2898 = vmatprep.subr.bf16.mxu0 0
    %2899 = vmatpush1.bf16.msra.mxu0 0
    %2900 = vmatprep.subr.bf16.mxu0 0
    %2901 = vmatpush1.bf16.msra.mxu0 0
    %2902 = vmatprep.subr.bf16.mxu0 0
    %2903 = vmatpush1.bf16.msra.mxu0 0
    %2904 = vmatprep.subr.bf16.mxu0 0
    %2905 = vmatpush1.bf16.msra.mxu0 %v2888
    %2906 = vmatprep.subr.bf16.mxu0 0
    %2907 = vmatpush1.bf16.msra.mxu0 %v2887
    %2908 = vmatprep.subr.bf16.mxu0 0
    %2909 = vmatpush1.bf16.msra.mxu0 %v2886
    %2910 = vmatprep.subr.bf16.mxu0 0
    %2911 = vmatpush1.bf16.msra.mxu0 %v2885
    %2912 = vmatprep.subr.bf16.mxu0 0
    %2913 = vmatpush2.bf16.msra.mxu0 0
    %2914 = vmatprep.subr.bf16.mxu0 0
    %2915 = vmatpush2.bf16.msra.mxu0 0
    %2916 = vmatprep.subr.bf16.mxu0 0
    %2917 = vmatpush2.bf16.msra.mxu0 0
    %2918 = vmatprep.subr.bf16.mxu0 0
    %2919 = vmatpush2.bf16.msra.mxu0 0
    %2920 = vmatprep.subr.bf16.mxu0 0
    %2921 = vmatpush2.bf16.msra.mxu0 0
    %2922 = vmatprep.subr.bf16.mxu0 0
    %2923 = vmatpush2.bf16.msra.mxu0 0
    %2924 = vmatprep.subr.bf16.mxu0 0
    %2925 = vmatpush2.bf16.msra.mxu0 0
    %2926 = vmatprep.subr.bf16.mxu0 0
    %2927 = vmatpush2.bf16.msra.mxu0 0
    %2928 = vmatprep.mubr.bf16.mxu0 0
    %2929 = vmatmul.mubr.bf16.gmra.mxu0 %v2894
    %v2930 = vpop.f32.mrf.mxu0
    %v2931 = vadd.f32 0.0, %v2930
    %v2932 = vpop.f32.mrf.mxu0
    %v2933 = vpop.f32.mrf.mxu0
    %v2934 = vpop.f32.mrf.mxu0
    %2935 = vdwg.mxu0
    %v2936 = vadd.f32 %v2809, %v2931
    %v2937 = vld [vmem:[#allocation20] sm:$0x1]
    %v2939 = vlaneseq
    %v2940 = vshrl.u32 %v2939, 7
    %v2941 = vsub.s32 0, %v2940
    %v2942 = vrot.slane %v2937, %v2941
    %v2944 = vadd.f32 %v2936, %v2942
    %vm2945 = vcmp.gt.f32.partialorder %v2944, 20.0
    %v2946 = vmin.f32 %v2944, 20.0
    %v2947 = vmul.f32 %v2946, 1.442695
    %v2948 = vpow.pop %v2947
    %v2949 = vadd.f32 %v2948, 1.0
    %v2950 = vlog2.pop %v2949
    %v2951 = vmul.f32 %v2950, 0.6931472
    %v2952 = vmul.f32 -0.5, %v2948
    %v2953 = vadd.f32 %v2952, 1.0
    %v2954 = vmul.f32 %v2953, %v2948
    %v2955 = vand.u32 2147483647, %v2948
    %vm2956 = vcmp.lt.f32.partialorder %v2955, 0.0004427343
    %v2957 = vsel %vm2956, %v2954, %v2951
    %v2958 = vsel %vm2945, %v2944, %v2957
    %v2959 = vtanh.pop %v2958
    %v2960 = vmul.f32 %v2944, %v2959
    %v2961 = vrot.slane %v2960, 4
    %v2962 = vadd.f32 %v2960, %v2961
    %v2963 = vrot.slane %v2962, 2
    %v2964 = vadd.f32 %v2962, %v2963
    %v2965 = vrot.slane %v2964, 1
    %v2966 = vadd.f32 %v2964, %v2965
    %v2967 = vrcp.pop 8.0
    %v2968 = vmul.f32 %v2966, %v2967
    %v2969 = vsub.f32 %v2960, %v2968
    %v2970 = vmul.f32 %v2969, %v2969
    %v2971 = vrot.slane %v2970, 4
    %v2972 = vadd.f32 %v2970, %v2971
    %v2973 = vrot.slane %v2972, 2
    %v2974 = vadd.f32 %v2972, %v2973
    %v2975 = vrot.slane %v2974, 1
    %v2976 = vadd.f32 %v2974, %v2975
    %v2977 = vmul.f32 %v2976, %v2967
    %v2978 = vadd.f32 %v2977, 1e-05
    %v2979 = vrsqrt.pop %v2978
    %v2980 = vmul.f32 %v2969, %v2979
    %v2981 = vld [vmem:[%s41] sm:$0x1]
    %v2983 = vlaneseq
    %v2984 = vshrl.u32 %v2983, 7
    %v2985 = vsub.s32 0, %v2984
    %v2986 = vrot.slane %v2981, %v2985
    %v2988 = vmul.f32 %v2980, %v2986
    %v2989 = vld [vmem:[%s39] sm:$0x1]
    %v2991 = vlaneseq
    %v2992 = vshrl.u32 %v2991, 7
    %v2993 = vsub.s32 0, %v2992
    %v2994 = vrot.slane %v2989, %v2993
    %v2996 = vadd.f32 %v2988, %v2994
    %v2997 = vadd.f32 %v2996, %v2568
    %v2998 = vld [vmem:[%s49] sm:$0xf]
    %v2999 = vpack.c.bf16 %v2997, %v2997
    %vm3000 = vcmask 64512
    %v3002 = vsel %vm3000, %v2998, 0
    %vm3004 = vcmask 1043456
    %v3006 = vsel %vm3004, %v2999, 0
    %3008 = vmatprep.subr.bf16.mxu0 0
    %3009 = vmatpush1.bf16.msra.mxu0 0
    %3010 = vmatprep.subr.bf16.mxu0 0
    %3011 = vmatpush1.bf16.msra.mxu0 0
    %3012 = vmatprep.subr.bf16.mxu0 0
    %3013 = vmatpush1.bf16.msra.mxu0 0
    %3014 = vmatprep.subr.bf16.mxu0 0
    %3015 = vmatpush1.bf16.msra.mxu0 0
    %3016 = vmatprep.subr.bf16.mxu0 0
    %3017 = vmatpush1.bf16.msra.mxu0 0
    %3018 = vmatprep.subr.bf16.mxu0 0
    %3019 = vmatpush1.bf16.msra.mxu0 0
    %3020 = vmatprep.subr.bf16.mxu0 0
    %3021 = vmatpush1.bf16.msra.mxu0 0
    %3022 = vmatprep.subr.bf16.mxu0 0
    %3023 = vmatpush1.bf16.msra.mxu0 %v3006
    %3024 = vmatprep.subr.bf16.mxu0 0
    %3025 = vmatpush2.bf16.msra.mxu0 0
    %3026 = vmatprep.subr.bf16.mxu0 0
    %3027 = vmatpush2.bf16.msra.mxu0 0
    %3028 = vmatprep.subr.bf16.mxu0 0
    %3029 = vmatpush2.bf16.msra.mxu0 0
    %3030 = vmatprep.subr.bf16.mxu0 0
    %3031 = vmatpush2.bf16.msra.mxu0 0
    %3032 = vmatprep.subr.bf16.mxu0 0
    %3033 = vmatpush2.bf16.msra.mxu0 0
    %3034 = vmatprep.subr.bf16.mxu0 0
    %3035 = vmatpush2.bf16.msra.mxu0 0
    %3036 = vmatprep.subr.bf16.mxu0 0
    %3037 = vmatpush2.bf16.msra.mxu0 0
    %3038 = vmatprep.subr.bf16.mxu0 0
    %3039 = vmatpush2.bf16.msra.mxu0 0
    %3040 = vmatprep.mubr.bf16.mxu0 0
    %3041 = vmatmul.mubr.bf16.gmra.mxu0 %v3002
    %v3042 = vpop.f32.mrf.mxu0
    %v3043 = vadd.f32 0.0, %v3042
    %v3044 = vpop.f32.mrf.mxu0
    %v3045 = vpop.f32.mrf.mxu0
    %v3046 = vpop.f32.mrf.mxu0
    %3047 = vdwg.mxu0
    %v3048 = vld [vmem:[#allocation29] sm:$0xf]
    %v3049 = vld [vmem:[#allocation29 + $0x4] sm:$0xf]
    %v3050 = vld [vmem:[#allocation29 + $0x8] sm:$0xf]
    %v3051 = vld [vmem:[#allocation29 + $0xc] sm:$0xf]
    %v3052 = vld [vmem:[#allocation29 + $0x10] sm:$0xf]
    %v3053 = vld [vmem:[#allocation29 + $0x14] sm:$0xf]
    %v3054 = vld [vmem:[#allocation29 + $0x18] sm:$0xf]
    %v3055 = vld [vmem:[#allocation29 + $0x1c] sm:$0xf]
    %v3056 = vld [vmem:[#allocation29 + $0x20] sm:$0xf]
    %v3057 = vld [vmem:[#allocation29 + $0x24] sm:$0xf]
    %v3058 = vld [vmem:[#allocation29 + $0x28] sm:$0xf]
    %v3059 = vld [vmem:[#allocation29 + $0x2c] sm:$0xf]
    %v3060 = vld [vmem:[#allocation29 + $0x30] sm:$0xf]
    %v3061 = vld [vmem:[#allocation29 + $0x34] sm:$0xf]
    %v3062 = vld [vmem:[#allocation29 + $0x38] sm:$0xf]
    %v3063 = vld [vmem:[#allocation29 + $0x3c] sm:$0xf]
    %v3064 = vpack.c.bf16 %v3043, %v3043
    %s3065 = scalar_lea.vmem %s49, 4
    %v3066 = vld [vmem:[%s3065] sm:$0xf]
    %v3068 = vsel %vm3000, %v3066, 0
    %3070 = vmatprep.subr.bf16.mxu0 0
    %3071 = vmatpush1.bf16.msra.mxu0 0
    %3072 = vmatprep.subr.bf16.mxu0 0
    %3073 = vmatpush1.bf16.msra.mxu0 0
    %3074 = vmatprep.subr.bf16.mxu0 0
    %3075 = vmatpush1.bf16.msra.mxu0 0
    %3076 = vmatprep.subr.bf16.mxu0 0
    %3077 = vmatpush1.bf16.msra.mxu0 0
    %3078 = vmatprep.subr.bf16.mxu0 0
    %3079 = vmatpush1.bf16.msra.mxu0 0
    %3080 = vmatprep.subr.bf16.mxu0 0
    %3081 = vmatpush1.bf16.msra.mxu0 0
    %3082 = vmatprep.subr.bf16.mxu0 0
    %3083 = vmatpush1.bf16.msra.mxu0 0
    %3084 = vmatprep.subr.bf16.mxu0 0
    %3085 = vmatpush1.bf16.msra.mxu0 %v3006
    %3086 = vmatprep.subr.bf16.mxu0 0
    %3087 = vmatpush2.bf16.msra.mxu0 0
    %3088 = vmatprep.subr.bf16.mxu0 0
    %3089 = vmatpush2.bf16.msra.mxu0 0
    %3090 = vmatprep.subr.bf16.mxu0 0
    %3091 = vmatpush2.bf16.msra.mxu0 0
    %3092 = vmatprep.subr.bf16.mxu0 0
    %3093 = vmatpush2.bf16.msra.mxu0 0
    %3094 = vmatprep.subr.bf16.mxu0 0
    %3095 = vmatpush2.bf16.msra.mxu0 0
    %3096 = vmatprep.subr.bf16.mxu0 0
    %3097 = vmatpush2.bf16.msra.mxu0 0
    %3098 = vmatprep.subr.bf16.mxu0 0
    %3099 = vmatpush2.bf16.msra.mxu0 0
    %3100 = vmatprep.subr.bf16.mxu0 0
    %3101 = vmatpush2.bf16.msra.mxu0 0
    %3102 = vmatprep.mubr.bf16.mxu0 0
    %3103 = vmatmul.mubr.bf16.gmra.mxu0 %v3068
    %v3104 = vpop.f32.mrf.mxu0
    %v3105 = vadd.f32 0.0, %v3104
    %v3106 = vpop.f32.mrf.mxu0
    %v3107 = vpop.f32.mrf.mxu0
    %v3108 = vpop.f32.mrf.mxu0
    %3109 = vdwg.mxu0
    %s3110 = scalar_lea.vmem [#allocation29], 64
    %v3111 = vld [vmem:[%s3110] sm:$0xf]
    %v3112 = vld [vmem:[%s3110 + $0x4] sm:$0xf]
    %v3113 = vld [vmem:[%s3110 + $0x8] sm:$0xf]
    %v3114 = vld [vmem:[%s3110 + $0xc] sm:$0xf]
    %v3115 = vld [vmem:[%s3110 + $0x10] sm:$0xf]
    %v3116 = vld [vmem:[%s3110 + $0x14] sm:$0xf]
    %v3117 = vld [vmem:[%s3110 + $0x18] sm:$0xf]
    %v3118 = vld [vmem:[%s3110 + $0x1c] sm:$0xf]
    %v3119 = vld [vmem:[%s3110 + $0x20] sm:$0xf]
    %v3120 = vld [vmem:[%s3110 + $0x24] sm:$0xf]
    %v3121 = vld [vmem:[%s3110 + $0x28] sm:$0xf]
    %v3122 = vld [vmem:[%s3110 + $0x2c] sm:$0xf]
    %v3123 = vld [vmem:[%s3110 + $0x30] sm:$0xf]
    %v3124 = vld [vmem:[%s3110 + $0x34] sm:$0xf]
    %v3125 = vld [vmem:[%s3110 + $0x38] sm:$0xf]
    %v3126 = vld [vmem:[%s3110 + $0x3c] sm:$0xf]
    %v3127 = vpack.c.bf16 %v3105, %v3105
    %v3144 = vunpack.c.l.b16 %v3111
    %v3145 = vunpack.c.l.b16 %v3112
    %v3146 = vunpack.c.l.b16 %v3113
    %v3147 = vunpack.c.l.b16 %v3114
    %v3148 = vunpack.c.l.b16 %v3115
    %v3149 = vunpack.c.l.b16 %v3116
    %v3150 = vunpack.c.l.b16 %v3117
    %v3151 = vunpack.c.l.b16 %v3118
    %v3152 = vunpack.c.l.b16 %v3119
    %v3153 = vunpack.c.l.b16 %v3120
    %v3154 = vunpack.c.l.b16 %v3121
    %v3155 = vunpack.c.l.b16 %v3122
    %v3156 = vunpack.c.l.b16 %v3123
    %v3157 = vunpack.c.l.b16 %v3124
    %v3158 = vunpack.c.l.b16 %v3125
    %v3159 = vunpack.c.l.b16 %v3126
    %v3160 = vpack.c.b16 %v3145, %v3144
    %v3161 = vpack.c.b16 %v3147, %v3146
    %v3162 = vpack.c.b16 %v3149, %v3148
    %v3163 = vpack.c.b16 %v3151, %v3150
    %v3164 = vpack.c.b16 %v3153, %v3152
    %v3165 = vpack.c.b16 %v3155, %v3154
    %v3166 = vpack.c.b16 %v3157, %v3156
    %v3167 = vpack.c.b16 %v3159, %v3158
    %3176 = vmatprep.subr.bf16.mxu0 0
    %3177 = vmatpush1.bf16.msra.mxu0 %v3167
    %3178 = vmatprep.subr.bf16.mxu0 0
    %3179 = vmatpush1.bf16.msra.mxu0 %v3166
    %3180 = vmatprep.subr.bf16.mxu0 0
    %3181 = vmatpush1.bf16.msra.mxu0 %v3165
    %3182 = vmatprep.subr.bf16.mxu0 0
    %3183 = vmatpush1.bf16.msra.mxu0 %v3164
    %3184 = vmatprep.subr.bf16.mxu0 0
    %3185 = vmatpush1.bf16.msra.mxu0 %v3163
    %3186 = vmatprep.subr.bf16.mxu0 0
    %3187 = vmatpush1.bf16.msra.mxu0 %v3162
    %3188 = vmatprep.subr.bf16.mxu0 0
    %3189 = vmatpush1.bf16.msra.mxu0 %v3161
    %3190 = vmatprep.subr.bf16.mxu0 0
    %3191 = vmatpush1.bf16.msra.mxu0 %v3160
    %3192 = vmatprep.subr.bf16.mxu0 0
    %3193 = vmatpush2.bf16.msra.mxu0 0
    %3194 = vmatprep.subr.bf16.mxu0 0
    %3195 = vmatpush2.bf16.msra.mxu0 0
    %3196 = vmatprep.subr.bf16.mxu0 0
    %3197 = vmatpush2.bf16.msra.mxu0 0
    %3198 = vmatprep.subr.bf16.mxu0 0
    %3199 = vmatpush2.bf16.msra.mxu0 0
    %3200 = vmatprep.subr.bf16.mxu0 0
    %3201 = vmatpush2.bf16.msra.mxu0 0
    %3202 = vmatprep.subr.bf16.mxu0 0
    %3203 = vmatpush2.bf16.msra.mxu0 0
    %3204 = vmatprep.subr.bf16.mxu0 0
    %3205 = vmatpush2.bf16.msra.mxu0 0
    %3206 = vmatprep.subr.bf16.mxu0 0
    %3207 = vmatpush2.bf16.msra.mxu0 0
    %3208 = vmatprep.mubr.bf16.mxu0 0
    %3209 = vmatmul.mubr.bf16.gmra.mxu0 %v3127
    %v3210 = vpop.f32.mrf.mxu0
    %v3211 = vadd.f32 0.0, %v3210
    %v3212 = vpop.f32.mrf.mxu0
    %v3213 = vpop.f32.mrf.mxu0
    %v3214 = vpop.f32.mrf.mxu0
    %3215 = vdwg.mxu0
    %v3232 = vunpack.c.l.b16 %v3048
    %v3233 = vunpack.c.l.b16 %v3049
    %v3234 = vunpack.c.l.b16 %v3050
    %v3235 = vunpack.c.l.b16 %v3051
    %v3236 = vunpack.c.l.b16 %v3052
    %v3237 = vunpack.c.l.b16 %v3053
    %v3238 = vunpack.c.l.b16 %v3054
    %v3239 = vunpack.c.l.b16 %v3055
    %v3240 = vunpack.c.l.b16 %v3056
    %v3241 = vunpack.c.l.b16 %v3057
    %v3242 = vunpack.c.l.b16 %v3058
    %v3243 = vunpack.c.l.b16 %v3059
    %v3244 = vunpack.c.l.b16 %v3060
    %v3245 = vunpack.c.l.b16 %v3061
    %v3246 = vunpack.c.l.b16 %v3062
    %v3247 = vunpack.c.l.b16 %v3063
    %v3248 = vpack.c.b16 %v3233, %v3232
    %v3249 = vpack.c.b16 %v3235, %v3234
    %v3250 = vpack.c.b16 %v3237, %v3236
    %v3251 = vpack.c.b16 %v3239, %v3238
    %v3252 = vpack.c.b16 %v3241, %v3240
    %v3253 = vpack.c.b16 %v3243, %v3242
    %v3254 = vpack.c.b16 %v3245, %v3244
    %v3255 = vpack.c.b16 %v3247, %v3246
    %3264 = vmatprep.subr.bf16.mxu0 0
    %3265 = vmatpush1.bf16.msra.mxu0 %v3255
    %3266 = vmatprep.subr.bf16.mxu0 0
    %3267 = vmatpush1.bf16.msra.mxu0 %v3254
    %3268 = vmatprep.subr.bf16.mxu0 0
    %3269 = vmatpush1.bf16.msra.mxu0 %v3253
    %3270 = vmatprep.subr.bf16.mxu0 0
    %3271 = vmatpush1.bf16.msra.mxu0 %v3252
    %3272 = vmatprep.subr.bf16.mxu0 0
    %3273 = vmatpush1.bf16.msra.mxu0 %v3251
    %3274 = vmatprep.subr.bf16.mxu0 0
    %3275 = vmatpush1.bf16.msra.mxu0 %v3250
    %3276 = vmatprep.subr.bf16.mxu0 0
    %3277 = vmatpush1.bf16.msra.mxu0 %v3249
    %3278 = vmatprep.subr.bf16.mxu0 0
    %3279 = vmatpush1.bf16.msra.mxu0 %v3248
    %3280 = vmatprep.subr.bf16.mxu0 0
    %3281 = vmatpush2.bf16.msra.mxu0 0
    %3282 = vmatprep.subr.bf16.mxu0 0
    %3283 = vmatpush2.bf16.msra.mxu0 0
    %3284 = vmatprep.subr.bf16.mxu0 0
    %3285 = vmatpush2.bf16.msra.mxu0 0
    %3286 = vmatprep.subr.bf16.mxu0 0
    %3287 = vmatpush2.bf16.msra.mxu0 0
    %3288 = vmatprep.subr.bf16.mxu0 0
    %3289 = vmatpush2.bf16.msra.mxu0 0
    %3290 = vmatprep.subr.bf16.mxu0 0
    %3291 = vmatpush2.bf16.msra.mxu0 0
    %3292 = vmatprep.subr.bf16.mxu0 0
    %3293 = vmatpush2.bf16.msra.mxu0 0
    %3294 = vmatprep.subr.bf16.mxu0 0
    %3295 = vmatpush2.bf16.msra.mxu0 0
    %3296 = vmatprep.mubr.bf16.mxu0 0
    %3297 = vmatmul.mubr.bf16.gmra.mxu0 %v3064
    %v3298 = vpop.f32.mrf.mxu0
    %v3299 = vadd.f32 %v3211, %v3298
    %v3300 = vpop.f32.mrf.mxu0
    %v3301 = vpop.f32.mrf.mxu0
    %v3302 = vpop.f32.mrf.mxu0
    %3303 = vdwg.mxu0
    %s3304 = scalar_lea.vmem %s49, 8
    %v3305 = vld [vmem:[%s3304] sm:$0xf]
    %v3307 = vsel %vm3000, %v3305, 0
    %3309 = vmatprep.subr.bf16.mxu0 0
    %3310 = vmatpush1.bf16.msra.mxu0 0
    %3311 = vmatprep.subr.bf16.mxu0 0
    %3312 = vmatpush1.bf16.msra.mxu0 0
    %3313 = vmatprep.subr.bf16.mxu0 0
    %3314 = vmatpush1.bf16.msra.mxu0 0
    %3315 = vmatprep.subr.bf16.mxu0 0
    %3316 = vmatpush1.bf16.msra.mxu0 0
    %3317 = vmatprep.subr.bf16.mxu0 0
    %3318 = vmatpush1.bf16.msra.mxu0 0
    %3319 = vmatprep.subr.bf16.mxu0 0
    %3320 = vmatpush1.bf16.msra.mxu0 0
    %3321 = vmatprep.subr.bf16.mxu0 0
    %3322 = vmatpush1.bf16.msra.mxu0 0
    %3323 = vmatprep.subr.bf16.mxu0 0
    %3324 = vmatpush1.bf16.msra.mxu0 %v3006
    %3325 = vmatprep.subr.bf16.mxu0 0
    %3326 = vmatpush2.bf16.msra.mxu0 0
    %3327 = vmatprep.subr.bf16.mxu0 0
    %3328 = vmatpush2.bf16.msra.mxu0 0
    %3329 = vmatprep.subr.bf16.mxu0 0
    %3330 = vmatpush2.bf16.msra.mxu0 0
    %3331 = vmatprep.subr.bf16.mxu0 0
    %3332 = vmatpush2.bf16.msra.mxu0 0
    %3333 = vmatprep.subr.bf16.mxu0 0
    %3334 = vmatpush2.bf16.msra.mxu0 0
    %3335 = vmatprep.subr.bf16.mxu0 0
    %3336 = vmatpush2.bf16.msra.mxu0 0
    %3337 = vmatprep.subr.bf16.mxu0 0
    %3338 = vmatpush2.bf16.msra.mxu0 0
    %3339 = vmatprep.subr.bf16.mxu0 0
    %3340 = vmatpush2.bf16.msra.mxu0 0
    %3341 = vmatprep.mubr.bf16.mxu0 0
    %3342 = vmatmul.mubr.bf16.gmra.mxu0 %v3307
    %v3343 = vpop.f32.mrf.mxu0
    %v3344 = vadd.f32 0.0, %v3343
    %v3345 = vpop.f32.mrf.mxu0
    %v3346 = vpop.f32.mrf.mxu0
    %v3347 = vpop.f32.mrf.mxu0
    %3348 = vdwg.mxu0
    %s3349 = scalar_lea.vmem [#allocation29], 128
    %v3350 = vld [vmem:[%s3349] sm:$0xf]
    %v3351 = vld [vmem:[%s3349 + $0x4] sm:$0xf]
    %v3352 = vld [vmem:[%s3349 + $0x8] sm:$0xf]
    %v3353 = vld [vmem:[%s3349 + $0xc] sm:$0xf]
    %v3354 = vld [vmem:[%s3349 + $0x10] sm:$0xf]
    %v3355 = vld [vmem:[%s3349 + $0x14] sm:$0xf]
    %v3356 = vld [vmem:[%s3349 + $0x18] sm:$0xf]
    %v3357 = vld [vmem:[%s3349 + $0x1c] sm:$0xf]
    %v3358 = vld [vmem:[%s3349 + $0x20] sm:$0xf]
    %v3359 = vld [vmem:[%s3349 + $0x24] sm:$0xf]
    %v3360 = vld [vmem:[%s3349 + $0x28] sm:$0xf]
    %v3361 = vld [vmem:[%s3349 + $0x2c] sm:$0xf]
    %v3362 = vld [vmem:[%s3349 + $0x30] sm:$0xf]
    %v3363 = vld [vmem:[%s3349 + $0x34] sm:$0xf]
    %v3364 = vld [vmem:[%s3349 + $0x38] sm:$0xf]
    %v3365 = vld [vmem:[%s3349 + $0x3c] sm:$0xf]
    %v3366 = vpack.c.bf16 %v3344, %v3344
    %v3383 = vunpack.c.l.b16 %v3350
    %v3384 = vunpack.c.l.b16 %v3351
    %v3385 = vunpack.c.l.b16 %v3352
    %v3386 = vunpack.c.l.b16 %v3353
    %v3387 = vunpack.c.l.b16 %v3354
    %v3388 = vunpack.c.l.b16 %v3355
    %v3389 = vunpack.c.l.b16 %v3356
    %v3390 = vunpack.c.l.b16 %v3357
    %v3391 = vunpack.c.l.b16 %v3358
    %v3392 = vunpack.c.l.b16 %v3359
    %v3393 = vunpack.c.l.b16 %v3360
    %v3394 = vunpack.c.l.b16 %v3361
    %v3395 = vunpack.c.l.b16 %v3362
    %v3396 = vunpack.c.l.b16 %v3363
    %v3397 = vunpack.c.l.b16 %v3364
    %v3398 = vunpack.c.l.b16 %v3365
    %v3399 = vpack.c.b16 %v3384, %v3383
    %v3400 = vpack.c.b16 %v3386, %v3385
    %v3401 = vpack.c.b16 %v3388, %v3387
    %v3402 = vpack.c.b16 %v3390, %v3389
    %v3403 = vpack.c.b16 %v3392, %v3391
    %v3404 = vpack.c.b16 %v3394, %v3393
    %v3405 = vpack.c.b16 %v3396, %v3395
    %v3406 = vpack.c.b16 %v3398, %v3397
    %3415 = vmatprep.subr.bf16.mxu0 0
    %3416 = vmatpush1.bf16.msra.mxu0 %v3406
    %3417 = vmatprep.subr.bf16.mxu0 0
    %3418 = vmatpush1.bf16.msra.mxu0 %v3405
    %3419 = vmatprep.subr.bf16.mxu0 0
    %3420 = vmatpush1.bf16.msra.mxu0 %v3404
    %3421 = vmatprep.subr.bf16.mxu0 0
    %3422 = vmatpush1.bf16.msra.mxu0 %v3403
    %3423 = vmatprep.subr.bf16.mxu0 0
    %3424 = vmatpush1.bf16.msra.mxu0 %v3402
    %3425 = vmatprep.subr.bf16.mxu0 0
    %3426 = vmatpush1.bf16.msra.mxu0 %v3401
    %3427 = vmatprep.subr.bf16.mxu0 0
    %3428 = vmatpush1.bf16.msra.mxu0 %v3400
    %3429 = vmatprep.subr.bf16.mxu0 0
    %3430 = vmatpush1.bf16.msra.mxu0 %v3399
    %3431 = vmatprep.subr.bf16.mxu0 0
    %3432 = vmatpush2.bf16.msra.mxu0 0
    %3433 = vmatprep.subr.bf16.mxu0 0
    %3434 = vmatpush2.bf16.msra.mxu0 0
    %3435 = vmatprep.subr.bf16.mxu0 0
    %3436 = vmatpush2.bf16.msra.mxu0 0
    %3437 = vmatprep.subr.bf16.mxu0 0
    %3438 = vmatpush2.bf16.msra.mxu0 0
    %3439 = vmatprep.subr.bf16.mxu0 0
    %3440 = vmatpush2.bf16.msra.mxu0 0
    %3441 = vmatprep.subr.bf16.mxu0 0
    %3442 = vmatpush2.bf16.msra.mxu0 0
    %3443 = vmatprep.subr.bf16.mxu0 0
    %3444 = vmatpush2.bf16.msra.mxu0 0
    %3445 = vmatprep.subr.bf16.mxu0 0
    %3446 = vmatpush2.bf16.msra.mxu0 0
    %3447 = vmatprep.mubr.bf16.mxu0 0
    %3448 = vmatmul.mubr.bf16.gmra.mxu0 %v3366
    %v3449 = vpop.f32.mrf.mxu0
    %v3450 = vadd.f32 0.0, %v3449
    %v3451 = vpop.f32.mrf.mxu0
    %v3452 = vpop.f32.mrf.mxu0
    %v3453 = vpop.f32.mrf.mxu0
    %3454 = vdwg.mxu0
    %v3455 = vadd.f32 %v3299, %v3450
    %v3456 = vld [vmem:[#allocation22] sm:$0x1]
    %v3458 = vlaneseq
    %v3459 = vshrl.u32 %v3458, 7
    %v3460 = vsub.s32 0, %v3459
    %v3461 = vrot.slane %v3456, %v3460
    %v3463 = vadd.f32 %v3455, %v3461
    %vm3464 = vcmp.gt.f32.partialorder %v3463, 20.0
    %v3465 = vmin.f32 %v3463, 20.0
    %v3466 = vmul.f32 %v3465, 1.442695
    %v3467 = vpow.pop %v3466
    %v3468 = vadd.f32 %v3467, 1.0
    %v3469 = vlog2.pop %v3468
    %v3470 = vmul.f32 %v3469, 0.6931472
    %v3471 = vmul.f32 -0.5, %v3467
    %v3472 = vadd.f32 %v3471, 1.0
    %v3473 = vmul.f32 %v3472, %v3467
    %v3474 = vand.u32 2147483647, %v3467
    %vm3475 = vcmp.lt.f32.partialorder %v3474, 0.0004427343
    %v3476 = vsel %vm3475, %v3473, %v3470
    %v3477 = vsel %vm3464, %v3463, %v3476
    %v3478 = vtanh.pop %v3477
    %v3479 = vmul.f32 %v3463, %v3478
    %v3480 = vrot.slane %v3479, 4
    %v3481 = vadd.f32 %v3479, %v3480
    %v3482 = vrot.slane %v3481, 2
    %v3483 = vadd.f32 %v3481, %v3482
    %v3484 = vrot.slane %v3483, 1
    %v3485 = vadd.f32 %v3483, %v3484
    %v3486 = vmul.f32 %v3485, %v2967
    %v3487 = vsub.f32 %v3479, %v3486
    %v3488 = vmul.f32 %v3487, %v3487
    %v3489 = vrot.slane %v3488, 4
    %v3490 = vadd.f32 %v3488, %v3489
    %v3491 = vrot.slane %v3490, 2
    %v3492 = vadd.f32 %v3490, %v3491
    %v3493 = vrot.slane %v3492, 1
    %v3494 = vadd.f32 %v3492, %v3493
    %v3495 = vmul.f32 %v3494, %v2967
    %v3496 = vadd.f32 %v3495, 1e-05
    %v3497 = vrsqrt.pop %v3496
    %v3498 = vmul.f32 %v3487, %v3497
    %v3499 = vld [vmem:[%s45] sm:$0x1]
    %v3501 = vlaneseq
    %v3502 = vshrl.u32 %v3501, 7
    %v3503 = vsub.s32 0, %v3502
    %v3504 = vrot.slane %v3499, %v3503
    %v3506 = vmul.f32 %v3498, %v3504
    %v3507 = vld [vmem:[%s43] sm:$0x1]
    %v3509 = vlaneseq
    %v3510 = vshrl.u32 %v3509, 7
    %v3511 = vsub.s32 0, %v3510
    %v3512 = vrot.slane %v3507, %v3511
    %v3514 = vadd.f32 %v3506, %v3512
    %v3515 = vld [vmem:[#allocation46] sm:$0xf]
    %v3516 = vld [vmem:[#allocation46 + $0x4] sm:$0xf]
    %v3517 = vld [vmem:[#allocation46 + $0x8] sm:$0xf]
    %v3518 = vld [vmem:[#allocation46 + $0xc] sm:$0xf]
    %v3519 = vld [vmem:[#allocation44] sm:$0x1]
    %v3521 = vlaneseq
    %v3522 = vshrl.u32 %v3521, 7
    %v3523 = vsub.s32 0, %v3522
    %v3524 = vrot.slane %v3519, %v3523
    %v3530 = vunpack.c.l.b16 %v3515
    %v3531 = vunpack.c.l.b16 %v3516
    %v3532 = vunpack.c.l.b16 %v3517
    %v3533 = vunpack.c.l.b16 %v3518
    %v3534 = vpack.c.b16 %v3531, %v3530
    %v3535 = vpack.c.b16 %v3533, %v3532
    %3538 = vmatprep.subr.bf16.mxu0 0
    %3539 = vmatpush1.bf16.msra.mxu0 0
    %3540 = vmatprep.subr.bf16.mxu0 0
    %3541 = vmatpush1.bf16.msra.mxu0 0
    %3542 = vmatprep.subr.bf16.mxu0 0
    %3543 = vmatpush1.bf16.msra.mxu0 0
    %3544 = vmatprep.subr.bf16.mxu0 0
    %3545 = vmatpush1.bf16.msra.mxu0 0
    %3546 = vmatprep.subr.bf16.mxu0 0
    %3547 = vmatpush1.bf16.msra.mxu0 0
    %3548 = vmatprep.subr.bf16.mxu0 0
    %3549 = vmatpush1.bf16.msra.mxu0 0
    %3550 = vmatprep.subr.bf16.mxu0 0
    %3551 = vmatpush1.bf16.msra.mxu0 %v3535
    %3552 = vmatprep.subr.bf16.mxu0 0
    %3553 = vmatpush1.bf16.msra.mxu0 %v3534
    %3554 = vmatprep.subr.bf16.mxu0 0
    %3555 = vmatpush2.bf16.msra.mxu0 0
    %3556 = vmatprep.subr.bf16.mxu0 0
    %3557 = vmatpush2.bf16.msra.mxu0 0
    %3558 = vmatprep.subr.bf16.mxu0 0
    %3559 = vmatpush2.bf16.msra.mxu0 0
    %3560 = vmatprep.subr.bf16.mxu0 0
    %3561 = vmatpush2.bf16.msra.mxu0 0
    %3562 = vmatprep.subr.bf16.mxu0 0
    %3563 = vmatpush2.bf16.msra.mxu0 0
    %3564 = vmatprep.subr.bf16.mxu0 0
    %3565 = vmatpush2.bf16.msra.mxu0 0
    %3566 = vmatprep.subr.bf16.mxu0 0
    %3567 = vmatpush2.bf16.msra.mxu0 0
    %3568 = vmatprep.subr.bf16.mxu0 0
    %3569 = vmatpush2.bf16.msra.mxu0 0
    %3570 = vmatprep.mubr.bf16.mxu0 0
    %3571 = vmatmul.mubr.bf16.gmra.mxu0 %v1356
    %v3572 = vpop.f32.mrf.mxu0
    %v3573 = vadd.f32 %v3524, %v3572
    %v3574 = vpop.f32.mrf.mxu0
    %v3575 = vpop.f32.mrf.mxu0
    %v3576 = vpop.f32.mrf.mxu0
    %3577 = vdwg.mxu0
    %vm3578 = vcmp.gt.f32.partialorder %v3573, 20.0
    %v3579 = vmin.f32 %v3573, 20.0
    %v3580 = vmul.f32 %v3579, 1.442695
    %v3581 = vpow.pop %v3580
    %v3582 = vadd.f32 %v3581, 1.0
    %v3583 = vlog2.pop %v3582
    %v3584 = vmul.f32 %v3583, 0.6931472
    %v3585 = vmul.f32 -0.5, %v3581
    %v3586 = vadd.f32 %v3585, 1.0
    %v3587 = vmul.f32 %v3586, %v3581
    %v3588 = vand.u32 2147483647, %v3581
    %vm3589 = vcmp.lt.f32.partialorder %v3588, 0.0004427343
    %v3590 = vsel %vm3589, %v3587, %v3584
    %v3591 = vsel %vm3578, %v3573, %v3590
    %v3592 = vtanh.pop %v3591
    %v3593 = vmul.f32 %v3573, %v3592
    %v3594 = vld [vmem:[#allocation37] sm:$0xff]
    %v3596 = vsel %vm1416, %v3594, 0
    %v3599 = vsel %vm1039, %v3593, 0
    %3601 = vmatprep.subr.mxu0 0.0
    %3602 = vmatpush1.msra.mxu0 0.0
    %3603 = vmatprep.subr.mxu0 0.0
    %3604 = vmatpush1.msra.mxu0 0.0
    %3605 = vmatprep.subr.mxu0 0.0
    %3606 = vmatpush1.msra.mxu0 0.0
    %3607 = vmatprep.subr.mxu0 0.0
    %3608 = vmatpush1.msra.mxu0 0.0
    %3609 = vmatprep.subr.mxu0 0.0
    %3610 = vmatpush1.msra.mxu0 0.0
    %3611 = vmatprep.subr.mxu0 0.0
    %3612 = vmatpush1.msra.mxu0 0.0
    %3613 = vmatprep.subr.mxu0 0.0
    %3614 = vmatpush1.msra.mxu0 0.0
    %3615 = vmatprep.subr.mxu0 0.0
    %3616 = vmatpush1.msra.mxu0 0.0
    %3617 = vmatprep.subr.mxu0 0.0
    %3618 = vmatpush1.msra.mxu0 0.0
    %3619 = vmatprep.subr.mxu0 0.0
    %3620 = vmatpush1.msra.mxu0 0.0
    %3621 = vmatprep.subr.mxu0 0.0
    %3622 = vmatpush1.msra.mxu0 0.0
    %3623 = vmatprep.subr.mxu0 0.0
    %3624 = vmatpush1.msra.mxu0 0.0
    %3625 = vmatprep.subr.mxu0 0.0
    %3626 = vmatpush1.msra.mxu0 0.0
    %3627 = vmatprep.subr.mxu0 0.0
    %3628 = vmatpush1.msra.mxu0 0.0
    %3629 = vmatprep.subr.mxu0 0.0
    %3630 = vmatpush1.msra.mxu0 0.0
    %3631 = vmatprep.subr.mxu0 0.0
    %3632 = vmatpush1.msra.mxu0 %v3599
    %3633 = vmatprep.subr.mxu0 0.0
    %3634 = vmatpush2.msra.mxu0 0.0
    %3635 = vmatprep.subr.mxu0 0.0
    %3636 = vmatpush2.msra.mxu0 0.0
    %3637 = vmatprep.subr.mxu0 0.0
    %3638 = vmatpush2.msra.mxu0 0.0
    %3639 = vmatprep.subr.mxu0 0.0
    %3640 = vmatpush2.msra.mxu0 0.0
    %3641 = vmatprep.subr.mxu0 0.0
    %3642 = vmatpush2.msra.mxu0 0.0
    %3643 = vmatprep.subr.mxu0 0.0
    %3644 = vmatpush2.msra.mxu0 0.0
    %3645 = vmatprep.subr.mxu0 0.0
    %3646 = vmatpush2.msra.mxu0 0.0
    %3647 = vmatprep.subr.mxu0 0.0
    %3648 = vmatpush2.msra.mxu0 0.0
    %3649 = vmatprep.subr.mxu0 0.0
    %3650 = vmatpush2.msra.mxu0 0.0
    %3651 = vmatprep.subr.mxu0 0.0
    %3652 = vmatpush2.msra.mxu0 0.0
    %3653 = vmatprep.subr.mxu0 0.0
    %3654 = vmatpush2.msra.mxu0 0.0
    %3655 = vmatprep.subr.mxu0 0.0
    %3656 = vmatpush2.msra.mxu0 0.0
    %3657 = vmatprep.subr.mxu0 0.0
    %3658 = vmatpush2.msra.mxu0 0.0
    %3659 = vmatprep.subr.mxu0 0.0
    %3660 = vmatpush2.msra.mxu0 0.0
    %3661 = vmatprep.subr.mxu0 0.0
    %3662 = vmatpush2.msra.mxu0 0.0
    %3663 = vmatprep.subr.mxu0 0.0
    %3664 = vmatpush2.msra.mxu0 0.0
    %3665 = vmatprep.mubr.f32.mxu0 0.0
    %3666 = vmatmul.mubr.f32.gmra.mxu0 %v3596
    %v3667 = vpop.f32.mrf.mxu0
    %v3668 = vadd.f32 0.0, %v3667
    %v3669 = vpop.f32.mrf.mxu0
    %3670 = vdwg.mxu0
    %v3671 = vld [vmem:[%s85] sm:$0xf]
    %v3672 = vpack.c.bf16 %v3514, %v3514
    %v3674 = vsel %vm3000, %v3671, 0
    %v3677 = vsel %vm3004, %v3672, 0
    %3679 = vmatprep.subr.bf16.mxu0 0
    %3680 = vmatpush1.bf16.msra.mxu0 0
    %3681 = vmatprep.subr.bf16.mxu0 0
    %3682 = vmatpush1.bf16.msra.mxu0 0
    %3683 = vmatprep.subr.bf16.mxu0 0
    %3684 = vmatpush1.bf16.msra.mxu0 0
    %3685 = vmatprep.subr.bf16.mxu0 0
    %3686 = vmatpush1.bf16.msra.mxu0 0
    %3687 = vmatprep.subr.bf16.mxu0 0
    %3688 = vmatpush1.bf16.msra.mxu0 0
    %3689 = vmatprep.subr.bf16.mxu0 0
    %3690 = vmatpush1.bf16.msra.mxu0 0
    %3691 = vmatprep.subr.bf16.mxu0 0
    %3692 = vmatpush1.bf16.msra.mxu0 0
    %3693 = vmatprep.subr.bf16.mxu0 0
    %3694 = vmatpush1.bf16.msra.mxu0 %v3677
    %3695 = vmatprep.subr.bf16.mxu0 0
    %3696 = vmatpush2.bf16.msra.mxu0 0
    %3697 = vmatprep.subr.bf16.mxu0 0
    %3698 = vmatpush2.bf16.msra.mxu0 0
    %3699 = vmatprep.subr.bf16.mxu0 0
    %3700 = vmatpush2.bf16.msra.mxu0 0
    %3701 = vmatprep.subr.bf16.mxu0 0
    %3702 = vmatpush2.bf16.msra.mxu0 0
    %3703 = vmatprep.subr.bf16.mxu0 0
    %3704 = vmatpush2.bf16.msra.mxu0 0
    %3705 = vmatprep.subr.bf16.mxu0 0
    %3706 = vmatpush2.bf16.msra.mxu0 0
    %3707 = vmatprep.subr.bf16.mxu0 0
    %3708 = vmatpush2.bf16.msra.mxu0 0
    %3709 = vmatprep.subr.bf16.mxu0 0
    %3710 = vmatpush2.bf16.msra.mxu0 0
    %3711 = vmatprep.mubr.bf16.mxu0 0
    %3712 = vmatmul.mubr.bf16.gmra.mxu0 %v3674
    %v3713 = vpop.f32.mrf.mxu0
    %v3714 = vadd.f32 0.0, %v3713
    %v3715 = vpop.f32.mrf.mxu0
    %v3716 = vpop.f32.mrf.mxu0
    %v3717 = vpop.f32.mrf.mxu0
    %3718 = vdwg.mxu0
    %v3719 = vld [vmem:[%s95] sm:$0xf]
    %v3720 = vld [vmem:[%s95 + $0x4] sm:$0xf]
    %v3721 = vld [vmem:[%s95 + $0x8] sm:$0xf]
    %v3722 = vld [vmem:[%s95 + $0xc] sm:$0xf]
    %v3723 = vld [vmem:[%s95 + $0x10] sm:$0xf]
    %v3724 = vld [vmem:[%s95 + $0x14] sm:$0xf]
    %v3725 = vld [vmem:[%s95 + $0x18] sm:$0xf]
    %v3726 = vld [vmem:[%s95 + $0x1c] sm:$0xf]
    %v3727 = vld [vmem:[%s95 + $0x20] sm:$0xf]
    %v3728 = vld [vmem:[%s95 + $0x24] sm:$0xf]
    %v3729 = vld [vmem:[%s95 + $0x28] sm:$0xf]
    %v3730 = vld [vmem:[%s95 + $0x2c] sm:$0xf]
    %v3731 = vld [vmem:[%s95 + $0x30] sm:$0xf]
    %v3732 = vld [vmem:[%s95 + $0x34] sm:$0xf]
    %v3733 = vld [vmem:[%s95 + $0x38] sm:$0xf]
    %v3734 = vld [vmem:[%s95 + $0x3c] sm:$0xf]
    %v3735 = vpack.c.bf16 %v3714, %v3714
    %v3736 = vld [vmem:[%s97] sm:$0xf]
    %v3737 = vld [vmem:[%s97 + $0x4] sm:$0xf]
    %v3738 = vld [vmem:[%s97 + $0x8] sm:$0xf]
    %v3739 = vld [vmem:[%s97 + $0xc] sm:$0xf]
    %v3740 = vld [vmem:[%s97 + $0x10] sm:$0xf]
    %v3741 = vld [vmem:[%s97 + $0x14] sm:$0xf]
    %v3742 = vld [vmem:[%s97 + $0x18] sm:$0xf]
    %v3743 = vld [vmem:[%s97 + $0x1c] sm:$0xf]
    %v3744 = vld [vmem:[%s97 + $0x20] sm:$0xf]
    %v3745 = vld [vmem:[%s97 + $0x24] sm:$0xf]
    %v3746 = vld [vmem:[%s97 + $0x28] sm:$0xf]
    %v3747 = vld [vmem:[%s97 + $0x2c] sm:$0xf]
    %v3748 = vld [vmem:[%s97 + $0x30] sm:$0xf]
    %v3749 = vld [vmem:[%s97 + $0x34] sm:$0xf]
    %v3750 = vld [vmem:[%s97 + $0x38] sm:$0xf]
    %v3751 = vld [vmem:[%s97 + $0x3c] sm:$0xf]
    %v3768 = vunpack.c.l.b16 %v3736
    %v3769 = vunpack.c.l.b16 %v3737
    %v3770 = vunpack.c.l.b16 %v3738
    %v3771 = vunpack.c.l.b16 %v3739
    %v3772 = vunpack.c.l.b16 %v3740
    %v3773 = vunpack.c.l.b16 %v3741
    %v3774 = vunpack.c.l.b16 %v3742
    %v3775 = vunpack.c.l.b16 %v3743
    %v3776 = vunpack.c.l.b16 %v3744
    %v3777 = vunpack.c.l.b16 %v3745
    %v3778 = vunpack.c.l.b16 %v3746
    %v3779 = vunpack.c.l.b16 %v3747
    %v3780 = vunpack.c.l.b16 %v3748
    %v3781 = vunpack.c.l.b16 %v3749
    %v3782 = vunpack.c.l.b16 %v3750
    %v3783 = vunpack.c.l.b16 %v3751
    %v3784 = vpack.c.b16 %v3769, %v3768
    %v3785 = vpack.c.b16 %v3771, %v3770
    %v3786 = vpack.c.b16 %v3773, %v3772
    %v3787 = vpack.c.b16 %v3775, %v3774
    %v3788 = vpack.c.b16 %v3777, %v3776
    %v3789 = vpack.c.b16 %v3779, %v3778
    %v3790 = vpack.c.b16 %v3781, %v3780
    %v3791 = vpack.c.b16 %v3783, %v3782
    %3800 = vmatprep.subr.bf16.mxu0 0
    %3801 = vmatpush1.bf16.msra.mxu0 %v3791
    %3802 = vmatprep.subr.bf16.mxu0 0
    %3803 = vmatpush1.bf16.msra.mxu0 %v3790
    %3804 = vmatprep.subr.bf16.mxu0 0
    %3805 = vmatpush1.bf16.msra.mxu0 %v3789
    %3806 = vmatprep.subr.bf16.mxu0 0
    %3807 = vmatpush1.bf16.msra.mxu0 %v3788
    %3808 = vmatprep.subr.bf16.mxu0 0
    %3809 = vmatpush1.bf16.msra.mxu0 %v3787
    %3810 = vmatprep.subr.bf16.mxu0 0
    %3811 = vmatpush1.bf16.msra.mxu0 %v3786
    %3812 = vmatprep.subr.bf16.mxu0 0
    %3813 = vmatpush1.bf16.msra.mxu0 %v3785
    %3814 = vmatprep.subr.bf16.mxu0 0
    %3815 = vmatpush1.bf16.msra.mxu0 %v3784
    %3816 = vmatprep.subr.bf16.mxu0 0
    %3817 = vmatpush2.bf16.msra.mxu0 0
    %3818 = vmatprep.subr.bf16.mxu0 0
    %3819 = vmatpush2.bf16.msra.mxu0 0
    %3820 = vmatprep.subr.bf16.mxu0 0
    %3821 = vmatpush2.bf16.msra.mxu0 0
    %3822 = vmatprep.subr.bf16.mxu0 0
    %3823 = vmatpush2.bf16.msra.mxu0 0
    %3824 = vmatprep.subr.bf16.mxu0 0
    %3825 = vmatpush2.bf16.msra.mxu0 0
    %3826 = vmatprep.subr.bf16.mxu0 0
    %3827 = vmatpush2.bf16.msra.mxu0 0
    %3828 = vmatprep.subr.bf16.mxu0 0
    %3829 = vmatpush2.bf16.msra.mxu0 0
    %3830 = vmatprep.subr.bf16.mxu0 0
    %3831 = vmatpush2.bf16.msra.mxu0 0
    %3832 = vmatprep.mubr.bf16.mxu0 0
    %3833 = vmatmul.mubr.bf16.gmra.mxu0 %v3735
    %v3834 = vpop.f32.mrf.mxu0
    %v3835 = vadd.f32 0.0, %v3834
    %v3836 = vpop.f32.mrf.mxu0
    %v3837 = vpop.f32.mrf.mxu0
    %v3838 = vpop.f32.mrf.mxu0
    %3839 = vdwg.mxu0
    %v3856 = vunpack.c.l.b16 %v3719
    %v3857 = vunpack.c.l.b16 %v3720
    %v3858 = vunpack.c.l.b16 %v3721
    %v3859 = vunpack.c.l.b16 %v3722
    %v3860 = vunpack.c.l.b16 %v3723
    %v3861 = vunpack.c.l.b16 %v3724
    %v3862 = vunpack.c.l.b16 %v3725
    %v3863 = vunpack.c.l.b16 %v3726
    %v3864 = vunpack.c.l.b16 %v3727
    %v3865 = vunpack.c.l.b16 %v3728
    %v3866 = vunpack.c.l.b16 %v3729
    %v3867 = vunpack.c.l.b16 %v3730
    %v3868 = vunpack.c.l.b16 %v3731
    %v3869 = vunpack.c.l.b16 %v3732
    %v3870 = vunpack.c.l.b16 %v3733
    %v3871 = vunpack.c.l.b16 %v3734
    %v3872 = vpack.c.b16 %v3857, %v3856
    %v3873 = vpack.c.b16 %v3859, %v3858
    %v3874 = vpack.c.b16 %v3861, %v3860
    %v3875 = vpack.c.b16 %v3863, %v3862
    %v3876 = vpack.c.b16 %v3865, %v3864
    %v3877 = vpack.c.b16 %v3867, %v3866
    %v3878 = vpack.c.b16 %v3869, %v3868
    %v3879 = vpack.c.b16 %v3871, %v3870
    %3888 = vmatprep.subr.bf16.mxu0 0
    %3889 = vmatpush1.bf16.msra.mxu0 %v3879
    %3890 = vmatprep.subr.bf16.mxu0 0
    %3891 = vmatpush1.bf16.msra.mxu0 %v3878
    %3892 = vmatprep.subr.bf16.mxu0 0
    %3893 = vmatpush1.bf16.msra.mxu0 %v3877
    %3894 = vmatprep.subr.bf16.mxu0 0
    %3895 = vmatpush1.bf16.msra.mxu0 %v3876
    %3896 = vmatprep.subr.bf16.mxu0 0
    %3897 = vmatpush1.bf16.msra.mxu0 %v3875
    %3898 = vmatprep.subr.bf16.mxu0 0
    %3899 = vmatpush1.bf16.msra.mxu0 %v3874
    %3900 = vmatprep.subr.bf16.mxu0 0
    %3901 = vmatpush1.bf16.msra.mxu0 %v3873
    %3902 = vmatprep.subr.bf16.mxu0 0
    %3903 = vmatpush1.bf16.msra.mxu0 %v3872
    %3904 = vmatprep.subr.bf16.mxu0 0
    %3905 = vmatpush2.bf16.msra.mxu0 0
    %3906 = vmatprep.subr.bf16.mxu0 0
    %3907 = vmatpush2.bf16.msra.mxu0 0
    %3908 = vmatprep.subr.bf16.mxu0 0
    %3909 = vmatpush2.bf16.msra.mxu0 0
    %3910 = vmatprep.subr.bf16.mxu0 0
    %3911 = vmatpush2.bf16.msra.mxu0 0
    %3912 = vmatprep.subr.bf16.mxu0 0
    %3913 = vmatpush2.bf16.msra.mxu0 0
    %3914 = vmatprep.subr.bf16.mxu0 0
    %3915 = vmatpush2.bf16.msra.mxu0 0
    %3916 = vmatprep.subr.bf16.mxu0 0
    %3917 = vmatpush2.bf16.msra.mxu0 0
    %3918 = vmatprep.subr.bf16.mxu0 0
    %3919 = vmatpush2.bf16.msra.mxu0 0
    %3920 = vmatprep.mubr.bf16.mxu0 0
    %3921 = vmatmul.mubr.bf16.gmra.mxu0 %v3735
    %v3922 = vpop.f32.mrf.mxu0
    %v3923 = vadd.f32 %v3835, %v3922
    %v3924 = vpop.f32.mrf.mxu0
    %v3925 = vpop.f32.mrf.mxu0
    %v3926 = vpop.f32.mrf.mxu0
    %3927 = vdwg.mxu0
    %s3928 = scalar_lea.vmem %s85, 4
    %v3929 = vld [vmem:[%s3928] sm:$0xf]
    %v3931 = vsel %vm3000, %v3929, 0
    %3933 = vmatprep.subr.bf16.mxu0 0
    %3934 = vmatpush1.bf16.msra.mxu0 0
    %3935 = vmatprep.subr.bf16.mxu0 0
    %3936 = vmatpush1.bf16.msra.mxu0 0
    %3937 = vmatprep.subr.bf16.mxu0 0
    %3938 = vmatpush1.bf16.msra.mxu0 0
    %3939 = vmatprep.subr.bf16.mxu0 0
    %3940 = vmatpush1.bf16.msra.mxu0 0
    %3941 = vmatprep.subr.bf16.mxu0 0
    %3942 = vmatpush1.bf16.msra.mxu0 0
    %3943 = vmatprep.subr.bf16.mxu0 0
    %3944 = vmatpush1.bf16.msra.mxu0 0
    %3945 = vmatprep.subr.bf16.mxu0 0
    %3946 = vmatpush1.bf16.msra.mxu0 0
    %3947 = vmatprep.subr.bf16.mxu0 0
    %3948 = vmatpush1.bf16.msra.mxu0 %v3677
    %3949 = vmatprep.subr.bf16.mxu0 0
    %3950 = vmatpush2.bf16.msra.mxu0 0
    %3951 = vmatprep.subr.bf16.mxu0 0
    %3952 = vmatpush2.bf16.msra.mxu0 0
    %3953 = vmatprep.subr.bf16.mxu0 0
    %3954 = vmatpush2.bf16.msra.mxu0 0
    %3955 = vmatprep.subr.bf16.mxu0 0
    %3956 = vmatpush2.bf16.msra.mxu0 0
    %3957 = vmatprep.subr.bf16.mxu0 0
    %3958 = vmatpush2.bf16.msra.mxu0 0
    %3959 = vmatprep.subr.bf16.mxu0 0
    %3960 = vmatpush2.bf16.msra.mxu0 0
    %3961 = vmatprep.subr.bf16.mxu0 0
    %3962 = vmatpush2.bf16.msra.mxu0 0
    %3963 = vmatprep.subr.bf16.mxu0 0
    %3964 = vmatpush2.bf16.msra.mxu0 0
    %3965 = vmatprep.mubr.bf16.mxu0 0
    %3966 = vmatmul.mubr.bf16.gmra.mxu0 %v3931
    %v3967 = vpop.f32.mrf.mxu0
    %v3968 = vadd.f32 0.0, %v3967
    %v3969 = vpop.f32.mrf.mxu0
    %v3970 = vpop.f32.mrf.mxu0
    %v3971 = vpop.f32.mrf.mxu0
    %3972 = vdwg.mxu0
    %s3973 = scalar_lea.vmem %s95, 64
    %v3974 = vld [vmem:[%s3973] sm:$0xf]
    %v3975 = vld [vmem:[%s3973 + $0x4] sm:$0xf]
    %v3976 = vld [vmem:[%s3973 + $0x8] sm:$0xf]
    %v3977 = vld [vmem:[%s3973 + $0xc] sm:$0xf]
    %v3978 = vld [vmem:[%s3973 + $0x10] sm:$0xf]
    %v3979 = vld [vmem:[%s3973 + $0x14] sm:$0xf]
    %v3980 = vld [vmem:[%s3973 + $0x18] sm:$0xf]
    %v3981 = vld [vmem:[%s3973 + $0x1c] sm:$0xf]
    %v3982 = vld [vmem:[%s3973 + $0x20] sm:$0xf]
    %v3983 = vld [vmem:[%s3973 + $0x24] sm:$0xf]
    %v3984 = vld [vmem:[%s3973 + $0x28] sm:$0xf]
    %v3985 = vld [vmem:[%s3973 + $0x2c] sm:$0xf]
    %v3986 = vld [vmem:[%s3973 + $0x30] sm:$0xf]
    %v3987 = vld [vmem:[%s3973 + $0x34] sm:$0xf]
    %v3988 = vld [vmem:[%s3973 + $0x38] sm:$0xf]
    %v3989 = vld [vmem:[%s3973 + $0x3c] sm:$0xf]
    %v3990 = vpack.c.bf16 %v3968, %v3968
    %v4007 = vunpack.c.l.b16 %v3974
    %v4008 = vunpack.c.l.b16 %v3975
    %v4009 = vunpack.c.l.b16 %v3976
    %v4010 = vunpack.c.l.b16 %v3977
    %v4011 = vunpack.c.l.b16 %v3978
    %v4012 = vunpack.c.l.b16 %v3979
    %v4013 = vunpack.c.l.b16 %v3980
    %v4014 = vunpack.c.l.b16 %v3981
    %v4015 = vunpack.c.l.b16 %v3982
    %v4016 = vunpack.c.l.b16 %v3983
    %v4017 = vunpack.c.l.b16 %v3984
    %v4018 = vunpack.c.l.b16 %v3985
    %v4019 = vunpack.c.l.b16 %v3986
    %v4020 = vunpack.c.l.b16 %v3987
    %v4021 = vunpack.c.l.b16 %v3988
    %v4022 = vunpack.c.l.b16 %v3989
    %v4023 = vpack.c.b16 %v4008, %v4007
    %v4024 = vpack.c.b16 %v4010, %v4009
    %v4025 = vpack.c.b16 %v4012, %v4011
    %v4026 = vpack.c.b16 %v4014, %v4013
    %v4027 = vpack.c.b16 %v4016, %v4015
    %v4028 = vpack.c.b16 %v4018, %v4017
    %v4029 = vpack.c.b16 %v4020, %v4019
    %v4030 = vpack.c.b16 %v4022, %v4021
    %4039 = vmatprep.subr.bf16.mxu0 0
    %4040 = vmatpush1.bf16.msra.mxu0 %v4030
    %4041 = vmatprep.subr.bf16.mxu0 0
    %4042 = vmatpush1.bf16.msra.mxu0 %v4029
    %4043 = vmatprep.subr.bf16.mxu0 0
    %4044 = vmatpush1.bf16.msra.mxu0 %v4028
    %4045 = vmatprep.subr.bf16.mxu0 0
    %4046 = vmatpush1.bf16.msra.mxu0 %v4027
    %4047 = vmatprep.subr.bf16.mxu0 0
    %4048 = vmatpush1.bf16.msra.mxu0 %v4026
    %4049 = vmatprep.subr.bf16.mxu0 0
    %4050 = vmatpush1.bf16.msra.mxu0 %v4025
    %4051 = vmatprep.subr.bf16.mxu0 0
    %4052 = vmatpush1.bf16.msra.mxu0 %v4024
    %4053 = vmatprep.subr.bf16.mxu0 0
    %4054 = vmatpush1.bf16.msra.mxu0 %v4023
    %4055 = vmatprep.subr.bf16.mxu0 0
    %4056 = vmatpush2.bf16.msra.mxu0 0
    %4057 = vmatprep.subr.bf16.mxu0 0
    %4058 = vmatpush2.bf16.msra.mxu0 0
    %4059 = vmatprep.subr.bf16.mxu0 0
    %4060 = vmatpush2.bf16.msra.mxu0 0
    %4061 = vmatprep.subr.bf16.mxu0 0
    %4062 = vmatpush2.bf16.msra.mxu0 0
    %4063 = vmatprep.subr.bf16.mxu0 0
    %4064 = vmatpush2.bf16.msra.mxu0 0
    %4065 = vmatprep.subr.bf16.mxu0 0
    %4066 = vmatpush2.bf16.msra.mxu0 0
    %4067 = vmatprep.subr.bf16.mxu0 0
    %4068 = vmatpush2.bf16.msra.mxu0 0
    %4069 = vmatprep.subr.bf16.mxu0 0
    %4070 = vmatpush2.bf16.msra.mxu0 0
    %4071 = vmatprep.mubr.bf16.mxu0 0
    %4072 = vmatmul.mubr.bf16.gmra.mxu0 %v3990
    %v4073 = vpop.f32.mrf.mxu0
    %v4074 = vadd.f32 0.0, %v4073
    %v4075 = vpop.f32.mrf.mxu0
    %v4076 = vpop.f32.mrf.mxu0
    %v4077 = vpop.f32.mrf.mxu0
    %4078 = vdwg.mxu0
    %v4079 = vadd.f32 %v3923, %v4074
    %s4080 = scalar_lea.vmem %s97, 64
    %v4081 = vld [vmem:[%s4080] sm:$0xf]
    %v4082 = vld [vmem:[%s4080 + $0x4] sm:$0xf]
    %v4083 = vld [vmem:[%s4080 + $0x8] sm:$0xf]
    %v4084 = vld [vmem:[%s4080 + $0xc] sm:$0xf]
    %v4085 = vld [vmem:[%s4080 + $0x10] sm:$0xf]
    %v4086 = vld [vmem:[%s4080 + $0x14] sm:$0xf]
    %v4087 = vld [vmem:[%s4080 + $0x18] sm:$0xf]
    %v4088 = vld [vmem:[%s4080 + $0x1c] sm:$0xf]
    %v4089 = vld [vmem:[%s4080 + $0x20] sm:$0xf]
    %v4090 = vld [vmem:[%s4080 + $0x24] sm:$0xf]
    %v4091 = vld [vmem:[%s4080 + $0x28] sm:$0xf]
    %v4092 = vld [vmem:[%s4080 + $0x2c] sm:$0xf]
    %v4093 = vld [vmem:[%s4080 + $0x30] sm:$0xf]
    %v4094 = vld [vmem:[%s4080 + $0x34] sm:$0xf]
    %v4095 = vld [vmem:[%s4080 + $0x38] sm:$0xf]
    %v4096 = vld [vmem:[%s4080 + $0x3c] sm:$0xf]
    %v4113 = vunpack.c.l.b16 %v4081
    %v4114 = vunpack.c.l.b16 %v4082
    %v4115 = vunpack.c.l.b16 %v4083
    %v4116 = vunpack.c.l.b16 %v4084
    %v4117 = vunpack.c.l.b16 %v4085
    %v4118 = vunpack.c.l.b16 %v4086
    %v4119 = vunpack.c.l.b16 %v4087
    %v4120 = vunpack.c.l.b16 %v4088
    %v4121 = vunpack.c.l.b16 %v4089
    %v4122 = vunpack.c.l.b16 %v4090
    %v4123 = vunpack.c.l.b16 %v4091
    %v4124 = vunpack.c.l.b16 %v4092
    %v4125 = vunpack.c.l.b16 %v4093
    %v4126 = vunpack.c.l.b16 %v4094
    %v4127 = vunpack.c.l.b16 %v4095
    %v4128 = vunpack.c.l.b16 %v4096
    %v4129 = vpack.c.b16 %v4114, %v4113
    %v4130 = vpack.c.b16 %v4116, %v4115
    %v4131 = vpack.c.b16 %v4118, %v4117
    %v4132 = vpack.c.b16 %v4120, %v4119
    %v4133 = vpack.c.b16 %v4122, %v4121
    %v4134 = vpack.c.b16 %v4124, %v4123
    %v4135 = vpack.c.b16 %v4126, %v4125
    %v4136 = vpack.c.b16 %v4128, %v4127
    %4145 = vmatprep.subr.bf16.mxu0 0
    %4146 = vmatpush1.bf16.msra.mxu0 %v4136
    %4147 = vmatprep.subr.bf16.mxu0 0
    %4148 = vmatpush1.bf16.msra.mxu0 %v4135
    %4149 = vmatprep.subr.bf16.mxu0 0
    %4150 = vmatpush1.bf16.msra.mxu0 %v4134
    %4151 = vmatprep.subr.bf16.mxu0 0
    %4152 = vmatpush1.bf16.msra.mxu0 %v4133
    %4153 = vmatprep.subr.bf16.mxu0 0
    %4154 = vmatpush1.bf16.msra.mxu0 %v4132
    %4155 = vmatprep.subr.bf16.mxu0 0
    %4156 = vmatpush1.bf16.msra.mxu0 %v4131
    %4157 = vmatprep.subr.bf16.mxu0 0
    %4158 = vmatpush1.bf16.msra.mxu0 %v4130
    %4159 = vmatprep.subr.bf16.mxu0 0
    %4160 = vmatpush1.bf16.msra.mxu0 %v4129
    %4161 = vmatprep.subr.bf16.mxu0 0
    %4162 = vmatpush2.bf16.msra.mxu0 0
    %4163 = vmatprep.subr.bf16.mxu0 0
    %4164 = vmatpush2.bf16.msra.mxu0 0
    %4165 = vmatprep.subr.bf16.mxu0 0
    %4166 = vmatpush2.bf16.msra.mxu0 0
    %4167 = vmatprep.subr.bf16.mxu0 0
    %4168 = vmatpush2.bf16.msra.mxu0 0
    %4169 = vmatprep.subr.bf16.mxu0 0
    %4170 = vmatpush2.bf16.msra.mxu0 0
    %4171 = vmatprep.subr.bf16.mxu0 0
    %4172 = vmatpush2.bf16.msra.mxu0 0
    %4173 = vmatprep.subr.bf16.mxu0 0
    %4174 = vmatpush2.bf16.msra.mxu0 0
    %4175 = vmatprep.subr.bf16.mxu0 0
    %4176 = vmatpush2.bf16.msra.mxu0 0
    %4177 = vmatprep.mubr.bf16.mxu0 0
    %4178 = vmatmul.mubr.bf16.gmra.mxu0 %v3990
    %v4179 = vpop.f32.mrf.mxu0
    %v4180 = vadd.f32 0.0, %v4179
    %v4181 = vpop.f32.mrf.mxu0
    %v4182 = vpop.f32.mrf.mxu0
    %v4183 = vpop.f32.mrf.mxu0
    %4184 = vdwg.mxu0
    %v4185 = vadd.f32 %v4079, %v4180
    %s4186 = scalar_lea.vmem %s85, 8
    %v4187 = vld [vmem:[%s4186] sm:$0xf]
    %v4189 = vsel %vm3000, %v4187, 0
    %4191 = vmatprep.subr.bf16.mxu0 0
    %4192 = vmatpush1.bf16.msra.mxu0 0
    %4193 = vmatprep.subr.bf16.mxu0 0
    %4194 = vmatpush1.bf16.msra.mxu0 0
    %4195 = vmatprep.subr.bf16.mxu0 0
    %4196 = vmatpush1.bf16.msra.mxu0 0
    %4197 = vmatprep.subr.bf16.mxu0 0
    %4198 = vmatpush1.bf16.msra.mxu0 0
    %4199 = vmatprep.subr.bf16.mxu0 0
    %4200 = vmatpush1.bf16.msra.mxu0 0
    %4201 = vmatprep.subr.bf16.mxu0 0
    %4202 = vmatpush1.bf16.msra.mxu0 0
    %4203 = vmatprep.subr.bf16.mxu0 0
    %4204 = vmatpush1.bf16.msra.mxu0 0
    %4205 = vmatprep.subr.bf16.mxu0 0
    %4206 = vmatpush1.bf16.msra.mxu0 %v3677
    %4207 = vmatprep.subr.bf16.mxu0 0
    %4208 = vmatpush2.bf16.msra.mxu0 0
    %4209 = vmatprep.subr.bf16.mxu0 0
    %4210 = vmatpush2.bf16.msra.mxu0 0
    %4211 = vmatprep.subr.bf16.mxu0 0
    %4212 = vmatpush2.bf16.msra.mxu0 0
    %4213 = vmatprep.subr.bf16.mxu0 0
    %4214 = vmatpush2.bf16.msra.mxu0 0
    %4215 = vmatprep.subr.bf16.mxu0 0
    %4216 = vmatpush2.bf16.msra.mxu0 0
    %4217 = vmatprep.subr.bf16.mxu0 0
    %4218 = vmatpush2.bf16.msra.mxu0 0
    %4219 = vmatprep.subr.bf16.mxu0 0
    %4220 = vmatpush2.bf16.msra.mxu0 0
    %4221 = vmatprep.subr.bf16.mxu0 0
    %4222 = vmatpush2.bf16.msra.mxu0 0
    %4223 = vmatprep.mubr.bf16.mxu0 0
    %4224 = vmatmul.mubr.bf16.gmra.mxu0 %v4189
    %v4225 = vpop.f32.mrf.mxu0
    %v4226 = vadd.f32 0.0, %v4225
    %v4227 = vpop.f32.mrf.mxu0
    %v4228 = vpop.f32.mrf.mxu0
    %v4229 = vpop.f32.mrf.mxu0
    %4230 = vdwg.mxu0
    %s4231 = scalar_lea.vmem %s95, 128
    %v4232 = vld [vmem:[%s4231] sm:$0xf]
    %v4233 = vld [vmem:[%s4231 + $0x4] sm:$0xf]
    %v4234 = vld [vmem:[%s4231 + $0x8] sm:$0xf]
    %v4235 = vld [vmem:[%s4231 + $0xc] sm:$0xf]
    %v4236 = vld [vmem:[%s4231 + $0x10] sm:$0xf]
    %v4237 = vld [vmem:[%s4231 + $0x14] sm:$0xf]
    %v4238 = vld [vmem:[%s4231 + $0x18] sm:$0xf]
    %v4239 = vld [vmem:[%s4231 + $0x1c] sm:$0xf]
    %v4240 = vld [vmem:[%s4231 + $0x20] sm:$0xf]
    %v4241 = vld [vmem:[%s4231 + $0x24] sm:$0xf]
    %v4242 = vld [vmem:[%s4231 + $0x28] sm:$0xf]
    %v4243 = vld [vmem:[%s4231 + $0x2c] sm:$0xf]
    %v4244 = vld [vmem:[%s4231 + $0x30] sm:$0xf]
    %v4245 = vld [vmem:[%s4231 + $0x34] sm:$0xf]
    %v4246 = vld [vmem:[%s4231 + $0x38] sm:$0xf]
    %v4247 = vld [vmem:[%s4231 + $0x3c] sm:$0xf]
    %v4248 = vpack.c.bf16 %v4226, %v4226
    %v4265 = vunpack.c.l.b16 %v4232
    %v4266 = vunpack.c.l.b16 %v4233
    %v4267 = vunpack.c.l.b16 %v4234
    %v4268 = vunpack.c.l.b16 %v4235
    %v4269 = vunpack.c.l.b16 %v4236
    %v4270 = vunpack.c.l.b16 %v4237
    %v4271 = vunpack.c.l.b16 %v4238
    %v4272 = vunpack.c.l.b16 %v4239
    %v4273 = vunpack.c.l.b16 %v4240
    %v4274 = vunpack.c.l.b16 %v4241
    %v4275 = vunpack.c.l.b16 %v4242
    %v4276 = vunpack.c.l.b16 %v4243
    %v4277 = vunpack.c.l.b16 %v4244
    %v4278 = vunpack.c.l.b16 %v4245
    %v4279 = vunpack.c.l.b16 %v4246
    %v4280 = vunpack.c.l.b16 %v4247
    %v4281 = vpack.c.b16 %v4266, %v4265
    %v4282 = vpack.c.b16 %v4268, %v4267
    %v4283 = vpack.c.b16 %v4270, %v4269
    %v4284 = vpack.c.b16 %v4272, %v4271
    %v4285 = vpack.c.b16 %v4274, %v4273
    %v4286 = vpack.c.b16 %v4276, %v4275
    %v4287 = vpack.c.b16 %v4278, %v4277
    %v4288 = vpack.c.b16 %v4280, %v4279
    %4297 = vmatprep.subr.bf16.mxu0 0
    %4298 = vmatpush1.bf16.msra.mxu0 %v4288
    %4299 = vmatprep.subr.bf16.mxu0 0
    %4300 = vmatpush1.bf16.msra.mxu0 %v4287
    %4301 = vmatprep.subr.bf16.mxu0 0
    %4302 = vmatpush1.bf16.msra.mxu0 %v4286
    %4303 = vmatprep.subr.bf16.mxu0 0
    %4304 = vmatpush1.bf16.msra.mxu0 %v4285
    %4305 = vmatprep.subr.bf16.mxu0 0
    %4306 = vmatpush1.bf16.msra.mxu0 %v4284
    %4307 = vmatprep.subr.bf16.mxu0 0
    %4308 = vmatpush1.bf16.msra.mxu0 %v4283
    %4309 = vmatprep.subr.bf16.mxu0 0
    %4310 = vmatpush1.bf16.msra.mxu0 %v4282
    %4311 = vmatprep.subr.bf16.mxu0 0
    %4312 = vmatpush1.bf16.msra.mxu0 %v4281
    %4313 = vmatprep.subr.bf16.mxu0 0
    %4314 = vmatpush2.bf16.msra.mxu0 0
    %4315 = vmatprep.subr.bf16.mxu0 0
    %4316 = vmatpush2.bf16.msra.mxu0 0
    %4317 = vmatprep.subr.bf16.mxu0 0
    %4318 = vmatpush2.bf16.msra.mxu0 0
    %4319 = vmatprep.subr.bf16.mxu0 0
    %4320 = vmatpush2.bf16.msra.mxu0 0
    %4321 = vmatprep.subr.bf16.mxu0 0
    %4322 = vmatpush2.bf16.msra.mxu0 0
    %4323 = vmatprep.subr.bf16.mxu0 0
    %4324 = vmatpush2.bf16.msra.mxu0 0
    %4325 = vmatprep.subr.bf16.mxu0 0
    %4326 = vmatpush2.bf16.msra.mxu0 0
    %4327 = vmatprep.subr.bf16.mxu0 0
    %4328 = vmatpush2.bf16.msra.mxu0 0
    %4329 = vmatprep.mubr.bf16.mxu0 0
    %4330 = vmatmul.mubr.bf16.gmra.mxu0 %v4248
    %v4331 = vpop.f32.mrf.mxu0
    %v4332 = vadd.f32 0.0, %v4331
    %v4333 = vpop.f32.mrf.mxu0
    %v4334 = vpop.f32.mrf.mxu0
    %v4335 = vpop.f32.mrf.mxu0
    %4336 = vdwg.mxu0
    %v4337 = vadd.f32 %v4185, %v4332
    %s4338 = scalar_lea.vmem %s97, 128
    %v4339 = vld [vmem:[%s4338] sm:$0xf]
    %v4340 = vld [vmem:[%s4338 + $0x4] sm:$0xf]
    %v4341 = vld [vmem:[%s4338 + $0x8] sm:$0xf]
    %v4342 = vld [vmem:[%s4338 + $0xc] sm:$0xf]
    %v4343 = vld [vmem:[%s4338 + $0x10] sm:$0xf]
    %v4344 = vld [vmem:[%s4338 + $0x14] sm:$0xf]
    %v4345 = vld [vmem:[%s4338 + $0x18] sm:$0xf]
    %v4346 = vld [vmem:[%s4338 + $0x1c] sm:$0xf]
    %v4347 = vld [vmem:[%s4338 + $0x20] sm:$0xf]
    %v4348 = vld [vmem:[%s4338 + $0x24] sm:$0xf]
    %v4349 = vld [vmem:[%s4338 + $0x28] sm:$0xf]
    %v4350 = vld [vmem:[%s4338 + $0x2c] sm:$0xf]
    %v4351 = vld [vmem:[%s4338 + $0x30] sm:$0xf]
    %v4352 = vld [vmem:[%s4338 + $0x34] sm:$0xf]
    %v4353 = vld [vmem:[%s4338 + $0x38] sm:$0xf]
    %v4354 = vld [vmem:[%s4338 + $0x3c] sm:$0xf]
    %v4371 = vunpack.c.l.b16 %v4339
    %v4372 = vunpack.c.l.b16 %v4340
    %v4373 = vunpack.c.l.b16 %v4341
    %v4374 = vunpack.c.l.b16 %v4342
    %v4375 = vunpack.c.l.b16 %v4343
    %v4376 = vunpack.c.l.b16 %v4344
    %v4377 = vunpack.c.l.b16 %v4345
    %v4378 = vunpack.c.l.b16 %v4346
    %v4379 = vunpack.c.l.b16 %v4347
    %v4380 = vunpack.c.l.b16 %v4348
    %v4381 = vunpack.c.l.b16 %v4349
    %v4382 = vunpack.c.l.b16 %v4350
    %v4383 = vunpack.c.l.b16 %v4351
    %v4384 = vunpack.c.l.b16 %v4352
    %v4385 = vunpack.c.l.b16 %v4353
    %v4386 = vunpack.c.l.b16 %v4354
    %v4387 = vpack.c.b16 %v4372, %v4371
    %v4388 = vpack.c.b16 %v4374, %v4373
    %v4389 = vpack.c.b16 %v4376, %v4375
    %v4390 = vpack.c.b16 %v4378, %v4377
    %v4391 = vpack.c.b16 %v4380, %v4379
    %v4392 = vpack.c.b16 %v4382, %v4381
    %v4393 = vpack.c.b16 %v4384, %v4383
    %v4394 = vpack.c.b16 %v4386, %v4385
    %4403 = vmatprep.subr.bf16.mxu0 0
    %4404 = vmatpush1.bf16.msra.mxu0 %v4394
    %4405 = vmatprep.subr.bf16.mxu0 0
    %4406 = vmatpush1.bf16.msra.mxu0 %v4393
    %4407 = vmatprep.subr.bf16.mxu0 0
    %4408 = vmatpush1.bf16.msra.mxu0 %v4392
    %4409 = vmatprep.subr.bf16.mxu0 0
    %4410 = vmatpush1.bf16.msra.mxu0 %v4391
    %4411 = vmatprep.subr.bf16.mxu0 0
    %4412 = vmatpush1.bf16.msra.mxu0 %v4390
    %4413 = vmatprep.subr.bf16.mxu0 0
    %4414 = vmatpush1.bf16.msra.mxu0 %v4389
    %4415 = vmatprep.subr.bf16.mxu0 0
    %4416 = vmatpush1.bf16.msra.mxu0 %v4388
    %4417 = vmatprep.subr.bf16.mxu0 0
    %4418 = vmatpush1.bf16.msra.mxu0 %v4387
    %4419 = vmatprep.subr.bf16.mxu0 0
    %4420 = vmatpush2.bf16.msra.mxu0 0
    %4421 = vmatprep.subr.bf16.mxu0 0
    %4422 = vmatpush2.bf16.msra.mxu0 0
    %4423 = vmatprep.subr.bf16.mxu0 0
    %4424 = vmatpush2.bf16.msra.mxu0 0
    %4425 = vmatprep.subr.bf16.mxu0 0
    %4426 = vmatpush2.bf16.msra.mxu0 0
    %4427 = vmatprep.subr.bf16.mxu0 0
    %4428 = vmatpush2.bf16.msra.mxu0 0
    %4429 = vmatprep.subr.bf16.mxu0 0
    %4430 = vmatpush2.bf16.msra.mxu0 0
    %4431 = vmatprep.subr.bf16.mxu0 0
    %4432 = vmatpush2.bf16.msra.mxu0 0
    %4433 = vmatprep.subr.bf16.mxu0 0
    %4434 = vmatpush2.bf16.msra.mxu0 0
    %4435 = vmatprep.mubr.bf16.mxu0 0
    %4436 = vmatmul.mubr.bf16.gmra.mxu0 %v4248
    %v4437 = vpop.f32.mrf.mxu0
    %v4438 = vadd.f32 0.0, %v4437
    %v4439 = vpop.f32.mrf.mxu0
    %v4440 = vpop.f32.mrf.mxu0
    %v4441 = vpop.f32.mrf.mxu0
    %4442 = vdwg.mxu0
    %v4443 = vadd.f32 %v4337, %v4438
    %v4444 = vld [vmem:[#allocation38] sm:$0x1]
    %v4446 = vlaneseq
    %v4447 = vshrl.u32 %v4446, 7
    %v4448 = vsub.s32 0, %v4447
    %v4449 = vrot.slane %v4444, %v4448
    %v4451 = vadd.f32 %v4443, %v4449
    %vm4452 = vcmp.gt.f32.partialorder %v4451, 20.0
    %v4453 = vmin.f32 %v4451, 20.0
    %v4454 = vmul.f32 %v4453, 1.442695
    %v4455 = vpow.pop %v4454
    %v4456 = vadd.f32 %v4455, 1.0
    %v4457 = vlog2.pop %v4456
    %v4458 = vmul.f32 %v4457, 0.6931472
    %v4459 = vmul.f32 -0.5, %v4455
    %v4460 = vadd.f32 %v4459, 1.0
    %v4461 = vmul.f32 %v4460, %v4455
    %v4462 = vand.u32 2147483647, %v4455
    %vm4463 = vcmp.lt.f32.partialorder %v4462, 0.0004427343
    %v4464 = vsel %vm4463, %v4461, %v4458
    %v4465 = vsel %vm4452, %v4451, %v4464
    %v4466 = vtanh.pop %v4465
    %v4467 = vmul.f32 %v4451, %v4466
    %v4468 = vsel %vm1886, %v4467, 0.0
    %v4469 = vrot.slane %v4468, 4
    %v4470 = vadd.f32 %v4468, %v4469
    %v4471 = vrot.slane %v4470, 2
    %v4472 = vadd.f32 %v4470, %v4471
    %v4473 = vrot.slane %v4472, 1
    %v4474 = vadd.f32 %v4472, %v4473
    %v4475 = vmul.f32 %v4474, %v2967
    %v4476 = vsub.f32 %v4467, %v4475
    %v4477 = vmul.f32 %v4476, %v4476
    %v4478 = vsel %vm1886, %v4477, 0.0
    %v4479 = vrot.slane %v4478, 4
    %v4480 = vadd.f32 %v4478, %v4479
    %v4481 = vrot.slane %v4480, 2
    %v4482 = vadd.f32 %v4480, %v4481
    %v4483 = vrot.slane %v4482, 1
    %v4484 = vadd.f32 %v4482, %v4483
    %v4485 = vmul.f32 %v4484, %v2967
    %v4486 = vadd.f32 %v4485, 1e-05
    %v4487 = vrsqrt.pop %v4486
    %v4488 = vmul.f32 %v4476, %v4487
    %v4489 = vld [vmem:[%s79] sm:$0x1]
    %v4491 = vlaneseq
    %v4492 = vshrl.u32 %v4491, 7
    %v4493 = vsub.s32 0, %v4492
    %v4494 = vrot.slane %v4489, %v4493
    %v4496 = vmul.f32 %v4488, %v4494
    %v4497 = vld [vmem:[%s77] sm:$0x1]
    %v4499 = vlaneseq
    %v4500 = vshrl.u32 %v4499, 7
    %v4501 = vsub.s32 0, %v4500
    %v4502 = vrot.slane %v4497, %v4501
    %v4504 = vadd.f32 %v4496, %v4502
    %v4505 = vadd.f32 %v4504, %v3668
    %v4506 = vld [vmem:[%s87] sm:$0xf]
    %v4507 = vpack.c.bf16 %v4505, %v4505
    %v4509 = vsel %vm3000, %v4506, 0
    %v4512 = vsel %vm3004, %v4507, 0
    %4514 = vmatprep.subr.bf16.mxu0 0
    %4515 = vmatpush1.bf16.msra.mxu0 0
    %4516 = vmatprep.subr.bf16.mxu0 0
    %4517 = vmatpush1.bf16.msra.mxu0 0
    %4518 = vmatprep.subr.bf16.mxu0 0
    %4519 = vmatpush1.bf16.msra.mxu0 0
    %4520 = vmatprep.subr.bf16.mxu0 0
    %4521 = vmatpush1.bf16.msra.mxu0 0
    %4522 = vmatprep.subr.bf16.mxu0 0
    %4523 = vmatpush1.bf16.msra.mxu0 0
    %4524 = vmatprep.subr.bf16.mxu0 0
    %4525 = vmatpush1.bf16.msra.mxu0 0
    %4526 = vmatprep.subr.bf16.mxu0 0
    %4527 = vmatpush1.bf16.msra.mxu0 0
    %4528 = vmatprep.subr.bf16.mxu0 0
    %4529 = vmatpush1.bf16.msra.mxu0 %v4512
    %4530 = vmatprep.subr.bf16.mxu0 0
    %4531 = vmatpush2.bf16.msra.mxu0 0
    %4532 = vmatprep.subr.bf16.mxu0 0
    %4533 = vmatpush2.bf16.msra.mxu0 0
    %4534 = vmatprep.subr.bf16.mxu0 0
    %4535 = vmatpush2.bf16.msra.mxu0 0
    %4536 = vmatprep.subr.bf16.mxu0 0
    %4537 = vmatpush2.bf16.msra.mxu0 0
    %4538 = vmatprep.subr.bf16.mxu0 0
    %4539 = vmatpush2.bf16.msra.mxu0 0
    %4540 = vmatprep.subr.bf16.mxu0 0
    %4541 = vmatpush2.bf16.msra.mxu0 0
    %4542 = vmatprep.subr.bf16.mxu0 0
    %4543 = vmatpush2.bf16.msra.mxu0 0
    %4544 = vmatprep.subr.bf16.mxu0 0
    %4545 = vmatpush2.bf16.msra.mxu0 0
    %4546 = vmatprep.mubr.bf16.mxu0 0
    %4547 = vmatmul.mubr.bf16.gmra.mxu0 %v4509
    %v4548 = vpop.f32.mrf.mxu0
    %v4549 = vadd.f32 0.0, %v4548
    %v4550 = vpop.f32.mrf.mxu0
    %v4551 = vpop.f32.mrf.mxu0
    %v4552 = vpop.f32.mrf.mxu0
    %4553 = vdwg.mxu0
    %v4554 = vld [vmem:[#allocation47] sm:$0xf]
    %v4555 = vld [vmem:[#allocation47 + $0x4] sm:$0xf]
    %v4556 = vld [vmem:[#allocation47 + $0x8] sm:$0xf]
    %v4557 = vld [vmem:[#allocation47 + $0xc] sm:$0xf]
    %v4558 = vld [vmem:[#allocation47 + $0x10] sm:$0xf]
    %v4559 = vld [vmem:[#allocation47 + $0x14] sm:$0xf]
    %v4560 = vld [vmem:[#allocation47 + $0x18] sm:$0xf]
    %v4561 = vld [vmem:[#allocation47 + $0x1c] sm:$0xf]
    %v4562 = vpack.c.bf16 %v4549, %v4549
    %s4563 = scalar_lea.vmem %s87, 4
    %v4564 = vld [vmem:[%s4563] sm:$0xf]
    %v4566 = vsel %vm3000, %v4564, 0
    %4568 = vmatprep.subr.bf16.mxu0 0
    %4569 = vmatpush1.bf16.msra.mxu0 0
    %4570 = vmatprep.subr.bf16.mxu0 0
    %4571 = vmatpush1.bf16.msra.mxu0 0
    %4572 = vmatprep.subr.bf16.mxu0 0
    %4573 = vmatpush1.bf16.msra.mxu0 0
    %4574 = vmatprep.subr.bf16.mxu0 0
    %4575 = vmatpush1.bf16.msra.mxu0 0
    %4576 = vmatprep.subr.bf16.mxu0 0
    %4577 = vmatpush1.bf16.msra.mxu0 0
    %4578 = vmatprep.subr.bf16.mxu0 0
    %4579 = vmatpush1.bf16.msra.mxu0 0
    %4580 = vmatprep.subr.bf16.mxu0 0
    %4581 = vmatpush1.bf16.msra.mxu0 0
    %4582 = vmatprep.subr.bf16.mxu0 0
    %4583 = vmatpush1.bf16.msra.mxu0 %v4512
    %4584 = vmatprep.subr.bf16.mxu0 0
    %4585 = vmatpush2.bf16.msra.mxu0 0
    %4586 = vmatprep.subr.bf16.mxu0 0
    %4587 = vmatpush2.bf16.msra.mxu0 0
    %4588 = vmatprep.subr.bf16.mxu0 0
    %4589 = vmatpush2.bf16.msra.mxu0 0
    %4590 = vmatprep.subr.bf16.mxu0 0
    %4591 = vmatpush2.bf16.msra.mxu0 0
    %4592 = vmatprep.subr.bf16.mxu0 0
    %4593 = vmatpush2.bf16.msra.mxu0 0
    %4594 = vmatprep.subr.bf16.mxu0 0
    %4595 = vmatpush2.bf16.msra.mxu0 0
    %4596 = vmatprep.subr.bf16.mxu0 0
    %4597 = vmatpush2.bf16.msra.mxu0 0
    %4598 = vmatprep.subr.bf16.mxu0 0
    %4599 = vmatpush2.bf16.msra.mxu0 0
    %4600 = vmatprep.mubr.bf16.mxu0 0
    %4601 = vmatmul.mubr.bf16.gmra.mxu0 %v4566
    %v4602 = vpop.f32.mrf.mxu0
    %v4603 = vadd.f32 0.0, %v4602
    %v4604 = vpop.f32.mrf.mxu0
    %v4605 = vpop.f32.mrf.mxu0
    %v4606 = vpop.f32.mrf.mxu0
    %4607 = vdwg.mxu0
    %s4608 = scalar_lea.vmem [#allocation47], 32
    %v4609 = vld [vmem:[%s4608] sm:$0xf]
    %v4610 = vld [vmem:[%s4608 + $0x4] sm:$0xf]
    %v4611 = vld [vmem:[%s4608 + $0x8] sm:$0xf]
    %v4612 = vld [vmem:[%s4608 + $0xc] sm:$0xf]
    %v4613 = vld [vmem:[%s4608 + $0x10] sm:$0xf]
    %v4614 = vld [vmem:[%s4608 + $0x14] sm:$0xf]
    %v4615 = vld [vmem:[%s4608 + $0x18] sm:$0xf]
    %v4616 = vld [vmem:[%s4608 + $0x1c] sm:$0xf]
    %v4617 = vpack.c.bf16 %v4603, %v4603
    %v4626 = vunpack.c.l.b16 %v4609
    %v4627 = vunpack.c.l.b16 %v4610
    %v4628 = vunpack.c.l.b16 %v4611
    %v4629 = vunpack.c.l.b16 %v4612
    %v4630 = vunpack.c.l.b16 %v4613
    %v4631 = vunpack.c.l.b16 %v4614
    %v4632 = vunpack.c.l.b16 %v4615
    %v4633 = vunpack.c.l.b16 %v4616
    %v4634 = vpack.c.b16 %v4627, %v4626
    %v4635 = vpack.c.b16 %v4629, %v4628
    %v4636 = vpack.c.b16 %v4631, %v4630
    %v4637 = vpack.c.b16 %v4633, %v4632
    %v4643 = vsel %vm1886, %v4617, 0
    %4645 = vmatprep.subr.bf16.mxu0 0
    %4646 = vmatpush1.bf16.msra.mxu0 0
    %4647 = vmatprep.subr.bf16.mxu0 0
    %4648 = vmatpush1.bf16.msra.mxu0 0
    %4649 = vmatprep.subr.bf16.mxu0 0
    %4650 = vmatpush1.bf16.msra.mxu0 0
    %4651 = vmatprep.subr.bf16.mxu0 0
    %4652 = vmatpush1.bf16.msra.mxu0 0
    %4653 = vmatprep.subr.bf16.mxu0 0
    %4654 = vmatpush1.bf16.msra.mxu0 %v4637
    %4655 = vmatprep.subr.bf16.mxu0 0
    %4656 = vmatpush1.bf16.msra.mxu0 %v4636
    %4657 = vmatprep.subr.bf16.mxu0 0
    %4658 = vmatpush1.bf16.msra.mxu0 %v4635
    %4659 = vmatprep.subr.bf16.mxu0 0
    %4660 = vmatpush1.bf16.msra.mxu0 %v4634
    %4661 = vmatprep.subr.bf16.mxu0 0
    %4662 = vmatpush2.bf16.msra.mxu0 0
    %4663 = vmatprep.subr.bf16.mxu0 0
    %4664 = vmatpush2.bf16.msra.mxu0 0
    %4665 = vmatprep.subr.bf16.mxu0 0
    %4666 = vmatpush2.bf16.msra.mxu0 0
    %4667 = vmatprep.subr.bf16.mxu0 0
    %4668 = vmatpush2.bf16.msra.mxu0 0
    %4669 = vmatprep.subr.bf16.mxu0 0
    %4670 = vmatpush2.bf16.msra.mxu0 0
    %4671 = vmatprep.subr.bf16.mxu0 0
    %4672 = vmatpush2.bf16.msra.mxu0 0
    %4673 = vmatprep.subr.bf16.mxu0 0
    %4674 = vmatpush2.bf16.msra.mxu0 0
    %4675 = vmatprep.subr.bf16.mxu0 0
    %4676 = vmatpush2.bf16.msra.mxu0 0
    %4677 = vmatprep.mubr.bf16.mxu0 0
    %4678 = vmatmul.mubr.bf16.gmra.mxu0 %v4643
    %v4679 = vpop.f32.mrf.mxu0
    %v4680 = vadd.f32 0.0, %v4679
    %v4681 = vpop.f32.mrf.mxu0
    %v4682 = vpop.f32.mrf.mxu0
    %v4683 = vpop.f32.mrf.mxu0
    %4684 = vdwg.mxu0
    %v4693 = vunpack.c.l.b16 %v4554
    %v4694 = vunpack.c.l.b16 %v4555
    %v4695 = vunpack.c.l.b16 %v4556
    %v4696 = vunpack.c.l.b16 %v4557
    %v4697 = vunpack.c.l.b16 %v4558
    %v4698 = vunpack.c.l.b16 %v4559
    %v4699 = vunpack.c.l.b16 %v4560
    %v4700 = vunpack.c.l.b16 %v4561
    %v4701 = vpack.c.b16 %v4694, %v4693
    %v4702 = vpack.c.b16 %v4696, %v4695
    %v4703 = vpack.c.b16 %v4698, %v4697
    %v4704 = vpack.c.b16 %v4700, %v4699
    %v4710 = vsel %vm1886, %v4562, 0
    %4712 = vmatprep.subr.bf16.mxu0 0
    %4713 = vmatpush1.bf16.msra.mxu0 0
    %4714 = vmatprep.subr.bf16.mxu0 0
    %4715 = vmatpush1.bf16.msra.mxu0 0
    %4716 = vmatprep.subr.bf16.mxu0 0
    %4717 = vmatpush1.bf16.msra.mxu0 0
    %4718 = vmatprep.subr.bf16.mxu0 0
    %4719 = vmatpush1.bf16.msra.mxu0 0
    %4720 = vmatprep.subr.bf16.mxu0 0
    %4721 = vmatpush1.bf16.msra.mxu0 %v4704
    %4722 = vmatprep.subr.bf16.mxu0 0
    %4723 = vmatpush1.bf16.msra.mxu0 %v4703
    %4724 = vmatprep.subr.bf16.mxu0 0
    %4725 = vmatpush1.bf16.msra.mxu0 %v4702
    %4726 = vmatprep.subr.bf16.mxu0 0
    %4727 = vmatpush1.bf16.msra.mxu0 %v4701
    %4728 = vmatprep.subr.bf16.mxu0 0
    %4729 = vmatpush2.bf16.msra.mxu0 0
    %4730 = vmatprep.subr.bf16.mxu0 0
    %4731 = vmatpush2.bf16.msra.mxu0 0
    %4732 = vmatprep.subr.bf16.mxu0 0
    %4733 = vmatpush2.bf16.msra.mxu0 0
    %4734 = vmatprep.subr.bf16.mxu0 0
    %4735 = vmatpush2.bf16.msra.mxu0 0
    %4736 = vmatprep.subr.bf16.mxu0 0
    %4737 = vmatpush2.bf16.msra.mxu0 0
    %4738 = vmatprep.subr.bf16.mxu0 0
    %4739 = vmatpush2.bf16.msra.mxu0 0
    %4740 = vmatprep.subr.bf16.mxu0 0
    %4741 = vmatpush2.bf16.msra.mxu0 0
    %4742 = vmatprep.subr.bf16.mxu0 0
    %4743 = vmatpush2.bf16.msra.mxu0 0
    %4744 = vmatprep.mubr.bf16.mxu0 0
    %4745 = vmatmul.mubr.bf16.gmra.mxu0 %v4710
    %v4746 = vpop.f32.mrf.mxu0
    %v4747 = vadd.f32 %v4680, %v4746
    %v4748 = vpop.f32.mrf.mxu0
    %v4749 = vpop.f32.mrf.mxu0
    %v4750 = vpop.f32.mrf.mxu0
    %4751 = vdwg.mxu0
    %s4752 = scalar_lea.vmem %s87, 8
    %v4753 = vld [vmem:[%s4752] sm:$0xf]
    %v4755 = vsel %vm3000, %v4753, 0
    %4757 = vmatprep.subr.bf16.mxu0 0
    %4758 = vmatpush1.bf16.msra.mxu0 0
    %4759 = vmatprep.subr.bf16.mxu0 0
    %4760 = vmatpush1.bf16.msra.mxu0 0
    %4761 = vmatprep.subr.bf16.mxu0 0
    %4762 = vmatpush1.bf16.msra.mxu0 0
    %4763 = vmatprep.subr.bf16.mxu0 0
    %4764 = vmatpush1.bf16.msra.mxu0 0
    %4765 = vmatprep.subr.bf16.mxu0 0
    %4766 = vmatpush1.bf16.msra.mxu0 0
    %4767 = vmatprep.subr.bf16.mxu0 0
    %4768 = vmatpush1.bf16.msra.mxu0 0
    %4769 = vmatprep.subr.bf16.mxu0 0
    %4770 = vmatpush1.bf16.msra.mxu0 0
    %4771 = vmatprep.subr.bf16.mxu0 0
    %4772 = vmatpush1.bf16.msra.mxu0 %v4512
    %4773 = vmatprep.subr.bf16.mxu0 0
    %4774 = vmatpush2.bf16.msra.mxu0 0
    %4775 = vmatprep.subr.bf16.mxu0 0
    %4776 = vmatpush2.bf16.msra.mxu0 0
    %4777 = vmatprep.subr.bf16.mxu0 0
    %4778 = vmatpush2.bf16.msra.mxu0 0
    %4779 = vmatprep.subr.bf16.mxu0 0
    %4780 = vmatpush2.bf16.msra.mxu0 0
    %4781 = vmatprep.subr.bf16.mxu0 0
    %4782 = vmatpush2.bf16.msra.mxu0 0
    %4783 = vmatprep.subr.bf16.mxu0 0
    %4784 = vmatpush2.bf16.msra.mxu0 0
    %4785 = vmatprep.subr.bf16.mxu0 0
    %4786 = vmatpush2.bf16.msra.mxu0 0
    %4787 = vmatprep.subr.bf16.mxu0 0
    %4788 = vmatpush2.bf16.msra.mxu0 0
    %4789 = vmatprep.mubr.bf16.mxu0 0
    %4790 = vmatmul.mubr.bf16.gmra.mxu0 %v4755
    %v4791 = vpop.f32.mrf.mxu0
    %v4792 = vadd.f32 0.0, %v4791
    %v4793 = vpop.f32.mrf.mxu0
    %v4794 = vpop.f32.mrf.mxu0
    %v4795 = vpop.f32.mrf.mxu0
    %4796 = vdwg.mxu0
    %s4797 = scalar_lea.vmem [#allocation47], 64
    %v4798 = vld [vmem:[%s4797] sm:$0xf]
    %v4799 = vld [vmem:[%s4797 + $0x4] sm:$0xf]
    %v4800 = vld [vmem:[%s4797 + $0x8] sm:$0xf]
    %v4801 = vld [vmem:[%s4797 + $0xc] sm:$0xf]
    %v4802 = vld [vmem:[%s4797 + $0x10] sm:$0xf]
    %v4803 = vld [vmem:[%s4797 + $0x14] sm:$0xf]
    %v4804 = vld [vmem:[%s4797 + $0x18] sm:$0xf]
    %v4805 = vld [vmem:[%s4797 + $0x1c] sm:$0xf]
    %v4806 = vpack.c.bf16 %v4792, %v4792
    %v4815 = vunpack.c.l.b16 %v4798
    %v4816 = vunpack.c.l.b16 %v4799
    %v4817 = vunpack.c.l.b16 %v4800
    %v4818 = vunpack.c.l.b16 %v4801
    %v4819 = vunpack.c.l.b16 %v4802
    %v4820 = vunpack.c.l.b16 %v4803
    %v4821 = vunpack.c.l.b16 %v4804
    %v4822 = vunpack.c.l.b16 %v4805
    %v4823 = vpack.c.b16 %v4816, %v4815
    %v4824 = vpack.c.b16 %v4818, %v4817
    %v4825 = vpack.c.b16 %v4820, %v4819
    %v4826 = vpack.c.b16 %v4822, %v4821
    %v4832 = vsel %vm1886, %v4806, 0
    %4834 = vmatprep.subr.bf16.mxu0 0
    %4835 = vmatpush1.bf16.msra.mxu0 0
    %4836 = vmatprep.subr.bf16.mxu0 0
    %4837 = vmatpush1.bf16.msra.mxu0 0
    %4838 = vmatprep.subr.bf16.mxu0 0
    %4839 = vmatpush1.bf16.msra.mxu0 0
    %4840 = vmatprep.subr.bf16.mxu0 0
    %4841 = vmatpush1.bf16.msra.mxu0 0
    %4842 = vmatprep.subr.bf16.mxu0 0
    %4843 = vmatpush1.bf16.msra.mxu0 %v4826
    %4844 = vmatprep.subr.bf16.mxu0 0
    %4845 = vmatpush1.bf16.msra.mxu0 %v4825
    %4846 = vmatprep.subr.bf16.mxu0 0
    %4847 = vmatpush1.bf16.msra.mxu0 %v4824
    %4848 = vmatprep.subr.bf16.mxu0 0
    %4849 = vmatpush1.bf16.msra.mxu0 %v4823
    %4850 = vmatprep.subr.bf16.mxu0 0
    %4851 = vmatpush2.bf16.msra.mxu0 0
    %4852 = vmatprep.subr.bf16.mxu0 0
    %4853 = vmatpush2.bf16.msra.mxu0 0
    %4854 = vmatprep.subr.bf16.mxu0 0
    %4855 = vmatpush2.bf16.msra.mxu0 0
    %4856 = vmatprep.subr.bf16.mxu0 0
    %4857 = vmatpush2.bf16.msra.mxu0 0
    %4858 = vmatprep.subr.bf16.mxu0 0
    %4859 = vmatpush2.bf16.msra.mxu0 0
    %4860 = vmatprep.subr.bf16.mxu0 0
    %4861 = vmatpush2.bf16.msra.mxu0 0
    %4862 = vmatprep.subr.bf16.mxu0 0
    %4863 = vmatpush2.bf16.msra.mxu0 0
    %4864 = vmatprep.subr.bf16.mxu0 0
    %4865 = vmatpush2.bf16.msra.mxu0 0
    %4866 = vmatprep.mubr.bf16.mxu0 0
    %4867 = vmatmul.mubr.bf16.gmra.mxu0 %v4832
    %v4868 = vpop.f32.mrf.mxu0
    %v4869 = vadd.f32 0.0, %v4868
    %v4870 = vpop.f32.mrf.mxu0
    %v4871 = vpop.f32.mrf.mxu0
    %v4872 = vpop.f32.mrf.mxu0
    %4873 = vdwg.mxu0
    %v4874 = vadd.f32 %v4747, %v4869
    %v4875 = vld [vmem:[#allocation40] sm:$0x1]
    %v4877 = vlaneseq
    %v4878 = vshrl.u32 %v4877, 7
    %v4879 = vsub.s32 0, %v4878
    %v4880 = vrot.slane %v4875, %v4879
    %v4882 = vadd.f32 %v4874, %v4880
    %vm4883 = vcmp.gt.f32.partialorder %v4882, 20.0
    %v4884 = vmin.f32 %v4882, 20.0
    %v4885 = vmul.f32 %v4884, 1.442695
    %v4886 = vpow.pop %v4885
    %v4887 = vadd.f32 %v4886, 1.0
    %v4888 = vlog2.pop %v4887
    %v4889 = vmul.f32 %v4888, 0.6931472
    %v4890 = vmul.f32 -0.5, %v4886
    %v4891 = vadd.f32 %v4890, 1.0
    %v4892 = vmul.f32 %v4891, %v4886
    %v4893 = vand.u32 2147483647, %v4886
    %vm4894 = vcmp.lt.f32.partialorder %v4893, 0.0004427343
    %v4895 = vsel %vm4894, %v4892, %v4889
    %v4896 = vsel %vm4883, %v4882, %v4895
    %v4897 = vtanh.pop %v4896
    %v4898 = vmul.f32 %v4882, %v4897
    %v4899 = vsel %vm1886, %v4898, 0.0
    %v4900 = vrot.slane %v4899, 4
    %v4901 = vadd.f32 %v4899, %v4900
    %v4902 = vrot.slane %v4901, 2
    %v4903 = vadd.f32 %v4901, %v4902
    %v4904 = vrot.slane %v4903, 1
    %v4905 = vadd.f32 %v4903, %v4904
    %v4906 = vmul.f32 %v4905, %v2967
    %v4907 = vsub.f32 %v4898, %v4906
    %v4908 = vmul.f32 %v4907, %v4907
    %v4909 = vsel %vm1886, %v4908, 0.0
    %v4910 = vrot.slane %v4909, 4
    %v4911 = vadd.f32 %v4909, %v4910
    %v4912 = vrot.slane %v4911, 2
    %v4913 = vadd.f32 %v4911, %v4912
    %v4914 = vrot.slane %v4913, 1
    %v4915 = vadd.f32 %v4913, %v4914
    %v4916 = vmul.f32 %v4915, %v2967
    %v4917 = vadd.f32 %v4916, 1e-05
    %v4918 = vrsqrt.pop %v4917
    %v4919 = vmul.f32 %v4907, %v4918
    %v4920 = vld [vmem:[%s83] sm:$0x1]
    %v4922 = vlaneseq
    %v4923 = vshrl.u32 %v4922, 7
    %v4924 = vsub.s32 0, %v4923
    %v4925 = vrot.slane %v4920, %v4924
    %v4927 = vmul.f32 %v4919, %v4925
    %v4928 = vld [vmem:[%s81] sm:$0x1]
    %v4930 = vlaneseq
    %v4931 = vshrl.u32 %v4930, 7
    %v4932 = vsub.s32 0, %v4931
    %v4933 = vrot.slane %v4928, %v4932
    %v4935 = vadd.f32 %v4927, %v4933
    %v4936 = vld [vmem:[#allocation43] sm:$0xf]
    %v4937 = vld [vmem:[#allocation43 + $0x4] sm:$0xf]
    %v4938 = vpack.c.bf16 %v4935, %v4935
    %v4941 = vunpack.c.l.b16 %v4936
    %v4942 = vunpack.c.l.b16 %v4937
    %v4943 = vpack.c.b16 %v4942, %v4941
    %v4945 = vsel %vm3000, %v4943, 0
    %v4948 = vsel %vm3004, %v4938, 0
    %4950 = vmatprep.subr.bf16.mxu0 0
    %4951 = vmatpush1.bf16.msra.mxu0 0
    %4952 = vmatprep.subr.bf16.mxu0 0
    %4953 = vmatpush1.bf16.msra.mxu0 0
    %4954 = vmatprep.subr.bf16.mxu0 0
    %4955 = vmatpush1.bf16.msra.mxu0 0
    %4956 = vmatprep.subr.bf16.mxu0 0
    %4957 = vmatpush1.bf16.msra.mxu0 0
    %4958 = vmatprep.subr.bf16.mxu0 0
    %4959 = vmatpush1.bf16.msra.mxu0 0
    %4960 = vmatprep.subr.bf16.mxu0 0
    %4961 = vmatpush1.bf16.msra.mxu0 0
    %4962 = vmatprep.subr.bf16.mxu0 0
    %4963 = vmatpush1.bf16.msra.mxu0 0
    %4964 = vmatprep.subr.bf16.mxu0 0
    %4965 = vmatpush1.bf16.msra.mxu0 %v4948
    %4966 = vmatprep.subr.bf16.mxu0 0
    %4967 = vmatpush2.bf16.msra.mxu0 0
    %4968 = vmatprep.subr.bf16.mxu0 0
    %4969 = vmatpush2.bf16.msra.mxu0 0
    %4970 = vmatprep.subr.bf16.mxu0 0
    %4971 = vmatpush2.bf16.msra.mxu0 0
    %4972 = vmatprep.subr.bf16.mxu0 0
    %4973 = vmatpush2.bf16.msra.mxu0 0
    %4974 = vmatprep.subr.bf16.mxu0 0
    %4975 = vmatpush2.bf16.msra.mxu0 0
    %4976 = vmatprep.subr.bf16.mxu0 0
    %4977 = vmatpush2.bf16.msra.mxu0 0
    %4978 = vmatprep.subr.bf16.mxu0 0
    %4979 = vmatpush2.bf16.msra.mxu0 0
    %4980 = vmatprep.subr.bf16.mxu0 0
    %4981 = vmatpush2.bf16.msra.mxu0 0
    %4982 = vmatprep.mubr.bf16.mxu0 0
    %4983 = vmatmul.mubr.bf16.gmra.mxu0 %v4945
    %v4984 = vpop.f32.mrf.mxu0
    %v4985 = vadd.f32 0.0, %v4984
    %v4986 = vpop.f32.mrf.mxu0
    %v4987 = vpop.f32.mrf.mxu0
    %v4988 = vadd.f32 0.0, %v4987
    %v4989 = vpop.f32.mrf.mxu0
    %4990 = vdwg.mxu0
    %v4991 = vld [vmem:[%s101] sm:$0xf]
    %v4992 = vld [vmem:[%s101 + $0x4] sm:$0xf]
    %v4993 = vld [vmem:[%s101 + $0x8] sm:$0xf]
    %v4994 = vld [vmem:[%s101 + $0xc] sm:$0xf]
    %v4995 = vld [vmem:[%s101 + $0x10] sm:$0xf]
    %v4996 = vld [vmem:[%s101 + $0x14] sm:$0xf]
    %v4997 = vld [vmem:[%s101 + $0x18] sm:$0xf]
    %v4998 = vld [vmem:[%s101 + $0x1c] sm:$0xf]
    %v4999 = vpack.c.bf16 %v4988, %v4985
    %s5000 = scalar_lea.vmem [#allocation43], 8
    %v5001 = vld [vmem:[%s5000] sm:$0xf]
    %v5002 = vld [vmem:[%s5000 + $0x4] sm:$0xf]
    %v5005 = vunpack.c.l.b16 %v5001
    %v5006 = vunpack.c.l.b16 %v5002
    %v5007 = vpack.c.b16 %v5006, %v5005
    %v5009 = vsel %vm3000, %v5007, 0
    %5011 = vmatprep.subr.bf16.mxu0 0
    %5012 = vmatpush1.bf16.msra.mxu0 0
    %5013 = vmatprep.subr.bf16.mxu0 0
    %5014 = vmatpush1.bf16.msra.mxu0 0
    %5015 = vmatprep.subr.bf16.mxu0 0
    %5016 = vmatpush1.bf16.msra.mxu0 0
    %5017 = vmatprep.subr.bf16.mxu0 0
    %5018 = vmatpush1.bf16.msra.mxu0 0
    %5019 = vmatprep.subr.bf16.mxu0 0
    %5020 = vmatpush1.bf16.msra.mxu0 0
    %5021 = vmatprep.subr.bf16.mxu0 0
    %5022 = vmatpush1.bf16.msra.mxu0 0
    %5023 = vmatprep.subr.bf16.mxu0 0
    %5024 = vmatpush1.bf16.msra.mxu0 0
    %5025 = vmatprep.subr.bf16.mxu0 0
    %5026 = vmatpush1.bf16.msra.mxu0 %v4948
    %5027 = vmatprep.subr.bf16.mxu0 0
    %5028 = vmatpush2.bf16.msra.mxu0 0
    %5029 = vmatprep.subr.bf16.mxu0 0
    %5030 = vmatpush2.bf16.msra.mxu0 0
    %5031 = vmatprep.subr.bf16.mxu0 0
    %5032 = vmatpush2.bf16.msra.mxu0 0
    %5033 = vmatprep.subr.bf16.mxu0 0
    %5034 = vmatpush2.bf16.msra.mxu0 0
    %5035 = vmatprep.subr.bf16.mxu0 0
    %5036 = vmatpush2.bf16.msra.mxu0 0
    %5037 = vmatprep.subr.bf16.mxu0 0
    %5038 = vmatpush2.bf16.msra.mxu0 0
    %5039 = vmatprep.subr.bf16.mxu0 0
    %5040 = vmatpush2.bf16.msra.mxu0 0
    %5041 = vmatprep.subr.bf16.mxu0 0
    %5042 = vmatpush2.bf16.msra.mxu0 0
    %5043 = vmatprep.mubr.bf16.mxu0 0
    %5044 = vmatmul.mubr.bf16.gmra.mxu0 %v5009
    %v5045 = vpop.f32.mrf.mxu0
    %v5046 = vadd.f32 0.0, %v5045
    %v5047 = vpop.f32.mrf.mxu0
    %v5048 = vpop.f32.mrf.mxu0
    %v5049 = vadd.f32 0.0, %v5048
    %v5050 = vpop.f32.mrf.mxu0
    %5051 = vdwg.mxu0
    %s5052 = scalar_lea.vmem %s101, 32
    %v5053 = vld [vmem:[%s5052] sm:$0xf]
    %v5054 = vld [vmem:[%s5052 + $0x4] sm:$0xf]
    %v5055 = vld [vmem:[%s5052 + $0x8] sm:$0xf]
    %v5056 = vld [vmem:[%s5052 + $0xc] sm:$0xf]
    %v5057 = vld [vmem:[%s5052 + $0x10] sm:$0xf]
    %v5058 = vld [vmem:[%s5052 + $0x14] sm:$0xf]
    %v5059 = vld [vmem:[%s5052 + $0x18] sm:$0xf]
    %v5060 = vld [vmem:[%s5052 + $0x1c] sm:$0xf]
    %v5061 = vpack.c.bf16 %v5049, %v5046
    %v5070 = vunpack.c.l.b16 %v5053
    %v5071 = vunpack.c.l.b16 %v5054
    %v5072 = vunpack.c.l.b16 %v5055
    %v5073 = vunpack.c.l.b16 %v5056
    %v5074 = vunpack.c.l.b16 %v5057
    %v5075 = vunpack.c.l.b16 %v5058
    %v5076 = vunpack.c.l.b16 %v5059
    %v5077 = vunpack.c.l.b16 %v5060
    %v5078 = vpack.c.b16 %v5071, %v5070
    %v5079 = vpack.c.b16 %v5073, %v5072
    %v5080 = vpack.c.b16 %v5075, %v5074
    %v5081 = vpack.c.b16 %v5077, %v5076
    %v5087 = vsel %vm1886, %v5061, 0
    %5089 = vmatprep.subr.bf16.mxu0 0
    %5090 = vmatpush1.bf16.msra.mxu0 0
    %5091 = vmatprep.subr.bf16.mxu0 0
    %5092 = vmatpush1.bf16.msra.mxu0 0
    %5093 = vmatprep.subr.bf16.mxu0 0
    %5094 = vmatpush1.bf16.msra.mxu0 0
    %5095 = vmatprep.subr.bf16.mxu0 0
    %5096 = vmatpush1.bf16.msra.mxu0 0
    %5097 = vmatprep.subr.bf16.mxu0 0
    %5098 = vmatpush1.bf16.msra.mxu0 %v5081
    %5099 = vmatprep.subr.bf16.mxu0 0
    %5100 = vmatpush1.bf16.msra.mxu0 %v5080
    %5101 = vmatprep.subr.bf16.mxu0 0
    %5102 = vmatpush1.bf16.msra.mxu0 %v5079
    %5103 = vmatprep.subr.bf16.mxu0 0
    %5104 = vmatpush1.bf16.msra.mxu0 %v5078
    %5105 = vmatprep.subr.bf16.mxu0 0
    %5106 = vmatpush2.bf16.msra.mxu0 0
    %5107 = vmatprep.subr.bf16.mxu0 0
    %5108 = vmatpush2.bf16.msra.mxu0 0
    %5109 = vmatprep.subr.bf16.mxu0 0
    %5110 = vmatpush2.bf16.msra.mxu0 0
    %5111 = vmatprep.subr.bf16.mxu0 0
    %5112 = vmatpush2.bf16.msra.mxu0 0
    %5113 = vmatprep.subr.bf16.mxu0 0
    %5114 = vmatpush2.bf16.msra.mxu0 0
    %5115 = vmatprep.subr.bf16.mxu0 0
    %5116 = vmatpush2.bf16.msra.mxu0 0
    %5117 = vmatprep.subr.bf16.mxu0 0
    %5118 = vmatpush2.bf16.msra.mxu0 0
    %5119 = vmatprep.subr.bf16.mxu0 0
    %5120 = vmatpush2.bf16.msra.mxu0 0
    %5121 = vmatprep.mubr.bf16.mxu0 0
    %5122 = vmatmul.mubr.bf16.gmra.mxu0 %v5087
    %v5123 = vpop.f32.mrf.mxu0
    %v5124 = vadd.f32 0.0, %v5123
    %v5125 = vpop.f32.mrf.mxu0
    %v5126 = vpop.f32.mrf.mxu0
    %v5127 = vadd.f32 0.0, %v5126
    %v5128 = vpop.f32.mrf.mxu0
    %5129 = vdwg.mxu0
    %v5138 = vunpack.c.l.b16 %v4991
    %v5139 = vunpack.c.l.b16 %v4992
    %v5140 = vunpack.c.l.b16 %v4993
    %v5141 = vunpack.c.l.b16 %v4994
    %v5142 = vunpack.c.l.b16 %v4995
    %v5143 = vunpack.c.l.b16 %v4996
    %v5144 = vunpack.c.l.b16 %v4997
    %v5145 = vunpack.c.l.b16 %v4998
    %v5146 = vpack.c.b16 %v5139, %v5138
    %v5147 = vpack.c.b16 %v5141, %v5140
    %v5148 = vpack.c.b16 %v5143, %v5142
    %v5149 = vpack.c.b16 %v5145, %v5144
    %v5155 = vsel %vm1886, %v4999, 0
    %5157 = vmatprep.subr.bf16.mxu0 0
    %5158 = vmatpush1.bf16.msra.mxu0 0
    %5159 = vmatprep.subr.bf16.mxu0 0
    %5160 = vmatpush1.bf16.msra.mxu0 0
    %5161 = vmatprep.subr.bf16.mxu0 0
    %5162 = vmatpush1.bf16.msra.mxu0 0
    %5163 = vmatprep.subr.bf16.mxu0 0
    %5164 = vmatpush1.bf16.msra.mxu0 0
    %5165 = vmatprep.subr.bf16.mxu0 0
    %5166 = vmatpush1.bf16.msra.mxu0 %v5149
    %5167 = vmatprep.subr.bf16.mxu0 0
    %5168 = vmatpush1.bf16.msra.mxu0 %v5148
    %5169 = vmatprep.subr.bf16.mxu0 0
    %5170 = vmatpush1.bf16.msra.mxu0 %v5147
    %5171 = vmatprep.subr.bf16.mxu0 0
    %5172 = vmatpush1.bf16.msra.mxu0 %v5146
    %5173 = vmatprep.subr.bf16.mxu0 0
    %5174 = vmatpush2.bf16.msra.mxu0 0
    %5175 = vmatprep.subr.bf16.mxu0 0
    %5176 = vmatpush2.bf16.msra.mxu0 0
    %5177 = vmatprep.subr.bf16.mxu0 0
    %5178 = vmatpush2.bf16.msra.mxu0 0
    %5179 = vmatprep.subr.bf16.mxu0 0
    %5180 = vmatpush2.bf16.msra.mxu0 0
    %5181 = vmatprep.subr.bf16.mxu0 0
    %5182 = vmatpush2.bf16.msra.mxu0 0
    %5183 = vmatprep.subr.bf16.mxu0 0
    %5184 = vmatpush2.bf16.msra.mxu0 0
    %5185 = vmatprep.subr.bf16.mxu0 0
    %5186 = vmatpush2.bf16.msra.mxu0 0
    %5187 = vmatprep.subr.bf16.mxu0 0
    %5188 = vmatpush2.bf16.msra.mxu0 0
    %5189 = vmatprep.mubr.bf16.mxu0 0
    %5190 = vmatmul.mubr.bf16.gmra.mxu0 %v5155
    %v5191 = vpop.f32.mrf.mxu0
    %v5192 = vadd.f32 %v5124, %v5191
    %v5193 = vpop.f32.mrf.mxu0
    %v5194 = vpop.f32.mrf.mxu0
    %v5195 = vadd.f32 %v5127, %v5194
    %v5196 = vpop.f32.mrf.mxu0
    %5197 = vdwg.mxu0
    %s5198 = scalar_lea.vmem [#allocation43], 16
    %v5199 = vld [vmem:[%s5198] sm:$0xf]
    %v5200 = vld [vmem:[%s5198 + $0x4] sm:$0xf]
    %v5203 = vunpack.c.l.b16 %v5199
    %v5204 = vunpack.c.l.b16 %v5200
    %v5205 = vpack.c.b16 %v5204, %v5203
    %v5207 = vsel %vm3000, %v5205, 0
    %5209 = vmatprep.subr.bf16.mxu0 0
    %5210 = vmatpush1.bf16.msra.mxu0 0
    %5211 = vmatprep.subr.bf16.mxu0 0
    %5212 = vmatpush1.bf16.msra.mxu0 0
    %5213 = vmatprep.subr.bf16.mxu0 0
    %5214 = vmatpush1.bf16.msra.mxu0 0
    %5215 = vmatprep.subr.bf16.mxu0 0
    %5216 = vmatpush1.bf16.msra.mxu0 0
    %5217 = vmatprep.subr.bf16.mxu0 0
    %5218 = vmatpush1.bf16.msra.mxu0 0
    %5219 = vmatprep.subr.bf16.mxu0 0
    %5220 = vmatpush1.bf16.msra.mxu0 0
    %5221 = vmatprep.subr.bf16.mxu0 0
    %5222 = vmatpush1.bf16.msra.mxu0 0
    %5223 = vmatprep.subr.bf16.mxu0 0
    %5224 = vmatpush1.bf16.msra.mxu0 %v4948
    %5225 = vmatprep.subr.bf16.mxu0 0
    %5226 = vmatpush2.bf16.msra.mxu0 0
    %5227 = vmatprep.subr.bf16.mxu0 0
    %5228 = vmatpush2.bf16.msra.mxu0 0
    %5229 = vmatprep.subr.bf16.mxu0 0
    %5230 = vmatpush2.bf16.msra.mxu0 0
    %5231 = vmatprep.subr.bf16.mxu0 0
    %5232 = vmatpush2.bf16.msra.mxu0 0
    %5233 = vmatprep.subr.bf16.mxu0 0
    %5234 = vmatpush2.bf16.msra.mxu0 0
    %5235 = vmatprep.subr.bf16.mxu0 0
    %5236 = vmatpush2.bf16.msra.mxu0 0
    %5237 = vmatprep.subr.bf16.mxu0 0
    %5238 = vmatpush2.bf16.msra.mxu0 0
    %5239 = vmatprep.subr.bf16.mxu0 0
    %5240 = vmatpush2.bf16.msra.mxu0 0
    %5241 = vmatprep.mubr.bf16.mxu0 0
    %5242 = vmatmul.mubr.bf16.gmra.mxu0 %v5207
    %v5243 = vpop.f32.mrf.mxu0
    %v5244 = vadd.f32 0.0, %v5243
    %v5245 = vpop.f32.mrf.mxu0
    %v5246 = vpop.f32.mrf.mxu0
    %v5247 = vadd.f32 0.0, %v5246
    %v5248 = vpop.f32.mrf.mxu0
    %5249 = vdwg.mxu0
    %s5250 = scalar_lea.vmem %s101, 64
    %v5251 = vld [vmem:[%s5250] sm:$0xf]
    %v5252 = vld [vmem:[%s5250 + $0x4] sm:$0xf]
    %v5253 = vld [vmem:[%s5250 + $0x8] sm:$0xf]
    %v5254 = vld [vmem:[%s5250 + $0xc] sm:$0xf]
    %v5255 = vld [vmem:[%s5250 + $0x10] sm:$0xf]
    %v5256 = vld [vmem:[%s5250 + $0x14] sm:$0xf]
    %v5257 = vld [vmem:[%s5250 + $0x18] sm:$0xf]
    %v5258 = vld [vmem:[%s5250 + $0x1c] sm:$0xf]
    %v5259 = vpack.c.bf16 %v5247, %v5244
    %v5268 = vunpack.c.l.b16 %v5251
    %v5269 = vunpack.c.l.b16 %v5252
    %v5270 = vunpack.c.l.b16 %v5253
    %v5271 = vunpack.c.l.b16 %v5254
    %v5272 = vunpack.c.l.b16 %v5255
    %v5273 = vunpack.c.l.b16 %v5256
    %v5274 = vunpack.c.l.b16 %v5257
    %v5275 = vunpack.c.l.b16 %v5258
    %v5276 = vpack.c.b16 %v5269, %v5268
    %v5277 = vpack.c.b16 %v5271, %v5270
    %v5278 = vpack.c.b16 %v5273, %v5272
    %v5279 = vpack.c.b16 %v5275, %v5274
    %v5285 = vsel %vm1886, %v5259, 0
    %5287 = vmatprep.subr.bf16.mxu0 0
    %5288 = vmatpush1.bf16.msra.mxu0 0
    %5289 = vmatprep.subr.bf16.mxu0 0
    %5290 = vmatpush1.bf16.msra.mxu0 0
    %5291 = vmatprep.subr.bf16.mxu0 0
    %5292 = vmatpush1.bf16.msra.mxu0 0
    %5293 = vmatprep.subr.bf16.mxu0 0
    %5294 = vmatpush1.bf16.msra.mxu0 0
    %5295 = vmatprep.subr.bf16.mxu0 0
    %5296 = vmatpush1.bf16.msra.mxu0 %v5279
    %5297 = vmatprep.subr.bf16.mxu0 0
    %5298 = vmatpush1.bf16.msra.mxu0 %v5278
    %5299 = vmatprep.subr.bf16.mxu0 0
    %5300 = vmatpush1.bf16.msra.mxu0 %v5277
    %5301 = vmatprep.subr.bf16.mxu0 0
    %5302 = vmatpush1.bf16.msra.mxu0 %v5276
    %5303 = vmatprep.subr.bf16.mxu0 0
    %5304 = vmatpush2.bf16.msra.mxu0 0
    %5305 = vmatprep.subr.bf16.mxu0 0
    %5306 = vmatpush2.bf16.msra.mxu0 0
    %5307 = vmatprep.subr.bf16.mxu0 0
    %5308 = vmatpush2.bf16.msra.mxu0 0
    %5309 = vmatprep.subr.bf16.mxu0 0
    %5310 = vmatpush2.bf16.msra.mxu0 0
    %5311 = vmatprep.subr.bf16.mxu0 0
    %5312 = vmatpush2.bf16.msra.mxu0 0
    %5313 = vmatprep.subr.bf16.mxu0 0
    %5314 = vmatpush2.bf16.msra.mxu0 0
    %5315 = vmatprep.subr.bf16.mxu0 0
    %5316 = vmatpush2.bf16.msra.mxu0 0
    %5317 = vmatprep.subr.bf16.mxu0 0
    %5318 = vmatpush2.bf16.msra.mxu0 0
    %5319 = vmatprep.mubr.bf16.mxu0 0
    %5320 = vmatmul.mubr.bf16.gmra.mxu0 %v5285
    %v5321 = vpop.f32.mrf.mxu0
    %v5322 = vadd.f32 0.0, %v5321
    %v5323 = vpop.f32.mrf.mxu0
    %v5324 = vpop.f32.mrf.mxu0
    %v5325 = vadd.f32 0.0, %v5324
    %v5326 = vpop.f32.mrf.mxu0
    %5327 = vdwg.mxu0
    %v5328 = vadd.f32 %v5192, %v5322
    %v5329 = vadd.f32 %v5195, %v5325
    %s5330 = scalar_lea.vmem [#allocation43], 24
    %v5331 = vld [vmem:[%s5330] sm:$0xf]
    %v5332 = vld [vmem:[%s5330 + $0x4] sm:$0xf]
    %v5335 = vunpack.c.l.b16 %v5331
    %v5336 = vunpack.c.l.b16 %v5332
    %v5337 = vpack.c.b16 %v5336, %v5335
    %v5339 = vsel %vm3000, %v5337, 0
    %5341 = vmatprep.subr.bf16.mxu0 0
    %5342 = vmatpush1.bf16.msra.mxu0 0
    %5343 = vmatprep.subr.bf16.mxu0 0
    %5344 = vmatpush1.bf16.msra.mxu0 0
    %5345 = vmatprep.subr.bf16.mxu0 0
    %5346 = vmatpush1.bf16.msra.mxu0 0
    %5347 = vmatprep.subr.bf16.mxu0 0
    %5348 = vmatpush1.bf16.msra.mxu0 0
    %5349 = vmatprep.subr.bf16.mxu0 0
    %5350 = vmatpush1.bf16.msra.mxu0 0
    %5351 = vmatprep.subr.bf16.mxu0 0
    %5352 = vmatpush1.bf16.msra.mxu0 0
    %5353 = vmatprep.subr.bf16.mxu0 0
    %5354 = vmatpush1.bf16.msra.mxu0 0
    %5355 = vmatprep.subr.bf16.mxu0 0
    %5356 = vmatpush1.bf16.msra.mxu0 %v4948
    %5357 = vmatprep.subr.bf16.mxu0 0
    %5358 = vmatpush2.bf16.msra.mxu0 0
    %5359 = vmatprep.subr.bf16.mxu0 0
    %5360 = vmatpush2.bf16.msra.mxu0 0
    %5361 = vmatprep.subr.bf16.mxu0 0
    %5362 = vmatpush2.bf16.msra.mxu0 0
    %5363 = vmatprep.subr.bf16.mxu0 0
    %5364 = vmatpush2.bf16.msra.mxu0 0
    %5365 = vmatprep.subr.bf16.mxu0 0
    %5366 = vmatpush2.bf16.msra.mxu0 0
    %5367 = vmatprep.subr.bf16.mxu0 0
    %5368 = vmatpush2.bf16.msra.mxu0 0
    %5369 = vmatprep.subr.bf16.mxu0 0
    %5370 = vmatpush2.bf16.msra.mxu0 0
    %5371 = vmatprep.subr.bf16.mxu0 0
    %5372 = vmatpush2.bf16.msra.mxu0 0
    %5373 = vmatprep.mubr.bf16.mxu0 0
    %5374 = vmatmul.mubr.bf16.gmra.mxu0 %v5339
    %v5375 = vpop.f32.mrf.mxu0
    %v5376 = vadd.f32 0.0, %v5375
    %v5377 = vpop.f32.mrf.mxu0
    %v5378 = vpop.f32.mrf.mxu0
    %v5379 = vadd.f32 0.0, %v5378
    %v5380 = vpop.f32.mrf.mxu0
    %5381 = vdwg.mxu0
    %s5382 = scalar_lea.vmem %s101, 96
    %v5383 = vld [vmem:[%s5382] sm:$0xf]
    %v5384 = vld [vmem:[%s5382 + $0x4] sm:$0xf]
    %v5385 = vld [vmem:[%s5382 + $0x8] sm:$0xf]
    %v5386 = vld [vmem:[%s5382 + $0xc] sm:$0xf]
    %v5387 = vld [vmem:[%s5382 + $0x10] sm:$0xf]
    %v5388 = vld [vmem:[%s5382 + $0x14] sm:$0xf]
    %v5389 = vld [vmem:[%s5382 + $0x18] sm:$0xf]
    %v5390 = vld [vmem:[%s5382 + $0x1c] sm:$0xf]
    %v5391 = vpack.c.bf16 %v5379, %v5376
    %v5400 = vunpack.c.l.b16 %v5383
    %v5401 = vunpack.c.l.b16 %v5384
    %v5402 = vunpack.c.l.b16 %v5385
    %v5403 = vunpack.c.l.b16 %v5386
    %v5404 = vunpack.c.l.b16 %v5387
    %v5405 = vunpack.c.l.b16 %v5388
    %v5406 = vunpack.c.l.b16 %v5389
    %v5407 = vunpack.c.l.b16 %v5390
    %v5408 = vpack.c.b16 %v5401, %v5400
    %v5409 = vpack.c.b16 %v5403, %v5402
    %v5410 = vpack.c.b16 %v5405, %v5404
    %v5411 = vpack.c.b16 %v5407, %v5406
    %v5417 = vsel %vm1886, %v5391, 0
    %5419 = vmatprep.subr.bf16.mxu0 0
    %5420 = vmatpush1.bf16.msra.mxu0 0
    %5421 = vmatprep.subr.bf16.mxu0 0
    %5422 = vmatpush1.bf16.msra.mxu0 0
    %5423 = vmatprep.subr.bf16.mxu0 0
    %5424 = vmatpush1.bf16.msra.mxu0 0
    %5425 = vmatprep.subr.bf16.mxu0 0
    %5426 = vmatpush1.bf16.msra.mxu0 0
    %5427 = vmatprep.subr.bf16.mxu0 0
    %5428 = vmatpush1.bf16.msra.mxu0 %v5411
    %5429 = vmatprep.subr.bf16.mxu0 0
    %5430 = vmatpush1.bf16.msra.mxu0 %v5410
    %5431 = vmatprep.subr.bf16.mxu0 0
    %5432 = vmatpush1.bf16.msra.mxu0 %v5409
    %5433 = vmatprep.subr.bf16.mxu0 0
    %5434 = vmatpush1.bf16.msra.mxu0 %v5408
    %5435 = vmatprep.subr.bf16.mxu0 0
    %5436 = vmatpush2.bf16.msra.mxu0 0
    %5437 = vmatprep.subr.bf16.mxu0 0
    %5438 = vmatpush2.bf16.msra.mxu0 0
    %5439 = vmatprep.subr.bf16.mxu0 0
    %5440 = vmatpush2.bf16.msra.mxu0 0
    %5441 = vmatprep.subr.bf16.mxu0 0
    %5442 = vmatpush2.bf16.msra.mxu0 0
    %5443 = vmatprep.subr.bf16.mxu0 0
    %5444 = vmatpush2.bf16.msra.mxu0 0
    %5445 = vmatprep.subr.bf16.mxu0 0
    %5446 = vmatpush2.bf16.msra.mxu0 0
    %5447 = vmatprep.subr.bf16.mxu0 0
    %5448 = vmatpush2.bf16.msra.mxu0 0
    %5449 = vmatprep.subr.bf16.mxu0 0
    %5450 = vmatpush2.bf16.msra.mxu0 0
    %5451 = vmatprep.mubr.bf16.mxu0 0
    %5452 = vmatmul.mubr.bf16.gmra.mxu0 %v5417
    %v5453 = vpop.f32.mrf.mxu0
    %v5454 = vadd.f32 0.0, %v5453
    %v5455 = vpop.f32.mrf.mxu0
    %v5456 = vpop.f32.mrf.mxu0
    %v5457 = vadd.f32 0.0, %v5456
    %v5458 = vpop.f32.mrf.mxu0
    %5459 = vdwg.mxu0
    %v5460 = vadd.f32 %v5328, %v5454
    %v5461 = vadd.f32 %v5329, %v5457
    %v5462 = vld [vmem:[#allocation41] sm:$0x1]
    %v5464 = vlaneseq
    %v5465 = vshrl.u32 %v5464, 7
    %v5466 = vsub.s32 0, %v5465
    %v5467 = vrot.slane %v5462, %v5466
    %v5469 = vadd.f32 %v5460, %v5467
    %v5470 = vadd.f32 %v5461, %v5467
    %v5471 = vld [vmem:[#allocation56] sm:$0xf]
    %v5472 = vld [vmem:[#allocation56 + $0x4] sm:$0xf]
    %v5473 = vld [vmem:[#allocation56 + $0x8] sm:$0xf]
    %v5474 = vld [vmem:[#allocation56 + $0xc] sm:$0xf]
    %v5475 = vld [vmem:[#allocation55] sm:$0x1]
    %v5477 = vlaneseq
    %v5478 = vshrl.u32 %v5477, 7
    %v5479 = vsub.s32 0, %v5478
    %v5480 = vrot.slane %v5475, %v5479
    %v5486 = vunpack.c.l.b16 %v5471
    %v5487 = vunpack.c.l.b16 %v5472
    %v5488 = vunpack.c.l.b16 %v5473
    %v5489 = vunpack.c.l.b16 %v5474
    %v5490 = vpack.c.b16 %v5487, %v5486
    %v5491 = vpack.c.b16 %v5489, %v5488
    %5494 = vmatprep.subr.bf16.mxu0 0
    %5495 = vmatpush1.bf16.msra.mxu0 0
    %5496 = vmatprep.subr.bf16.mxu0 0
    %5497 = vmatpush1.bf16.msra.mxu0 0
    %5498 = vmatprep.subr.bf16.mxu0 0
    %5499 = vmatpush1.bf16.msra.mxu0 0
    %5500 = vmatprep.subr.bf16.mxu0 0
    %5501 = vmatpush1.bf16.msra.mxu0 0
    %5502 = vmatprep.subr.bf16.mxu0 0
    %5503 = vmatpush1.bf16.msra.mxu0 0
    %5504 = vmatprep.subr.bf16.mxu0 0
    %5505 = vmatpush1.bf16.msra.mxu0 0
    %5506 = vmatprep.subr.bf16.mxu0 0
    %5507 = vmatpush1.bf16.msra.mxu0 %v5491
    %5508 = vmatprep.subr.bf16.mxu0 0
    %5509 = vmatpush1.bf16.msra.mxu0 %v5490
    %5510 = vmatprep.subr.bf16.mxu0 0
    %5511 = vmatpush2.bf16.msra.mxu0 0
    %5512 = vmatprep.subr.bf16.mxu0 0
    %5513 = vmatpush2.bf16.msra.mxu0 0
    %5514 = vmatprep.subr.bf16.mxu0 0
    %5515 = vmatpush2.bf16.msra.mxu0 0
    %5516 = vmatprep.subr.bf16.mxu0 0
    %5517 = vmatpush2.bf16.msra.mxu0 0
    %5518 = vmatprep.subr.bf16.mxu0 0
    %5519 = vmatpush2.bf16.msra.mxu0 0
    %5520 = vmatprep.subr.bf16.mxu0 0
    %5521 = vmatpush2.bf16.msra.mxu0 0
    %5522 = vmatprep.subr.bf16.mxu0 0
    %5523 = vmatpush2.bf16.msra.mxu0 0
    %5524 = vmatprep.subr.bf16.mxu0 0
    %5525 = vmatpush2.bf16.msra.mxu0 0
    %5526 = vmatprep.mubr.bf16.mxu0 0
    %5527 = vmatmul.mubr.bf16.gmra.mxu0 %v1356
    %v5528 = vpop.f32.mrf.mxu0
    %v5529 = vadd.f32 %v5480, %v5528
    %v5530 = vpop.f32.mrf.mxu0
    %v5531 = vpop.f32.mrf.mxu0
    %v5532 = vpop.f32.mrf.mxu0
    %5533 = vdwg.mxu0
    %vm5534 = vcmp.gt.f32.partialorder %v5529, 20.0
    %v5535 = vmin.f32 %v5529, 20.0
    %v5536 = vmul.f32 %v5535, 1.442695
    %v5537 = vpow.pop %v5536
    %v5538 = vadd.f32 %v5537, 1.0
    %v5539 = vlog2.pop %v5538
    %v5540 = vmul.f32 %v5539, 0.6931472
    %v5541 = vmul.f32 -0.5, %v5537
    %v5542 = vadd.f32 %v5541, 1.0
    %v5543 = vmul.f32 %v5542, %v5537
    %v5544 = vand.u32 2147483647, %v5537
    %vm5545 = vcmp.lt.f32.partialorder %v5544, 0.0004427343
    %v5546 = vsel %vm5545, %v5543, %v5540
    %v5547 = vsel %vm5534, %v5529, %v5546
    %v5548 = vtanh.pop %v5547
    %v5549 = vmul.f32 %v5529, %v5548
    %v5550 = vld [vmem:[%s103] sm:$0xff]
    %v5551 = vld [vmem:[%s103 + $0x8] sm:$0xff]
    %v5553 = vsel %vm1416, %v5550, 0
    %v5556 = vsel %vm1416, %v5551, 0
    %v5559 = vsel %vm1039, %v5549, 0
    %5561 = vmatprep.subr.mxu0 0.0
    %5562 = vmatpush1.msra.mxu0 0.0
    %5563 = vmatprep.subr.mxu0 0.0
    %5564 = vmatpush1.msra.mxu0 0.0
    %5565 = vmatprep.subr.mxu0 0.0
    %5566 = vmatpush1.msra.mxu0 0.0
    %5567 = vmatprep.subr.mxu0 0.0
    %5568 = vmatpush1.msra.mxu0 0.0
    %5569 = vmatprep.subr.mxu0 0.0
    %5570 = vmatpush1.msra.mxu0 0.0
    %5571 = vmatprep.subr.mxu0 0.0
    %5572 = vmatpush1.msra.mxu0 0.0
    %5573 = vmatprep.subr.mxu0 0.0
    %5574 = vmatpush1.msra.mxu0 0.0
    %5575 = vmatprep.subr.mxu0 0.0
    %5576 = vmatpush1.msra.mxu0 0.0
    %5577 = vmatprep.subr.mxu0 0.0
    %5578 = vmatpush1.msra.mxu0 0.0
    %5579 = vmatprep.subr.mxu0 0.0
    %5580 = vmatpush1.msra.mxu0 0.0
    %5581 = vmatprep.subr.mxu0 0.0
    %5582 = vmatpush1.msra.mxu0 0.0
    %5583 = vmatprep.subr.mxu0 0.0
    %5584 = vmatpush1.msra.mxu0 0.0
    %5585 = vmatprep.subr.mxu0 0.0
    %5586 = vmatpush1.msra.mxu0 0.0
    %5587 = vmatprep.subr.mxu0 0.0
    %5588 = vmatpush1.msra.mxu0 0.0
    %5589 = vmatprep.subr.mxu0 0.0
    %5590 = vmatpush1.msra.mxu0 0.0
    %5591 = vmatprep.subr.mxu0 0.0
    %5592 = vmatpush1.msra.mxu0 %v5559
    %5593 = vmatprep.subr.mxu0 0.0
    %5594 = vmatpush2.msra.mxu0 0.0
    %5595 = vmatprep.subr.mxu0 0.0
    %5596 = vmatpush2.msra.mxu0 0.0
    %5597 = vmatprep.subr.mxu0 0.0
    %5598 = vmatpush2.msra.mxu0 0.0
    %5599 = vmatprep.subr.mxu0 0.0
    %5600 = vmatpush2.msra.mxu0 0.0
    %5601 = vmatprep.subr.mxu0 0.0
    %5602 = vmatpush2.msra.mxu0 0.0
    %5603 = vmatprep.subr.mxu0 0.0
    %5604 = vmatpush2.msra.mxu0 0.0
    %5605 = vmatprep.subr.mxu0 0.0
    %5606 = vmatpush2.msra.mxu0 0.0
    %5607 = vmatprep.subr.mxu0 0.0
    %5608 = vmatpush2.msra.mxu0 0.0
    %5609 = vmatprep.subr.mxu0 0.0
    %5610 = vmatpush2.msra.mxu0 0.0
    %5611 = vmatprep.subr.mxu0 0.0
    %5612 = vmatpush2.msra.mxu0 0.0
    %5613 = vmatprep.subr.mxu0 0.0
    %5614 = vmatpush2.msra.mxu0 0.0
    %5615 = vmatprep.subr.mxu0 0.0
    %5616 = vmatpush2.msra.mxu0 0.0
    %5617 = vmatprep.subr.mxu0 0.0
    %5618 = vmatpush2.msra.mxu0 0.0
    %5619 = vmatprep.subr.mxu0 0.0
    %5620 = vmatpush2.msra.mxu0 0.0
    %5621 = vmatprep.subr.mxu0 0.0
    %5622 = vmatpush2.msra.mxu0 0.0
    %5623 = vmatprep.subr.mxu0 0.0
    %5624 = vmatpush2.msra.mxu0 0.0
    %5625 = vmatprep.mubr.f32.mxu0 0.0
    %5626 = vmatmul.mubr.f32.gmra.mxu0 %v5553
    %v5627 = vpop.f32.mrf.mxu0
    %v5628 = vadd.f32 0.0, %v5627
    %v5629 = vpop.f32.mrf.mxu0
    %5630 = vmatprep.mubr.f32.mxu0 0.0
    %5631 = vmatmul.mubr.f32.gmra.mxu0 %v5556
    %v5632 = vpop.f32.mrf.mxu0
    %v5633 = vadd.f32 0.0, %v5632
    %v5634 = vpop.f32.mrf.mxu0
    %5635 = vdwg.mxu0
    %v5636 = vld [vmem:[%s119] sm:$0xf]
    %v5637 = vld [vmem:[%s119 + $0x4] sm:$0xf]
    %v5638 = vpack.c.bf16 %v5470, %v5469
    %v5641 = vunpack.c.l.b16 %v5636
    %v5642 = vunpack.c.l.b16 %v5637
    %v5643 = vpack.c.b16 %v5642, %v5641
    %v5645 = vsel %vm1944, %v5643, 0
    %5647 = vmatprep.subr.bf16.mxu0 0
    %5648 = vmatpush1.bf16.msra.mxu0 0
    %5649 = vmatprep.subr.bf16.mxu0 0
    %5650 = vmatpush1.bf16.msra.mxu0 0
    %5651 = vmatprep.subr.bf16.mxu0 0
    %5652 = vmatpush1.bf16.msra.mxu0 0
    %5653 = vmatprep.subr.bf16.mxu0 0
    %5654 = vmatpush1.bf16.msra.mxu0 0
    %5655 = vmatprep.subr.bf16.mxu0 0
    %5656 = vmatpush1.bf16.msra.mxu0 0
    %5657 = vmatprep.subr.bf16.mxu0 0
    %5658 = vmatpush1.bf16.msra.mxu0 0
    %5659 = vmatprep.subr.bf16.mxu0 0
    %5660 = vmatpush1.bf16.msra.mxu0 0
    %5661 = vmatprep.subr.bf16.mxu0 0
    %5662 = vmatpush1.bf16.msra.mxu0 %v5638
    %5663 = vmatprep.subr.bf16.mxu0 0
    %5664 = vmatpush2.bf16.msra.mxu0 0
    %5665 = vmatprep.subr.bf16.mxu0 0
    %5666 = vmatpush2.bf16.msra.mxu0 0
    %5667 = vmatprep.subr.bf16.mxu0 0
    %5668 = vmatpush2.bf16.msra.mxu0 0
    %5669 = vmatprep.subr.bf16.mxu0 0
    %5670 = vmatpush2.bf16.msra.mxu0 0
    %5671 = vmatprep.subr.bf16.mxu0 0
    %5672 = vmatpush2.bf16.msra.mxu0 0
    %5673 = vmatprep.subr.bf16.mxu0 0
    %5674 = vmatpush2.bf16.msra.mxu0 0
    %5675 = vmatprep.subr.bf16.mxu0 0
    %5676 = vmatpush2.bf16.msra.mxu0 0
    %5677 = vmatprep.subr.bf16.mxu0 0
    %5678 = vmatpush2.bf16.msra.mxu0 0
    %5679 = vmatprep.mubr.bf16.mxu0 0
    %5680 = vmatmul.mubr.bf16.gmra.mxu0 %v5645
    %v5681 = vpop.f32.mrf.mxu0
    %v5682 = vadd.f32 0.0, %v5681
    %v5683 = vpop.f32.mrf.mxu0
    %v5684 = vpop.f32.mrf.mxu0
    %v5685 = vadd.f32 0.0, %v5684
    %v5686 = vpop.f32.mrf.mxu0
    %5687 = vdwg.mxu0
    %v5688 = vld [vmem:[#allocation58] sm:$0xf]
    %v5689 = vld [vmem:[#allocation58 + $0x4] sm:$0xf]
    %v5690 = vld [vmem:[#allocation58 + $0x8] sm:$0xf]
    %v5691 = vld [vmem:[#allocation58 + $0xc] sm:$0xf]
    %v5692 = vld [vmem:[#allocation58 + $0x10] sm:$0xf]
    %v5693 = vld [vmem:[#allocation58 + $0x14] sm:$0xf]
    %v5694 = vld [vmem:[#allocation58 + $0x18] sm:$0xf]
    %v5695 = vld [vmem:[#allocation58 + $0x1c] sm:$0xf]
    %v5696 = vpack.c.bf16 %v5685, %v5682
    %5697 = vmatprep.subr.bf16.mxu0 0
    %5698 = vmatpush1.bf16.msra.mxu0 0
    %5699 = vmatprep.subr.bf16.mxu0 0
    %5700 = vmatpush1.bf16.msra.mxu0 0
    %5701 = vmatprep.subr.bf16.mxu0 0
    %5702 = vmatpush1.bf16.msra.mxu0 0
    %5703 = vmatprep.subr.bf16.mxu0 0
    %5704 = vmatpush1.bf16.msra.mxu0 0
    %5705 = vmatprep.subr.bf16.mxu0 0
    %5706 = vmatpush1.bf16.msra.mxu0 0
    %5707 = vmatprep.subr.bf16.mxu0 0
    %5708 = vmatpush1.bf16.msra.mxu0 0
    %5709 = vmatprep.subr.bf16.mxu0 0
    %5710 = vmatpush1.bf16.msra.mxu0 0
    %5711 = vmatprep.subr.bf16.mxu0 0
    %5712 = vmatpush1.bf16.msra.mxu0 %v2572
    %5713 = vmatprep.subr.bf16.mxu0 0
    %5714 = vmatpush2.bf16.msra.mxu0 0
    %5715 = vmatprep.subr.bf16.mxu0 0
    %5716 = vmatpush2.bf16.msra.mxu0 0
    %5717 = vmatprep.subr.bf16.mxu0 0
    %5718 = vmatpush2.bf16.msra.mxu0 0
    %5719 = vmatprep.subr.bf16.mxu0 0
    %5720 = vmatpush2.bf16.msra.mxu0 0
    %5721 = vmatprep.subr.bf16.mxu0 0
    %5722 = vmatpush2.bf16.msra.mxu0 0
    %5723 = vmatprep.subr.bf16.mxu0 0
    %5724 = vmatpush2.bf16.msra.mxu0 0
    %5725 = vmatprep.subr.bf16.mxu0 0
    %5726 = vmatpush2.bf16.msra.mxu0 0
    %5727 = vmatprep.subr.bf16.mxu0 0
    %5728 = vmatpush2.bf16.msra.mxu0 0
    %5729 = vmatprep.mubr.bf16.mxu0 0
    %5730 = vmatmul.mubr.bf16.gmra.mxu0 %v5645
    %v5731 = vpop.f32.mrf.mxu0
    %v5732 = vadd.f32 0.0, %v5731
    %v5733 = vpop.f32.mrf.mxu0
    %v5734 = vpop.f32.mrf.mxu0
    %v5735 = vadd.f32 0.0, %v5734
    %v5736 = vpop.f32.mrf.mxu0
    %5737 = vdwg.mxu0
    %v5738 = vld [vmem:[#allocation59] sm:$0xf]
    %v5739 = vld [vmem:[#allocation59 + $0x4] sm:$0xf]
    %v5740 = vld [vmem:[#allocation59 + $0x8] sm:$0xf]
    %v5741 = vld [vmem:[#allocation59 + $0xc] sm:$0xf]
    %v5742 = vld [vmem:[#allocation59 + $0x10] sm:$0xf]
    %v5743 = vld [vmem:[#allocation59 + $0x14] sm:$0xf]
    %v5744 = vld [vmem:[#allocation59 + $0x18] sm:$0xf]
    %v5745 = vld [vmem:[#allocation59 + $0x1c] sm:$0xf]
    %v5746 = vpack.c.bf16 %v5735, %v5732
    %v5755 = vunpack.c.l.b16 %v5738
    %v5756 = vunpack.c.l.b16 %v5739
    %v5757 = vunpack.c.l.b16 %v5740
    %v5758 = vunpack.c.l.b16 %v5741
    %v5759 = vunpack.c.l.b16 %v5742
    %v5760 = vunpack.c.l.b16 %v5743
    %v5761 = vunpack.c.l.b16 %v5744
    %v5762 = vunpack.c.l.b16 %v5745
    %v5763 = vpack.c.b16 %v5756, %v5755
    %v5764 = vpack.c.b16 %v5758, %v5757
    %v5765 = vpack.c.b16 %v5760, %v5759
    %v5766 = vpack.c.b16 %v5762, %v5761
    %v5772 = vsel %vm1886, %v5746, 0
    %5774 = vmatprep.subr.bf16.mxu0 0
    %5775 = vmatpush1.bf16.msra.mxu0 0
    %5776 = vmatprep.subr.bf16.mxu0 0
    %5777 = vmatpush1.bf16.msra.mxu0 0
    %5778 = vmatprep.subr.bf16.mxu0 0
    %5779 = vmatpush1.bf16.msra.mxu0 0
    %5780 = vmatprep.subr.bf16.mxu0 0
    %5781 = vmatpush1.bf16.msra.mxu0 0
    %5782 = vmatprep.subr.bf16.mxu0 0
    %5783 = vmatpush1.bf16.msra.mxu0 %v5766
    %5784 = vmatprep.subr.bf16.mxu0 0
    %5785 = vmatpush1.bf16.msra.mxu0 %v5765
    %5786 = vmatprep.subr.bf16.mxu0 0
    %5787 = vmatpush1.bf16.msra.mxu0 %v5764
    %5788 = vmatprep.subr.bf16.mxu0 0
    %5789 = vmatpush1.bf16.msra.mxu0 %v5763
    %5790 = vmatprep.subr.bf16.mxu0 0
    %5791 = vmatpush2.bf16.msra.mxu0 0
    %5792 = vmatprep.subr.bf16.mxu0 0
    %5793 = vmatpush2.bf16.msra.mxu0 0
    %5794 = vmatprep.subr.bf16.mxu0 0
    %5795 = vmatpush2.bf16.msra.mxu0 0
    %5796 = vmatprep.subr.bf16.mxu0 0
    %5797 = vmatpush2.bf16.msra.mxu0 0
    %5798 = vmatprep.subr.bf16.mxu0 0
    %5799 = vmatpush2.bf16.msra.mxu0 0
    %5800 = vmatprep.subr.bf16.mxu0 0
    %5801 = vmatpush2.bf16.msra.mxu0 0
    %5802 = vmatprep.subr.bf16.mxu0 0
    %5803 = vmatpush2.bf16.msra.mxu0 0
    %5804 = vmatprep.subr.bf16.mxu0 0
    %5805 = vmatpush2.bf16.msra.mxu0 0
    %5806 = vmatprep.mubr.bf16.mxu0 0
    %5807 = vmatmul.mubr.bf16.gmra.mxu0 %v5772
    %v5808 = vpop.f32.mrf.mxu0
    %v5809 = vadd.f32 0.0, %v5808
    %v5810 = vpop.f32.mrf.mxu0
    %v5811 = vpop.f32.mrf.mxu0
    %v5812 = vadd.f32 0.0, %v5811
    %v5813 = vpop.f32.mrf.mxu0
    %5814 = vdwg.mxu0
    %v5823 = vunpack.c.l.b16 %v5688
    %v5824 = vunpack.c.l.b16 %v5689
    %v5825 = vunpack.c.l.b16 %v5690
    %v5826 = vunpack.c.l.b16 %v5691
    %v5827 = vunpack.c.l.b16 %v5692
    %v5828 = vunpack.c.l.b16 %v5693
    %v5829 = vunpack.c.l.b16 %v5694
    %v5830 = vunpack.c.l.b16 %v5695
    %v5831 = vpack.c.b16 %v5824, %v5823
    %v5832 = vpack.c.b16 %v5826, %v5825
    %v5833 = vpack.c.b16 %v5828, %v5827
    %v5834 = vpack.c.b16 %v5830, %v5829
    %v5840 = vsel %vm1886, %v5696, 0
    %5842 = vmatprep.subr.bf16.mxu0 0
    %5843 = vmatpush1.bf16.msra.mxu0 0
    %5844 = vmatprep.subr.bf16.mxu0 0
    %5845 = vmatpush1.bf16.msra.mxu0 0
    %5846 = vmatprep.subr.bf16.mxu0 0
    %5847 = vmatpush1.bf16.msra.mxu0 0
    %5848 = vmatprep.subr.bf16.mxu0 0
    %5849 = vmatpush1.bf16.msra.mxu0 0
    %5850 = vmatprep.subr.bf16.mxu0 0
    %5851 = vmatpush1.bf16.msra.mxu0 %v5834
    %5852 = vmatprep.subr.bf16.mxu0 0
    %5853 = vmatpush1.bf16.msra.mxu0 %v5833
    %5854 = vmatprep.subr.bf16.mxu0 0
    %5855 = vmatpush1.bf16.msra.mxu0 %v5832
    %5856 = vmatprep.subr.bf16.mxu0 0
    %5857 = vmatpush1.bf16.msra.mxu0 %v5831
    %5858 = vmatprep.subr.bf16.mxu0 0
    %5859 = vmatpush2.bf16.msra.mxu0 0
    %5860 = vmatprep.subr.bf16.mxu0 0
    %5861 = vmatpush2.bf16.msra.mxu0 0
    %5862 = vmatprep.subr.bf16.mxu0 0
    %5863 = vmatpush2.bf16.msra.mxu0 0
    %5864 = vmatprep.subr.bf16.mxu0 0
    %5865 = vmatpush2.bf16.msra.mxu0 0
    %5866 = vmatprep.subr.bf16.mxu0 0
    %5867 = vmatpush2.bf16.msra.mxu0 0
    %5868 = vmatprep.subr.bf16.mxu0 0
    %5869 = vmatpush2.bf16.msra.mxu0 0
    %5870 = vmatprep.subr.bf16.mxu0 0
    %5871 = vmatpush2.bf16.msra.mxu0 0
    %5872 = vmatprep.subr.bf16.mxu0 0
    %5873 = vmatpush2.bf16.msra.mxu0 0
    %5874 = vmatprep.mubr.bf16.mxu0 0
    %5875 = vmatmul.mubr.bf16.gmra.mxu0 %v5840
    %v5876 = vpop.f32.mrf.mxu0
    %v5877 = vadd.f32 %v5809, %v5876
    %v5878 = vpop.f32.mrf.mxu0
    %v5879 = vpop.f32.mrf.mxu0
    %v5880 = vadd.f32 %v5812, %v5879
    %v5881 = vpop.f32.mrf.mxu0
    %5882 = vdwg.mxu0
    %s5883 = scalar_lea.vmem %s119, 8
    %v5884 = vld [vmem:[%s5883] sm:$0xf]
    %v5885 = vld [vmem:[%s5883 + $0x4] sm:$0xf]
    %v5888 = vunpack.c.l.b16 %v5884
    %v5889 = vunpack.c.l.b16 %v5885
    %v5890 = vpack.c.b16 %v5889, %v5888
    %v5892 = vsel %vm1944, %v5890, 0
    %5894 = vmatprep.subr.bf16.mxu0 0
    %5895 = vmatpush1.bf16.msra.mxu0 0
    %5896 = vmatprep.subr.bf16.mxu0 0
    %5897 = vmatpush1.bf16.msra.mxu0 0
    %5898 = vmatprep.subr.bf16.mxu0 0
    %5899 = vmatpush1.bf16.msra.mxu0 0
    %5900 = vmatprep.subr.bf16.mxu0 0
    %5901 = vmatpush1.bf16.msra.mxu0 0
    %5902 = vmatprep.subr.bf16.mxu0 0
    %5903 = vmatpush1.bf16.msra.mxu0 0
    %5904 = vmatprep.subr.bf16.mxu0 0
    %5905 = vmatpush1.bf16.msra.mxu0 0
    %5906 = vmatprep.subr.bf16.mxu0 0
    %5907 = vmatpush1.bf16.msra.mxu0 0
    %5908 = vmatprep.subr.bf16.mxu0 0
    %5909 = vmatpush1.bf16.msra.mxu0 %v5638
    %5910 = vmatprep.subr.bf16.mxu0 0
    %5911 = vmatpush2.bf16.msra.mxu0 0
    %5912 = vmatprep.subr.bf16.mxu0 0
    %5913 = vmatpush2.bf16.msra.mxu0 0
    %5914 = vmatprep.subr.bf16.mxu0 0
    %5915 = vmatpush2.bf16.msra.mxu0 0
    %5916 = vmatprep.subr.bf16.mxu0 0
    %5917 = vmatpush2.bf16.msra.mxu0 0
    %5918 = vmatprep.subr.bf16.mxu0 0
    %5919 = vmatpush2.bf16.msra.mxu0 0
    %5920 = vmatprep.subr.bf16.mxu0 0
    %5921 = vmatpush2.bf16.msra.mxu0 0
    %5922 = vmatprep.subr.bf16.mxu0 0
    %5923 = vmatpush2.bf16.msra.mxu0 0
    %5924 = vmatprep.subr.bf16.mxu0 0
    %5925 = vmatpush2.bf16.msra.mxu0 0
    %5926 = vmatprep.mubr.bf16.mxu0 0
    %5927 = vmatmul.mubr.bf16.gmra.mxu0 %v5892
    %v5928 = vpop.f32.mrf.mxu0
    %v5929 = vadd.f32 0.0, %v5928
    %v5930 = vpop.f32.mrf.mxu0
    %v5931 = vpop.f32.mrf.mxu0
    %v5932 = vadd.f32 0.0, %v5931
    %v5933 = vpop.f32.mrf.mxu0
    %5934 = vdwg.mxu0
    %s5935 = scalar_lea.vmem [#allocation58], 32
    %v5936 = vld [vmem:[%s5935] sm:$0xf]
    %v5937 = vld [vmem:[%s5935 + $0x4] sm:$0xf]
    %v5938 = vld [vmem:[%s5935 + $0x8] sm:$0xf]
    %v5939 = vld [vmem:[%s5935 + $0xc] sm:$0xf]
    %v5940 = vld [vmem:[%s5935 + $0x10] sm:$0xf]
    %v5941 = vld [vmem:[%s5935 + $0x14] sm:$0xf]
    %v5942 = vld [vmem:[%s5935 + $0x18] sm:$0xf]
    %v5943 = vld [vmem:[%s5935 + $0x1c] sm:$0xf]
    %v5944 = vpack.c.bf16 %v5932, %v5929
    %v5953 = vunpack.c.l.b16 %v5936
    %v5954 = vunpack.c.l.b16 %v5937
    %v5955 = vunpack.c.l.b16 %v5938
    %v5956 = vunpack.c.l.b16 %v5939
    %v5957 = vunpack.c.l.b16 %v5940
    %v5958 = vunpack.c.l.b16 %v5941
    %v5959 = vunpack.c.l.b16 %v5942
    %v5960 = vunpack.c.l.b16 %v5943
    %v5961 = vpack.c.b16 %v5954, %v5953
    %v5962 = vpack.c.b16 %v5956, %v5955
    %v5963 = vpack.c.b16 %v5958, %v5957
    %v5964 = vpack.c.b16 %v5960, %v5959
    %v5970 = vsel %vm1886, %v5944, 0
    %5972 = vmatprep.subr.bf16.mxu0 0
    %5973 = vmatpush1.bf16.msra.mxu0 0
    %5974 = vmatprep.subr.bf16.mxu0 0
    %5975 = vmatpush1.bf16.msra.mxu0 0
    %5976 = vmatprep.subr.bf16.mxu0 0
    %5977 = vmatpush1.bf16.msra.mxu0 0
    %5978 = vmatprep.subr.bf16.mxu0 0
    %5979 = vmatpush1.bf16.msra.mxu0 0
    %5980 = vmatprep.subr.bf16.mxu0 0
    %5981 = vmatpush1.bf16.msra.mxu0 %v5964
    %5982 = vmatprep.subr.bf16.mxu0 0
    %5983 = vmatpush1.bf16.msra.mxu0 %v5963
    %5984 = vmatprep.subr.bf16.mxu0 0
    %5985 = vmatpush1.bf16.msra.mxu0 %v5962
    %5986 = vmatprep.subr.bf16.mxu0 0
    %5987 = vmatpush1.bf16.msra.mxu0 %v5961
    %5988 = vmatprep.subr.bf16.mxu0 0
    %5989 = vmatpush2.bf16.msra.mxu0 0
    %5990 = vmatprep.subr.bf16.mxu0 0
    %5991 = vmatpush2.bf16.msra.mxu0 0
    %5992 = vmatprep.subr.bf16.mxu0 0
    %5993 = vmatpush2.bf16.msra.mxu0 0
    %5994 = vmatprep.subr.bf16.mxu0 0
    %5995 = vmatpush2.bf16.msra.mxu0 0
    %5996 = vmatprep.subr.bf16.mxu0 0
    %5997 = vmatpush2.bf16.msra.mxu0 0
    %5998 = vmatprep.subr.bf16.mxu0 0
    %5999 = vmatpush2.bf16.msra.mxu0 0
    %6000 = vmatprep.subr.bf16.mxu0 0
    %6001 = vmatpush2.bf16.msra.mxu0 0
    %6002 = vmatprep.subr.bf16.mxu0 0
    %6003 = vmatpush2.bf16.msra.mxu0 0
    %6004 = vmatprep.mubr.bf16.mxu0 0
    %6005 = vmatmul.mubr.bf16.gmra.mxu0 %v5970
    %v6006 = vpop.f32.mrf.mxu0
    %v6007 = vadd.f32 0.0, %v6006
    %v6008 = vpop.f32.mrf.mxu0
    %v6009 = vpop.f32.mrf.mxu0
    %v6010 = vadd.f32 0.0, %v6009
    %v6011 = vpop.f32.mrf.mxu0
    %6012 = vdwg.mxu0
    %v6013 = vadd.f32 %v5877, %v6007
    %v6014 = vadd.f32 %v5880, %v6010
    %6015 = vmatprep.subr.bf16.mxu0 0
    %6016 = vmatpush1.bf16.msra.mxu0 0
    %6017 = vmatprep.subr.bf16.mxu0 0
    %6018 = vmatpush1.bf16.msra.mxu0 0
    %6019 = vmatprep.subr.bf16.mxu0 0
    %6020 = vmatpush1.bf16.msra.mxu0 0
    %6021 = vmatprep.subr.bf16.mxu0 0
    %6022 = vmatpush1.bf16.msra.mxu0 0
    %6023 = vmatprep.subr.bf16.mxu0 0
    %6024 = vmatpush1.bf16.msra.mxu0 0
    %6025 = vmatprep.subr.bf16.mxu0 0
    %6026 = vmatpush1.bf16.msra.mxu0 0
    %6027 = vmatprep.subr.bf16.mxu0 0
    %6028 = vmatpush1.bf16.msra.mxu0 0
    %6029 = vmatprep.subr.bf16.mxu0 0
    %6030 = vmatpush1.bf16.msra.mxu0 %v2572
    %6031 = vmatprep.subr.bf16.mxu0 0
    %6032 = vmatpush2.bf16.msra.mxu0 0
    %6033 = vmatprep.subr.bf16.mxu0 0
    %6034 = vmatpush2.bf16.msra.mxu0 0
    %6035 = vmatprep.subr.bf16.mxu0 0
    %6036 = vmatpush2.bf16.msra.mxu0 0
    %6037 = vmatprep.subr.bf16.mxu0 0
    %6038 = vmatpush2.bf16.msra.mxu0 0
    %6039 = vmatprep.subr.bf16.mxu0 0
    %6040 = vmatpush2.bf16.msra.mxu0 0
    %6041 = vmatprep.subr.bf16.mxu0 0
    %6042 = vmatpush2.bf16.msra.mxu0 0
    %6043 = vmatprep.subr.bf16.mxu0 0
    %6044 = vmatpush2.bf16.msra.mxu0 0
    %6045 = vmatprep.subr.bf16.mxu0 0
    %6046 = vmatpush2.bf16.msra.mxu0 0
    %6047 = vmatprep.mubr.bf16.mxu0 0
    %6048 = vmatmul.mubr.bf16.gmra.mxu0 %v5892
    %v6049 = vpop.f32.mrf.mxu0
    %v6050 = vadd.f32 0.0, %v6049
    %v6051 = vpop.f32.mrf.mxu0
    %v6052 = vpop.f32.mrf.mxu0
    %v6053 = vadd.f32 0.0, %v6052
    %v6054 = vpop.f32.mrf.mxu0
    %6055 = vdwg.mxu0
    %s6056 = scalar_lea.vmem [#allocation59], 32
    %v6057 = vld [vmem:[%s6056] sm:$0xf]
    %v6058 = vld [vmem:[%s6056 + $0x4] sm:$0xf]
    %v6059 = vld [vmem:[%s6056 + $0x8] sm:$0xf]
    %v6060 = vld [vmem:[%s6056 + $0xc] sm:$0xf]
    %v6061 = vld [vmem:[%s6056 + $0x10] sm:$0xf]
    %v6062 = vld [vmem:[%s6056 + $0x14] sm:$0xf]
    %v6063 = vld [vmem:[%s6056 + $0x18] sm:$0xf]
    %v6064 = vld [vmem:[%s6056 + $0x1c] sm:$0xf]
    %v6065 = vpack.c.bf16 %v6053, %v6050
    %v6074 = vunpack.c.l.b16 %v6057
    %v6075 = vunpack.c.l.b16 %v6058
    %v6076 = vunpack.c.l.b16 %v6059
    %v6077 = vunpack.c.l.b16 %v6060
    %v6078 = vunpack.c.l.b16 %v6061
    %v6079 = vunpack.c.l.b16 %v6062
    %v6080 = vunpack.c.l.b16 %v6063
    %v6081 = vunpack.c.l.b16 %v6064
    %v6082 = vpack.c.b16 %v6075, %v6074
    %v6083 = vpack.c.b16 %v6077, %v6076
    %v6084 = vpack.c.b16 %v6079, %v6078
    %v6085 = vpack.c.b16 %v6081, %v6080
    %v6091 = vsel %vm1886, %v6065, 0
    %6093 = vmatprep.subr.bf16.mxu0 0
    %6094 = vmatpush1.bf16.msra.mxu0 0
    %6095 = vmatprep.subr.bf16.mxu0 0
    %6096 = vmatpush1.bf16.msra.mxu0 0
    %6097 = vmatprep.subr.bf16.mxu0 0
    %6098 = vmatpush1.bf16.msra.mxu0 0
    %6099 = vmatprep.subr.bf16.mxu0 0
    %6100 = vmatpush1.bf16.msra.mxu0 0
    %6101 = vmatprep.subr.bf16.mxu0 0
    %6102 = vmatpush1.bf16.msra.mxu0 %v6085
    %6103 = vmatprep.subr.bf16.mxu0 0
    %6104 = vmatpush1.bf16.msra.mxu0 %v6084
    %6105 = vmatprep.subr.bf16.mxu0 0
    %6106 = vmatpush1.bf16.msra.mxu0 %v6083
    %6107 = vmatprep.subr.bf16.mxu0 0
    %6108 = vmatpush1.bf16.msra.mxu0 %v6082
    %6109 = vmatprep.subr.bf16.mxu0 0
    %6110 = vmatpush2.bf16.msra.mxu0 0
    %6111 = vmatprep.subr.bf16.mxu0 0
    %6112 = vmatpush2.bf16.msra.mxu0 0
    %6113 = vmatprep.subr.bf16.mxu0 0
    %6114 = vmatpush2.bf16.msra.mxu0 0
    %6115 = vmatprep.subr.bf16.mxu0 0
    %6116 = vmatpush2.bf16.msra.mxu0 0
    %6117 = vmatprep.subr.bf16.mxu0 0
    %6118 = vmatpush2.bf16.msra.mxu0 0
    %6119 = vmatprep.subr.bf16.mxu0 0
    %6120 = vmatpush2.bf16.msra.mxu0 0
    %6121 = vmatprep.subr.bf16.mxu0 0
    %6122 = vmatpush2.bf16.msra.mxu0 0
    %6123 = vmatprep.subr.bf16.mxu0 0
    %6124 = vmatpush2.bf16.msra.mxu0 0
    %6125 = vmatprep.mubr.bf16.mxu0 0
    %6126 = vmatmul.mubr.bf16.gmra.mxu0 %v6091
    %v6127 = vpop.f32.mrf.mxu0
    %v6128 = vadd.f32 0.0, %v6127
    %v6129 = vpop.f32.mrf.mxu0
    %v6130 = vpop.f32.mrf.mxu0
    %v6131 = vadd.f32 0.0, %v6130
    %v6132 = vpop.f32.mrf.mxu0
    %6133 = vdwg.mxu0
    %v6134 = vadd.f32 %v6013, %v6128
    %v6135 = vadd.f32 %v6014, %v6131
    %s6136 = scalar_lea.vmem %s119, 16
    %v6137 = vld [vmem:[%s6136] sm:$0xf]
    %v6138 = vld [vmem:[%s6136 + $0x4] sm:$0xf]
    %v6141 = vunpack.c.l.b16 %v6137
    %v6142 = vunpack.c.l.b16 %v6138
    %v6143 = vpack.c.b16 %v6142, %v6141
    %v6145 = vsel %vm1944, %v6143, 0
    %6147 = vmatprep.subr.bf16.mxu0 0
    %6148 = vmatpush1.bf16.msra.mxu0 0
    %6149 = vmatprep.subr.bf16.mxu0 0
    %6150 = vmatpush1.bf16.msra.mxu0 0
    %6151 = vmatprep.subr.bf16.mxu0 0
    %6152 = vmatpush1.bf16.msra.mxu0 0
    %6153 = vmatprep.subr.bf16.mxu0 0
    %6154 = vmatpush1.bf16.msra.mxu0 0
    %6155 = vmatprep.subr.bf16.mxu0 0
    %6156 = vmatpush1.bf16.msra.mxu0 0
    %6157 = vmatprep.subr.bf16.mxu0 0
    %6158 = vmatpush1.bf16.msra.mxu0 0
    %6159 = vmatprep.subr.bf16.mxu0 0
    %6160 = vmatpush1.bf16.msra.mxu0 0
    %6161 = vmatprep.subr.bf16.mxu0 0
    %6162 = vmatpush1.bf16.msra.mxu0 %v5638
    %6163 = vmatprep.subr.bf16.mxu0 0
    %6164 = vmatpush2.bf16.msra.mxu0 0
    %6165 = vmatprep.subr.bf16.mxu0 0
    %6166 = vmatpush2.bf16.msra.mxu0 0
    %6167 = vmatprep.subr.bf16.mxu0 0
    %6168 = vmatpush2.bf16.msra.mxu0 0
    %6169 = vmatprep.subr.bf16.mxu0 0
    %6170 = vmatpush2.bf16.msra.mxu0 0
    %6171 = vmatprep.subr.bf16.mxu0 0
    %6172 = vmatpush2.bf16.msra.mxu0 0
    %6173 = vmatprep.subr.bf16.mxu0 0
    %6174 = vmatpush2.bf16.msra.mxu0 0
    %6175 = vmatprep.subr.bf16.mxu0 0
    %6176 = vmatpush2.bf16.msra.mxu0 0
    %6177 = vmatprep.subr.bf16.mxu0 0
    %6178 = vmatpush2.bf16.msra.mxu0 0
    %6179 = vmatprep.mubr.bf16.mxu0 0
    %6180 = vmatmul.mubr.bf16.gmra.mxu0 %v6145
    %v6181 = vpop.f32.mrf.mxu0
    %v6182 = vadd.f32 0.0, %v6181
    %v6183 = vpop.f32.mrf.mxu0
    %v6184 = vpop.f32.mrf.mxu0
    %v6185 = vadd.f32 0.0, %v6184
    %v6186 = vpop.f32.mrf.mxu0
    %6187 = vdwg.mxu0
    %s6188 = scalar_lea.vmem [#allocation58], 64
    %v6189 = vld [vmem:[%s6188] sm:$0xf]
    %v6190 = vld [vmem:[%s6188 + $0x4] sm:$0xf]
    %v6191 = vld [vmem:[%s6188 + $0x8] sm:$0xf]
    %v6192 = vld [vmem:[%s6188 + $0xc] sm:$0xf]
    %v6193 = vld [vmem:[%s6188 + $0x10] sm:$0xf]
    %v6194 = vld [vmem:[%s6188 + $0x14] sm:$0xf]
    %v6195 = vld [vmem:[%s6188 + $0x18] sm:$0xf]
    %v6196 = vld [vmem:[%s6188 + $0x1c] sm:$0xf]
    %v6197 = vpack.c.bf16 %v6185, %v6182
    %v6206 = vunpack.c.l.b16 %v6189
    %v6207 = vunpack.c.l.b16 %v6190
    %v6208 = vunpack.c.l.b16 %v6191
    %v6209 = vunpack.c.l.b16 %v6192
    %v6210 = vunpack.c.l.b16 %v6193
    %v6211 = vunpack.c.l.b16 %v6194
    %v6212 = vunpack.c.l.b16 %v6195
    %v6213 = vunpack.c.l.b16 %v6196
    %v6214 = vpack.c.b16 %v6207, %v6206
    %v6215 = vpack.c.b16 %v6209, %v6208
    %v6216 = vpack.c.b16 %v6211, %v6210
    %v6217 = vpack.c.b16 %v6213, %v6212
    %v6223 = vsel %vm1886, %v6197, 0
    %6225 = vmatprep.subr.bf16.mxu0 0
    %6226 = vmatpush1.bf16.msra.mxu0 0
    %6227 = vmatprep.subr.bf16.mxu0 0
    %6228 = vmatpush1.bf16.msra.mxu0 0
    %6229 = vmatprep.subr.bf16.mxu0 0
    %6230 = vmatpush1.bf16.msra.mxu0 0
    %6231 = vmatprep.subr.bf16.mxu0 0
    %6232 = vmatpush1.bf16.msra.mxu0 0
    %6233 = vmatprep.subr.bf16.mxu0 0
    %6234 = vmatpush1.bf16.msra.mxu0 %v6217
    %6235 = vmatprep.subr.bf16.mxu0 0
    %6236 = vmatpush1.bf16.msra.mxu0 %v6216
    %6237 = vmatprep.subr.bf16.mxu0 0
    %6238 = vmatpush1.bf16.msra.mxu0 %v6215
    %6239 = vmatprep.subr.bf16.mxu0 0
    %6240 = vmatpush1.bf16.msra.mxu0 %v6214
    %6241 = vmatprep.subr.bf16.mxu0 0
    %6242 = vmatpush2.bf16.msra.mxu0 0
    %6243 = vmatprep.subr.bf16.mxu0 0
    %6244 = vmatpush2.bf16.msra.mxu0 0
    %6245 = vmatprep.subr.bf16.mxu0 0
    %6246 = vmatpush2.bf16.msra.mxu0 0
    %6247 = vmatprep.subr.bf16.mxu0 0
    %6248 = vmatpush2.bf16.msra.mxu0 0
    %6249 = vmatprep.subr.bf16.mxu0 0
    %6250 = vmatpush2.bf16.msra.mxu0 0
    %6251 = vmatprep.subr.bf16.mxu0 0
    %6252 = vmatpush2.bf16.msra.mxu0 0
    %6253 = vmatprep.subr.bf16.mxu0 0
    %6254 = vmatpush2.bf16.msra.mxu0 0
    %6255 = vmatprep.subr.bf16.mxu0 0
    %6256 = vmatpush2.bf16.msra.mxu0 0
    %6257 = vmatprep.mubr.bf16.mxu0 0
    %6258 = vmatmul.mubr.bf16.gmra.mxu0 %v6223
    %v6259 = vpop.f32.mrf.mxu0
    %v6260 = vadd.f32 0.0, %v6259
    %v6261 = vpop.f32.mrf.mxu0
    %v6262 = vpop.f32.mrf.mxu0
    %v6263 = vadd.f32 0.0, %v6262
    %v6264 = vpop.f32.mrf.mxu0
    %6265 = vdwg.mxu0
    %v6266 = vadd.f32 %v6134, %v6260
    %v6267 = vadd.f32 %v6135, %v6263
    %6268 = vmatprep.subr.bf16.mxu0 0
    %6269 = vmatpush1.bf16.msra.mxu0 0
    %6270 = vmatprep.subr.bf16.mxu0 0
    %6271 = vmatpush1.bf16.msra.mxu0 0
    %6272 = vmatprep.subr.bf16.mxu0 0
    %6273 = vmatpush1.bf16.msra.mxu0 0
    %6274 = vmatprep.subr.bf16.mxu0 0
    %6275 = vmatpush1.bf16.msra.mxu0 0
    %6276 = vmatprep.subr.bf16.mxu0 0
    %6277 = vmatpush1.bf16.msra.mxu0 0
    %6278 = vmatprep.subr.bf16.mxu0 0
    %6279 = vmatpush1.bf16.msra.mxu0 0
    %6280 = vmatprep.subr.bf16.mxu0 0
    %6281 = vmatpush1.bf16.msra.mxu0 0
    %6282 = vmatprep.subr.bf16.mxu0 0
    %6283 = vmatpush1.bf16.msra.mxu0 %v2572
    %6284 = vmatprep.subr.bf16.mxu0 0
    %6285 = vmatpush2.bf16.msra.mxu0 0
    %6286 = vmatprep.subr.bf16.mxu0 0
    %6287 = vmatpush2.bf16.msra.mxu0 0
    %6288 = vmatprep.subr.bf16.mxu0 0
    %6289 = vmatpush2.bf16.msra.mxu0 0
    %6290 = vmatprep.subr.bf16.mxu0 0
    %6291 = vmatpush2.bf16.msra.mxu0 0
    %6292 = vmatprep.subr.bf16.mxu0 0
    %6293 = vmatpush2.bf16.msra.mxu0 0
    %6294 = vmatprep.subr.bf16.mxu0 0
    %6295 = vmatpush2.bf16.msra.mxu0 0
    %6296 = vmatprep.subr.bf16.mxu0 0
    %6297 = vmatpush2.bf16.msra.mxu0 0
    %6298 = vmatprep.subr.bf16.mxu0 0
    %6299 = vmatpush2.bf16.msra.mxu0 0
    %6300 = vmatprep.mubr.bf16.mxu0 0
    %6301 = vmatmul.mubr.bf16.gmra.mxu0 %v6145
    %v6302 = vpop.f32.mrf.mxu0
    %v6303 = vadd.f32 0.0, %v6302
    %v6304 = vpop.f32.mrf.mxu0
    %v6305 = vpop.f32.mrf.mxu0
    %v6306 = vadd.f32 0.0, %v6305
    %v6307 = vpop.f32.mrf.mxu0
    %6308 = vdwg.mxu0
    %s6309 = scalar_lea.vmem [#allocation59], 64
    %v6310 = vld [vmem:[%s6309] sm:$0xf]
    %v6311 = vld [vmem:[%s6309 + $0x4] sm:$0xf]
    %v6312 = vld [vmem:[%s6309 + $0x8] sm:$0xf]
    %v6313 = vld [vmem:[%s6309 + $0xc] sm:$0xf]
    %v6314 = vld [vmem:[%s6309 + $0x10] sm:$0xf]
    %v6315 = vld [vmem:[%s6309 + $0x14] sm:$0xf]
    %v6316 = vld [vmem:[%s6309 + $0x18] sm:$0xf]
    %v6317 = vld [vmem:[%s6309 + $0x1c] sm:$0xf]
    %v6318 = vpack.c.bf16 %v6306, %v6303
    %v6327 = vunpack.c.l.b16 %v6310
    %v6328 = vunpack.c.l.b16 %v6311
    %v6329 = vunpack.c.l.b16 %v6312
    %v6330 = vunpack.c.l.b16 %v6313
    %v6331 = vunpack.c.l.b16 %v6314
    %v6332 = vunpack.c.l.b16 %v6315
    %v6333 = vunpack.c.l.b16 %v6316
    %v6334 = vunpack.c.l.b16 %v6317
    %v6335 = vpack.c.b16 %v6328, %v6327
    %v6336 = vpack.c.b16 %v6330, %v6329
    %v6337 = vpack.c.b16 %v6332, %v6331
    %v6338 = vpack.c.b16 %v6334, %v6333
    %v6344 = vsel %vm1886, %v6318, 0
    %6346 = vmatprep.subr.bf16.mxu0 0
    %6347 = vmatpush1.bf16.msra.mxu0 0
    %6348 = vmatprep.subr.bf16.mxu0 0
    %6349 = vmatpush1.bf16.msra.mxu0 0
    %6350 = vmatprep.subr.bf16.mxu0 0
    %6351 = vmatpush1.bf16.msra.mxu0 0
    %6352 = vmatprep.subr.bf16.mxu0 0
    %6353 = vmatpush1.bf16.msra.mxu0 0
    %6354 = vmatprep.subr.bf16.mxu0 0
    %6355 = vmatpush1.bf16.msra.mxu0 %v6338
    %6356 = vmatprep.subr.bf16.mxu0 0
    %6357 = vmatpush1.bf16.msra.mxu0 %v6337
    %6358 = vmatprep.subr.bf16.mxu0 0
    %6359 = vmatpush1.bf16.msra.mxu0 %v6336
    %6360 = vmatprep.subr.bf16.mxu0 0
    %6361 = vmatpush1.bf16.msra.mxu0 %v6335
    %6362 = vmatprep.subr.bf16.mxu0 0
    %6363 = vmatpush2.bf16.msra.mxu0 0
    %6364 = vmatprep.subr.bf16.mxu0 0
    %6365 = vmatpush2.bf16.msra.mxu0 0
    %6366 = vmatprep.subr.bf16.mxu0 0
    %6367 = vmatpush2.bf16.msra.mxu0 0
    %6368 = vmatprep.subr.bf16.mxu0 0
    %6369 = vmatpush2.bf16.msra.mxu0 0
    %6370 = vmatprep.subr.bf16.mxu0 0
    %6371 = vmatpush2.bf16.msra.mxu0 0
    %6372 = vmatprep.subr.bf16.mxu0 0
    %6373 = vmatpush2.bf16.msra.mxu0 0
    %6374 = vmatprep.subr.bf16.mxu0 0
    %6375 = vmatpush2.bf16.msra.mxu0 0
    %6376 = vmatprep.subr.bf16.mxu0 0
    %6377 = vmatpush2.bf16.msra.mxu0 0
    %6378 = vmatprep.mubr.bf16.mxu0 0
    %6379 = vmatmul.mubr.bf16.gmra.mxu0 %v6344
    %v6380 = vpop.f32.mrf.mxu0
    %v6381 = vadd.f32 0.0, %v6380
    %v6382 = vpop.f32.mrf.mxu0
    %v6383 = vpop.f32.mrf.mxu0
    %v6384 = vadd.f32 0.0, %v6383
    %v6385 = vpop.f32.mrf.mxu0
    %6386 = vdwg.mxu0
    %v6387 = vadd.f32 %v6266, %v6381
    %v6388 = vadd.f32 %v6267, %v6384
    %v6389 = vld [vmem:[#allocation49] sm:$0x1]
    %v6391 = vlaneseq
    %v6392 = vshrl.u32 %v6391, 7
    %v6393 = vsub.s32 0, %v6392
    %v6394 = vrot.slane %v6389, %v6393
    %v6396 = vadd.f32 %v6387, %v6394
    %v6397 = vadd.f32 %v6388, %v6394
    %vm6398 = vcmp.gt.f32.partialorder %v6396, 20.0
    %vm6399 = vcmp.gt.f32.partialorder %v6397, 20.0
    %v6400 = vmin.f32 %v6396, 20.0
    %v6401 = vmin.f32 %v6397, 20.0
    %v6402 = vmul.f32 %v6400, 1.442695
    %v6403 = vpow.pop %v6402
    %v6404 = vmul.f32 %v6401, 1.442695
    %v6405 = vpow.pop %v6404
    %v6406 = vadd.f32 %v6403, 1.0
    %v6407 = vlog2.pop %v6406
    %v6408 = vmul.f32 %v6407, 0.6931472
    %v6409 = vmul.f32 -0.5, %v6403
    %v6410 = vadd.f32 %v6409, 1.0
    %v6411 = vmul.f32 %v6410, %v6403
    %v6412 = vand.u32 2147483647, %v6403
    %vm6413 = vcmp.lt.f32.partialorder %v6412, 0.0004427343
    %v6414 = vsel %vm6413, %v6411, %v6408
    %v6415 = vadd.f32 %v6405, 1.0
    %v6416 = vlog2.pop %v6415
    %v6417 = vmul.f32 %v6416, 0.6931472
    %v6418 = vmul.f32 -0.5, %v6405
    %v6419 = vadd.f32 %v6418, 1.0
    %v6420 = vmul.f32 %v6419, %v6405
    %v6421 = vand.u32 2147483647, %v6405
    %vm6422 = vcmp.lt.f32.partialorder %v6421, 0.0004427343
    %v6423 = vsel %vm6422, %v6420, %v6417
    %v6424 = vsel %vm6398, %v6396, %v6414
    %v6425 = vsel %vm6399, %v6397, %v6423
    %v6426 = vtanh.pop %v6424
    %v6427 = vtanh.pop %v6425
    %v6428 = vmul.f32 %v6396, %v6426
    %v6429 = vmul.f32 %v6397, %v6427
    %v6430 = vsel %vm812, %v6428, 0.0
    %v6431 = vsel %vm812, %v6429, 0.0
    %v6432 = vadd.f32 %v6430, %v6431
    %v6433 = vrot.slane %v6432, 4
    %v6434 = vadd.f32 %v6432, %v6433
    %v6435 = vrot.slane %v6434, 2
    %v6436 = vadd.f32 %v6434, %v6435
    %v6437 = vrot.slane %v6436, 1
    %v6438 = vadd.f32 %v6436, %v6437
    %v6439 = vmul.f32 %v6438, %v1896
    %v6440 = vsub.f32 %v6428, %v6439
    %v6441 = vsub.f32 %v6429, %v6439
    %v6442 = vmul.f32 %v6440, %v6440
    %v6443 = vmul.f32 %v6441, %v6441
    %v6444 = vsel %vm812, %v6442, 0.0
    %v6445 = vsel %vm812, %v6443, 0.0
    %v6446 = vadd.f32 %v6444, %v6445
    %v6447 = vrot.slane %v6446, 4
    %v6448 = vadd.f32 %v6446, %v6447
    %v6449 = vrot.slane %v6448, 2
    %v6450 = vadd.f32 %v6448, %v6449
    %v6451 = vrot.slane %v6450, 1
    %v6452 = vadd.f32 %v6450, %v6451
    %v6453 = vmul.f32 %v6452, %v1896
    %v6454 = vadd.f32 %v6453, 1e-05
    %v6455 = vrsqrt.pop %v6454
    %v6456 = vmul.f32 %v6440, %v6455
    %v6457 = vmul.f32 %v6441, %v6455
    %v6458 = vld [vmem:[%s113] sm:$0x1]
    %v6460 = vlaneseq
    %v6461 = vshrl.u32 %v6460, 7
    %v6462 = vsub.s32 0, %v6461
    %v6463 = vrot.slane %v6458, %v6462
    %v6465 = vmul.f32 %v6456, %v6463
    %v6466 = vmul.f32 %v6457, %v6463
    %v6467 = vld [vmem:[%s111] sm:$0x1]
    %v6469 = vlaneseq
    %v6470 = vshrl.u32 %v6469, 7
    %v6471 = vsub.s32 0, %v6470
    %v6472 = vrot.slane %v6467, %v6471
    %v6474 = vadd.f32 %v6465, %v6472
    %v6475 = vadd.f32 %v6466, %v6472
    %v6476 = vadd.f32 %v6474, %v5628
    %v6477 = vadd.f32 %v6475, %v5633
    %v6478 = vld [vmem:[%s121] sm:$0xf]
    %v6479 = vld [vmem:[%s121 + $0x4] sm:$0xf]
    %v6480 = vpack.c.bf16 %v6477, %v6476
    %v6483 = vunpack.c.l.b16 %v6478
    %v6484 = vunpack.c.l.b16 %v6479
    %v6485 = vpack.c.b16 %v6484, %v6483
    %v6487 = vsel %vm1944, %v6485, 0
    %6489 = vmatprep.subr.bf16.mxu0 0
    %6490 = vmatpush1.bf16.msra.mxu0 0
    %6491 = vmatprep.subr.bf16.mxu0 0
    %6492 = vmatpush1.bf16.msra.mxu0 0
    %6493 = vmatprep.subr.bf16.mxu0 0
    %6494 = vmatpush1.bf16.msra.mxu0 0
    %6495 = vmatprep.subr.bf16.mxu0 0
    %6496 = vmatpush1.bf16.msra.mxu0 0
    %6497 = vmatprep.subr.bf16.mxu0 0
    %6498 = vmatpush1.bf16.msra.mxu0 0
    %6499 = vmatprep.subr.bf16.mxu0 0
    %6500 = vmatpush1.bf16.msra.mxu0 0
    %6501 = vmatprep.subr.bf16.mxu0 0
    %6502 = vmatpush1.bf16.msra.mxu0 0
    %6503 = vmatprep.subr.bf16.mxu0 0
    %6504 = vmatpush1.bf16.msra.mxu0 %v6480
    %6505 = vmatprep.subr.bf16.mxu0 0
    %6506 = vmatpush2.bf16.msra.mxu0 0
    %6507 = vmatprep.subr.bf16.mxu0 0
    %6508 = vmatpush2.bf16.msra.mxu0 0
    %6509 = vmatprep.subr.bf16.mxu0 0
    %6510 = vmatpush2.bf16.msra.mxu0 0
    %6511 = vmatprep.subr.bf16.mxu0 0
    %6512 = vmatpush2.bf16.msra.mxu0 0
    %6513 = vmatprep.subr.bf16.mxu0 0
    %6514 = vmatpush2.bf16.msra.mxu0 0
    %6515 = vmatprep.subr.bf16.mxu0 0
    %6516 = vmatpush2.bf16.msra.mxu0 0
    %6517 = vmatprep.subr.bf16.mxu0 0
    %6518 = vmatpush2.bf16.msra.mxu0 0
    %6519 = vmatprep.subr.bf16.mxu0 0
    %6520 = vmatpush2.bf16.msra.mxu0 0
    %6521 = vmatprep.mubr.bf16.mxu0 0
    %6522 = vmatmul.mubr.bf16.gmra.mxu0 %v6487
    %v6523 = vpop.f32.mrf.mxu0
    %v6524 = vadd.f32 0.0, %v6523
    %v6525 = vpop.f32.mrf.mxu0
    %v6526 = vpop.f32.mrf.mxu0
    %v6527 = vadd.f32 0.0, %v6526
    %v6528 = vpop.f32.mrf.mxu0
    %6529 = vdwg.mxu0
    %v6530 = vld [vmem:[#allocation61] sm:$0xf]
    %v6531 = vld [vmem:[#allocation61 + $0x4] sm:$0xf]
    %v6532 = vld [vmem:[#allocation61 + $0x8] sm:$0xf]
    %v6533 = vld [vmem:[#allocation61 + $0xc] sm:$0xf]
    %v6534 = vpack.c.bf16 %v6527, %v6524
    %s6535 = scalar_lea.vmem %s121, 8
    %v6536 = vld [vmem:[%s6535] sm:$0xf]
    %v6537 = vld [vmem:[%s6535 + $0x4] sm:$0xf]
    %v6540 = vunpack.c.l.b16 %v6536
    %v6541 = vunpack.c.l.b16 %v6537
    %v6542 = vpack.c.b16 %v6541, %v6540
    %v6544 = vsel %vm1944, %v6542, 0
    %6546 = vmatprep.subr.bf16.mxu0 0
    %6547 = vmatpush1.bf16.msra.mxu0 0
    %6548 = vmatprep.subr.bf16.mxu0 0
    %6549 = vmatpush1.bf16.msra.mxu0 0
    %6550 = vmatprep.subr.bf16.mxu0 0
    %6551 = vmatpush1.bf16.msra.mxu0 0
    %6552 = vmatprep.subr.bf16.mxu0 0
    %6553 = vmatpush1.bf16.msra.mxu0 0
    %6554 = vmatprep.subr.bf16.mxu0 0
    %6555 = vmatpush1.bf16.msra.mxu0 0
    %6556 = vmatprep.subr.bf16.mxu0 0
    %6557 = vmatpush1.bf16.msra.mxu0 0
    %6558 = vmatprep.subr.bf16.mxu0 0
    %6559 = vmatpush1.bf16.msra.mxu0 0
    %6560 = vmatprep.subr.bf16.mxu0 0
    %6561 = vmatpush1.bf16.msra.mxu0 %v6480
    %6562 = vmatprep.subr.bf16.mxu0 0
    %6563 = vmatpush2.bf16.msra.mxu0 0
    %6564 = vmatprep.subr.bf16.mxu0 0
    %6565 = vmatpush2.bf16.msra.mxu0 0
    %6566 = vmatprep.subr.bf16.mxu0 0
    %6567 = vmatpush2.bf16.msra.mxu0 0
    %6568 = vmatprep.subr.bf16.mxu0 0
    %6569 = vmatpush2.bf16.msra.mxu0 0
    %6570 = vmatprep.subr.bf16.mxu0 0
    %6571 = vmatpush2.bf16.msra.mxu0 0
    %6572 = vmatprep.subr.bf16.mxu0 0
    %6573 = vmatpush2.bf16.msra.mxu0 0
    %6574 = vmatprep.subr.bf16.mxu0 0
    %6575 = vmatpush2.bf16.msra.mxu0 0
    %6576 = vmatprep.subr.bf16.mxu0 0
    %6577 = vmatpush2.bf16.msra.mxu0 0
    %6578 = vmatprep.mubr.bf16.mxu0 0
    %6579 = vmatmul.mubr.bf16.gmra.mxu0 %v6544
    %v6580 = vpop.f32.mrf.mxu0
    %v6581 = vadd.f32 0.0, %v6580
    %v6582 = vpop.f32.mrf.mxu0
    %v6583 = vpop.f32.mrf.mxu0
    %v6584 = vadd.f32 0.0, %v6583
    %v6585 = vpop.f32.mrf.mxu0
    %6586 = vdwg.mxu0
    %s6587 = scalar_lea.vmem [#allocation61], 16
    %v6588 = vld [vmem:[%s6587] sm:$0xf]
    %v6589 = vld [vmem:[%s6587 + $0x4] sm:$0xf]
    %v6590 = vld [vmem:[%s6587 + $0x8] sm:$0xf]
    %v6591 = vld [vmem:[%s6587 + $0xc] sm:$0xf]
    %v6592 = vpack.c.bf16 %v6584, %v6581
    %v6597 = vunpack.c.l.b16 %v6588
    %v6598 = vunpack.c.l.b16 %v6589
    %v6599 = vunpack.c.l.b16 %v6590
    %v6600 = vunpack.c.l.b16 %v6591
    %v6601 = vpack.c.b16 %v6598, %v6597
    %v6602 = vpack.c.b16 %v6600, %v6599
    %v6606 = vsel %vm812, %v6592, 0
    %6608 = vmatprep.subr.bf16.mxu0 0
    %6609 = vmatpush1.bf16.msra.mxu0 0
    %6610 = vmatprep.subr.bf16.mxu0 0
    %6611 = vmatpush1.bf16.msra.mxu0 0
    %6612 = vmatprep.subr.bf16.mxu0 0
    %6613 = vmatpush1.bf16.msra.mxu0 0
    %6614 = vmatprep.subr.bf16.mxu0 0
    %6615 = vmatpush1.bf16.msra.mxu0 0
    %6616 = vmatprep.subr.bf16.mxu0 0
    %6617 = vmatpush1.bf16.msra.mxu0 0
    %6618 = vmatprep.subr.bf16.mxu0 0
    %6619 = vmatpush1.bf16.msra.mxu0 0
    %6620 = vmatprep.subr.bf16.mxu0 0
    %6621 = vmatpush1.bf16.msra.mxu0 %v6602
    %6622 = vmatprep.subr.bf16.mxu0 0
    %6623 = vmatpush1.bf16.msra.mxu0 %v6601
    %6624 = vmatprep.subr.bf16.mxu0 0
    %6625 = vmatpush2.bf16.msra.mxu0 0
    %6626 = vmatprep.subr.bf16.mxu0 0
    %6627 = vmatpush2.bf16.msra.mxu0 0
    %6628 = vmatprep.subr.bf16.mxu0 0
    %6629 = vmatpush2.bf16.msra.mxu0 0
    %6630 = vmatprep.subr.bf16.mxu0 0
    %6631 = vmatpush2.bf16.msra.mxu0 0
    %6632 = vmatprep.subr.bf16.mxu0 0
    %6633 = vmatpush2.bf16.msra.mxu0 0
    %6634 = vmatprep.subr.bf16.mxu0 0
    %6635 = vmatpush2.bf16.msra.mxu0 0
    %6636 = vmatprep.subr.bf16.mxu0 0
    %6637 = vmatpush2.bf16.msra.mxu0 0
    %6638 = vmatprep.subr.bf16.mxu0 0
    %6639 = vmatpush2.bf16.msra.mxu0 0
    %6640 = vmatprep.mubr.bf16.mxu0 0
    %6641 = vmatmul.mubr.bf16.gmra.mxu0 %v6606
    %v6642 = vpop.f32.mrf.mxu0
    %v6643 = vadd.f32 0.0, %v6642
    %v6644 = vpop.f32.mrf.mxu0
    %v6645 = vpop.f32.mrf.mxu0
    %v6646 = vadd.f32 0.0, %v6645
    %v6647 = vpop.f32.mrf.mxu0
    %6648 = vdwg.mxu0
    %v6653 = vunpack.c.l.b16 %v6530
    %v6654 = vunpack.c.l.b16 %v6531
    %v6655 = vunpack.c.l.b16 %v6532
    %v6656 = vunpack.c.l.b16 %v6533
    %v6657 = vpack.c.b16 %v6654, %v6653
    %v6658 = vpack.c.b16 %v6656, %v6655
    %v6662 = vsel %vm812, %v6534, 0
    %6664 = vmatprep.subr.bf16.mxu0 0
    %6665 = vmatpush1.bf16.msra.mxu0 0
    %6666 = vmatprep.subr.bf16.mxu0 0
    %6667 = vmatpush1.bf16.msra.mxu0 0
    %6668 = vmatprep.subr.bf16.mxu0 0
    %6669 = vmatpush1.bf16.msra.mxu0 0
    %6670 = vmatprep.subr.bf16.mxu0 0
    %6671 = vmatpush1.bf16.msra.mxu0 0
    %6672 = vmatprep.subr.bf16.mxu0 0
    %6673 = vmatpush1.bf16.msra.mxu0 0
    %6674 = vmatprep.subr.bf16.mxu0 0
    %6675 = vmatpush1.bf16.msra.mxu0 0
    %6676 = vmatprep.subr.bf16.mxu0 0
    %6677 = vmatpush1.bf16.msra.mxu0 %v6658
    %6678 = vmatprep.subr.bf16.mxu0 0
    %6679 = vmatpush1.bf16.msra.mxu0 %v6657
    %6680 = vmatprep.subr.bf16.mxu0 0
    %6681 = vmatpush2.bf16.msra.mxu0 0
    %6682 = vmatprep.subr.bf16.mxu0 0
    %6683 = vmatpush2.bf16.msra.mxu0 0
    %6684 = vmatprep.subr.bf16.mxu0 0
    %6685 = vmatpush2.bf16.msra.mxu0 0
    %6686 = vmatprep.subr.bf16.mxu0 0
    %6687 = vmatpush2.bf16.msra.mxu0 0
    %6688 = vmatprep.subr.bf16.mxu0 0
    %6689 = vmatpush2.bf16.msra.mxu0 0
    %6690 = vmatprep.subr.bf16.mxu0 0
    %6691 = vmatpush2.bf16.msra.mxu0 0
    %6692 = vmatprep.subr.bf16.mxu0 0
    %6693 = vmatpush2.bf16.msra.mxu0 0
    %6694 = vmatprep.subr.bf16.mxu0 0
    %6695 = vmatpush2.bf16.msra.mxu0 0
    %6696 = vmatprep.mubr.bf16.mxu0 0
    %6697 = vmatmul.mubr.bf16.gmra.mxu0 %v6662
    %v6698 = vpop.f32.mrf.mxu0
    %v6699 = vadd.f32 %v6643, %v6698
    %v6700 = vpop.f32.mrf.mxu0
    %v6701 = vpop.f32.mrf.mxu0
    %v6702 = vadd.f32 %v6646, %v6701
    %v6703 = vpop.f32.mrf.mxu0
    %6704 = vdwg.mxu0
    %s6705 = scalar_lea.vmem %s121, 16
    %v6706 = vld [vmem:[%s6705] sm:$0xf]
    %v6707 = vld [vmem:[%s6705 + $0x4] sm:$0xf]
    %v6710 = vunpack.c.l.b16 %v6706
    %v6711 = vunpack.c.l.b16 %v6707
    %v6712 = vpack.c.b16 %v6711, %v6710
    %v6714 = vsel %vm1944, %v6712, 0
    %6716 = vmatprep.subr.bf16.mxu0 0
    %6717 = vmatpush1.bf16.msra.mxu0 0
    %6718 = vmatprep.subr.bf16.mxu0 0
    %6719 = vmatpush1.bf16.msra.mxu0 0
    %6720 = vmatprep.subr.bf16.mxu0 0
    %6721 = vmatpush1.bf16.msra.mxu0 0
    %6722 = vmatprep.subr.bf16.mxu0 0
    %6723 = vmatpush1.bf16.msra.mxu0 0
    %6724 = vmatprep.subr.bf16.mxu0 0
    %6725 = vmatpush1.bf16.msra.mxu0 0
    %6726 = vmatprep.subr.bf16.mxu0 0
    %6727 = vmatpush1.bf16.msra.mxu0 0
    %6728 = vmatprep.subr.bf16.mxu0 0
    %6729 = vmatpush1.bf16.msra.mxu0 0
    %6730 = vmatprep.subr.bf16.mxu0 0
    %6731 = vmatpush1.bf16.msra.mxu0 %v6480
    %6732 = vmatprep.subr.bf16.mxu0 0
    %6733 = vmatpush2.bf16.msra.mxu0 0
    %6734 = vmatprep.subr.bf16.mxu0 0
    %6735 = vmatpush2.bf16.msra.mxu0 0
    %6736 = vmatprep.subr.bf16.mxu0 0
    %6737 = vmatpush2.bf16.msra.mxu0 0
    %6738 = vmatprep.subr.bf16.mxu0 0
    %6739 = vmatpush2.bf16.msra.mxu0 0
    %6740 = vmatprep.subr.bf16.mxu0 0
    %6741 = vmatpush2.bf16.msra.mxu0 0
    %6742 = vmatprep.subr.bf16.mxu0 0
    %6743 = vmatpush2.bf16.msra.mxu0 0
    %6744 = vmatprep.subr.bf16.mxu0 0
    %6745 = vmatpush2.bf16.msra.mxu0 0
    %6746 = vmatprep.subr.bf16.mxu0 0
    %6747 = vmatpush2.bf16.msra.mxu0 0
    %6748 = vmatprep.mubr.bf16.mxu0 0
    %6749 = vmatmul.mubr.bf16.gmra.mxu0 %v6714
    %v6750 = vpop.f32.mrf.mxu0
    %v6751 = vadd.f32 0.0, %v6750
    %v6752 = vpop.f32.mrf.mxu0
    %v6753 = vpop.f32.mrf.mxu0
    %v6754 = vadd.f32 0.0, %v6753
    %v6755 = vpop.f32.mrf.mxu0
    %6756 = vdwg.mxu0
    %s6757 = scalar_lea.vmem [#allocation61], 32
    %v6758 = vld [vmem:[%s6757] sm:$0xf]
    %v6759 = vld [vmem:[%s6757 + $0x4] sm:$0xf]
    %v6760 = vld [vmem:[%s6757 + $0x8] sm:$0xf]
    %v6761 = vld [vmem:[%s6757 + $0xc] sm:$0xf]
    %v6762 = vpack.c.bf16 %v6754, %v6751
    %v6767 = vunpack.c.l.b16 %v6758
    %v6768 = vunpack.c.l.b16 %v6759
    %v6769 = vunpack.c.l.b16 %v6760
    %v6770 = vunpack.c.l.b16 %v6761
    %v6771 = vpack.c.b16 %v6768, %v6767
    %v6772 = vpack.c.b16 %v6770, %v6769
    %v6776 = vsel %vm812, %v6762, 0
    %6778 = vmatprep.subr.bf16.mxu0 0
    %6779 = vmatpush1.bf16.msra.mxu0 0
    %6780 = vmatprep.subr.bf16.mxu0 0
    %6781 = vmatpush1.bf16.msra.mxu0 0
    %6782 = vmatprep.subr.bf16.mxu0 0
    %6783 = vmatpush1.bf16.msra.mxu0 0
    %6784 = vmatprep.subr.bf16.mxu0 0
    %6785 = vmatpush1.bf16.msra.mxu0 0
    %6786 = vmatprep.subr.bf16.mxu0 0
    %6787 = vmatpush1.bf16.msra.mxu0 0
    %6788 = vmatprep.subr.bf16.mxu0 0
    %6789 = vmatpush1.bf16.msra.mxu0 0
    %6790 = vmatprep.subr.bf16.mxu0 0
    %6791 = vmatpush1.bf16.msra.mxu0 %v6772
    %6792 = vmatprep.subr.bf16.mxu0 0
    %6793 = vmatpush1.bf16.msra.mxu0 %v6771
    %6794 = vmatprep.subr.bf16.mxu0 0
    %6795 = vmatpush2.bf16.msra.mxu0 0
    %6796 = vmatprep.subr.bf16.mxu0 0
    %6797 = vmatpush2.bf16.msra.mxu0 0
    %6798 = vmatprep.subr.bf16.mxu0 0
    %6799 = vmatpush2.bf16.msra.mxu0 0
    %6800 = vmatprep.subr.bf16.mxu0 0
    %6801 = vmatpush2.bf16.msra.mxu0 0
    %6802 = vmatprep.subr.bf16.mxu0 0
    %6803 = vmatpush2.bf16.msra.mxu0 0
    %6804 = vmatprep.subr.bf16.mxu0 0
    %6805 = vmatpush2.bf16.msra.mxu0 0
    %6806 = vmatprep.subr.bf16.mxu0 0
    %6807 = vmatpush2.bf16.msra.mxu0 0
    %6808 = vmatprep.subr.bf16.mxu0 0
    %6809 = vmatpush2.bf16.msra.mxu0 0
    %6810 = vmatprep.mubr.bf16.mxu0 0
    %6811 = vmatmul.mubr.bf16.gmra.mxu0 %v6776
    %v6812 = vpop.f32.mrf.mxu0
    %v6813 = vadd.f32 0.0, %v6812
    %v6814 = vpop.f32.mrf.mxu0
    %v6815 = vpop.f32.mrf.mxu0
    %v6816 = vadd.f32 0.0, %v6815
    %v6817 = vpop.f32.mrf.mxu0
    %6818 = vdwg.mxu0
    %v6819 = vadd.f32 %v6699, %v6813
    %v6820 = vadd.f32 %v6702, %v6816
    %v6821 = vld [vmem:[#allocation50] sm:$0x1]
    %v6823 = vlaneseq
    %v6824 = vshrl.u32 %v6823, 7
    %v6825 = vsub.s32 0, %v6824
    %v6826 = vrot.slane %v6821, %v6825
    %v6828 = vadd.f32 %v6819, %v6826
    %v6829 = vadd.f32 %v6820, %v6826
    %vm6830 = vcmp.gt.f32.partialorder %v6828, 20.0
    %vm6831 = vcmp.gt.f32.partialorder %v6829, 20.0
    %v6832 = vmin.f32 %v6828, 20.0
    %v6833 = vmin.f32 %v6829, 20.0
    %v6834 = vmul.f32 %v6832, 1.442695
    %v6835 = vpow.pop %v6834
    %v6836 = vmul.f32 %v6833, 1.442695
    %v6837 = vpow.pop %v6836
    %v6838 = vadd.f32 %v6835, 1.0
    %v6839 = vlog2.pop %v6838
    %v6840 = vmul.f32 %v6839, 0.6931472
    %v6841 = vmul.f32 -0.5, %v6835
    %v6842 = vadd.f32 %v6841, 1.0
    %v6843 = vmul.f32 %v6842, %v6835
    %v6844 = vand.u32 2147483647, %v6835
    %vm6845 = vcmp.lt.f32.partialorder %v6844, 0.0004427343
    %v6846 = vsel %vm6845, %v6843, %v6840
    %v6847 = vadd.f32 %v6837, 1.0
    %v6848 = vlog2.pop %v6847
    %v6849 = vmul.f32 %v6848, 0.6931472
    %v6850 = vmul.f32 -0.5, %v6837
    %v6851 = vadd.f32 %v6850, 1.0
    %v6852 = vmul.f32 %v6851, %v6837
    %v6853 = vand.u32 2147483647, %v6837
    %vm6854 = vcmp.lt.f32.partialorder %v6853, 0.0004427343
    %v6855 = vsel %vm6854, %v6852, %v6849
    %v6856 = vsel %vm6830, %v6828, %v6846
    %v6857 = vsel %vm6831, %v6829, %v6855
    %v6858 = vtanh.pop %v6856
    %v6859 = vtanh.pop %v6857
    %v6860 = vmul.f32 %v6828, %v6858
    %v6861 = vmul.f32 %v6829, %v6859
    %v6862 = vsel %vm812, %v6860, 0.0
    %v6863 = vsel %vm812, %v6861, 0.0
    %v6864 = vadd.f32 %v6862, %v6863
    %v6865 = vrot.slane %v6864, 4
    %v6866 = vadd.f32 %v6864, %v6865
    %v6867 = vrot.slane %v6866, 2
    %v6868 = vadd.f32 %v6866, %v6867
    %v6869 = vrot.slane %v6868, 1
    %v6870 = vadd.f32 %v6868, %v6869
    %v6871 = vmul.f32 %v6870, %v1896
    %v6872 = vsub.f32 %v6860, %v6871
    %v6873 = vsub.f32 %v6861, %v6871
    %v6874 = vmul.f32 %v6872, %v6872
    %v6875 = vmul.f32 %v6873, %v6873
    %v6876 = vsel %vm812, %v6874, 0.0
    %v6877 = vsel %vm812, %v6875, 0.0
    %v6878 = vadd.f32 %v6876, %v6877
    %v6879 = vrot.slane %v6878, 4
    %v6880 = vadd.f32 %v6878, %v6879
    %v6881 = vrot.slane %v6880, 2
    %v6882 = vadd.f32 %v6880, %v6881
    %v6883 = vrot.slane %v6882, 1
    %v6884 = vadd.f32 %v6882, %v6883
    %v6885 = vmul.f32 %v6884, %v1896
    %v6886 = vadd.f32 %v6885, 1e-05
    %v6887 = vrsqrt.pop %v6886
    %v6888 = vmul.f32 %v6872, %v6887
    %v6889 = vmul.f32 %v6873, %v6887
    %v6890 = vld [vmem:[%s117] sm:$0x1]
    %v6892 = vlaneseq
    %v6893 = vshrl.u32 %v6892, 7
    %v6894 = vsub.s32 0, %v6893
    %v6895 = vrot.slane %v6890, %v6894
    %v6897 = vmul.f32 %v6888, %v6895
    %v6898 = vmul.f32 %v6889, %v6895
    %v6899 = vld [vmem:[%s115] sm:$0x1]
    %v6901 = vlaneseq
    %v6902 = vshrl.u32 %v6901, 7
    %v6903 = vsub.s32 0, %v6902
    %v6904 = vrot.slane %v6899, %v6903
    %v6906 = vadd.f32 %v6897, %v6904
    %v6907 = vadd.f32 %v6898, %v6904
    %v6908 = vld [vmem:[#allocation53] sm:$0xf]
    %v6909 = vld [vmem:[#allocation53 + $0x4] sm:$0xf]
    %v6910 = vld [vmem:[#allocation53 + $0x8] sm:$0xf]
    %v6911 = vld [vmem:[#allocation53 + $0xc] sm:$0xf]
    %v6912 = vpack.c.bf16 %v6907, %v6906
    %v6917 = vunpack.c.l.b16 %v6908
    %v6918 = vunpack.c.l.b16 %v6909
    %v6919 = vunpack.c.l.b16 %v6910
    %v6920 = vunpack.c.l.b16 %v6911
    %v6921 = vpack.c.b16 %v6918, %v6917
    %v6922 = vpack.c.b16 %v6920, %v6919
    %v6924 = vsel %vm1944, %v6921, 0
    %v6927 = vsel %vm1944, %v6922, 0
    %6929 = vmatprep.subr.bf16.mxu0 0
    %6930 = vmatpush1.bf16.msra.mxu0 0
    %6931 = vmatprep.subr.bf16.mxu0 0
    %6932 = vmatpush1.bf16.msra.mxu0 0
    %6933 = vmatprep.subr.bf16.mxu0 0
    %6934 = vmatpush1.bf16.msra.mxu0 0
    %6935 = vmatprep.subr.bf16.mxu0 0
    %6936 = vmatpush1.bf16.msra.mxu0 0
    %6937 = vmatprep.subr.bf16.mxu0 0
    %6938 = vmatpush1.bf16.msra.mxu0 0
    %6939 = vmatprep.subr.bf16.mxu0 0
    %6940 = vmatpush1.bf16.msra.mxu0 0
    %6941 = vmatprep.subr.bf16.mxu0 0
    %6942 = vmatpush1.bf16.msra.mxu0 0
    %6943 = vmatprep.subr.bf16.mxu0 0
    %6944 = vmatpush1.bf16.msra.mxu0 %v6912
    %6945 = vmatprep.subr.bf16.mxu0 0
    %6946 = vmatpush2.bf16.msra.mxu0 0
    %6947 = vmatprep.subr.bf16.mxu0 0
    %6948 = vmatpush2.bf16.msra.mxu0 0
    %6949 = vmatprep.subr.bf16.mxu0 0
    %6950 = vmatpush2.bf16.msra.mxu0 0
    %6951 = vmatprep.subr.bf16.mxu0 0
    %6952 = vmatpush2.bf16.msra.mxu0 0
    %6953 = vmatprep.subr.bf16.mxu0 0
    %6954 = vmatpush2.bf16.msra.mxu0 0
    %6955 = vmatprep.subr.bf16.mxu0 0
    %6956 = vmatpush2.bf16.msra.mxu0 0
    %6957 = vmatprep.subr.bf16.mxu0 0
    %6958 = vmatpush2.bf16.msra.mxu0 0
    %6959 = vmatprep.subr.bf16.mxu0 0
    %6960 = vmatpush2.bf16.msra.mxu0 0
    %6961 = vmatprep.mubr.bf16.mxu0 0
    %6962 = vmatmul.mubr.bf16.gmra.mxu0 %v6924
    %v6963 = vpop.f32.mrf.mxu0
    %v6964 = vadd.f32 0.0, %v6963
    %v6965 = vpop.f32.mrf.mxu0
    %v6966 = vpop.f32.mrf.mxu0
    %v6967 = vadd.f32 0.0, %v6966
    %v6968 = vpop.f32.mrf.mxu0
    %6969 = vmatprep.mubr.bf16.mxu0 0
    %6970 = vmatmul.mubr.bf16.gmra.mxu0 %v6927
    %v6971 = vpop.f32.mrf.mxu0
    %v6972 = vadd.f32 0.0, %v6971
    %v6973 = vpop.f32.mrf.mxu0
    %v6974 = vpop.f32.mrf.mxu0
    %v6975 = vadd.f32 0.0, %v6974
    %v6976 = vpop.f32.mrf.mxu0
    %6977 = vdwg.mxu0
    %v6978 = vld [vmem:[#allocation62] sm:$0xf]
    %v6979 = vld [vmem:[#allocation62 + $0x4] sm:$0xf]
    %v6980 = vld [vmem:[#allocation62 + $0x8] sm:$0xf]
    %v6981 = vld [vmem:[#allocation62 + $0xc] sm:$0xf]
    %v6982 = vpack.c.bf16 %v6967, %v6964
    %v6983 = vpack.c.bf16 %v6975, %v6972
    %s6984 = scalar_lea.vmem [#allocation53], 16
    %v6985 = vld [vmem:[%s6984] sm:$0xf]
    %v6986 = vld [vmem:[%s6984 + $0x4] sm:$0xf]
    %v6987 = vld [vmem:[%s6984 + $0x8] sm:$0xf]
    %v6988 = vld [vmem:[%s6984 + $0xc] sm:$0xf]
    %v6993 = vunpack.c.l.b16 %v6985
    %v6994 = vunpack.c.l.b16 %v6986
    %v6995 = vunpack.c.l.b16 %v6987
    %v6996 = vunpack.c.l.b16 %v6988
    %v6997 = vpack.c.b16 %v6994, %v6993
    %v6998 = vpack.c.b16 %v6996, %v6995
    %v7000 = vsel %vm1944, %v6997, 0
    %v7003 = vsel %vm1944, %v6998, 0
    %7005 = vmatprep.subr.bf16.mxu0 0
    %7006 = vmatpush1.bf16.msra.mxu0 0
    %7007 = vmatprep.subr.bf16.mxu0 0
    %7008 = vmatpush1.bf16.msra.mxu0 0
    %7009 = vmatprep.subr.bf16.mxu0 0
    %7010 = vmatpush1.bf16.msra.mxu0 0
    %7011 = vmatprep.subr.bf16.mxu0 0
    %7012 = vmatpush1.bf16.msra.mxu0 0
    %7013 = vmatprep.subr.bf16.mxu0 0
    %7014 = vmatpush1.bf16.msra.mxu0 0
    %7015 = vmatprep.subr.bf16.mxu0 0
    %7016 = vmatpush1.bf16.msra.mxu0 0
    %7017 = vmatprep.subr.bf16.mxu0 0
    %7018 = vmatpush1.bf16.msra.mxu0 0
    %7019 = vmatprep.subr.bf16.mxu0 0
    %7020 = vmatpush1.bf16.msra.mxu0 %v6912
    %7021 = vmatprep.subr.bf16.mxu0 0
    %7022 = vmatpush2.bf16.msra.mxu0 0
    %7023 = vmatprep.subr.bf16.mxu0 0
    %7024 = vmatpush2.bf16.msra.mxu0 0
    %7025 = vmatprep.subr.bf16.mxu0 0
    %7026 = vmatpush2.bf16.msra.mxu0 0
    %7027 = vmatprep.subr.bf16.mxu0 0
    %7028 = vmatpush2.bf16.msra.mxu0 0
    %7029 = vmatprep.subr.bf16.mxu0 0
    %7030 = vmatpush2.bf16.msra.mxu0 0
    %7031 = vmatprep.subr.bf16.mxu0 0
    %7032 = vmatpush2.bf16.msra.mxu0 0
    %7033 = vmatprep.subr.bf16.mxu0 0
    %7034 = vmatpush2.bf16.msra.mxu0 0
    %7035 = vmatprep.subr.bf16.mxu0 0
    %7036 = vmatpush2.bf16.msra.mxu0 0
    %7037 = vmatprep.mubr.bf16.mxu0 0
    %7038 = vmatmul.mubr.bf16.gmra.mxu0 %v7000
    %v7039 = vpop.f32.mrf.mxu0
    %v7040 = vadd.f32 0.0, %v7039
    %v7041 = vpop.f32.mrf.mxu0
    %v7042 = vpop.f32.mrf.mxu0
    %v7043 = vadd.f32 0.0, %v7042
    %v7044 = vpop.f32.mrf.mxu0
    %7045 = vmatprep.mubr.bf16.mxu0 0
    %7046 = vmatmul.mubr.bf16.gmra.mxu0 %v7003
    %v7047 = vpop.f32.mrf.mxu0
    %v7048 = vadd.f32 0.0, %v7047
    %v7049 = vpop.f32.mrf.mxu0
    %v7050 = vpop.f32.mrf.mxu0
    %v7051 = vadd.f32 0.0, %v7050
    %v7052 = vpop.f32.mrf.mxu0
    %7053 = vdwg.mxu0
    %s7054 = scalar_lea.vmem [#allocation62], 16
    %v7055 = vld [vmem:[%s7054] sm:$0xf]
    %v7056 = vld [vmem:[%s7054 + $0x4] sm:$0xf]
    %v7057 = vld [vmem:[%s7054 + $0x8] sm:$0xf]
    %v7058 = vld [vmem:[%s7054 + $0xc] sm:$0xf]
    %v7059 = vpack.c.bf16 %v7043, %v7040
    %v7060 = vpack.c.bf16 %v7051, %v7048
    %v7065 = vunpack.c.l.b16 %v7055
    %v7066 = vunpack.c.l.b16 %v7056
    %v7067 = vunpack.c.l.b16 %v7057
    %v7068 = vunpack.c.l.b16 %v7058
    %v7069 = vpack.c.b16 %v7066, %v7065
    %v7070 = vpack.c.b16 %v7068, %v7067
    %v7074 = vsel %vm812, %v7059, 0
    %v7077 = vsel %vm812, %v7060, 0
    %7079 = vmatprep.subr.bf16.mxu0 0
    %7080 = vmatpush1.bf16.msra.mxu0 0
    %7081 = vmatprep.subr.bf16.mxu0 0
    %7082 = vmatpush1.bf16.msra.mxu0 0
    %7083 = vmatprep.subr.bf16.mxu0 0
    %7084 = vmatpush1.bf16.msra.mxu0 0
    %7085 = vmatprep.subr.bf16.mxu0 0
    %7086 = vmatpush1.bf16.msra.mxu0 0
    %7087 = vmatprep.subr.bf16.mxu0 0
    %7088 = vmatpush1.bf16.msra.mxu0 0
    %7089 = vmatprep.subr.bf16.mxu0 0
    %7090 = vmatpush1.bf16.msra.mxu0 0
    %7091 = vmatprep.subr.bf16.mxu0 0
    %7092 = vmatpush1.bf16.msra.mxu0 %v7070
    %7093 = vmatprep.subr.bf16.mxu0 0
    %7094 = vmatpush1.bf16.msra.mxu0 %v7069
    %7095 = vmatprep.subr.bf16.mxu0 0
    %7096 = vmatpush2.bf16.msra.mxu0 0
    %7097 = vmatprep.subr.bf16.mxu0 0
    %7098 = vmatpush2.bf16.msra.mxu0 0
    %7099 = vmatprep.subr.bf16.mxu0 0
    %7100 = vmatpush2.bf16.msra.mxu0 0
    %7101 = vmatprep.subr.bf16.mxu0 0
    %7102 = vmatpush2.bf16.msra.mxu0 0
    %7103 = vmatprep.subr.bf16.mxu0 0
    %7104 = vmatpush2.bf16.msra.mxu0 0
    %7105 = vmatprep.subr.bf16.mxu0 0
    %7106 = vmatpush2.bf16.msra.mxu0 0
    %7107 = vmatprep.subr.bf16.mxu0 0
    %7108 = vmatpush2.bf16.msra.mxu0 0
    %7109 = vmatprep.subr.bf16.mxu0 0
    %7110 = vmatpush2.bf16.msra.mxu0 0
    %7111 = vmatprep.mubr.bf16.mxu0 0
    %7112 = vmatmul.mubr.bf16.gmra.mxu0 %v7074
    %v7113 = vpop.f32.mrf.mxu0
    %v7114 = vadd.f32 0.0, %v7113
    %v7115 = vpop.f32.mrf.mxu0
    %v7116 = vpop.f32.mrf.mxu0
    %v7117 = vadd.f32 0.0, %v7116
    %v7118 = vpop.f32.mrf.mxu0
    %7119 = vmatprep.mubr.bf16.mxu0 0
    %7120 = vmatmul.mubr.bf16.gmra.mxu0 %v7077
    %v7121 = vpop.f32.mrf.mxu0
    %v7122 = vadd.f32 0.0, %v7121
    %v7123 = vpop.f32.mrf.mxu0
    %v7124 = vpop.f32.mrf.mxu0
    %v7125 = vadd.f32 0.0, %v7124
    %v7126 = vpop.f32.mrf.mxu0
    %7127 = vdwg.mxu0
    %v7132 = vunpack.c.l.b16 %v6978
    %v7133 = vunpack.c.l.b16 %v6979
    %v7134 = vunpack.c.l.b16 %v6980
    %v7135 = vunpack.c.l.b16 %v6981
    %v7136 = vpack.c.b16 %v7133, %v7132
    %v7137 = vpack.c.b16 %v7135, %v7134
    %v7141 = vsel %vm812, %v6982, 0
    %v7144 = vsel %vm812, %v6983, 0
    %7146 = vmatprep.subr.bf16.mxu0 0
    %7147 = vmatpush1.bf16.msra.mxu0 0
    %7148 = vmatprep.subr.bf16.mxu0 0
    %7149 = vmatpush1.bf16.msra.mxu0 0
    %7150 = vmatprep.subr.bf16.mxu0 0
    %7151 = vmatpush1.bf16.msra.mxu0 0
    %7152 = vmatprep.subr.bf16.mxu0 0
    %7153 = vmatpush1.bf16.msra.mxu0 0
    %7154 = vmatprep.subr.bf16.mxu0 0
    %7155 = vmatpush1.bf16.msra.mxu0 0
    %7156 = vmatprep.subr.bf16.mxu0 0
    %7157 = vmatpush1.bf16.msra.mxu0 0
    %7158 = vmatprep.subr.bf16.mxu0 0
    %7159 = vmatpush1.bf16.msra.mxu0 %v7137
    %7160 = vmatprep.subr.bf16.mxu0 0
    %7161 = vmatpush1.bf16.msra.mxu0 %v7136
    %7162 = vmatprep.subr.bf16.mxu0 0
    %7163 = vmatpush2.bf16.msra.mxu0 0
    %7164 = vmatprep.subr.bf16.mxu0 0
    %7165 = vmatpush2.bf16.msra.mxu0 0
    %7166 = vmatprep.subr.bf16.mxu0 0
    %7167 = vmatpush2.bf16.msra.mxu0 0
    %7168 = vmatprep.subr.bf16.mxu0 0
    %7169 = vmatpush2.bf16.msra.mxu0 0
    %7170 = vmatprep.subr.bf16.mxu0 0
    %7171 = vmatpush2.bf16.msra.mxu0 0
    %7172 = vmatprep.subr.bf16.mxu0 0
    %7173 = vmatpush2.bf16.msra.mxu0 0
    %7174 = vmatprep.subr.bf16.mxu0 0
    %7175 = vmatpush2.bf16.msra.mxu0 0
    %7176 = vmatprep.subr.bf16.mxu0 0
    %7177 = vmatpush2.bf16.msra.mxu0 0
    %7178 = vmatprep.mubr.bf16.mxu0 0
    %7179 = vmatmul.mubr.bf16.gmra.mxu0 %v7141
    %v7180 = vpop.f32.mrf.mxu0
    %v7181 = vadd.f32 %v7114, %v7180
    %v7182 = vpop.f32.mrf.mxu0
    %v7183 = vpop.f32.mrf.mxu0
    %v7184 = vadd.f32 %v7117, %v7183
    %v7185 = vpop.f32.mrf.mxu0
    %7186 = vmatprep.mubr.bf16.mxu0 0
    %7187 = vmatmul.mubr.bf16.gmra.mxu0 %v7144
    %v7188 = vpop.f32.mrf.mxu0
    %v7189 = vadd.f32 %v7122, %v7188
    %v7190 = vpop.f32.mrf.mxu0
    %v7191 = vpop.f32.mrf.mxu0
    %v7192 = vadd.f32 %v7125, %v7191
    %v7193 = vpop.f32.mrf.mxu0
    %7194 = vdwg.mxu0
    %s7195 = scalar_lea.vmem [#allocation53], 32
    %v7196 = vld [vmem:[%s7195] sm:$0xf]
    %v7197 = vld [vmem:[%s7195 + $0x4] sm:$0xf]
    %v7198 = vld [vmem:[%s7195 + $0x8] sm:$0xf]
    %v7199 = vld [vmem:[%s7195 + $0xc] sm:$0xf]
    %v7204 = vunpack.c.l.b16 %v7196
    %v7205 = vunpack.c.l.b16 %v7197
    %v7206 = vunpack.c.l.b16 %v7198
    %v7207 = vunpack.c.l.b16 %v7199
    %v7208 = vpack.c.b16 %v7205, %v7204
    %v7209 = vpack.c.b16 %v7207, %v7206
    %v7211 = vsel %vm1944, %v7208, 0
    %v7214 = vsel %vm1944, %v7209, 0
    %7216 = vmatprep.subr.bf16.mxu0 0
    %7217 = vmatpush1.bf16.msra.mxu0 0
    %7218 = vmatprep.subr.bf16.mxu0 0
    %7219 = vmatpush1.bf16.msra.mxu0 0
    %7220 = vmatprep.subr.bf16.mxu0 0
    %7221 = vmatpush1.bf16.msra.mxu0 0
    %7222 = vmatprep.subr.bf16.mxu0 0
    %7223 = vmatpush1.bf16.msra.mxu0 0
    %7224 = vmatprep.subr.bf16.mxu0 0
    %7225 = vmatpush1.bf16.msra.mxu0 0
    %7226 = vmatprep.subr.bf16.mxu0 0
    %7227 = vmatpush1.bf16.msra.mxu0 0
    %7228 = vmatprep.subr.bf16.mxu0 0
    %7229 = vmatpush1.bf16.msra.mxu0 0
    %7230 = vmatprep.subr.bf16.mxu0 0
    %7231 = vmatpush1.bf16.msra.mxu0 %v6912
    %7232 = vmatprep.subr.bf16.mxu0 0
    %7233 = vmatpush2.bf16.msra.mxu0 0
    %7234 = vmatprep.subr.bf16.mxu0 0
    %7235 = vmatpush2.bf16.msra.mxu0 0
    %7236 = vmatprep.subr.bf16.mxu0 0
    %7237 = vmatpush2.bf16.msra.mxu0 0
    %7238 = vmatprep.subr.bf16.mxu0 0
    %7239 = vmatpush2.bf16.msra.mxu0 0
    %7240 = vmatprep.subr.bf16.mxu0 0
    %7241 = vmatpush2.bf16.msra.mxu0 0
    %7242 = vmatprep.subr.bf16.mxu0 0
    %7243 = vmatpush2.bf16.msra.mxu0 0
    %7244 = vmatprep.subr.bf16.mxu0 0
    %7245 = vmatpush2.bf16.msra.mxu0 0
    %7246 = vmatprep.subr.bf16.mxu0 0
    %7247 = vmatpush2.bf16.msra.mxu0 0
    %7248 = vmatprep.mubr.bf16.mxu0 0
    %7249 = vmatmul.mubr.bf16.gmra.mxu0 %v7211
    %v7250 = vpop.f32.mrf.mxu0
    %v7251 = vadd.f32 0.0, %v7250
    %v7252 = vpop.f32.mrf.mxu0
    %v7253 = vpop.f32.mrf.mxu0
    %v7254 = vadd.f32 0.0, %v7253
    %v7255 = vpop.f32.mrf.mxu0
    %7256 = vmatprep.mubr.bf16.mxu0 0
    %7257 = vmatmul.mubr.bf16.gmra.mxu0 %v7214
    %v7258 = vpop.f32.mrf.mxu0
    %v7259 = vadd.f32 0.0, %v7258
    %v7260 = vpop.f32.mrf.mxu0
    %v7261 = vpop.f32.mrf.mxu0
    %v7262 = vadd.f32 0.0, %v7261
    %v7263 = vpop.f32.mrf.mxu0
    %7264 = vdwg.mxu0
    %s7265 = scalar_lea.vmem [#allocation62], 32
    %v7266 = vld [vmem:[%s7265] sm:$0xf]
    %v7267 = vld [vmem:[%s7265 + $0x4] sm:$0xf]
    %v7268 = vld [vmem:[%s7265 + $0x8] sm:$0xf]
    %v7269 = vld [vmem:[%s7265 + $0xc] sm:$0xf]
    %v7270 = vpack.c.bf16 %v7254, %v7251
    %v7271 = vpack.c.bf16 %v7262, %v7259
    %v7276 = vunpack.c.l.b16 %v7266
    %v7277 = vunpack.c.l.b16 %v7267
    %v7278 = vunpack.c.l.b16 %v7268
    %v7279 = vunpack.c.l.b16 %v7269
    %v7280 = vpack.c.b16 %v7277, %v7276
    %v7281 = vpack.c.b16 %v7279, %v7278
    %v7285 = vsel %vm812, %v7270, 0
    %v7288 = vsel %vm812, %v7271, 0
    %7290 = vmatprep.subr.bf16.mxu0 0
    %7291 = vmatpush1.bf16.msra.mxu0 0
    %7292 = vmatprep.subr.bf16.mxu0 0
    %7293 = vmatpush1.bf16.msra.mxu0 0
    %7294 = vmatprep.subr.bf16.mxu0 0
    %7295 = vmatpush1.bf16.msra.mxu0 0
    %7296 = vmatprep.subr.bf16.mxu0 0
    %7297 = vmatpush1.bf16.msra.mxu0 0
    %7298 = vmatprep.subr.bf16.mxu0 0
    %7299 = vmatpush1.bf16.msra.mxu0 0
    %7300 = vmatprep.subr.bf16.mxu0 0
    %7301 = vmatpush1.bf16.msra.mxu0 0
    %7302 = vmatprep.subr.bf16.mxu0 0
    %7303 = vmatpush1.bf16.msra.mxu0 %v7281
    %7304 = vmatprep.subr.bf16.mxu0 0
    %7305 = vmatpush1.bf16.msra.mxu0 %v7280
    %7306 = vmatprep.subr.bf16.mxu0 0
    %7307 = vmatpush2.bf16.msra.mxu0 0
    %7308 = vmatprep.subr.bf16.mxu0 0
    %7309 = vmatpush2.bf16.msra.mxu0 0
    %7310 = vmatprep.subr.bf16.mxu0 0
    %7311 = vmatpush2.bf16.msra.mxu0 0
    %7312 = vmatprep.subr.bf16.mxu0 0
    %7313 = vmatpush2.bf16.msra.mxu0 0
    %7314 = vmatprep.subr.bf16.mxu0 0
    %7315 = vmatpush2.bf16.msra.mxu0 0
    %7316 = vmatprep.subr.bf16.mxu0 0
    %7317 = vmatpush2.bf16.msra.mxu0 0
    %7318 = vmatprep.subr.bf16.mxu0 0
    %7319 = vmatpush2.bf16.msra.mxu0 0
    %7320 = vmatprep.subr.bf16.mxu0 0
    %7321 = vmatpush2.bf16.msra.mxu0 0
    %7322 = vmatprep.mubr.bf16.mxu0 0
    %7323 = vmatmul.mubr.bf16.gmra.mxu0 %v7285
    %v7324 = vpop.f32.mrf.mxu0
    %v7325 = vadd.f32 0.0, %v7324
    %v7326 = vpop.f32.mrf.mxu0
    %v7327 = vpop.f32.mrf.mxu0
    %v7328 = vadd.f32 0.0, %v7327
    %v7329 = vpop.f32.mrf.mxu0
    %7330 = vmatprep.mubr.bf16.mxu0 0
    %7331 = vmatmul.mubr.bf16.gmra.mxu0 %v7288
    %v7332 = vpop.f32.mrf.mxu0
    %v7333 = vadd.f32 0.0, %v7332
    %v7334 = vpop.f32.mrf.mxu0
    %v7335 = vpop.f32.mrf.mxu0
    %v7336 = vadd.f32 0.0, %v7335
    %v7337 = vpop.f32.mrf.mxu0
    %7338 = vdwg.mxu0
    %v7339 = vadd.f32 %v7181, %v7325
    %v7340 = vadd.f32 %v7184, %v7328
    %v7341 = vadd.f32 %v7189, %v7333
    %v7342 = vadd.f32 %v7192, %v7336
    %s7343 = scalar_lea.vmem [#allocation53], 48
    %v7344 = vld [vmem:[%s7343] sm:$0xf]
    %v7345 = vld [vmem:[%s7343 + $0x4] sm:$0xf]
    %v7346 = vld [vmem:[%s7343 + $0x8] sm:$0xf]
    %v7347 = vld [vmem:[%s7343 + $0xc] sm:$0xf]
    %v7352 = vunpack.c.l.b16 %v7344
    %v7353 = vunpack.c.l.b16 %v7345
    %v7354 = vunpack.c.l.b16 %v7346
    %v7355 = vunpack.c.l.b16 %v7347
    %v7356 = vpack.c.b16 %v7353, %v7352
    %v7357 = vpack.c.b16 %v7355, %v7354
    %v7359 = vsel %vm1944, %v7356, 0
    %v7362 = vsel %vm1944, %v7357, 0
    %7364 = vmatprep.subr.bf16.mxu0 0
    %7365 = vmatpush1.bf16.msra.mxu0 0
    %7366 = vmatprep.subr.bf16.mxu0 0
    %7367 = vmatpush1.bf16.msra.mxu0 0
    %7368 = vmatprep.subr.bf16.mxu0 0
    %7369 = vmatpush1.bf16.msra.mxu0 0
    %7370 = vmatprep.subr.bf16.mxu0 0
    %7371 = vmatpush1.bf16.msra.mxu0 0
    %7372 = vmatprep.subr.bf16.mxu0 0
    %7373 = vmatpush1.bf16.msra.mxu0 0
    %7374 = vmatprep.subr.bf16.mxu0 0
    %7375 = vmatpush1.bf16.msra.mxu0 0
    %7376 = vmatprep.subr.bf16.mxu0 0
    %7377 = vmatpush1.bf16.msra.mxu0 0
    %7378 = vmatprep.subr.bf16.mxu0 0
    %7379 = vmatpush1.bf16.msra.mxu0 %v6912
    %7380 = vmatprep.subr.bf16.mxu0 0
    %7381 = vmatpush2.bf16.msra.mxu0 0
    %7382 = vmatprep.subr.bf16.mxu0 0
    %7383 = vmatpush2.bf16.msra.mxu0 0
    %7384 = vmatprep.subr.bf16.mxu0 0
    %7385 = vmatpush2.bf16.msra.mxu0 0
    %7386 = vmatprep.subr.bf16.mxu0 0
    %7387 = vmatpush2.bf16.msra.mxu0 0
    %7388 = vmatprep.subr.bf16.mxu0 0
    %7389 = vmatpush2.bf16.msra.mxu0 0
    %7390 = vmatprep.subr.bf16.mxu0 0
    %7391 = vmatpush2.bf16.msra.mxu0 0
    %7392 = vmatprep.subr.bf16.mxu0 0
    %7393 = vmatpush2.bf16.msra.mxu0 0
    %7394 = vmatprep.subr.bf16.mxu0 0
    %7395 = vmatpush2.bf16.msra.mxu0 0
    %7396 = vmatprep.mubr.bf16.mxu0 0
    %7397 = vmatmul.mubr.bf16.gmra.mxu0 %v7359
    %v7398 = vpop.f32.mrf.mxu0
    %v7399 = vadd.f32 0.0, %v7398
    %v7400 = vpop.f32.mrf.mxu0
    %v7401 = vpop.f32.mrf.mxu0
    %v7402 = vadd.f32 0.0, %v7401
    %v7403 = vpop.f32.mrf.mxu0
    %7404 = vmatprep.mubr.bf16.mxu0 0
    %7405 = vmatmul.mubr.bf16.gmra.mxu0 %v7362
    %v7406 = vpop.f32.mrf.mxu0
    %v7407 = vadd.f32 0.0, %v7406
    %v7408 = vpop.f32.mrf.mxu0
    %v7409 = vpop.f32.mrf.mxu0
    %v7410 = vadd.f32 0.0, %v7409
    %v7411 = vpop.f32.mrf.mxu0
    %7412 = vdwg.mxu0
    %s7413 = scalar_lea.vmem [#allocation62], 48
    %v7414 = vld [vmem:[%s7413] sm:$0xf]
    %v7415 = vld [vmem:[%s7413 + $0x4] sm:$0xf]
    %v7416 = vld [vmem:[%s7413 + $0x8] sm:$0xf]
    %v7417 = vld [vmem:[%s7413 + $0xc] sm:$0xf]
    %v7418 = vpack.c.bf16 %v7402, %v7399
    %v7419 = vpack.c.bf16 %v7410, %v7407
    %v7424 = vunpack.c.l.b16 %v7414
    %v7425 = vunpack.c.l.b16 %v7415
    %v7426 = vunpack.c.l.b16 %v7416
    %v7427 = vunpack.c.l.b16 %v7417
    %v7428 = vpack.c.b16 %v7425, %v7424
    %v7429 = vpack.c.b16 %v7427, %v7426
    %v7433 = vsel %vm812, %v7418, 0
    %v7436 = vsel %vm812, %v7419, 0
    %7438 = vmatprep.subr.bf16.mxu0 0
    %7439 = vmatpush1.bf16.msra.mxu0 0
    %7440 = vmatprep.subr.bf16.mxu0 0
    %7441 = vmatpush1.bf16.msra.mxu0 0
    %7442 = vmatprep.subr.bf16.mxu0 0
    %7443 = vmatpush1.bf16.msra.mxu0 0
    %7444 = vmatprep.subr.bf16.mxu0 0
    %7445 = vmatpush1.bf16.msra.mxu0 0
    %7446 = vmatprep.subr.bf16.mxu0 0
    %7447 = vmatpush1.bf16.msra.mxu0 0
    %7448 = vmatprep.subr.bf16.mxu0 0
    %7449 = vmatpush1.bf16.msra.mxu0 0
    %7450 = vmatprep.subr.bf16.mxu0 0
    %7451 = vmatpush1.bf16.msra.mxu0 %v7429
    %7452 = vmatprep.subr.bf16.mxu0 0
    %7453 = vmatpush1.bf16.msra.mxu0 %v7428
    %7454 = vmatprep.subr.bf16.mxu0 0
    %7455 = vmatpush2.bf16.msra.mxu0 0
    %7456 = vmatprep.subr.bf16.mxu0 0
    %7457 = vmatpush2.bf16.msra.mxu0 0
    %7458 = vmatprep.subr.bf16.mxu0 0
    %7459 = vmatpush2.bf16.msra.mxu0 0
    %7460 = vmatprep.subr.bf16.mxu0 0
    %7461 = vmatpush2.bf16.msra.mxu0 0
    %7462 = vmatprep.subr.bf16.mxu0 0
    %7463 = vmatpush2.bf16.msra.mxu0 0
    %7464 = vmatprep.subr.bf16.mxu0 0
    %7465 = vmatpush2.bf16.msra.mxu0 0
    %7466 = vmatprep.subr.bf16.mxu0 0
    %7467 = vmatpush2.bf16.msra.mxu0 0
    %7468 = vmatprep.subr.bf16.mxu0 0
    %7469 = vmatpush2.bf16.msra.mxu0 0
    %7470 = vmatprep.mubr.bf16.mxu0 0
    %7471 = vmatmul.mubr.bf16.gmra.mxu0 %v7433
    %v7472 = vpop.f32.mrf.mxu0
    %v7473 = vadd.f32 0.0, %v7472
    %v7474 = vpop.f32.mrf.mxu0
    %v7475 = vpop.f32.mrf.mxu0
    %v7476 = vadd.f32 0.0, %v7475
    %v7477 = vpop.f32.mrf.mxu0
    %7478 = vmatprep.mubr.bf16.mxu0 0
    %7479 = vmatmul.mubr.bf16.gmra.mxu0 %v7436
    %v7480 = vpop.f32.mrf.mxu0
    %v7481 = vadd.f32 0.0, %v7480
    %v7482 = vpop.f32.mrf.mxu0
    %v7483 = vpop.f32.mrf.mxu0
    %v7484 = vadd.f32 0.0, %v7483
    %v7485 = vpop.f32.mrf.mxu0
    %7486 = vdwg.mxu0
    %v7487 = vadd.f32 %v7339, %v7473
    %v7488 = vadd.f32 %v7340, %v7476
    %v7489 = vadd.f32 %v7341, %v7481
    %v7490 = vadd.f32 %v7342, %v7484
    %v7491 = vld [vmem:[#allocation52] sm:$0x1]
    %v7493 = vlaneseq
    %v7494 = vshrl.u32 %v7493, 7
    %v7495 = vsub.s32 0, %v7494
    %v7496 = vrot.slane %v7491, %v7495
    %v7498 = vadd.f32 %v7487, %v7496
    %v7499 = vadd.f32 %v7488, %v7496
    %v7500 = vadd.f32 %v7489, %v7496
    %v7501 = vadd.f32 %v7490, %v7496
    %v7502 = vld [vmem:[#allocation32] sm:$0xf]
    %v7503 = vld [vmem:[#allocation32 + $0x4] sm:$0xf]
    %v7504 = vld [vmem:[#allocation32 + $0x8] sm:$0xf]
    %v7505 = vld [vmem:[#allocation32 + $0xc] sm:$0xf]
    %v7506 = vpack.c.bf16 %v7499, %v7498
    %v7507 = vpack.c.bf16 %v7501, %v7500
    %v7508 = vld [vmem:[#allocation31] sm:$0x1]
    %v7510 = vlaneseq
    %v7511 = vshrl.u32 %v7510, 7
    %v7512 = vsub.s32 0, %v7511
    %v7513 = vrot.slane %v7508, %v7512
    %v7519 = vunpack.c.l.b16 %v7502
    %v7520 = vunpack.c.l.b16 %v7503
    %v7521 = vunpack.c.l.b16 %v7504
    %v7522 = vunpack.c.l.b16 %v7505
    %v7523 = vpack.c.b16 %v7520, %v7519
    %v7524 = vpack.c.b16 %v7522, %v7521
    %v7528 = vsel %vm812, %v7506, 0
    %v7531 = vsel %vm812, %v7507, 0
    %7533 = vmatprep.subr.bf16.mxu0 0
    %7534 = vmatpush1.bf16.msra.mxu0 0
    %7535 = vmatprep.subr.bf16.mxu0 0
    %7536 = vmatpush1.bf16.msra.mxu0 0
    %7537 = vmatprep.subr.bf16.mxu0 0
    %7538 = vmatpush1.bf16.msra.mxu0 0
    %7539 = vmatprep.subr.bf16.mxu0 0
    %7540 = vmatpush1.bf16.msra.mxu0 0
    %7541 = vmatprep.subr.bf16.mxu0 0
    %7542 = vmatpush1.bf16.msra.mxu0 0
    %7543 = vmatprep.subr.bf16.mxu0 0
    %7544 = vmatpush1.bf16.msra.mxu0 0
    %7545 = vmatprep.subr.bf16.mxu0 0
    %7546 = vmatpush1.bf16.msra.mxu0 %v7524
    %7547 = vmatprep.subr.bf16.mxu0 0
    %7548 = vmatpush1.bf16.msra.mxu0 %v7523
    %7549 = vmatprep.subr.bf16.mxu0 0
    %7550 = vmatpush2.bf16.msra.mxu0 0
    %7551 = vmatprep.subr.bf16.mxu0 0
    %7552 = vmatpush2.bf16.msra.mxu0 0
    %7553 = vmatprep.subr.bf16.mxu0 0
    %7554 = vmatpush2.bf16.msra.mxu0 0
    %7555 = vmatprep.subr.bf16.mxu0 0
    %7556 = vmatpush2.bf16.msra.mxu0 0
    %7557 = vmatprep.subr.bf16.mxu0 0
    %7558 = vmatpush2.bf16.msra.mxu0 0
    %7559 = vmatprep.subr.bf16.mxu0 0
    %7560 = vmatpush2.bf16.msra.mxu0 0
    %7561 = vmatprep.subr.bf16.mxu0 0
    %7562 = vmatpush2.bf16.msra.mxu0 0
    %7563 = vmatprep.subr.bf16.mxu0 0
    %7564 = vmatpush2.bf16.msra.mxu0 0
    %7565 = vmatprep.mubr.bf16.mxu0 0
    %7566 = vmatmul.mubr.bf16.gmra.mxu0 %v7528
    %v7567 = vpop.f32.mrf.mxu0
    %v7568 = vadd.f32 %v7513, %v7567
    %v7569 = vpop.f32.mrf.mxu0
    %v7570 = vpop.f32.mrf.mxu0
    %v7571 = vadd.f32 %v7513, %v7570
    %v7572 = vpop.f32.mrf.mxu0
    %7573 = vmatprep.mubr.bf16.mxu0 0
    %7574 = vmatmul.mubr.bf16.gmra.mxu0 %v7531
    %v7575 = vpop.f32.mrf.mxu0
    %v7576 = vadd.f32 %v7513, %v7575
    %v7577 = vpop.f32.mrf.mxu0
    %v7578 = vpop.f32.mrf.mxu0
    %v7579 = vadd.f32 %v7513, %v7578
    %v7580 = vpop.f32.mrf.mxu0
    %7581 = vdwg.mxu0
    %vm7582 = vcmask 195584
    %7583 = vst.msk [vmem:[#allocation64] sm:$0xff] %vm7582, %v7568
    %7584 = vst.msk [vmem:[#allocation64 + $0x8] sm:$0xff] %vm7582, %v7571
    %7585 = vst.msk [vmem:[#allocation64 + $0x10] sm:$0xff] %vm7582, %v7576
    %7586 = vst.msk [vmem:[#allocation64 + $0x18] sm:$0xff] %vm7582, %v7579
    // Predicated region
    $region438: #{_lambda_.1} parent=1 // pred_check
      _
    $region439: #{_lambda_.1} parent=1 // pred_check_branch
      %7588 = sbr.rel (0) target = $region441
    $region440: #{_lambda_.1} parent=1 // pred_region
      %s7590 = ssub.s32 512, 512
      %7591 = vsyncadd [#allocation4], %s7590
      %s7592 = sshll.u32 [#allocation64], 4
      %s7593 = int_to_ptr.vmem [resolvable:$true] %s7592
      %7598 = dma.vmem_to_hbm [thread:$0]  %s7593, 512, %s139, [#allocation4], 128, 128, 8
    $region441: #{_lambda_.1} parent=1 // pred_fallthru
      _
    // Predicated region
    $region442: #{_lambda_.1} parent=1 // pred_check
      _
    $region443: #{_lambda_.1} parent=1 // pred_check_branch
      %7600 = sbr.rel (0) target = $region445
    $region444: #{_lambda_.1} parent=1 // pred_region
      %7601 = dma.done [#allocation4], 512
    $region445: #{_lambda_.1} parent=1 // pred_fallthru
      _
    %7602 = vsyncpa [#allocation3], 1
    %7603 = vsyncpa [#allocation6], 1
    %7604 = vsyncpa [#allocation9], 1
    %7605 = vsyncpa [#allocation12], 1
    %7606 = vsyncpa [#allocation15], 1
    %7607 = vsyncpa [#allocation18], 1
    %7608 = vsyncpa [#allocation21], 1
    %7609 = vsyncpa [#allocation24], 1
    %7610 = vsyncpa [#allocation27], 1
    %7611 = vsyncpa [#allocation30], 1
    %7612 = vsyncpa [#allocation33], 1
    %7613 = vsyncpa [#allocation36], 1
    %7614 = vsyncpa [#allocation39], 1
    %7615 = vsyncpa [#allocation42], 1
    %7616 = vsyncpa [#allocation45], 1
    %7617 = vsyncpa [#allocation48], 1
    %7618 = vsyncpa [#allocation51], 1
    %7619 = vsyncpa [#allocation54], 1
    %7620 = vsyncpa [#allocation57], 1
    %7621 = vsyncpa [#allocation60], 1
    %7622 = vsyncpa [#allocation63], 1
    %7623 = vsyncpa [#allocation4], 1

</llo_original>
